<compile_context>
chip_gen: v6e
topology: v6e:2x2x1
jax: 0.10.0
libtpu: 0.0.40
codegen_flags: <defaults>
</compile_context>

<pallas_src>
import math
import functools

import numpy as np
import jax
import jax.numpy as jnp
from jax.experimental import pallas as pl
from jax.experimental.pallas import tpu as pltpu

EMBED_DIM = 128          # must be a multiple of NUM_HEADS
NUM_HEADS = 8
WINDOW = 4
LN_EPS = 1e-5
_NEG_BIAS = -1e30        # additive mask for cross-window score entries


def _layernorm_f32(x, gamma, beta):
    mean = jnp.mean(x, axis=-1, keepdims=True)
    var = jnp.mean((x - mean) ** 2, axis=-1, keepdims=True)
    return (x - mean) * jax.lax.rsqrt(var + LN_EPS) * gamma + beta


def _erf_f32(x):
    # Abramowitz & Stegun 7.1.26 (max abs err ~1.5e-7 == f32 precision).
    # Uses only mul/add/exp/select -> guaranteed Mosaic lowering.
    p = 0.3275911
    a1, a2, a3, a4, a5 = (0.254829592, -0.284496736, 1.421413741,
                          -1.453152027, 1.061405429)
    ax = jnp.abs(x)
    t = 1.0 / (1.0 + p * ax)
    poly = ((((a5 * t + a4) * t + a3) * t + a2) * t + a1) * t
    y = 1.0 - poly * jnp.exp(-(ax * ax))
    return jnp.where(x < 0.0, -y, y)


def _gelu_exact(x):
    # Matches torch.nn.GELU() (exact erf form) to float32 precision.
    return 0.5 * x * (1.0 + _erf_f32(x * 0.7071067811865476))


# ------------- fused kernel: LN1 + multi-head attention + residual -------------
def _attn_kernel(x_ref, g_ref, b_ref, bias_ref, wqkv_ref, bqkv_ref,
                 wo_ref, bo_ref, o_ref, *, num_heads):
    WB, L, E = x_ref.shape                      # WB sequences of length L packed
    R = WB * L
    x = x_ref[...].astype(jnp.float32).reshape(R, E)

    # LayerNorm (f32 statistics)
    xn = _layernorm_f32(x, g_ref[...], b_ref[...])

    # Packed QKV projection: one (R, E) x (E, 3E) MXU matmul
    qkv = jnp.dot(xn, wqkv_ref[...], preferred_element_type=jnp.float32) + bqkv_ref[...]

    # Precomputed block-diagonal bias keeps packed sequences/windows independent.
    bias = bias_ref[...]

    Dh = E // num_heads
    scale = 1.0 / math.sqrt(Dh)
    wo = wo_ref[...]

    acc = jnp.zeros((R, E), jnp.float32)
    for h in range(num_heads):                  # static unroll over heads
        qh = qkv[:, h * Dh:(h + 1) * Dh] * scale
        kh = qkv[:, E + h * Dh:E + (h + 1) * Dh]
        vh = qkv[:, 2 * E + h * Dh:2 * E + (h + 1) * Dh]
        # scores for ALL packed sequences at once: (R, Dh) x (R, Dh)^T -> (R, R)
        s = jax.lax.dot_general(qh, kh, (((1,), (1,)), ((), ())),
                                preferred_element_type=jnp.float32) + bias
        s = s - jnp.max(s, axis=-1, keepdims=True)
        p = jnp.exp(s)
        p = p * (1.0 / jnp.sum(p, axis=-1, keepdims=True))   # one reciprocal + bcast mul
        ctx = jnp.dot(p, vh, preferred_element_type=jnp.float32)         # (R, Dh)
        # accumulate output projection per head -> no 8-way lane concat
        acc = acc + jnp.dot(ctx, wo[h * Dh:(h + 1) * Dh, :],
                            preferred_element_type=jnp.float32)

    out = x + acc + bo_ref[...]                 # fused residual add
    o_ref[...] = out.reshape(WB, L, E).astype(o_ref.dtype)


def _pick_seq_batch(S, L, row_cap=256):
    """Largest divisor of S whose packed row count WB*L stays <= row_cap."""
    best = 1
    for d in range(1, S + 1):
        if S % d == 0 and d * L <= row_cap:
            best = d
    return best


def _block_diag_bias(num_seq, seq_len):
    if num_seq == 1:
        return np.zeros((seq_len, seq_len), np.float32)
    r = num_seq * seq_len
    ids = np.arange(r) // seq_len
    return np.where(ids[:, None] == ids[None, :], 0.0, _NEG_BIAS).astype(np.float32)


def attention_block(x_seqs, ln_g, ln_b, p):
    # x_seqs: (S, L, E) independent sequences; returns x + MHA(LN(x)) per sequence.
    S, L, E = x_seqs.shape
    WB = _pick_seq_batch(S, L)
    R = WB * L
    bias = jnp.asarray(_block_diag_bias(WB, L))
    kernel = functools.partial(_attn_kernel, num_heads=NUM_HEADS)
    return pl.pallas_call(
        kernel,
        out_shape=jax.ShapeDtypeStruct((S, L, E), x_seqs.dtype),
        grid=(S // WB,),
        in_specs=[
            pl.BlockSpec((WB, L, E), lambda i: (i, 0, 0)),
            pl.BlockSpec((1, E), lambda i: (0, 0)),
            pl.BlockSpec((1, E), lambda i: (0, 0)),
            pl.BlockSpec((R, R), lambda i: (0, 0)),
            pl.BlockSpec((E, 3 * E), lambda i: (0, 0)),
            pl.BlockSpec((1, 3 * E), lambda i: (0, 0)),
            pl.BlockSpec((E, E), lambda i: (0, 0)),
            pl.BlockSpec((1, E), lambda i: (0, 0)),
        ],
        out_specs=pl.BlockSpec((WB, L, E), lambda i: (i, 0, 0)),
        compiler_params=pltpu.CompilerParams(dimension_semantics=("parallel",)),
    )(x_seqs, ln_g.reshape(1, E), ln_b.reshape(1, E), bias,
      p["w_qkv"], p["b_qkv"], p["w_out"], p["b_out"])


# ------------------- fused kernel: LN2 + FFN + residual -------------------
def _ffn_kernel(x_ref, g_ref, b_ref, w1_ref, b1_ref, w2_ref, b2_ref, o_ref):
    x = x_ref[...].astype(jnp.float32)
    xn = _layernorm_f32(x, g_ref[...], b_ref[...])
    h = jnp.dot(xn, w1_ref[...], preferred_element_type=jnp.float32) + b1_ref[...]
    h = _gelu_exact(h)                          # exact erf GELU == torch nn.GELU()
    out = jnp.dot(h, w2_ref[...], preferred_element_type=jnp.float32) + b2_ref[...]
    o_ref[...] = (x + out).astype(o_ref.dtype)  # fused residual add


def _pick_row_tile(R, Hd):
    # keep TR*Hd f32 intermediate <= ~1 MiB so GELU temporaries never press VMEM
    cap = max(128, min(512, (1 << 18) // max(Hd, 1)))
    for t in (512, 256, 128, 64, 32, 16, 8):
        if t <= cap and R % t == 0:
            return t
    return R


def ffn_block(x, ln_g, ln_b, p):
    B, N, E = x.shape
    Hd = p["w1"].shape[1]
    R = B * N
    TR = _pick_row_tile(R, Hd)
    out = pl.pallas_call(
        _ffn_kernel,
        out_shape=jax.ShapeDtypeStruct((R, E), x.dtype),
        grid=(R // TR,),
        in_specs=[
            pl.BlockSpec((TR, E), lambda i: (i, 0)),
            pl.BlockSpec((1, E), lambda i: (0, 0)),
            pl.BlockSpec((1, E), lambda i: (0, 0)),
            pl.BlockSpec((E, Hd), lambda i: (0, 0)),
            pl.BlockSpec((1, Hd), lambda i: (0, 0)),
            pl.BlockSpec((Hd, E), lambda i: (0, 0)),
            pl.BlockSpec((1, E), lambda i: (0, 0)),
        ],
        out_specs=pl.BlockSpec((TR, E), lambda i: (i, 0)),
        compiler_params=pltpu.CompilerParams(dimension_semantics=("parallel",)),
    )(x.reshape(R, E), ln_g.reshape(1, E), ln_b.reshape(1, E),
      p["w1"], p["b1"], p["w2"], p["b2"])
    return out.reshape(B, N, E)


# ----------------------------- attention variants ----------------------------
def apply_attention(x, ln_g, ln_b, p, choice):
    # Returns x + attn(LN1(x)); LN1 + residual are fused inside the kernel.
    B, N, E = x.shape
    if choice == "global":
        return attention_block(x, ln_g, ln_b, p)

    H = W = int(math.sqrt(N))
    ws = WINDOW
    shift = ws // 2 if choice == "shifted_window" else 0
    xg = x.reshape(B, H, W, E)
    if shift:
        xg = jnp.roll(xg, shift=(-shift, -shift), axis=(1, 2))
    # window partition: (B, H, W, E) -> (B*nh*nw, ws*ws, E)
    # TODO(synk): could be expressed via BlockSpec index_map to avoid the XLA
    # transpose round trip; kept as glue since the tensors here are tiny.
    xw = xg.reshape(B, H // ws, ws, W // ws, ws, E)
    xw = jnp.transpose(xw, (0, 1, 3, 2, 4, 5)).reshape(-1, ws * ws, E)
    yw = attention_block(xw, ln_g, ln_b, p)      # includes residual in window layout
    # undo window partition (LN + residual commute with the token permutation)
    yg = yw.reshape(B, H // ws, W // ws, ws, ws, E)
    yg = jnp.transpose(yg, (0, 1, 3, 2, 4, 5)).reshape(B, H, W, E)
    if shift:
        yg = jnp.roll(yg, shift=(shift, shift), axis=(1, 2))
    return yg.reshape(B, N, E)


# ----------------------------------- cell ------------------------------------
def mixed_transformer_cell(x, params, arch):
    # Dropout layers are identity (inference mode).
    if isinstance(arch, (list, tuple)) and not isinstance(arch[0], str):
        arch = arch[0]
    attn_choice, ffn_choice = arch
    x = apply_attention(x, params["ln1_g"], params["ln1_b"],
                        params["attn"][attn_choice], attn_choice)
    x = ffn_block(x, params["ln2_g"], params["ln2_b"], params["ffn"][ffn_choice])
    return x


# ------------------------------ parameter init -------------------------------
def init_params(key, embed_dim=EMBED_DIM):
    keys = iter(jax.random.split(key, 64))

    def nrm(shape, scale=0.02):
        return scale * jax.random.normal(next(keys), shape, jnp.float32)

    params = {
        "ln1_g": 1.0 + nrm((embed_dim,)),
        "ln1_b": nrm((embed_dim,)),
        "ln2_g": 1.0 + nrm((embed_dim,)),
        "ln2_b": nrm((embed_dim,)),
        "attn": {},
        "ffn": {},
    }
    for name in ("global", "window", "shifted_window"):
        params["attn"][name] = {
            "w_qkv": nrm((embed_dim, 3 * embed_dim)),   # packed Q,K,V projection
            "b_qkv": nrm((1, 3 * embed_dim)),
            "w_out": nrm((embed_dim, embed_dim)),
            "b_out": nrm((1, embed_dim)),
        }
    for name, exp in (("ffn_2", 2), ("ffn_4", 4), ("ffn_8", 8)):
        hd = embed_dim * exp
        params["ffn"][name] = {
            "w1": nrm((embed_dim, hd)),
            "b1": nrm((1, hd)),
            "w2": nrm((hd, embed_dim)),
            "b2": nrm((1, embed_dim)),
        }
    return params


if __name__ == "__main__":
    key = jax.random.PRNGKey(0)
    kp, kx = jax.random.split(key)
    B, N, E = 2, 64, EMBED_DIM            # N = 8x8 spatial grid; window=4 divides 8
    params = init_params(kp, E)
    x = jax.random.normal(kx, (B, N, E), jnp.float32)

    for arch in (("global", "ffn_2"), ("window", "ffn_4"), ("shifted_window", "ffn_8")):
        fn = jax.jit(functools.partial(mixed_transformer_cell, arch=arch))
        out = jax.block_until_ready(fn(x, params))
        assert out.shape == (B, N, E)
        assert bool(jnp.all(jnp.isfinite(out)))

    print("KERNEL_OK")
</pallas_src>

<mosaic_0001>
module attributes {stable_mosaic.version = 11 : i64} {
  func.func @_ffn_kernel(%arg0: i32, %arg1: memref<128x128xf32, #tpu.memory_space<vmem>>, %arg2: memref<1x128xf32, #tpu.memory_space<vmem>>, %arg3: memref<1x128xf32, #tpu.memory_space<vmem>>, %arg4: memref<128x256xf32, #tpu.memory_space<vmem>>, %arg5: memref<1x256xf32, #tpu.memory_space<vmem>>, %arg6: memref<256x128xf32, #tpu.memory_space<vmem>>, %arg7: memref<1x128xf32, #tpu.memory_space<vmem>>, %arg8: memref<128x128xf32, #tpu.memory_space<vmem>>) attributes {dimension_semantics = [#tpu.dimension_semantics<parallel>], iteration_bounds = array<i64: 1>, scalar_prefetch = 0 : i64, scratch_operands = 0 : i64, tpu.core_type = #tpu.core_type<tc>, window_params = [{transform_indices = @transform_0, window_bounds = array<i64: 128, 128>}, {pipeline_mode = #tpu.pipeline_mode<synchronous>, transform_indices = @transform_1, window_bounds = array<i64: 1, 128>}, {pipeline_mode = #tpu.pipeline_mode<synchronous>, transform_indices = @transform_2, window_bounds = array<i64: 1, 128>}, {pipeline_mode = #tpu.pipeline_mode<synchronous>, transform_indices = @transform_3, window_bounds = array<i64: 128, 256>}, {pipeline_mode = #tpu.pipeline_mode<synchronous>, transform_indices = @transform_4, window_bounds = array<i64: 1, 256>}, {pipeline_mode = #tpu.pipeline_mode<synchronous>, transform_indices = @transform_5, window_bounds = array<i64: 256, 128>}, {pipeline_mode = #tpu.pipeline_mode<synchronous>, transform_indices = @transform_6, window_bounds = array<i64: 1, 128>}, {transform_indices = @transform_7, window_bounds = array<i64: 128, 128>}]} {
    %c0 = arith.constant 0 : index
    %c0_0 = arith.constant 0 : index
    %0 = vector.load %arg1[%c0, %c0_0] : memref<128x128xf32, #tpu.memory_space<vmem>>, vector<128x128xf32>
    %c0_1 = arith.constant 0 : index
    %c0_2 = arith.constant 0 : index
    %1 = vector.load %arg2[%c0_1, %c0_2] : memref<1x128xf32, #tpu.memory_space<vmem>>, vector<1x128xf32>
    %c0_3 = arith.constant 0 : index
    %c0_4 = arith.constant 0 : index
    %2 = vector.load %arg3[%c0_3, %c0_4] : memref<1x128xf32, #tpu.memory_space<vmem>>, vector<1x128xf32>
    %cst = arith.constant dense<0.000000e+00> : vector<128xf32>
    %3 = vector.multi_reduction <add>, %0, %cst [1] : vector<128x128xf32> to vector<128xf32>
    %4 = vector.shape_cast %3 : vector<128xf32> to vector<128x1xf32>
    %cst_5 = arith.constant 1.280000e+02 : f32
    %5 = vector.broadcast %cst_5 : f32 to vector<128x1xf32>
    %6 = arith.divf %4, %5 : vector<128x1xf32>
    %7 = vector.broadcast %6 : vector<128x1xf32> to vector<128x128xf32>
    %8 = arith.subf %0, %7 : vector<128x128xf32>
    %9 = arith.mulf %8, %8 : vector<128x128xf32>
    %cst_6 = arith.constant dense<0.000000e+00> : vector<128xf32>
    %10 = vector.multi_reduction <add>, %9, %cst_6 [1] : vector<128x128xf32> to vector<128xf32>
    %11 = vector.shape_cast %10 : vector<128xf32> to vector<128x1xf32>
    %cst_7 = arith.constant 1.280000e+02 : f32
    %12 = vector.broadcast %cst_7 : f32 to vector<128x1xf32>
    %13 = arith.divf %11, %12 : vector<128x1xf32>
    %14 = vector.broadcast %6 : vector<128x1xf32> to vector<128x128xf32>
    %15 = arith.subf %0, %14 : vector<128x128xf32>
    %cst_8 = arith.constant 9.99999974E-6 : f32
    %16 = vector.broadcast %cst_8 : f32 to vector<128x1xf32>
    %17 = arith.addf %13, %16 : vector<128x1xf32>
    %18 = math.rsqrt %17 : vector<128x1xf32>
    %19 = vector.broadcast %18 : vector<128x1xf32> to vector<128x128xf32>
    %20 = arith.mulf %15, %19 : vector<128x128xf32>
    %21 = vector.broadcast %1 : vector<1x128xf32> to vector<128x128xf32>
    %22 = arith.mulf %20, %21 : vector<128x128xf32>
    %23 = vector.broadcast %2 : vector<1x128xf32> to vector<128x128xf32>
    %24 = arith.addf %22, %23 : vector<128x128xf32>
    %c0_9 = arith.constant 0 : index
    %c0_10 = arith.constant 0 : index
    %25 = vector.load %arg4[%c0_9, %c0_10] : memref<128x256xf32, #tpu.memory_space<vmem>>, vector<128x256xf32>
    %cst_11 = arith.constant dense<0.000000e+00> : vector<128x256xf32>
    %26 = tpu.matmul %24, %25, %cst_11 {dimension_numbers = #tpu.dot_dimension_numbers<[1], [0], [0], [1], [0, 0, 1, 1], [], []>} : vector<128x128xf32>, vector<128x256xf32>, vector<128x256xf32> -> vector<128x256xf32>
    %c0_12 = arith.constant 0 : index
    %c0_13 = arith.constant 0 : index
    %27 = vector.load %arg5[%c0_12, %c0_13] : memref<1x256xf32, #tpu.memory_space<vmem>>, vector<1x256xf32>
    %28 = vector.broadcast %27 : vector<1x256xf32> to vector<128x256xf32>
    %29 = arith.addf %26, %28 : vector<128x256xf32>
    %cst_14 = arith.constant 5.000000e-01 : f32
    %30 = vector.broadcast %cst_14 : f32 to vector<128x256xf32>
    %31 = arith.mulf %30, %29 : vector<128x256xf32>
    %cst_15 = arith.constant 0.707106769 : f32
    %32 = vector.broadcast %cst_15 : f32 to vector<128x256xf32>
    %33 = arith.mulf %29, %32 : vector<128x256xf32>
    %34 = math.absf %33 : vector<128x256xf32>
    %cst_16 = arith.constant 0.327591091 : f32
    %35 = vector.broadcast %cst_16 : f32 to vector<128x256xf32>
    %36 = arith.mulf %35, %34 : vector<128x256xf32>
    %cst_17 = arith.constant 1.000000e+00 : f32
    %37 = vector.broadcast %cst_17 : f32 to vector<128x256xf32>
    %38 = arith.addf %37, %36 : vector<128x256xf32>
    %cst_18 = arith.constant 1.000000e+00 : f32
    %39 = vector.broadcast %cst_18 : f32 to vector<128x256xf32>
    %40 = arith.divf %39, %38 : vector<128x256xf32>
    %cst_19 = arith.constant 1.06140542 : f32
    %41 = vector.broadcast %cst_19 : f32 to vector<128x256xf32>
    %42 = arith.mulf %41, %40 : vector<128x256xf32>
    %cst_20 = arith.constant -1.45315206 : f32
    %43 = vector.broadcast %cst_20 : f32 to vector<128x256xf32>
    %44 = arith.addf %42, %43 : vector<128x256xf32>
    %45 = arith.mulf %44, %40 : vector<128x256xf32>
    %cst_21 = arith.constant 1.42141378 : f32
    %46 = vector.broadcast %cst_21 : f32 to vector<128x256xf32>
    %47 = arith.addf %45, %46 : vector<128x256xf32>
    %48 = arith.mulf %47, %40 : vector<128x256xf32>
    %cst_22 = arith.constant -0.284496725 : f32
    %49 = vector.broadcast %cst_22 : f32 to vector<128x256xf32>
    %50 = arith.addf %48, %49 : vector<128x256xf32>
    %51 = arith.mulf %50, %40 : vector<128x256xf32>
    %cst_23 = arith.constant 0.254829586 : f32
    %52 = vector.broadcast %cst_23 : f32 to vector<128x256xf32>
    %53 = arith.addf %51, %52 : vector<128x256xf32>
    %54 = arith.mulf %53, %40 : vector<128x256xf32>
    %55 = arith.mulf %34, %34 : vector<128x256xf32>
    %cst_24 = arith.constant 0.000000e+00 : f32
    %56 = vector.broadcast %cst_24 : f32 to vector<128x256xf32>
    %57 = arith.subf %56, %55 : vector<128x256xf32>
    %58 = math.exp %57 : vector<128x256xf32>
    %59 = arith.mulf %54, %58 : vector<128x256xf32>
    %cst_25 = arith.constant 1.000000e+00 : f32
    %60 = vector.broadcast %cst_25 : f32 to vector<128x256xf32>
    %61 = arith.subf %60, %59 : vector<128x256xf32>
    %cst_26 = arith.constant 0.000000e+00 : f32
    %62 = vector.broadcast %cst_26 : f32 to vector<128x256xf32>
    %63 = arith.cmpf olt, %33, %62 : vector<128x256xf32>
    %cst_27 = arith.constant 0.000000e+00 : f32
    %64 = vector.broadcast %cst_27 : f32 to vector<128x256xf32>
    %65 = arith.subf %64, %61 : vector<128x256xf32>
    %66 = arith.select %63, %65, %61 : vector<128x256xi1>, vector<128x256xf32>
    %cst_28 = arith.constant 1.000000e+00 : f32
    %67 = vector.broadcast %cst_28 : f32 to vector<128x256xf32>
    %68 = arith.addf %67, %66 : vector<128x256xf32>
    %69 = arith.mulf %31, %68 : vector<128x256xf32>
    %c0_29 = arith.constant 0 : index
    %c0_30 = arith.constant 0 : index
    %70 = vector.load %arg6[%c0_29, %c0_30] : memref<256x128xf32, #tpu.memory_space<vmem>>, vector<256x128xf32>
    %cst_31 = arith.constant dense<0.000000e+00> : vector<128x128xf32>
    %71 = tpu.matmul %69, %70, %cst_31 {dimension_numbers = #tpu.dot_dimension_numbers<[1], [0], [0], [1], [0, 0, 1, 1], [], []>} : vector<128x256xf32>, vector<256x128xf32>, vector<128x128xf32> -> vector<128x128xf32>
    %c0_32 = arith.constant 0 : index
    %c0_33 = arith.constant 0 : index
    %72 = vector.load %arg7[%c0_32, %c0_33] : memref<1x128xf32, #tpu.memory_space<vmem>>, vector<1x128xf32>
    %73 = vector.broadcast %72 : vector<1x128xf32> to vector<128x128xf32>
    %74 = arith.addf %71, %73 : vector<128x128xf32>
    %75 = arith.addf %0, %74 : vector<128x128xf32>
    %c0_34 = arith.constant 0 : index
    %c0_35 = arith.constant 0 : index
    %76 = vector.load %arg8[%c0_34, %c0_35] : memref<128x128xf32, #tpu.memory_space<vmem>>, vector<128x128xf32>
    tpu.vector_store %arg8[%c0_34, %c0_35], %75 {strides = array<i32>} : memref<128x128xf32, #tpu.memory_space<vmem>>, vector<128x128xf32>,
    return
  }
  func.func @transform_0(%arg0: i32) -> (i32, i32) {
    %c0_i32 = arith.constant 0 : i32
    %c0_i32_0 = arith.constant 0 : i32
    return %arg0, %c0_i32 : i32, i32
  }
  func.func @transform_1(%arg0: i32) -> (i32, i32) {
    %c0_i32 = arith.constant 0 : i32
    %c0_i32_0 = arith.constant 0 : i32
    %c0_i32_1 = arith.constant 0 : i32
    return %c0_i32, %c0_i32_0 : i32, i32
  }
  func.func @transform_2(%arg0: i32) -> (i32, i32) {
    %c0_i32 = arith.constant 0 : i32
    %c0_i32_0 = arith.constant 0 : i32
    %c0_i32_1 = arith.constant 0 : i32
    return %c0_i32, %c0_i32_0 : i32, i32
  }
  func.func @transform_3(%arg0: i32) -> (i32, i32) {
    %c0_i32 = arith.constant 0 : i32
    %c0_i32_0 = arith.constant 0 : i32
    %c0_i32_1 = arith.constant 0 : i32
    return %c0_i32, %c0_i32_0 : i32, i32
  }
  func.func @transform_4(%arg0: i32) -> (i32, i32) {
    %c0_i32 = arith.constant 0 : i32
    %c0_i32_0 = arith.constant 0 : i32
    %c0_i32_1 = arith.constant 0 : i32
    return %c0_i32, %c0_i32_0 : i32, i32
  }
  func.func @transform_5(%arg0: i32) -> (i32, i32) {
    %c0_i32 = arith.constant 0 : i32
    %c0_i32_0 = arith.constant 0 : i32
    %c0_i32_1 = arith.constant 0 : i32
    return %c0_i32, %c0_i32_0 : i32, i32
  }
  func.func @transform_6(%arg0: i32) -> (i32, i32) {
    %c0_i32 = arith.constant 0 : i32
    %c0_i32_0 = arith.constant 0 : i32
    %c0_i32_1 = arith.constant 0 : i32
    return %c0_i32, %c0_i32_0 : i32, i32
  }
  func.func @transform_7(%arg0: i32) -> (i32, i32) {
    %c0_i32 = arith.constant 0 : i32
    %c0_i32_0 = arith.constant 0 : i32
    return %arg0, %c0_i32 : i32, i32
  }
}

module attributes {stable_mosaic.version = 11 : i64} {
  func.func @_attn_kernel(%arg0: i32, %arg1: memref<2x64x128xf32, #tpu.memory_space<vmem>>, %arg2: memref<1x128xf32, #tpu.memory_space<vmem>>, %arg3: memref<1x128xf32, #tpu.memory_space<vmem>>, %arg4: memref<128x128xf32, #tpu.memory_space<vmem>>, %arg5: memref<128x384xf32, #tpu.memory_space<vmem>>, %arg6: memref<1x384xf32, #tpu.memory_space<vmem>>, %arg7: memref<128x128xf32, #tpu.memory_space<vmem>>, %arg8: memref<1x128xf32, #tpu.memory_space<vmem>>, %arg9: memref<2x64x128xf32, #tpu.memory_space<vmem>>) attributes {dimension_semantics = [#tpu.dimension_semantics<parallel>], iteration_bounds = array<i64: 1>, scalar_prefetch = 0 : i64, scratch_operands = 0 : i64, tpu.core_type = #tpu.core_type<tc>, window_params = [{transform_indices = @transform_0, window_bounds = array<i64: 2, 64, 128>}, {pipeline_mode = #tpu.pipeline_mode<synchronous>, transform_indices = @transform_1, window_bounds = array<i64: 1, 128>}, {pipeline_mode = #tpu.pipeline_mode<synchronous>, transform_indices = @transform_2, window_bounds = array<i64: 1, 128>}, {pipeline_mode = #tpu.pipeline_mode<synchronous>, transform_indices = @transform_3, window_bounds = array<i64: 128, 128>}, {pipeline_mode = #tpu.pipeline_mode<synchronous>, transform_indices = @transform_4, window_bounds = array<i64: 128, 384>}, {pipeline_mode = #tpu.pipeline_mode<synchronous>, transform_indices = @transform_5, window_bounds = array<i64: 1, 384>}, {pipeline_mode = #tpu.pipeline_mode<synchronous>, transform_indices = @transform_6, window_bounds = array<i64: 128, 128>}, {pipeline_mode = #tpu.pipeline_mode<synchronous>, transform_indices = @transform_7, window_bounds = array<i64: 1, 128>}, {transform_indices = @transform_8, window_bounds = array<i64: 2, 64, 128>}]} {
    %c0 = arith.constant 0 : index
    %c0_0 = arith.constant 0 : index
    %c0_1 = arith.constant 0 : index
    %0 = vector.load %arg1[%c0, %c0_0, %c0_1] : memref<2x64x128xf32, #tpu.memory_space<vmem>>, vector<2x64x128xf32>
    %1 = vector.shape_cast %0 : vector<2x64x128xf32> to vector<128x128xf32>
    %c0_2 = arith.constant 0 : index
    %c0_3 = arith.constant 0 : index
    %2 = vector.load %arg2[%c0_2, %c0_3] : memref<1x128xf32, #tpu.memory_space<vmem>>, vector<1x128xf32>
    %c0_4 = arith.constant 0 : index
    %c0_5 = arith.constant 0 : index
    %3 = vector.load %arg3[%c0_4, %c0_5] : memref<1x128xf32, #tpu.memory_space<vmem>>, vector<1x128xf32>
    %cst = arith.constant dense<0.000000e+00> : vector<128xf32>
    %4 = vector.multi_reduction <add>, %1, %cst [1] : vector<128x128xf32> to vector<128xf32>
    %5 = vector.shape_cast %4 : vector<128xf32> to vector<128x1xf32>
    %cst_6 = arith.constant 1.280000e+02 : f32
    %6 = vector.broadcast %cst_6 : f32 to vector<128x1xf32>
    %7 = arith.divf %5, %6 : vector<128x1xf32>
    %8 = vector.broadcast %7 : vector<128x1xf32> to vector<128x128xf32>
    %9 = arith.subf %1, %8 : vector<128x128xf32>
    %10 = arith.mulf %9, %9 : vector<128x128xf32>
    %cst_7 = arith.constant dense<0.000000e+00> : vector<128xf32>
    %11 = vector.multi_reduction <add>, %10, %cst_7 [1] : vector<128x128xf32> to vector<128xf32>
    %12 = vector.shape_cast %11 : vector<128xf32> to vector<128x1xf32>
    %cst_8 = arith.constant 1.280000e+02 : f32
    %13 = vector.broadcast %cst_8 : f32 to vector<128x1xf32>
    %14 = arith.divf %12, %13 : vector<128x1xf32>
    %15 = vector.broadcast %7 : vector<128x1xf32> to vector<128x128xf32>
    %16 = arith.subf %1, %15 : vector<128x128xf32>
    %cst_9 = arith.constant 9.99999974E-6 : f32
    %17 = vector.broadcast %cst_9 : f32 to vector<128x1xf32>
    %18 = arith.addf %14, %17 : vector<128x1xf32>
    %19 = math.rsqrt %18 : vector<128x1xf32>
    %20 = vector.broadcast %19 : vector<128x1xf32> to vector<128x128xf32>
    %21 = arith.mulf %16, %20 : vector<128x128xf32>
    %22 = vector.broadcast %2 : vector<1x128xf32> to vector<128x128xf32>
    %23 = arith.mulf %21, %22 : vector<128x128xf32>
    %24 = vector.broadcast %3 : vector<1x128xf32> to vector<128x128xf32>
    %25 = arith.addf %23, %24 : vector<128x128xf32>
    %c0_10 = arith.constant 0 : index
    %c0_11 = arith.constant 0 : index
    %26 = vector.load %arg5[%c0_10, %c0_11] : memref<128x384xf32, #tpu.memory_space<vmem>>, vector<128x384xf32>
    %cst_12 = arith.constant dense<0.000000e+00> : vector<128x384xf32>
    %27 = tpu.matmul %25, %26, %cst_12 {dimension_numbers = #tpu.dot_dimension_numbers<[1], [0], [0], [1], [0, 0, 1, 1], [], []>} : vector<128x128xf32>, vector<128x384xf32>, vector<128x384xf32> -> vector<128x384xf32>
    %c0_13 = arith.constant 0 : index
    %c0_14 = arith.constant 0 : index
    %28 = vector.load %arg6[%c0_13, %c0_14] : memref<1x384xf32, #tpu.memory_space<vmem>>, vector<1x384xf32>
    %29 = vector.broadcast %28 : vector<1x384xf32> to vector<128x384xf32>
    %30 = arith.addf %27, %29 : vector<128x384xf32>
    %c0_15 = arith.constant 0 : index
    %c0_16 = arith.constant 0 : index
    %31 = vector.load %arg4[%c0_15, %c0_16] : memref<128x128xf32, #tpu.memory_space<vmem>>, vector<128x128xf32>
    %c0_17 = arith.constant 0 : index
    %c0_18 = arith.constant 0 : index
    %32 = vector.load %arg7[%c0_17, %c0_18] : memref<128x128xf32, #tpu.memory_space<vmem>>, vector<128x128xf32>
    %cst_19 = arith.constant 0.000000e+00 : f32
    %33 = vector.broadcast %cst_19 : f32 to vector<128x128xf32>
    %34 = vector.extract_strided_slice %30 {offsets = [0, 0], sizes = [128, 16], strides = [1, 1]} : vector<128x384xf32> to vector<128x16xf32>
    %cst_20 = arith.constant 2.500000e-01 : f32
    %35 = vector.broadcast %cst_20 : f32 to vector<128x16xf32>
    %36 = arith.mulf %34, %35 : vector<128x16xf32>
    %37 = vector.extract_strided_slice %30 {offsets = [0, 128], sizes = [128, 16], strides = [1, 1]} : vector<128x384xf32> to vector<128x16xf32>
    %38 = vector.extract_strided_slice %30 {offsets = [0, 256], sizes = [128, 16], strides = [1, 1]} : vector<128x384xf32> to vector<128x16xf32>
    %cst_21 = arith.constant dense<0.000000e+00> : vector<128x128xf32>
    %39 = tpu.matmul %36, %37, %cst_21 {dimension_numbers = #tpu.dot_dimension_numbers<[1], [1], [0], [0], [0, 0, 1, 0], [], []>} : vector<128x16xf32>, vector<128x16xf32>, vector<128x128xf32> -> vector<128x128xf32>
    %40 = arith.addf %39, %31 : vector<128x128xf32>
    %cst_22 = arith.constant dense<0xFF800000> : vector<128xf32>
    %41 = vector.multi_reduction <maximumf>, %40, %cst_22 [1] : vector<128x128xf32> to vector<128xf32>
    %42 = vector.shape_cast %41 : vector<128xf32> to vector<128x1xf32>
    %43 = vector.broadcast %42 : vector<128x1xf32> to vector<128x128xf32>
    %44 = arith.subf %40, %43 : vector<128x128xf32>
    %45 = math.exp %44 : vector<128x128xf32>
    %cst_23 = arith.constant dense<0.000000e+00> : vector<128xf32>
    %46 = vector.multi_reduction <add>, %45, %cst_23 [1] : vector<128x128xf32> to vector<128xf32>
    %47 = vector.shape_cast %46 : vector<128xf32> to vector<128x1xf32>
    %cst_24 = arith.constant 1.000000e+00 : f32
    %48 = vector.broadcast %cst_24 : f32 to vector<128x1xf32>
    %49 = arith.divf %48, %47 : vector<128x1xf32>
    %50 = vector.broadcast %49 : vector<128x1xf32> to vector<128x128xf32>
    %51 = arith.mulf %45, %50 : vector<128x128xf32>
    %cst_25 = arith.constant dense<0.000000e+00> : vector<128x16xf32>
    %52 = tpu.matmul %51, %38, %cst_25 {dimension_numbers = #tpu.dot_dimension_numbers<[1], [0], [0], [1], [0, 0, 1, 1], [], []>} : vector<128x128xf32>, vector<128x16xf32>, vector<128x16xf32> -> vector<128x16xf32>
    %53 = vector.extract_strided_slice %32 {offsets = [0, 0], sizes = [16, 128], strides = [1, 1]} : vector<128x128xf32> to vector<16x128xf32>
    %cst_26 = arith.constant dense<0.000000e+00> : vector<128x128xf32>
    %54 = tpu.matmul %52, %53, %cst_26 {dimension_numbers = #tpu.dot_dimension_numbers<[1], [0], [0], [1], [0, 0, 1, 1], [], []>} : vector<128x16xf32>, vector<16x128xf32>, vector<128x128xf32> -> vector<128x128xf32>
    %55 = arith.addf %33, %54 : vector<128x128xf32>
    %56 = vector.extract_strided_slice %30 {offsets = [0, 16], sizes = [128, 16], strides = [1, 1]} : vector<128x384xf32> to vector<128x16xf32>
    %cst_27 = arith.constant 2.500000e-01 : f32
    %57 = vector.broadcast %cst_27 : f32 to vector<128x16xf32>
    %58 = arith.mulf %56, %57 : vector<128x16xf32>
    %59 = vector.extract_strided_slice %30 {offsets = [0, 144], sizes = [128, 16], strides = [1, 1]} : vector<128x384xf32> to vector<128x16xf32>
    %60 = vector.extract_strided_slice %30 {offsets = [0, 272], sizes = [128, 16], strides = [1, 1]} : vector<128x384xf32> to vector<128x16xf32>
    %cst_28 = arith.constant dense<0.000000e+00> : vector<128x128xf32>
    %61 = tpu.matmul %58, %59, %cst_28 {dimension_numbers = #tpu.dot_dimension_numbers<[1], [1], [0], [0], [0, 0, 1, 0], [], []>} : vector<128x16xf32>, vector<128x16xf32>, vector<128x128xf32> -> vector<128x128xf32>
    %62 = arith.addf %61, %31 : vector<128x128xf32>
    %cst_29 = arith.constant dense<0xFF800000> : vector<128xf32>
    %63 = vector.multi_reduction <maximumf>, %62, %cst_29 [1] : vector<128x128xf32> to vector<128xf32>
    %64 = vector.shape_cast %63 : vector<128xf32> to vector<128x1xf32>
    %65 = vector.broadcast %64 : vector<128x1xf32> to vector<128x128xf32>
    %66 = arith.subf %62, %65 : vector<128x128xf32>
    %67 = math.exp %66 : vector<128x128xf32>
    %cst_30 = arith.constant dense<0.000000e+00> : vector<128xf32>
    %68 = vector.multi_reduction <add>, %67, %cst_30 [1] : vector<128x128xf32> to vector<128xf32>
    %69 = vector.shape_cast %68 : vector<128xf32> to vector<128x1xf32>
    %cst_31 = arith.constant 1.000000e+00 : f32
    %70 = vector.broadcast %cst_31 : f32 to vector<128x1xf32>
    %71 = arith.divf %70, %69 : vector<128x1xf32>
    %72 = vector.broadcast %71 : vector<128x1xf32> to vector<128x128xf32>
    %73 = arith.mulf %67, %72 : vector<128x128xf32>
    %cst_32 = arith.constant dense<0.000000e+00> : vector<128x16xf32>
    %74 = tpu.matmul %73, %60, %cst_32 {dimension_numbers = #tpu.dot_dimension_numbers<[1], [0], [0], [1], [0, 0, 1, 1], [], []>} : vector<128x128xf32>, vector<128x16xf32>, vector<128x16xf32> -> vector<128x16xf32>
    %75 = vector.extract_strided_slice %32 {offsets = [16, 0], sizes = [16, 128], strides = [1, 1]} : vector<128x128xf32> to vector<16x128xf32>
    %cst_33 = arith.constant dense<0.000000e+00> : vector<128x128xf32>
    %76 = tpu.matmul %74, %75, %cst_33 {dimension_numbers = #tpu.dot_dimension_numbers<[1], [0], [0], [1], [0, 0, 1, 1], [], []>} : vector<128x16xf32>, vector<16x128xf32>, vector<128x128xf32> -> vector<128x128xf32>
    %77 = arith.addf %55, %76 : vector<128x128xf32>
    %78 = vector.extract_strided_slice %30 {offsets = [0, 32], sizes = [128, 16], strides = [1, 1]} : vector<128x384xf32> to vector<128x16xf32>
    %cst_34 = arith.constant 2.500000e-01 : f32
    %79 = vector.broadcast %cst_34 : f32 to vector<128x16xf32>
    %80 = arith.mulf %78, %79 : vector<128x16xf32>
    %81 = vector.extract_strided_slice %30 {offsets = [0, 160], sizes = [128, 16], strides = [1, 1]} : vector<128x384xf32> to vector<128x16xf32>
    %82 = vector.extract_strided_slice %30 {offsets = [0, 288], sizes = [128, 16], strides = [1, 1]} : vector<128x384xf32> to vector<128x16xf32>
    %cst_35 = arith.constant dense<0.000000e+00> : vector<128x128xf32>
    %83 = tpu.matmul %80, %81, %cst_35 {dimension_numbers = #tpu.dot_dimension_numbers<[1], [1], [0], [0], [0, 0, 1, 0], [], []>} : vector<128x16xf32>, vector<128x16xf32>, vector<128x128xf32> -> vector<128x128xf32>
    %84 = arith.addf %83, %31 : vector<128x128xf32>
    %cst_36 = arith.constant dense<0xFF800000> : vector<128xf32>
    %85 = vector.multi_reduction <maximumf>, %84, %cst_36 [1] : vector<128x128xf32> to vector<128xf32>
    %86 = vector.shape_cast %85 : vector<128xf32> to vector<128x1xf32>
    %87 = vector.broadcast %86 : vector<128x1xf32> to vector<128x128xf32>
    %88 = arith.subf %84, %87 : vector<128x128xf32>
    %89 = math.exp %88 : vector<128x128xf32>
    %cst_37 = arith.constant dense<0.000000e+00> : vector<128xf32>
    %90 = vector.multi_reduction <add>, %89, %cst_37 [1] : vector<128x128xf32> to vector<128xf32>
    %91 = vector.shape_cast %90 : vector<128xf32> to vector<128x1xf32>
    %cst_38 = arith.constant 1.000000e+00 : f32
    %92 = vector.broadcast %cst_38 : f32 to vector<128x1xf32>
    %93 = arith.divf %92, %91 : vector<128x1xf32>
    %94 = vector.broadcast %93 : vector<128x1xf32> to vector<128x128xf32>
    %95 = arith.mulf %89, %94 : vector<128x128xf32>
    %cst_39 = arith.constant dense<0.000000e+00> : vector<128x16xf32>
    %96 = tpu.matmul %95, %82, %cst_39 {dimension_numbers = #tpu.dot_dimension_numbers<[1], [0], [0], [1], [0, 0, 1, 1], [], []>} : vector<128x128xf32>, vector<128x16xf32>, vector<128x16xf32> -> vector<128x16xf32>
    %97 = vector.extract_strided_slice %32 {offsets = [32, 0], sizes = [16, 128], strides = [1, 1]} : vector<128x128xf32> to vector<16x128xf32>
    %cst_40 = arith.constant dense<0.000000e+00> : vector<128x128xf32>
    %98 = tpu.matmul %96, %97, %cst_40 {dimension_numbers = #tpu.dot_dimension_numbers<[1], [0], [0], [1], [0, 0, 1, 1], [], []>} : vector<128x16xf32>, vector<16x128xf32>, vector<128x128xf32> -> vector<128x128xf32>
    %99 = arith.addf %77, %98 : vector<128x128xf32>
    %100 = vector.extract_strided_slice %30 {offsets = [0, 48], sizes = [128, 16], strides = [1, 1]} : vector<128x384xf32> to vector<128x16xf32>
    %cst_41 = arith.constant 2.500000e-01 : f32
    %101 = vector.broadcast %cst_41 : f32 to vector<128x16xf32>
    %102 = arith.mulf %100, %101 : vector<128x16xf32>
    %103 = vector.extract_strided_slice %30 {offsets = [0, 176], sizes = [128, 16], strides = [1, 1]} : vector<128x384xf32> to vector<128x16xf32>
    %104 = vector.extract_strided_slice %30 {offsets = [0, 304], sizes = [128, 16], strides = [1, 1]} : vector<128x384xf32> to vector<128x16xf32>
    %cst_42 = arith.constant dense<0.000000e+00> : vector<128x128xf32>
    %105 = tpu.matmul %102, %103, %cst_42 {dimension_numbers = #tpu.dot_dimension_numbers<[1], [1], [0], [0], [0, 0, 1, 0], [], []>} : vector<128x16xf32>, vector<128x16xf32>, vector<128x128xf32> -> vector<128x128xf32>
    %106 = arith.addf %105, %31 : vector<128x128xf32>
    %cst_43 = arith.constant dense<0xFF800000> : vector<128xf32>
    %107 = vector.multi_reduction <maximumf>, %106, %cst_43 [1] : vector<128x128xf32> to vector<128xf32>
    %108 = vector.shape_cast %107 : vector<128xf32> to vector<128x1xf32>
    %109 = vector.broadcast %108 : vector<128x1xf32> to vector<128x128xf32>
    %110 = arith.subf %106, %109 : vector<128x128xf32>
    %111 = math.exp %110 : vector<128x128xf32>
    %cst_44 = arith.constant dense<0.000000e+00> : vector<128xf32>
    %112 = vector.multi_reduction <add>, %111, %cst_44 [1] : vector<128x128xf32> to vector<128xf32>
    %113 = vector.shape_cast %112 : vector<128xf32> to vector<128x1xf32>
    %cst_45 = arith.constant 1.000000e+00 : f32
    %114 = vector.broadcast %cst_45 : f32 to vector<128x1xf32>
    %115 = arith.divf %114, %113 : vector<128x1xf32>
    %116 = vector.broadcast %115 : vector<128x1xf32> to vector<128x128xf32>
    %117 = arith.mulf %111, %116 : vector<128x128xf32>
    %cst_46 = arith.constant dense<0.000000e+00> : vector<128x16xf32>
    %118 = tpu.matmul %117, %104, %cst_46 {dimension_numbers = #tpu.dot_dimension_numbers<[1], [0], [0], [1], [0, 0, 1, 1], [], []>} : vector<128x128xf32>, vector<128x16xf32>, vector<128x16xf32> -> vector<128x16xf32>
    %119 = vector.extract_strided_slice %32 {offsets = [48, 0], sizes = [16, 128], strides = [1, 1]} : vector<128x128xf32> to vector<16x128xf32>
    %cst_47 = arith.constant dense<0.000000e+00> : vector<128x128xf32>
    %120 = tpu.matmul %118, %119, %cst_47 {dimension_numbers = #tpu.dot_dimension_numbers<[1], [0], [0], [1], [0, 0, 1, 1], [], []>} : vector<128x16xf32>, vector<16x128xf32>, vector<128x128xf32> -> vector<128x128xf32>
    %121 = arith.addf %99, %120 : vector<128x128xf32>
    %122 = vector.extract_strided_slice %30 {offsets = [0, 64], sizes = [128, 16], strides = [1, 1]} : vector<128x384xf32> to vector<128x16xf32>
    %cst_48 = arith.constant 2.500000e-01 : f32
    %123 = vector.broadcast %cst_48 : f32 to vector<128x16xf32>
    %124 = arith.mulf %122, %123 : vector<128x16xf32>
    %125 = vector.extract_strided_slice %30 {offsets = [0, 192], sizes = [128, 16], strides = [1, 1]} : vector<128x384xf32> to vector<128x16xf32>
    %126 = vector.extract_strided_slice %30 {offsets = [0, 320], sizes = [128, 16], strides = [1, 1]} : vector<128x384xf32> to vector<128x16xf32>
    %cst_49 = arith.constant dense<0.000000e+00> : vector<128x128xf32>
    %127 = tpu.matmul %124, %125, %cst_49 {dimension_numbers = #tpu.dot_dimension_numbers<[1], [1], [0], [0], [0, 0, 1, 0], [], []>} : vector<128x16xf32>, vector<128x16xf32>, vector<128x128xf32> -> vector<128x128xf32>
    %128 = arith.addf %127, %31 : vector<128x128xf32>
    %cst_50 = arith.constant dense<0xFF800000> : vector<128xf32>
    %129 = vector.multi_reduction <maximumf>, %128, %cst_50 [1] : vector<128x128xf32> to vector<128xf32>
    %130 = vector.shape_cast %129 : vector<128xf32> to vector<128x1xf32>
    %131 = vector.broadcast %130 : vector<128x1xf32> to vector<128x128xf32>
    %132 = arith.subf %128, %131 : vector<128x128xf32>
    %133 = math.exp %132 : vector<128x128xf32>
    %cst_51 = arith.constant dense<0.000000e+00> : vector<128xf32>
    %134 = vector.multi_reduction <add>, %133, %cst_51 [1] : vector<128x128xf32> to vector<128xf32>
    %135 = vector.shape_cast %134 : vector<128xf32> to vector<128x1xf32>
    %cst_52 = arith.constant 1.000000e+00 : f32
    %136 = vector.broadcast %cst_52 : f32 to vector<128x1xf32>
    %137 = arith.divf %136, %135 : vector<128x1xf32>
    %138 = vector.broadcast %137 : vector<128x1xf32> to vector<128x128xf32>
    %139 = arith.mulf %133, %138 : vector<128x128xf32>
    %cst_53 = arith.constant dense<0.000000e+00> : vector<128x16xf32>
    %140 = tpu.matmul %139, %126, %cst_53 {dimension_numbers = #tpu.dot_dimension_numbers<[1], [0], [0], [1], [0, 0, 1, 1], [], []>} : vector<128x128xf32>, vector<128x16xf32>, vector<128x16xf32> -> vector<128x16xf32>
    %141 = vector.extract_strided_slice %32 {offsets = [64, 0], sizes = [16, 128], strides = [1, 1]} : vector<128x128xf32> to vector<16x128xf32>
    %cst_54 = arith.constant dense<0.000000e+00> : vector<128x128xf32>
    %142 = tpu.matmul %140, %141, %cst_54 {dimension_numbers = #tpu.dot_dimension_numbers<[1], [0], [0], [1], [0, 0, 1, 1], [], []>} : vector<128x16xf32>, vector<16x128xf32>, vector<128x128xf32> -> vector<128x128xf32>
    %143 = arith.addf %121, %142 : vector<128x128xf32>
    %144 = vector.extract_strided_slice %30 {offsets = [0, 80], sizes = [128, 16], strides = [1, 1]} : vector<128x384xf32> to vector<128x16xf32>
    %cst_55 = arith.constant 2.500000e-01 : f32
    %145 = vector.broadcast %cst_55 : f32 to vector<128x16xf32>
    %146 = arith.mulf %144, %145 : vector<128x16xf32>
    %147 = vector.extract_strided_slice %30 {offsets = [0, 208], sizes = [128, 16], strides = [1, 1]} : vector<128x384xf32> to vector<128x16xf32>
    %148 = vector.extract_strided_slice %30 {offsets = [0, 336], sizes = [128, 16], strides = [1, 1]} : vector<128x384xf32> to vector<128x16xf32>
    %cst_56 = arith.constant dense<0.000000e+00> : vector<128x128xf32>
    %149 = tpu.matmul %146, %147, %cst_56 {dimension_numbers = #tpu.dot_dimension_numbers<[1], [1], [0], [0], [0, 0, 1, 0], [], []>} : vector<128x16xf32>, vector<128x16xf32>, vector<128x128xf32> -> vector<128x128xf32>
    %150 = arith.addf %149, %31 : vector<128x128xf32>
    %cst_57 = arith.constant dense<0xFF800000> : vector<128xf32>
    %151 = vector.multi_reduction <maximumf>, %150, %cst_57 [1] : vector<128x128xf32> to vector<128xf32>
    %152 = vector.shape_cast %151 : vector<128xf32> to vector<128x1xf32>
    %153 = vector.broadcast %152 : vector<128x1xf32> to vector<128x128xf32>
    %154 = arith.subf %150, %153 : vector<128x128xf32>
    %155 = math.exp %154 : vector<128x128xf32>
    %cst_58 = arith.constant dense<0.000000e+00> : vector<128xf32>
    %156 = vector.multi_reduction <add>, %155, %cst_58 [1] : vector<128x128xf32> to vector<128xf32>
    %157 = vector.shape_cast %156 : vector<128xf32> to vector<128x1xf32>
    %cst_59 = arith.constant 1.000000e+00 : f32
    %158 = vector.broadcast %cst_59 : f32 to vector<128x1xf32>
    %159 = arith.divf %158, %157 : vector<128x1xf32>
    %160 = vector.broadcast %159 : vector<128x1xf32> to vector<128x128xf32>
    %161 = arith.mulf %155, %160 : vector<128x128xf32>
    %cst_60 = arith.constant dense<0.000000e+00> : vector<128x16xf32>
    %162 = tpu.matmul %161, %148, %cst_60 {dimension_numbers = #tpu.dot_dimension_numbers<[1], [0], [0], [1], [0, 0, 1, 1], [], []>} : vector<128x128xf32>, vector<128x16xf32>, vector<128x16xf32> -> vector<128x16xf32>
    %163 = vector.extract_strided_slice %32 {offsets = [80, 0], sizes = [16, 128], strides = [1, 1]} : vector<128x128xf32> to vector<16x128xf32>
    %cst_61 = arith.constant dense<0.000000e+00> : vector<128x128xf32>
    %164 = tpu.matmul %162, %163, %cst_61 {dimension_numbers = #tpu.dot_dimension_numbers<[1], [0], [0], [1], [0, 0, 1, 1], [], []>} : vector<128x16xf32>, vector<16x128xf32>, vector<128x128xf32> -> vector<128x128xf32>
    %165 = arith.addf %143, %164 : vector<128x128xf32>
    %166 = vector.extract_strided_slice %30 {offsets = [0, 96], sizes = [128, 16], strides = [1, 1]} : vector<128x384xf32> to vector<128x16xf32>
    %cst_62 = arith.constant 2.500000e-01 : f32
    %167 = vector.broadcast %cst_62 : f32 to vector<128x16xf32>
    %168 = arith.mulf %166, %167 : vector<128x16xf32>
    %169 = vector.extract_strided_slice %30 {offsets = [0, 224], sizes = [128, 16], strides = [1, 1]} : vector<128x384xf32> to vector<128x16xf32>
    %170 = vector.extract_strided_slice %30 {offsets = [0, 352], sizes = [128, 16], strides = [1, 1]} : vector<128x384xf32> to vector<128x16xf32>
    %cst_63 = arith.constant dense<0.000000e+00> : vector<128x128xf32>
    %171 = tpu.matmul %168, %169, %cst_63 {dimension_numbers = #tpu.dot_dimension_numbers<[1], [1], [0], [0], [0, 0, 1, 0], [], []>} : vector<128x16xf32>, vector<128x16xf32>, vector<128x128xf32> -> vector<128x128xf32>
    %172 = arith.addf %171, %31 : vector<128x128xf32>
    %cst_64 = arith.constant dense<0xFF800000> : vector<128xf32>
    %173 = vector.multi_reduction <maximumf>, %172, %cst_64 [1] : vector<128x128xf32> to vector<128xf32>
    %174 = vector.shape_cast %173 : vector<128xf32> to vector<128x1xf32>
    %175 = vector.broadcast %174 : vector<128x1xf32> to vector<128x128xf32>
    %176 = arith.subf %172, %175 : vector<128x128xf32>
    %177 = math.exp %176 : vector<128x128xf32>
    %cst_65 = arith.constant dense<0.000000e+00> : vector<128xf32>
    %178 = vector.multi_reduction <add>, %177, %cst_65 [1] : vector<128x128xf32> to vector<128xf32>
    %179 = vector.shape_cast %178 : vector<128xf32> to vector<128x1xf32>
    %cst_66 = arith.constant 1.000000e+00 : f32
    %180 = vector.broadcast %cst_66 : f32 to vector<128x1xf32>
    %181 = arith.divf %180, %179 : vector<128x1xf32>
    %182 = vector.broadcast %181 : vector<128x1xf32> to vector<128x128xf32>
    %183 = arith.mulf %177, %182 : vector<128x128xf32>
    %cst_67 = arith.constant dense<0.000000e+00> : vector<128x16xf32>
    %184 = tpu.matmul %183, %170, %cst_67 {dimension_numbers = #tpu.dot_dimension_numbers<[1], [0], [0], [1], [0, 0, 1, 1], [], []>} : vector<128x128xf32>, vector<128x16xf32>, vector<128x16xf32> -> vector<128x16xf32>
    %185 = vector.extract_strided_slice %32 {offsets = [96, 0], sizes = [16, 128], strides = [1, 1]} : vector<128x128xf32> to vector<16x128xf32>
    %cst_68 = arith.constant dense<0.000000e+00> : vector<128x128xf32>
    %186 = tpu.matmul %184, %185, %cst_68 {dimension_numbers = #tpu.dot_dimension_numbers<[1], [0], [0], [1], [0, 0, 1, 1], [], []>} : vector<128x16xf32>, vector<16x128xf32>, vector<128x128xf32> -> vector<128x128xf32>
    %187 = arith.addf %165, %186 : vector<128x128xf32>
    %188 = vector.extract_strided_slice %30 {offsets = [0, 112], sizes = [128, 16], strides = [1, 1]} : vector<128x384xf32> to vector<128x16xf32>
    %cst_69 = arith.constant 2.500000e-01 : f32
    %189 = vector.broadcast %cst_69 : f32 to vector<128x16xf32>
    %190 = arith.mulf %188, %189 : vector<128x16xf32>
    %191 = vector.extract_strided_slice %30 {offsets = [0, 240], sizes = [128, 16], strides = [1, 1]} : vector<128x384xf32> to vector<128x16xf32>
    %192 = vector.extract_strided_slice %30 {offsets = [0, 368], sizes = [128, 16], strides = [1, 1]} : vector<128x384xf32> to vector<128x16xf32>
    %cst_70 = arith.constant dense<0.000000e+00> : vector<128x128xf32>
    %193 = tpu.matmul %190, %191, %cst_70 {dimension_numbers = #tpu.dot_dimension_numbers<[1], [1], [0], [0], [0, 0, 1, 0], [], []>} : vector<128x16xf32>, vector<128x16xf32>, vector<128x128xf32> -> vector<128x128xf32>
    %194 = arith.addf %193, %31 : vector<128x128xf32>
    %cst_71 = arith.constant dense<0xFF800000> : vector<128xf32>
    %195 = vector.multi_reduction <maximumf>, %194, %cst_71 [1] : vector<128x128xf32> to vector<128xf32>
    %196 = vector.shape_cast %195 : vector<128xf32> to vector<128x1xf32>
    %197 = vector.broadcast %196 : vector<128x1xf32> to vector<128x128xf32>
    %198 = arith.subf %194, %197 : vector<128x128xf32>
    %199 = math.exp %198 : vector<128x128xf32>
    %cst_72 = arith.constant dense<0.000000e+00> : vector<128xf32>
    %200 = vector.multi_reduction <add>, %199, %cst_72 [1] : vector<128x128xf32> to vector<128xf32>
    %201 = vector.shape_cast %200 : vector<128xf32> to vector<128x1xf32>
    %cst_73 = arith.constant 1.000000e+00 : f32
    %202 = vector.broadcast %cst_73 : f32 to vector<128x1xf32>
    %203 = arith.divf %202, %201 : vector<128x1xf32>
    %204 = vector.broadcast %203 : vector<128x1xf32> to vector<128x128xf32>
    %205 = arith.mulf %199, %204 : vector<128x128xf32>
    %cst_74 = arith.constant dense<0.000000e+00> : vector<128x16xf32>
    %206 = tpu.matmul %205, %192, %cst_74 {dimension_numbers = #tpu.dot_dimension_numbers<[1], [0], [0], [1], [0, 0, 1, 1], [], []>} : vector<128x128xf32>, vector<128x16xf32>, vector<128x16xf32> -> vector<128x16xf32>
    %207 = vector.extract_strided_slice %32 {offsets = [112, 0], sizes = [16, 128], strides = [1, 1]} : vector<128x128xf32> to vector<16x128xf32>
    %cst_75 = arith.constant dense<0.000000e+00> : vector<128x128xf32>
    %208 = tpu.matmul %206, %207, %cst_75 {dimension_numbers = #tpu.dot_dimension_numbers<[1], [0], [0], [1], [0, 0, 1, 1], [], []>} : vector<128x16xf32>, vector<16x128xf32>, vector<128x128xf32> -> vector<128x128xf32>
    %209 = arith.addf %187, %208 : vector<128x128xf32>
    %210 = arith.addf %1, %209 : vector<128x128xf32>
    %c0_76 = arith.constant 0 : index
    %c0_77 = arith.constant 0 : index
    %211 = vector.load %arg8[%c0_76, %c0_77] : memref<1x128xf32, #tpu.memory_space<vmem>>, vector<1x128xf32>
    %212 = vector.broadcast %211 : vector<1x128xf32> to vector<128x128xf32>
    %213 = arith.addf %210, %212 : vector<128x128xf32>
    %214 = vector.shape_cast %213 : vector<128x128xf32> to vector<2x64x128xf32>
    %c0_78 = arith.constant 0 : index
    %c0_79 = arith.constant 0 : index
    %c0_80 = arith.constant 0 : index
    %215 = vector.load %arg9[%c0_78, %c0_79, %c0_80] : memref<2x64x128xf32, #tpu.memory_space<vmem>>, vector<2x64x128xf32>
    tpu.vector_store %arg9[%c0_78, %c0_79, %c0_80], %214 {strides = array<i32>} : memref<2x64x128xf32, #tpu.memory_space<vmem>>, vector<2x64x128xf32>,
    return
  }
  func.func @transform_0(%arg0: i32) -> (i32, i32, i32) {
    %c0_i32 = arith.constant 0 : i32
    %c0_i32_0 = arith.constant 0 : i32
    %c0_i32_1 = arith.constant 0 : i32
    return %arg0, %c0_i32, %c0_i32_0 : i32, i32, i32
  }
  func.func @transform_1(%arg0: i32) -> (i32, i32) {
    %c0_i32 = arith.constant 0 : i32
    %c0_i32_0 = arith.constant 0 : i32
    %c0_i32_1 = arith.constant 0 : i32
    return %c0_i32, %c0_i32_0 : i32, i32
  }
  func.func @transform_2(%arg0: i32) -> (i32, i32) {
    %c0_i32 = arith.constant 0 : i32
    %c0_i32_0 = arith.constant 0 : i32
    %c0_i32_1 = arith.constant 0 : i32
    return %c0_i32, %c0_i32_0 : i32, i32
  }
  func.func @transform_3(%arg0: i32) -> (i32, i32) {
    %c0_i32 = arith.constant 0 : i32
    %c0_i32_0 = arith.constant 0 : i32
    %c0_i32_1 = arith.constant 0 : i32
    return %c0_i32, %c0_i32_0 : i32, i32
  }
  func.func @transform_4(%arg0: i32) -> (i32, i32) {
    %c0_i32 = arith.constant 0 : i32
    %c0_i32_0 = arith.constant 0 : i32
    %c0_i32_1 = arith.constant 0 : i32
    return %c0_i32, %c0_i32_0 : i32, i32
  }
  func.func @transform_5(%arg0: i32) -> (i32, i32) {
    %c0_i32 = arith.constant 0 : i32
    %c0_i32_0 = arith.constant 0 : i32
    %c0_i32_1 = arith.constant 0 : i32
    return %c0_i32, %c0_i32_0 : i32, i32
  }
  func.func @transform_6(%arg0: i32) -> (i32, i32) {
    %c0_i32 = arith.constant 0 : i32
    %c0_i32_0 = arith.constant 0 : i32
    %c0_i32_1 = arith.constant 0 : i32
    return %c0_i32, %c0_i32_0 : i32, i32
  }
  func.func @transform_7(%arg0: i32) -> (i32, i32) {
    %c0_i32 = arith.constant 0 : i32
    %c0_i32_0 = arith.constant 0 : i32
    %c0_i32_1 = arith.constant 0 : i32
    return %c0_i32, %c0_i32_0 : i32, i32
  }
  func.func @transform_8(%arg0: i32) -> (i32, i32, i32) {
    %c0_i32 = arith.constant 0 : i32
    %c0_i32_0 = arith.constant 0 : i32
    %c0_i32_1 = arith.constant 0 : i32
    return %arg0, %c0_i32, %c0_i32_0 : i32, i32, i32
  }
}

</mosaic_0001>

<llo_original>
// kernel: mixed_transformer_cell.3
$region0: #{mixed_transformer_cell.3}
  #allocation0 [shape = 'u32[]', space=smem, size = 0x4, offset = 0x4, fixed_abs, tag = 'smem constant byte address 0x4 - core index']
  #allocation1 [shape = 'u32[144,128]{1,0:T(1,128)}', space=vmem, size = 0x12000, scoped, tag = 'internal scratch']
  %s0 = inlined_call_operand.vmem [shape: f32[128,128], index: 0, kind: input, shape index: {}]
  %s1 = inlined_call_operand.vmem [shape: f32[1,128], index: 1, kind: input, shape index: {}]
  %s2 = inlined_call_operand.vmem [shape: f32[1,128], index: 2, kind: input, shape index: {}]
  %s3 = inlined_call_operand.vmem [shape: f32[128,256], index: 3, kind: input, shape index: {}]
  %s4 = inlined_call_operand.vmem [shape: f32[1,256], index: 4, kind: input, shape index: {}]
  %s5 = inlined_call_operand.vmem [shape: f32[256,128], index: 5, kind: input, shape index: {}]
  %s6 = inlined_call_operand.vmem [shape: f32[1,128], index: 6, kind: input, shape index: {}]
  %s7 = inlined_call_operand.hbm [shape: f32[128,128], index: 7, kind: output, shape index: {}]
  %s8 = sld [smem:[#allocation0]]
  $region38: #{mixed_transformer_cell.3} parent=0
    _
  %s10 = ssub.s32 1, %s8
  %s11 = scalar_select 0, %s10, %s8
  $region1: #{mixed_transformer_cell.3} parent=0
    #allocation2 [shape = 'u8[65536]{0}', space=vmem, size = 0x10000, scoped, tag = 'output window, operand 0, single buffered']
    #allocation3 [shape = 's32[1]{0}', space=sflag, size = 0x4, scoped, tag = 'scoped memory for mixed_transformer_cell.3']
    %12 = vsyncpa [#allocation3], 0
    // Predicated region
    $region2: #{mixed_transformer_cell.3} parent=1 // pred_check
      _
    $region3: #{mixed_transformer_cell.3} parent=1 // pred_check_branch
      %14 = sbr.rel (0) target = $region5
    $region4: #{mixed_transformer_cell.3} parent=1 // pred_region
      _
    $region5: #{mixed_transformer_cell.3} parent=1 // pred_fallthru
      _
    // Predicated region
    $region6: #{mixed_transformer_cell.3} parent=1 // pred_check
      _
    $region7: #{mixed_transformer_cell.3} parent=1 // pred_check_branch
      %16 = sbr.rel (0) target = $region9
    $region8: #{mixed_transformer_cell.3} parent=1 // pred_region
      _
    $region9: #{mixed_transformer_cell.3} parent=1 // pred_fallthru
      _
    // Predicated region
    $region10: #{mixed_transformer_cell.3} parent=1 // pred_check
      _
    $region11: #{mixed_transformer_cell.3} parent=1 // pred_check_branch
      %18 = sbr.rel (0) target = $region13
    $region12: #{mixed_transformer_cell.3} parent=1 // pred_region
      _
    $region13: #{mixed_transformer_cell.3} parent=1 // pred_fallthru
      _
    // Predicated region
    $region14: #{mixed_transformer_cell.3} parent=1 // pred_check
      _
    $region15: #{mixed_transformer_cell.3} parent=1 // pred_check_branch
      %20 = sbr.rel (0) target = $region17
    $region16: #{mixed_transformer_cell.3} parent=1 // pred_region
      _
    $region17: #{mixed_transformer_cell.3} parent=1 // pred_fallthru
      _
    // Predicated region
    $region18: #{mixed_transformer_cell.3} parent=1 // pred_check
      _
    $region19: #{mixed_transformer_cell.3} parent=1 // pred_check_branch
      %22 = sbr.rel (0) target = $region21
    $region20: #{mixed_transformer_cell.3} parent=1 // pred_region
      _
    $region21: #{mixed_transformer_cell.3} parent=1 // pred_fallthru
      _
    // Predicated region
    $region22: #{mixed_transformer_cell.3} parent=1 // pred_check
      _
    $region23: #{mixed_transformer_cell.3} parent=1 // pred_check_branch
      %24 = sbr.rel (0) target = $region25
    $region24: #{mixed_transformer_cell.3} parent=1 // pred_region
      _
    $region25: #{mixed_transformer_cell.3} parent=1 // pred_fallthru
      _
    // Predicated region
    $region26: #{mixed_transformer_cell.3} parent=1 // pred_check
      _
    $region27: #{mixed_transformer_cell.3} parent=1 // pred_check_branch
      %26 = sbr.rel (0) target = $region29
    $region28: #{mixed_transformer_cell.3} parent=1 // pred_region
      _
    $region29: #{mixed_transformer_cell.3} parent=1 // pred_fallthru
      _
    %v27 = vld [vmem:[%s0] sm:$0xff]
    %v28 = vld [vmem:[%s0 + $0x8] sm:$0xff]
    %v29 = vld [vmem:[%s0 + $0x10] sm:$0xff]
    %v30 = vld [vmem:[%s0 + $0x18] sm:$0xff]
    %v31 = vld [vmem:[%s0 + $0x20] sm:$0xff]
    %v32 = vld [vmem:[%s0 + $0x28] sm:$0xff]
    %v33 = vld [vmem:[%s0 + $0x30] sm:$0xff]
    %v34 = vld [vmem:[%s0 + $0x38] sm:$0xff]
    %v35 = vld [vmem:[%s0 + $0x40] sm:$0xff]
    %v36 = vld [vmem:[%s0 + $0x48] sm:$0xff]
    %v37 = vld [vmem:[%s0 + $0x50] sm:$0xff]
    %v38 = vld [vmem:[%s0 + $0x58] sm:$0xff]
    %v39 = vld [vmem:[%s0 + $0x60] sm:$0xff]
    %v40 = vld [vmem:[%s0 + $0x68] sm:$0xff]
    %v41 = vld [vmem:[%s0 + $0x70] sm:$0xff]
    %v42 = vld [vmem:[%s0 + $0x78] sm:$0xff]
    %v43 = vld [vmem:[%s1] sm:$0x1]
    %v44 = vld [vmem:[%s2] sm:$0x1]
    %45 = vadd.xlane.f32.xlu0 %v27
    %v46 = vpop.xlane.xlu0 %45
    %47 = vadd.xlane.f32.xlu0 %v28
    %v48 = vpop.xlane.xlu0 %47
    %49 = vadd.xlane.f32.xlu0 %v29
    %v50 = vpop.xlane.xlu0 %49
    %51 = vadd.xlane.f32.xlu0 %v30
    %v52 = vpop.xlane.xlu0 %51
    %53 = vadd.xlane.f32.xlu0 %v31
    %v54 = vpop.xlane.xlu0 %53
    %55 = vadd.xlane.f32.xlu0 %v32
    %v56 = vpop.xlane.xlu0 %55
    %57 = vadd.xlane.f32.xlu0 %v33
    %v58 = vpop.xlane.xlu0 %57
    %59 = vadd.xlane.f32.xlu0 %v34
    %v60 = vpop.xlane.xlu0 %59
    %61 = vadd.xlane.f32.xlu0 %v35
    %v62 = vpop.xlane.xlu0 %61
    %63 = vadd.xlane.f32.xlu0 %v36
    %v64 = vpop.xlane.xlu0 %63
    %65 = vadd.xlane.f32.xlu0 %v37
    %v66 = vpop.xlane.xlu0 %65
    %67 = vadd.xlane.f32.xlu0 %v38
    %v68 = vpop.xlane.xlu0 %67
    %69 = vadd.xlane.f32.xlu0 %v39
    %v70 = vpop.xlane.xlu0 %69
    %71 = vadd.xlane.f32.xlu0 %v40
    %v72 = vpop.xlane.xlu0 %71
    %73 = vadd.xlane.f32.xlu0 %v41
    %v74 = vpop.xlane.xlu0 %73
    %75 = vadd.xlane.f32.xlu0 %v42
    %v76 = vpop.xlane.xlu0 %75
    %v77 = vrcp.pop 128.0
    %v78 = vmul.f32 %v46, %v77
    %v79 = vmul.f32 %v48, %v77
    %v80 = vmul.f32 %v50, %v77
    %v81 = vmul.f32 %v52, %v77
    %v82 = vmul.f32 %v54, %v77
    %v83 = vmul.f32 %v56, %v77
    %v84 = vmul.f32 %v58, %v77
    %v85 = vmul.f32 %v60, %v77
    %v86 = vmul.f32 %v62, %v77
    %v87 = vmul.f32 %v64, %v77
    %v88 = vmul.f32 %v66, %v77
    %v89 = vmul.f32 %v68, %v77
    %v90 = vmul.f32 %v70, %v77
    %v91 = vmul.f32 %v72, %v77
    %v92 = vmul.f32 %v74, %v77
    %v93 = vmul.f32 %v76, %v77
    %v94 = vsub.f32 %v27, %v78
    %v95 = vsub.f32 %v28, %v79
    %v96 = vsub.f32 %v29, %v80
    %v97 = vsub.f32 %v30, %v81
    %v98 = vsub.f32 %v31, %v82
    %v99 = vsub.f32 %v32, %v83
    %v100 = vsub.f32 %v33, %v84
    %v101 = vsub.f32 %v34, %v85
    %v102 = vsub.f32 %v35, %v86
    %v103 = vsub.f32 %v36, %v87
    %v104 = vsub.f32 %v37, %v88
    %v105 = vsub.f32 %v38, %v89
    %v106 = vsub.f32 %v39, %v90
    %v107 = vsub.f32 %v40, %v91
    %v108 = vsub.f32 %v41, %v92
    %v109 = vsub.f32 %v42, %v93
    %v110 = vmul.f32 %v94, %v94
    %v111 = vmul.f32 %v95, %v95
    %v112 = vmul.f32 %v96, %v96
    %v113 = vmul.f32 %v97, %v97
    %v114 = vmul.f32 %v98, %v98
    %v115 = vmul.f32 %v99, %v99
    %v116 = vmul.f32 %v100, %v100
    %v117 = vmul.f32 %v101, %v101
    %v118 = vmul.f32 %v102, %v102
    %v119 = vmul.f32 %v103, %v103
    %v120 = vmul.f32 %v104, %v104
    %v121 = vmul.f32 %v105, %v105
    %v122 = vmul.f32 %v106, %v106
    %v123 = vmul.f32 %v107, %v107
    %v124 = vmul.f32 %v108, %v108
    %v125 = vmul.f32 %v109, %v109
    %126 = vadd.xlane.f32.xlu0 %v110
    %v127 = vpop.xlane.xlu0 %126
    %128 = vadd.xlane.f32.xlu0 %v111
    %v129 = vpop.xlane.xlu0 %128
    %130 = vadd.xlane.f32.xlu0 %v112
    %v131 = vpop.xlane.xlu0 %130
    %132 = vadd.xlane.f32.xlu0 %v113
    %v133 = vpop.xlane.xlu0 %132
    %134 = vadd.xlane.f32.xlu0 %v114
    %v135 = vpop.xlane.xlu0 %134
    %136 = vadd.xlane.f32.xlu0 %v115
    %v137 = vpop.xlane.xlu0 %136
    %138 = vadd.xlane.f32.xlu0 %v116
    %v139 = vpop.xlane.xlu0 %138
    %140 = vadd.xlane.f32.xlu0 %v117
    %v141 = vpop.xlane.xlu0 %140
    %142 = vadd.xlane.f32.xlu0 %v118
    %v143 = vpop.xlane.xlu0 %142
    %144 = vadd.xlane.f32.xlu0 %v119
    %v145 = vpop.xlane.xlu0 %144
    %146 = vadd.xlane.f32.xlu0 %v120
    %v147 = vpop.xlane.xlu0 %146
    %148 = vadd.xlane.f32.xlu0 %v121
    %v149 = vpop.xlane.xlu0 %148
    %150 = vadd.xlane.f32.xlu0 %v122
    %v151 = vpop.xlane.xlu0 %150
    %152 = vadd.xlane.f32.xlu0 %v123
    %v153 = vpop.xlane.xlu0 %152
    %154 = vadd.xlane.f32.xlu0 %v124
    %v155 = vpop.xlane.xlu0 %154
    %156 = vadd.xlane.f32.xlu0 %v125
    %v157 = vpop.xlane.xlu0 %156
    %v158 = vmul.f32 %v127, %v77
    %v159 = vmul.f32 %v129, %v77
    %v160 = vmul.f32 %v131, %v77
    %v161 = vmul.f32 %v133, %v77
    %v162 = vmul.f32 %v135, %v77
    %v163 = vmul.f32 %v137, %v77
    %v164 = vmul.f32 %v139, %v77
    %v165 = vmul.f32 %v141, %v77
    %v166 = vmul.f32 %v143, %v77
    %v167 = vmul.f32 %v145, %v77
    %v168 = vmul.f32 %v147, %v77
    %v169 = vmul.f32 %v149, %v77
    %v170 = vmul.f32 %v151, %v77
    %v171 = vmul.f32 %v153, %v77
    %v172 = vmul.f32 %v155, %v77
    %v173 = vmul.f32 %v157, %v77
    %v174 = vadd.f32 %v158, 1e-05
    %v175 = vadd.f32 %v159, 1e-05
    %v176 = vadd.f32 %v160, 1e-05
    %v177 = vadd.f32 %v161, 1e-05
    %v178 = vadd.f32 %v162, 1e-05
    %v179 = vadd.f32 %v163, 1e-05
    %v180 = vadd.f32 %v164, 1e-05
    %v181 = vadd.f32 %v165, 1e-05
    %v182 = vadd.f32 %v166, 1e-05
    %v183 = vadd.f32 %v167, 1e-05
    %v184 = vadd.f32 %v168, 1e-05
    %v185 = vadd.f32 %v169, 1e-05
    %v186 = vadd.f32 %v170, 1e-05
    %v187 = vadd.f32 %v171, 1e-05
    %v188 = vadd.f32 %v172, 1e-05
    %v189 = vadd.f32 %v173, 1e-05
    %v190 = vrsqrt.pop %v174
    %v191 = vrsqrt.pop %v175
    %v192 = vrsqrt.pop %v176
    %v193 = vrsqrt.pop %v177
    %v194 = vrsqrt.pop %v178
    %v195 = vrsqrt.pop %v179
    %v196 = vrsqrt.pop %v180
    %v197 = vrsqrt.pop %v181
    %v198 = vrsqrt.pop %v182
    %v199 = vrsqrt.pop %v183
    %v200 = vrsqrt.pop %v184
    %v201 = vrsqrt.pop %v185
    %v202 = vrsqrt.pop %v186
    %v203 = vrsqrt.pop %v187
    %v204 = vrsqrt.pop %v188
    %v205 = vrsqrt.pop %v189
    %v206 = vmul.f32 %v94, %v190
    %v207 = vmul.f32 %v95, %v191
    %v208 = vmul.f32 %v96, %v192
    %v209 = vmul.f32 %v97, %v193
    %v210 = vmul.f32 %v98, %v194
    %v211 = vmul.f32 %v99, %v195
    %v212 = vmul.f32 %v100, %v196
    %v213 = vmul.f32 %v101, %v197
    %v214 = vmul.f32 %v102, %v198
    %v215 = vmul.f32 %v103, %v199
    %v216 = vmul.f32 %v104, %v200
    %v217 = vmul.f32 %v105, %v201
    %v218 = vmul.f32 %v106, %v202
    %v219 = vmul.f32 %v107, %v203
    %v220 = vmul.f32 %v108, %v204
    %v221 = vmul.f32 %v109, %v205
    %v223 = vlaneseq
    %v224 = vshrl.u32 %v223, 7
    %v225 = vsub.s32 0, %v224
    %v226 = vrot.slane %v43, %v225
    %v228 = vmul.f32 %v206, %v226
    %v229 = vmul.f32 %v207, %v226
    %v230 = vmul.f32 %v208, %v226
    %v231 = vmul.f32 %v209, %v226
    %v232 = vmul.f32 %v210, %v226
    %v233 = vmul.f32 %v211, %v226
    %v234 = vmul.f32 %v212, %v226
    %v235 = vmul.f32 %v213, %v226
    %v236 = vmul.f32 %v214, %v226
    %v237 = vmul.f32 %v215, %v226
    %v238 = vmul.f32 %v216, %v226
    %v239 = vmul.f32 %v217, %v226
    %v240 = vmul.f32 %v218, %v226
    %v241 = vmul.f32 %v219, %v226
    %v242 = vmul.f32 %v220, %v226
    %v243 = vmul.f32 %v221, %v226
    %v245 = vlaneseq
    %v246 = vshrl.u32 %v245, 7
    %v247 = vsub.s32 0, %v246
    %v248 = vrot.slane %v44, %v247
    %v250 = vadd.f32 %v228, %v248
    %v251 = vadd.f32 %v229, %v248
    %v252 = vadd.f32 %v230, %v248
    %v253 = vadd.f32 %v231, %v248
    %v254 = vadd.f32 %v232, %v248
    %v255 = vadd.f32 %v233, %v248
    %v256 = vadd.f32 %v234, %v248
    %v257 = vadd.f32 %v235, %v248
    %v258 = vadd.f32 %v236, %v248
    %v259 = vadd.f32 %v237, %v248
    %v260 = vadd.f32 %v238, %v248
    %v261 = vadd.f32 %v239, %v248
    %v262 = vadd.f32 %v240, %v248
    %v263 = vadd.f32 %v241, %v248
    %v264 = vadd.f32 %v242, %v248
    %v265 = vadd.f32 %v243, %v248
    %v266 = vld [vmem:[%s3] sm:$0xff]
    %v267 = vld [vmem:[%s3 + $0x8] sm:$0xff]
    %v268 = vld [vmem:[%s3 + $0x10] sm:$0xff]
    %v269 = vld [vmem:[%s3 + $0x18] sm:$0xff]
    %v270 = vld [vmem:[%s3 + $0x20] sm:$0xff]
    %v271 = vld [vmem:[%s3 + $0x28] sm:$0xff]
    %v272 = vld [vmem:[%s3 + $0x30] sm:$0xff]
    %v273 = vld [vmem:[%s3 + $0x38] sm:$0xff]
    %v274 = vld [vmem:[%s3 + $0x40] sm:$0xff]
    %v275 = vld [vmem:[%s3 + $0x48] sm:$0xff]
    %v276 = vld [vmem:[%s3 + $0x50] sm:$0xff]
    %v277 = vld [vmem:[%s3 + $0x58] sm:$0xff]
    %v278 = vld [vmem:[%s3 + $0x60] sm:$0xff]
    %v279 = vld [vmem:[%s3 + $0x68] sm:$0xff]
    %v280 = vld [vmem:[%s3 + $0x70] sm:$0xff]
    %v281 = vld [vmem:[%s3 + $0x78] sm:$0xff]
    %v282 = vld [vmem:[%s3 + $0x80] sm:$0xff]
    %v283 = vld [vmem:[%s3 + $0x88] sm:$0xff]
    %v284 = vld [vmem:[%s3 + $0x90] sm:$0xff]
    %v285 = vld [vmem:[%s3 + $0x98] sm:$0xff]
    %v286 = vld [vmem:[%s3 + $0xa0] sm:$0xff]
    %v287 = vld [vmem:[%s3 + $0xa8] sm:$0xff]
    %v288 = vld [vmem:[%s3 + $0xb0] sm:$0xff]
    %v289 = vld [vmem:[%s3 + $0xb8] sm:$0xff]
    %v290 = vld [vmem:[%s3 + $0xc0] sm:$0xff]
    %v291 = vld [vmem:[%s3 + $0xc8] sm:$0xff]
    %v292 = vld [vmem:[%s3 + $0xd0] sm:$0xff]
    %v293 = vld [vmem:[%s3 + $0xd8] sm:$0xff]
    %v294 = vld [vmem:[%s3 + $0xe0] sm:$0xff]
    %v295 = vld [vmem:[%s3 + $0xe8] sm:$0xff]
    %v296 = vld [vmem:[%s3 + $0xf0] sm:$0xff]
    %v297 = vld [vmem:[%s3 + $0xf8] sm:$0xff]
    %v298 = vld [vmem:[%s4] sm:$0x3]
    %v300 = vlaneseq
    %v301 = vshrl.u32 %v300, 7
    %v302 = vsub.s32 0, %v301
    %v303 = vrot.slane %v298, %v302
    %v304 = vlaneseq
    %v305 = vshrl.u32 %v304, 7
    %v306 = vsub.s32 1, %v305
    %v307 = vrot.slane %v298, %v306
    %310 = vmatprep.subr.mxu0 %v297
    %311 = vmatpush1.msra.mxu0 %v296
    %312 = vmatprep.subr.mxu0 %v295
    %313 = vmatpush1.msra.mxu0 %v294
    %314 = vmatprep.subr.mxu0 %v293
    %315 = vmatpush1.msra.mxu0 %v292
    %316 = vmatprep.subr.mxu0 %v291
    %317 = vmatpush1.msra.mxu0 %v290
    %318 = vmatprep.subr.mxu0 %v289
    %319 = vmatpush1.msra.mxu0 %v288
    %320 = vmatprep.subr.mxu0 %v287
    %321 = vmatpush1.msra.mxu0 %v286
    %322 = vmatprep.subr.mxu0 %v285
    %323 = vmatpush1.msra.mxu0 %v284
    %324 = vmatprep.subr.mxu0 %v283
    %325 = vmatpush1.msra.mxu0 %v282
    %326 = vmatprep.subr.mxu0 %v281
    %327 = vmatpush1.msra.mxu0 %v280
    %328 = vmatprep.subr.mxu0 %v279
    %329 = vmatpush1.msra.mxu0 %v278
    %330 = vmatprep.subr.mxu0 %v277
    %331 = vmatpush1.msra.mxu0 %v276
    %332 = vmatprep.subr.mxu0 %v275
    %333 = vmatpush1.msra.mxu0 %v274
    %334 = vmatprep.subr.mxu0 %v273
    %335 = vmatpush1.msra.mxu0 %v272
    %336 = vmatprep.subr.mxu0 %v271
    %337 = vmatpush1.msra.mxu0 %v270
    %338 = vmatprep.subr.mxu0 %v269
    %339 = vmatpush1.msra.mxu0 %v268
    %340 = vmatprep.subr.mxu0 %v267
    %341 = vmatpush1.msra.mxu0 %v266
    %342 = vmatprep.subr.mxu0 0.0
    %343 = vmatpush2.msra.mxu0 0.0
    %344 = vmatprep.subr.mxu0 0.0
    %345 = vmatpush2.msra.mxu0 0.0
    %346 = vmatprep.subr.mxu0 0.0
    %347 = vmatpush2.msra.mxu0 0.0
    %348 = vmatprep.subr.mxu0 0.0
    %349 = vmatpush2.msra.mxu0 0.0
    %350 = vmatprep.subr.mxu0 0.0
    %351 = vmatpush2.msra.mxu0 0.0
    %352 = vmatprep.subr.mxu0 0.0
    %353 = vmatpush2.msra.mxu0 0.0
    %354 = vmatprep.subr.mxu0 0.0
    %355 = vmatpush2.msra.mxu0 0.0
    %356 = vmatprep.subr.mxu0 0.0
    %357 = vmatpush2.msra.mxu0 0.0
    %358 = vmatprep.subr.mxu0 0.0
    %359 = vmatpush2.msra.mxu0 0.0
    %360 = vmatprep.subr.mxu0 0.0
    %361 = vmatpush2.msra.mxu0 0.0
    %362 = vmatprep.subr.mxu0 0.0
    %363 = vmatpush2.msra.mxu0 0.0
    %364 = vmatprep.subr.mxu0 0.0
    %365 = vmatpush2.msra.mxu0 0.0
    %366 = vmatprep.subr.mxu0 0.0
    %367 = vmatpush2.msra.mxu0 0.0
    %368 = vmatprep.subr.mxu0 0.0
    %369 = vmatpush2.msra.mxu0 0.0
    %370 = vmatprep.subr.mxu0 0.0
    %371 = vmatpush2.msra.mxu0 0.0
    %372 = vmatprep.subr.mxu0 0.0
    %373 = vmatpush2.msra.mxu0 0.0
    %374 = vmatprep.mubr.f32.mxu0 0.0
    %375 = vmatmul.mubr.f32.gmra.mxu0 %v250
    %v376 = vpop.f32.mrf.mxu0
    %v377 = vadd.f32 %v303, %v376
    %v378 = vpop.f32.mrf.mxu0
    %v379 = vadd.f32 %v307, %v378
    %380 = vmatprep.mubr.f32.mxu0 0.0
    %381 = vmatmul.mubr.f32.gmra.mxu0 %v251
    %v382 = vpop.f32.mrf.mxu0
    %v383 = vadd.f32 %v303, %v382
    %v384 = vpop.f32.mrf.mxu0
    %v385 = vadd.f32 %v307, %v384
    %386 = vmatprep.mubr.f32.mxu0 0.0
    %387 = vmatmul.mubr.f32.gmra.mxu0 %v252
    %v388 = vpop.f32.mrf.mxu0
    %v389 = vadd.f32 %v303, %v388
    %v390 = vpop.f32.mrf.mxu0
    %v391 = vadd.f32 %v307, %v390
    %392 = vmatprep.mubr.f32.mxu0 0.0
    %393 = vmatmul.mubr.f32.gmra.mxu0 %v253
    %v394 = vpop.f32.mrf.mxu0
    %v395 = vadd.f32 %v303, %v394
    %v396 = vpop.f32.mrf.mxu0
    %v397 = vadd.f32 %v307, %v396
    %398 = vmatprep.mubr.f32.mxu0 0.0
    %399 = vmatmul.mubr.f32.gmra.mxu0 %v254
    %v400 = vpop.f32.mrf.mxu0
    %v401 = vadd.f32 %v303, %v400
    %v402 = vpop.f32.mrf.mxu0
    %v403 = vadd.f32 %v307, %v402
    %404 = vmatprep.mubr.f32.mxu0 0.0
    %405 = vmatmul.mubr.f32.gmra.mxu0 %v255
    %v406 = vpop.f32.mrf.mxu0
    %v407 = vadd.f32 %v303, %v406
    %v408 = vpop.f32.mrf.mxu0
    %v409 = vadd.f32 %v307, %v408
    %410 = vmatprep.mubr.f32.mxu0 0.0
    %411 = vmatmul.mubr.f32.gmra.mxu0 %v256
    %v412 = vpop.f32.mrf.mxu0
    %v413 = vadd.f32 %v303, %v412
    %v414 = vpop.f32.mrf.mxu0
    %v415 = vadd.f32 %v307, %v414
    %416 = vmatprep.mubr.f32.mxu0 0.0
    %417 = vmatmul.mubr.f32.gmra.mxu0 %v257
    %v418 = vpop.f32.mrf.mxu0
    %v419 = vadd.f32 %v303, %v418
    %v420 = vpop.f32.mrf.mxu0
    %v421 = vadd.f32 %v307, %v420
    %422 = vmatprep.mubr.f32.mxu0 0.0
    %423 = vmatmul.mubr.f32.gmra.mxu0 %v258
    %v424 = vpop.f32.mrf.mxu0
    %v425 = vadd.f32 %v303, %v424
    %v426 = vpop.f32.mrf.mxu0
    %v427 = vadd.f32 %v307, %v426
    %428 = vmatprep.mubr.f32.mxu0 0.0
    %429 = vmatmul.mubr.f32.gmra.mxu0 %v259
    %v430 = vpop.f32.mrf.mxu0
    %v431 = vadd.f32 %v303, %v430
    %v432 = vpop.f32.mrf.mxu0
    %v433 = vadd.f32 %v307, %v432
    %434 = vmatprep.mubr.f32.mxu0 0.0
    %435 = vmatmul.mubr.f32.gmra.mxu0 %v260
    %v436 = vpop.f32.mrf.mxu0
    %v437 = vadd.f32 %v303, %v436
    %v438 = vpop.f32.mrf.mxu0
    %v439 = vadd.f32 %v307, %v438
    %440 = vmatprep.mubr.f32.mxu0 0.0
    %441 = vmatmul.mubr.f32.gmra.mxu0 %v261
    %v442 = vpop.f32.mrf.mxu0
    %v443 = vadd.f32 %v303, %v442
    %v444 = vpop.f32.mrf.mxu0
    %v445 = vadd.f32 %v307, %v444
    %446 = vmatprep.mubr.f32.mxu0 0.0
    %447 = vmatmul.mubr.f32.gmra.mxu0 %v262
    %v448 = vpop.f32.mrf.mxu0
    %v449 = vadd.f32 %v303, %v448
    %v450 = vpop.f32.mrf.mxu0
    %v451 = vadd.f32 %v307, %v450
    %452 = vmatprep.mubr.f32.mxu0 0.0
    %453 = vmatmul.mubr.f32.gmra.mxu0 %v263
    %v454 = vpop.f32.mrf.mxu0
    %v455 = vadd.f32 %v303, %v454
    %v456 = vpop.f32.mrf.mxu0
    %v457 = vadd.f32 %v307, %v456
    %458 = vmatprep.mubr.f32.mxu0 0.0
    %459 = vmatmul.mubr.f32.gmra.mxu0 %v264
    %v460 = vpop.f32.mrf.mxu0
    %v461 = vadd.f32 %v303, %v460
    %v462 = vpop.f32.mrf.mxu0
    %v463 = vadd.f32 %v307, %v462
    %464 = vmatprep.mubr.f32.mxu0 0.0
    %465 = vmatmul.mubr.f32.gmra.mxu0 %v265
    %v466 = vpop.f32.mrf.mxu0
    %v467 = vadd.f32 %v303, %v466
    %v468 = vpop.f32.mrf.mxu0
    %v469 = vadd.f32 %v307, %v468
    %470 = vdwg.mxu0
    %v471 = vmul.f32 %v377, 0.5
    %v472 = vmul.f32 %v379, 0.5
    %v473 = vmul.f32 %v383, 0.5
    %v474 = vmul.f32 %v385, 0.5
    %v475 = vmul.f32 %v389, 0.5
    %v476 = vmul.f32 %v391, 0.5
    %v477 = vmul.f32 %v395, 0.5
    %v478 = vmul.f32 %v397, 0.5
    %v479 = vmul.f32 %v401, 0.5
    %v480 = vmul.f32 %v403, 0.5
    %v481 = vmul.f32 %v407, 0.5
    %v482 = vmul.f32 %v409, 0.5
    %v483 = vmul.f32 %v413, 0.5
    %v484 = vmul.f32 %v415, 0.5
    %v485 = vmul.f32 %v419, 0.5
    %v486 = vmul.f32 %v421, 0.5
    %v487 = vmul.f32 %v425, 0.5
    %v488 = vmul.f32 %v427, 0.5
    %v489 = vmul.f32 %v431, 0.5
    %v490 = vmul.f32 %v433, 0.5
    %v491 = vmul.f32 %v437, 0.5
    %v492 = vmul.f32 %v439, 0.5
    %v493 = vmul.f32 %v443, 0.5
    %v494 = vmul.f32 %v445, 0.5
    %v495 = vmul.f32 %v449, 0.5
    %v496 = vmul.f32 %v451, 0.5
    %v497 = vmul.f32 %v455, 0.5
    %v498 = vmul.f32 %v457, 0.5
    %v499 = vmul.f32 %v461, 0.5
    %v500 = vmul.f32 %v463, 0.5
    %v501 = vmul.f32 %v467, 0.5
    %v502 = vmul.f32 %v469, 0.5
    %v503 = vmul.f32 %v377, 0.70710677
    %v504 = vmul.f32 %v379, 0.70710677
    %v505 = vmul.f32 %v383, 0.70710677
    %v506 = vmul.f32 %v385, 0.70710677
    %v507 = vmul.f32 %v389, 0.70710677
    %v508 = vmul.f32 %v391, 0.70710677
    %v509 = vmul.f32 %v395, 0.70710677
    %v510 = vmul.f32 %v397, 0.70710677
    %v511 = vmul.f32 %v401, 0.70710677
    %v512 = vmul.f32 %v403, 0.70710677
    %v513 = vmul.f32 %v407, 0.70710677
    %v514 = vmul.f32 %v409, 0.70710677
    %v515 = vmul.f32 %v413, 0.70710677
    %v516 = vmul.f32 %v415, 0.70710677
    %v517 = vmul.f32 %v419, 0.70710677
    %v518 = vmul.f32 %v421, 0.70710677
    %v519 = vmul.f32 %v425, 0.70710677
    %v520 = vmul.f32 %v427, 0.70710677
    %v521 = vmul.f32 %v431, 0.70710677
    %v522 = vmul.f32 %v433, 0.70710677
    %v523 = vmul.f32 %v437, 0.70710677
    %v524 = vmul.f32 %v439, 0.70710677
    %v525 = vmul.f32 %v443, 0.70710677
    %v526 = vmul.f32 %v445, 0.70710677
    %v527 = vmul.f32 %v449, 0.70710677
    %v528 = vmul.f32 %v451, 0.70710677
    %v529 = vmul.f32 %v455, 0.70710677
    %v530 = vmul.f32 %v457, 0.70710677
    %v531 = vmul.f32 %v461, 0.70710677
    %v532 = vmul.f32 %v463, 0.70710677
    %v533 = vmul.f32 %v467, 0.70710677
    %v534 = vmul.f32 %v469, 0.70710677
    %v535 = vand.u32 2147483647, %v503
    %v536 = vand.u32 2147483647, %v504
    %v537 = vand.u32 2147483647, %v505
    %v538 = vand.u32 2147483647, %v506
    %v539 = vand.u32 2147483647, %v507
    %v540 = vand.u32 2147483647, %v508
    %v541 = vand.u32 2147483647, %v509
    %v542 = vand.u32 2147483647, %v510
    %v543 = vand.u32 2147483647, %v511
    %v544 = vand.u32 2147483647, %v512
    %v545 = vand.u32 2147483647, %v513
    %v546 = vand.u32 2147483647, %v514
    %v547 = vand.u32 2147483647, %v515
    %v548 = vand.u32 2147483647, %v516
    %v549 = vand.u32 2147483647, %v517
    %v550 = vand.u32 2147483647, %v518
    %v551 = vand.u32 2147483647, %v519
    %v552 = vand.u32 2147483647, %v520
    %v553 = vand.u32 2147483647, %v521
    %v554 = vand.u32 2147483647, %v522
    %v555 = vand.u32 2147483647, %v523
    %v556 = vand.u32 2147483647, %v524
    %v557 = vand.u32 2147483647, %v525
    %v558 = vand.u32 2147483647, %v526
    %v559 = vand.u32 2147483647, %v527
    %v560 = vand.u32 2147483647, %v528
    %v561 = vand.u32 2147483647, %v529
    %v562 = vand.u32 2147483647, %v530
    %v563 = vand.u32 2147483647, %v531
    %v564 = vand.u32 2147483647, %v532
    %v565 = vand.u32 2147483647, %v533
    %v566 = vand.u32 2147483647, %v534
    %v567 = vmul.f32 %v535, 0.3275911
    %v568 = vmul.f32 %v536, 0.3275911
    %v569 = vmul.f32 %v537, 0.3275911
    %v570 = vmul.f32 %v538, 0.3275911
    %v571 = vmul.f32 %v539, 0.3275911
    %v572 = vmul.f32 %v540, 0.3275911
    %v573 = vmul.f32 %v541, 0.3275911
    %v574 = vmul.f32 %v542, 0.3275911
    %v575 = vmul.f32 %v543, 0.3275911
    %v576 = vmul.f32 %v544, 0.3275911
    %v577 = vmul.f32 %v545, 0.3275911
    %v578 = vmul.f32 %v546, 0.3275911
    %v579 = vmul.f32 %v547, 0.3275911
    %v580 = vmul.f32 %v548, 0.3275911
    %v581 = vmul.f32 %v549, 0.3275911
    %v582 = vmul.f32 %v550, 0.3275911
    %v583 = vmul.f32 %v551, 0.3275911
    %v584 = vmul.f32 %v552, 0.3275911
    %v585 = vmul.f32 %v553, 0.3275911
    %v586 = vmul.f32 %v554, 0.3275911
    %v587 = vmul.f32 %v555, 0.3275911
    %v588 = vmul.f32 %v556, 0.3275911
    %v589 = vmul.f32 %v557, 0.3275911
    %v590 = vmul.f32 %v558, 0.3275911
    %v591 = vmul.f32 %v559, 0.3275911
    %v592 = vmul.f32 %v560, 0.3275911
    %v593 = vmul.f32 %v561, 0.3275911
    %v594 = vmul.f32 %v562, 0.3275911
    %v595 = vmul.f32 %v563, 0.3275911
    %v596 = vmul.f32 %v564, 0.3275911
    %v597 = vmul.f32 %v565, 0.3275911
    %v598 = vmul.f32 %v566, 0.3275911
    %v599 = vadd.f32 %v567, 1.0
    %v600 = vadd.f32 %v568, 1.0
    %v601 = vadd.f32 %v569, 1.0
    %v602 = vadd.f32 %v570, 1.0
    %v603 = vadd.f32 %v571, 1.0
    %v604 = vadd.f32 %v572, 1.0
    %v605 = vadd.f32 %v573, 1.0
    %v606 = vadd.f32 %v574, 1.0
    %v607 = vadd.f32 %v575, 1.0
    %v608 = vadd.f32 %v576, 1.0
    %v609 = vadd.f32 %v577, 1.0
    %v610 = vadd.f32 %v578, 1.0
    %v611 = vadd.f32 %v579, 1.0
    %v612 = vadd.f32 %v580, 1.0
    %v613 = vadd.f32 %v581, 1.0
    %v614 = vadd.f32 %v582, 1.0
    %v615 = vadd.f32 %v583, 1.0
    %v616 = vadd.f32 %v584, 1.0
    %v617 = vadd.f32 %v585, 1.0
    %v618 = vadd.f32 %v586, 1.0
    %v619 = vadd.f32 %v587, 1.0
    %v620 = vadd.f32 %v588, 1.0
    %v621 = vadd.f32 %v589, 1.0
    %v622 = vadd.f32 %v590, 1.0
    %v623 = vadd.f32 %v591, 1.0
    %v624 = vadd.f32 %v592, 1.0
    %v625 = vadd.f32 %v593, 1.0
    %v626 = vadd.f32 %v594, 1.0
    %v627 = vadd.f32 %v595, 1.0
    %v628 = vadd.f32 %v596, 1.0
    %v629 = vadd.f32 %v597, 1.0
    %v630 = vadd.f32 %v598, 1.0
    %v631 = vrcp.pop %v599
    %v632 = vmul.f32 1.0, %v631
    %v633 = vrcp.pop %v600
    %v634 = vmul.f32 1.0, %v633
    %v635 = vrcp.pop %v601
    %v636 = vmul.f32 1.0, %v635
    %v637 = vrcp.pop %v602
    %v638 = vmul.f32 1.0, %v637
    %v639 = vrcp.pop %v603
    %v640 = vmul.f32 1.0, %v639
    %v641 = vrcp.pop %v604
    %v642 = vmul.f32 1.0, %v641
    %v643 = vrcp.pop %v605
    %v644 = vmul.f32 1.0, %v643
    %v645 = vrcp.pop %v606
    %v646 = vmul.f32 1.0, %v645
    %v647 = vrcp.pop %v607
    %v648 = vmul.f32 1.0, %v647
    %v649 = vrcp.pop %v608
    %v650 = vmul.f32 1.0, %v649
    %v651 = vrcp.pop %v609
    %v652 = vmul.f32 1.0, %v651
    %v653 = vrcp.pop %v610
    %v654 = vmul.f32 1.0, %v653
    %v655 = vrcp.pop %v611
    %v656 = vmul.f32 1.0, %v655
    %v657 = vrcp.pop %v612
    %v658 = vmul.f32 1.0, %v657
    %v659 = vrcp.pop %v613
    %v660 = vmul.f32 1.0, %v659
    %v661 = vrcp.pop %v614
    %v662 = vmul.f32 1.0, %v661
    %v663 = vrcp.pop %v615
    %v664 = vmul.f32 1.0, %v663
    %v665 = vrcp.pop %v616
    %v666 = vmul.f32 1.0, %v665
    %v667 = vrcp.pop %v617
    %v668 = vmul.f32 1.0, %v667
    %v669 = vrcp.pop %v618
    %v670 = vmul.f32 1.0, %v669
    %v671 = vrcp.pop %v619
    %v672 = vmul.f32 1.0, %v671
    %v673 = vrcp.pop %v620
    %v674 = vmul.f32 1.0, %v673
    %v675 = vrcp.pop %v621
    %v676 = vmul.f32 1.0, %v675
    %v677 = vrcp.pop %v622
    %v678 = vmul.f32 1.0, %v677
    %v679 = vrcp.pop %v623
    %v680 = vmul.f32 1.0, %v679
    %v681 = vrcp.pop %v624
    %v682 = vmul.f32 1.0, %v681
    %v683 = vrcp.pop %v625
    %v684 = vmul.f32 1.0, %v683
    %v685 = vrcp.pop %v626
    %v686 = vmul.f32 1.0, %v685
    %v687 = vrcp.pop %v627
    %v688 = vmul.f32 1.0, %v687
    %v689 = vrcp.pop %v628
    %v690 = vmul.f32 1.0, %v689
    %v691 = vrcp.pop %v629
    %v692 = vmul.f32 1.0, %v691
    %v693 = vrcp.pop %v630
    %v694 = vmul.f32 1.0, %v693
    %v695 = vmul.f32 %v632, 1.0614054
    %v696 = vmul.f32 %v634, 1.0614054
    %v697 = vmul.f32 %v636, 1.0614054
    %v698 = vmul.f32 %v638, 1.0614054
    %v699 = vmul.f32 %v640, 1.0614054
    %v700 = vmul.f32 %v642, 1.0614054
    %v701 = vmul.f32 %v644, 1.0614054
    %v702 = vmul.f32 %v646, 1.0614054
    %v703 = vmul.f32 %v648, 1.0614054
    %v704 = vmul.f32 %v650, 1.0614054
    %v705 = vmul.f32 %v652, 1.0614054
    %v706 = vmul.f32 %v654, 1.0614054
    %v707 = vmul.f32 %v656, 1.0614054
    %v708 = vmul.f32 %v658, 1.0614054
    %v709 = vmul.f32 %v660, 1.0614054
    %v710 = vmul.f32 %v662, 1.0614054
    %v711 = vmul.f32 %v664, 1.0614054
    %v712 = vmul.f32 %v666, 1.0614054
    %v713 = vmul.f32 %v668, 1.0614054
    %v714 = vmul.f32 %v670, 1.0614054
    %v715 = vmul.f32 %v672, 1.0614054
    %v716 = vmul.f32 %v674, 1.0614054
    %v717 = vmul.f32 %v676, 1.0614054
    %v718 = vmul.f32 %v678, 1.0614054
    %v719 = vmul.f32 %v680, 1.0614054
    %v720 = vmul.f32 %v682, 1.0614054
    %v721 = vmul.f32 %v684, 1.0614054
    %v722 = vmul.f32 %v686, 1.0614054
    %v723 = vmul.f32 %v688, 1.0614054
    %v724 = vmul.f32 %v690, 1.0614054
    %v725 = vmul.f32 %v692, 1.0614054
    %v726 = vmul.f32 %v694, 1.0614054
    %v727 = vadd.f32 %v695, -1.4531521
    %v728 = vadd.f32 %v696, -1.4531521
    %v729 = vadd.f32 %v697, -1.4531521
    %v730 = vadd.f32 %v698, -1.4531521
    %v731 = vadd.f32 %v699, -1.4531521
    %v732 = vadd.f32 %v700, -1.4531521
    %v733 = vadd.f32 %v701, -1.4531521
    %v734 = vadd.f32 %v702, -1.4531521
    %v735 = vadd.f32 %v703, -1.4531521
    %v736 = vadd.f32 %v704, -1.4531521
    %v737 = vadd.f32 %v705, -1.4531521
    %v738 = vadd.f32 %v706, -1.4531521
    %v739 = vadd.f32 %v707, -1.4531521
    %v740 = vadd.f32 %v708, -1.4531521
    %v741 = vadd.f32 %v709, -1.4531521
    %v742 = vadd.f32 %v710, -1.4531521
    %v743 = vadd.f32 %v711, -1.4531521
    %v744 = vadd.f32 %v712, -1.4531521
    %v745 = vadd.f32 %v713, -1.4531521
    %v746 = vadd.f32 %v714, -1.4531521
    %v747 = vadd.f32 %v715, -1.4531521
    %v748 = vadd.f32 %v716, -1.4531521
    %v749 = vadd.f32 %v717, -1.4531521
    %v750 = vadd.f32 %v718, -1.4531521
    %v751 = vadd.f32 %v719, -1.4531521
    %v752 = vadd.f32 %v720, -1.4531521
    %v753 = vadd.f32 %v721, -1.4531521
    %v754 = vadd.f32 %v722, -1.4531521
    %v755 = vadd.f32 %v723, -1.4531521
    %v756 = vadd.f32 %v724, -1.4531521
    %v757 = vadd.f32 %v725, -1.4531521
    %v758 = vadd.f32 %v726, -1.4531521
    %v759 = vmul.f32 %v727, %v632
    %v760 = vmul.f32 %v728, %v634
    %v761 = vmul.f32 %v729, %v636
    %v762 = vmul.f32 %v730, %v638
    %v763 = vmul.f32 %v731, %v640
    %v764 = vmul.f32 %v732, %v642
    %v765 = vmul.f32 %v733, %v644
    %v766 = vmul.f32 %v734, %v646
    %v767 = vmul.f32 %v735, %v648
    %v768 = vmul.f32 %v736, %v650
    %v769 = vmul.f32 %v737, %v652
    %v770 = vmul.f32 %v738, %v654
    %v771 = vmul.f32 %v739, %v656
    %v772 = vmul.f32 %v740, %v658
    %v773 = vmul.f32 %v741, %v660
    %v774 = vmul.f32 %v742, %v662
    %v775 = vmul.f32 %v743, %v664
    %v776 = vmul.f32 %v744, %v666
    %v777 = vmul.f32 %v745, %v668
    %v778 = vmul.f32 %v746, %v670
    %v779 = vmul.f32 %v747, %v672
    %v780 = vmul.f32 %v748, %v674
    %v781 = vmul.f32 %v749, %v676
    %v782 = vmul.f32 %v750, %v678
    %v783 = vmul.f32 %v751, %v680
    %v784 = vmul.f32 %v752, %v682
    %v785 = vmul.f32 %v753, %v684
    %v786 = vmul.f32 %v754, %v686
    %v787 = vmul.f32 %v755, %v688
    %v788 = vmul.f32 %v756, %v690
    %v789 = vmul.f32 %v757, %v692
    %v790 = vmul.f32 %v758, %v694
    %v791 = vadd.f32 %v759, 1.4214138
    %v792 = vadd.f32 %v760, 1.4214138
    %v793 = vadd.f32 %v761, 1.4214138
    %v794 = vadd.f32 %v762, 1.4214138
    %v795 = vadd.f32 %v763, 1.4214138
    %v796 = vadd.f32 %v764, 1.4214138
    %v797 = vadd.f32 %v765, 1.4214138
    %v798 = vadd.f32 %v766, 1.4214138
    %v799 = vadd.f32 %v767, 1.4214138
    %v800 = vadd.f32 %v768, 1.4214138
    %v801 = vadd.f32 %v769, 1.4214138
    %v802 = vadd.f32 %v770, 1.4214138
    %v803 = vadd.f32 %v771, 1.4214138
    %v804 = vadd.f32 %v772, 1.4214138
    %v805 = vadd.f32 %v773, 1.4214138
    %v806 = vadd.f32 %v774, 1.4214138
    %v807 = vadd.f32 %v775, 1.4214138
    %v808 = vadd.f32 %v776, 1.4214138
    %v809 = vadd.f32 %v777, 1.4214138
    %v810 = vadd.f32 %v778, 1.4214138
    %v811 = vadd.f32 %v779, 1.4214138
    %v812 = vadd.f32 %v780, 1.4214138
    %v813 = vadd.f32 %v781, 1.4214138
    %v814 = vadd.f32 %v782, 1.4214138
    %v815 = vadd.f32 %v783, 1.4214138
    %v816 = vadd.f32 %v784, 1.4214138
    %v817 = vadd.f32 %v785, 1.4214138
    %v818 = vadd.f32 %v786, 1.4214138
    %v819 = vadd.f32 %v787, 1.4214138
    %v820 = vadd.f32 %v788, 1.4214138
    %v821 = vadd.f32 %v789, 1.4214138
    %v822 = vadd.f32 %v790, 1.4214138
    %v823 = vmul.f32 %v791, %v632
    %v824 = vmul.f32 %v792, %v634
    %v825 = vmul.f32 %v793, %v636
    %v826 = vmul.f32 %v794, %v638
    %v827 = vmul.f32 %v795, %v640
    %v828 = vmul.f32 %v796, %v642
    %v829 = vmul.f32 %v797, %v644
    %v830 = vmul.f32 %v798, %v646
    %v831 = vmul.f32 %v799, %v648
    %v832 = vmul.f32 %v800, %v650
    %v833 = vmul.f32 %v801, %v652
    %v834 = vmul.f32 %v802, %v654
    %v835 = vmul.f32 %v803, %v656
    %v836 = vmul.f32 %v804, %v658
    %v837 = vmul.f32 %v805, %v660
    %v838 = vmul.f32 %v806, %v662
    %v839 = vmul.f32 %v807, %v664
    %v840 = vmul.f32 %v808, %v666
    %v841 = vmul.f32 %v809, %v668
    %v842 = vmul.f32 %v810, %v670
    %v843 = vmul.f32 %v811, %v672
    %v844 = vmul.f32 %v812, %v674
    %v845 = vmul.f32 %v813, %v676
    %v846 = vmul.f32 %v814, %v678
    %v847 = vmul.f32 %v815, %v680
    %v848 = vmul.f32 %v816, %v682
    %v849 = vmul.f32 %v817, %v684
    %v850 = vmul.f32 %v818, %v686
    %v851 = vmul.f32 %v819, %v688
    %v852 = vmul.f32 %v820, %v690
    %v853 = vmul.f32 %v821, %v692
    %v854 = vmul.f32 %v822, %v694
    %v855 = vadd.f32 %v823, -0.28449672
    %v856 = vadd.f32 %v824, -0.28449672
    %v857 = vadd.f32 %v825, -0.28449672
    %v858 = vadd.f32 %v826, -0.28449672
    %v859 = vadd.f32 %v827, -0.28449672
    %v860 = vadd.f32 %v828, -0.28449672
    %v861 = vadd.f32 %v829, -0.28449672
    %v862 = vadd.f32 %v830, -0.28449672
    %v863 = vadd.f32 %v831, -0.28449672
    %v864 = vadd.f32 %v832, -0.28449672
    %v865 = vadd.f32 %v833, -0.28449672
    %v866 = vadd.f32 %v834, -0.28449672
    %v867 = vadd.f32 %v835, -0.28449672
    %v868 = vadd.f32 %v836, -0.28449672
    %v869 = vadd.f32 %v837, -0.28449672
    %v870 = vadd.f32 %v838, -0.28449672
    %v871 = vadd.f32 %v839, -0.28449672
    %v872 = vadd.f32 %v840, -0.28449672
    %v873 = vadd.f32 %v841, -0.28449672
    %v874 = vadd.f32 %v842, -0.28449672
    %v875 = vadd.f32 %v843, -0.28449672
    %v876 = vadd.f32 %v844, -0.28449672
    %v877 = vadd.f32 %v845, -0.28449672
    %v878 = vadd.f32 %v846, -0.28449672
    %v879 = vadd.f32 %v847, -0.28449672
    %v880 = vadd.f32 %v848, -0.28449672
    %v881 = vadd.f32 %v849, -0.28449672
    %v882 = vadd.f32 %v850, -0.28449672
    %v883 = vadd.f32 %v851, -0.28449672
    %v884 = vadd.f32 %v852, -0.28449672
    %v885 = vadd.f32 %v853, -0.28449672
    %v886 = vadd.f32 %v854, -0.28449672
    %v887 = vmul.f32 %v855, %v632
    %v888 = vmul.f32 %v856, %v634
    %v889 = vmul.f32 %v857, %v636
    %v890 = vmul.f32 %v858, %v638
    %v891 = vmul.f32 %v859, %v640
    %v892 = vmul.f32 %v860, %v642
    %v893 = vmul.f32 %v861, %v644
    %v894 = vmul.f32 %v862, %v646
    %v895 = vmul.f32 %v863, %v648
    %v896 = vmul.f32 %v864, %v650
    %v897 = vmul.f32 %v865, %v652
    %v898 = vmul.f32 %v866, %v654
    %v899 = vmul.f32 %v867, %v656
    %v900 = vmul.f32 %v868, %v658
    %v901 = vmul.f32 %v869, %v660
    %v902 = vmul.f32 %v870, %v662
    %v903 = vmul.f32 %v871, %v664
    %v904 = vmul.f32 %v872, %v666
    %v905 = vmul.f32 %v873, %v668
    %v906 = vmul.f32 %v874, %v670
    %v907 = vmul.f32 %v875, %v672
    %v908 = vmul.f32 %v876, %v674
    %v909 = vmul.f32 %v877, %v676
    %v910 = vmul.f32 %v878, %v678
    %v911 = vmul.f32 %v879, %v680
    %v912 = vmul.f32 %v880, %v682
    %v913 = vmul.f32 %v881, %v684
    %v914 = vmul.f32 %v882, %v686
    %v915 = vmul.f32 %v883, %v688
    %v916 = vmul.f32 %v884, %v690
    %v917 = vmul.f32 %v885, %v692
    %v918 = vmul.f32 %v886, %v694
    %v919 = vadd.f32 %v887, 0.2548296
    %v920 = vadd.f32 %v888, 0.2548296
    %v921 = vadd.f32 %v889, 0.2548296
    %v922 = vadd.f32 %v890, 0.2548296
    %v923 = vadd.f32 %v891, 0.2548296
    %v924 = vadd.f32 %v892, 0.2548296
    %v925 = vadd.f32 %v893, 0.2548296
    %v926 = vadd.f32 %v894, 0.2548296
    %v927 = vadd.f32 %v895, 0.2548296
    %v928 = vadd.f32 %v896, 0.2548296
    %v929 = vadd.f32 %v897, 0.2548296
    %v930 = vadd.f32 %v898, 0.2548296
    %v931 = vadd.f32 %v899, 0.2548296
    %v932 = vadd.f32 %v900, 0.2548296
    %v933 = vadd.f32 %v901, 0.2548296
    %v934 = vadd.f32 %v902, 0.2548296
    %v935 = vadd.f32 %v903, 0.2548296
    %v936 = vadd.f32 %v904, 0.2548296
    %v937 = vadd.f32 %v905, 0.2548296
    %v938 = vadd.f32 %v906, 0.2548296
    %v939 = vadd.f32 %v907, 0.2548296
    %v940 = vadd.f32 %v908, 0.2548296
    %v941 = vadd.f32 %v909, 0.2548296
    %v942 = vadd.f32 %v910, 0.2548296
    %v943 = vadd.f32 %v911, 0.2548296
    %v944 = vadd.f32 %v912, 0.2548296
    %v945 = vadd.f32 %v913, 0.2548296
    %v946 = vadd.f32 %v914, 0.2548296
    %v947 = vadd.f32 %v915, 0.2548296
    %v948 = vadd.f32 %v916, 0.2548296
    %v949 = vadd.f32 %v917, 0.2548296
    %v950 = vadd.f32 %v918, 0.2548296
    %v951 = vmul.f32 %v919, %v632
    %v952 = vmul.f32 %v920, %v634
    %v953 = vmul.f32 %v921, %v636
    %v954 = vmul.f32 %v922, %v638
    %v955 = vmul.f32 %v923, %v640
    %v956 = vmul.f32 %v924, %v642
    %v957 = vmul.f32 %v925, %v644
    %v958 = vmul.f32 %v926, %v646
    %v959 = vmul.f32 %v927, %v648
    %v960 = vmul.f32 %v928, %v650
    %v961 = vmul.f32 %v929, %v652
    %v962 = vmul.f32 %v930, %v654
    %v963 = vmul.f32 %v931, %v656
    %v964 = vmul.f32 %v932, %v658
    %v965 = vmul.f32 %v933, %v660
    %v966 = vmul.f32 %v934, %v662
    %v967 = vmul.f32 %v935, %v664
    %v968 = vmul.f32 %v936, %v666
    %v969 = vmul.f32 %v937, %v668
    %v970 = vmul.f32 %v938, %v670
    %v971 = vmul.f32 %v939, %v672
    %v972 = vmul.f32 %v940, %v674
    %v973 = vmul.f32 %v941, %v676
    %v974 = vmul.f32 %v942, %v678
    %v975 = vmul.f32 %v943, %v680
    %v976 = vmul.f32 %v944, %v682
    %v977 = vmul.f32 %v945, %v684
    %v978 = vmul.f32 %v946, %v686
    %v979 = vmul.f32 %v947, %v688
    %v980 = vmul.f32 %v948, %v690
    %v981 = vmul.f32 %v949, %v692
    %v982 = vmul.f32 %v950, %v694
    %v983 = vmul.f32 %v535, %v535
    %v984 = vmul.f32 %v536, %v536
    %v985 = vmul.f32 %v537, %v537
    %v986 = vmul.f32 %v538, %v538
    %v987 = vmul.f32 %v539, %v539
    %v988 = vmul.f32 %v540, %v540
    %v989 = vmul.f32 %v541, %v541
    %v990 = vmul.f32 %v542, %v542
    %v991 = vmul.f32 %v543, %v543
    %v992 = vmul.f32 %v544, %v544
    %v993 = vmul.f32 %v545, %v545
    %v994 = vmul.f32 %v546, %v546
    %v995 = vmul.f32 %v547, %v547
    %v996 = vmul.f32 %v548, %v548
    %v997 = vmul.f32 %v549, %v549
    %v998 = vmul.f32 %v550, %v550
    %v999 = vmul.f32 %v551, %v551
    %v1000 = vmul.f32 %v552, %v552
    %v1001 = vmul.f32 %v553, %v553
    %v1002 = vmul.f32 %v554, %v554
    %v1003 = vmul.f32 %v555, %v555
    %v1004 = vmul.f32 %v556, %v556
    %v1005 = vmul.f32 %v557, %v557
    %v1006 = vmul.f32 %v558, %v558
    %v1007 = vmul.f32 %v559, %v559
    %v1008 = vmul.f32 %v560, %v560
    %v1009 = vmul.f32 %v561, %v561
    %v1010 = vmul.f32 %v562, %v562
    %v1011 = vmul.f32 %v563, %v563
    %v1012 = vmul.f32 %v564, %v564
    %v1013 = vmul.f32 %v565, %v565
    %v1014 = vmul.f32 %v566, %v566
    %v1015 = vsub.f32 0.0, %v983
    %v1016 = vsub.f32 0.0, %v984
    %v1017 = vsub.f32 0.0, %v985
    %v1018 = vsub.f32 0.0, %v986
    %v1019 = vsub.f32 0.0, %v987
    %v1020 = vsub.f32 0.0, %v988
    %v1021 = vsub.f32 0.0, %v989
    %v1022 = vsub.f32 0.0, %v990
    %v1023 = vsub.f32 0.0, %v991
    %v1024 = vsub.f32 0.0, %v992
    %v1025 = vsub.f32 0.0, %v993
    %v1026 = vsub.f32 0.0, %v994
    %v1027 = vsub.f32 0.0, %v995
    %v1028 = vsub.f32 0.0, %v996
    %v1029 = vsub.f32 0.0, %v997
    %v1030 = vsub.f32 0.0, %v998
    %v1031 = vsub.f32 0.0, %v999
    %v1032 = vsub.f32 0.0, %v1000
    %v1033 = vsub.f32 0.0, %v1001
    %v1034 = vsub.f32 0.0, %v1002
    %v1035 = vsub.f32 0.0, %v1003
    %v1036 = vsub.f32 0.0, %v1004
    %v1037 = vsub.f32 0.0, %v1005
    %v1038 = vsub.f32 0.0, %v1006
    %v1039 = vsub.f32 0.0, %v1007
    %v1040 = vsub.f32 0.0, %v1008
    %v1041 = vsub.f32 0.0, %v1009
    %v1042 = vsub.f32 0.0, %v1010
    %v1043 = vsub.f32 0.0, %v1011
    %v1044 = vsub.f32 0.0, %v1012
    %v1045 = vsub.f32 0.0, %v1013
    %v1046 = vsub.f32 0.0, %v1014
    %v1047 = vmul.f32 %v1015, 1.442695
    %v1048 = vpow.pop %v1047
    %v1049 = vmul.f32 %v1016, 1.442695
    %v1050 = vpow.pop %v1049
    %v1051 = vmul.f32 %v1017, 1.442695
    %v1052 = vpow.pop %v1051
    %v1053 = vmul.f32 %v1018, 1.442695
    %v1054 = vpow.pop %v1053
    %v1055 = vmul.f32 %v1019, 1.442695
    %v1056 = vpow.pop %v1055
    %v1057 = vmul.f32 %v1020, 1.442695
    %v1058 = vpow.pop %v1057
    %v1059 = vmul.f32 %v1021, 1.442695
    %v1060 = vpow.pop %v1059
    %v1061 = vmul.f32 %v1022, 1.442695
    %v1062 = vpow.pop %v1061
    %v1063 = vmul.f32 %v1023, 1.442695
    %v1064 = vpow.pop %v1063
    %v1065 = vmul.f32 %v1024, 1.442695
    %v1066 = vpow.pop %v1065
    %v1067 = vmul.f32 %v1025, 1.442695
    %v1068 = vpow.pop %v1067
    %v1069 = vmul.f32 %v1026, 1.442695
    %v1070 = vpow.pop %v1069
    %v1071 = vmul.f32 %v1027, 1.442695
    %v1072 = vpow.pop %v1071
    %v1073 = vmul.f32 %v1028, 1.442695
    %v1074 = vpow.pop %v1073
    %v1075 = vmul.f32 %v1029, 1.442695
    %v1076 = vpow.pop %v1075
    %v1077 = vmul.f32 %v1030, 1.442695
    %v1078 = vpow.pop %v1077
    %v1079 = vmul.f32 %v1031, 1.442695
    %v1080 = vpow.pop %v1079
    %v1081 = vmul.f32 %v1032, 1.442695
    %v1082 = vpow.pop %v1081
    %v1083 = vmul.f32 %v1033, 1.442695
    %v1084 = vpow.pop %v1083
    %v1085 = vmul.f32 %v1034, 1.442695
    %v1086 = vpow.pop %v1085
    %v1087 = vmul.f32 %v1035, 1.442695
    %v1088 = vpow.pop %v1087
    %v1089 = vmul.f32 %v1036, 1.442695
    %v1090 = vpow.pop %v1089
    %v1091 = vmul.f32 %v1037, 1.442695
    %v1092 = vpow.pop %v1091
    %v1093 = vmul.f32 %v1038, 1.442695
    %v1094 = vpow.pop %v1093
    %v1095 = vmul.f32 %v1039, 1.442695
    %v1096 = vpow.pop %v1095
    %v1097 = vmul.f32 %v1040, 1.442695
    %v1098 = vpow.pop %v1097
    %v1099 = vmul.f32 %v1041, 1.442695
    %v1100 = vpow.pop %v1099
    %v1101 = vmul.f32 %v1042, 1.442695
    %v1102 = vpow.pop %v1101
    %v1103 = vmul.f32 %v1043, 1.442695
    %v1104 = vpow.pop %v1103
    %v1105 = vmul.f32 %v1044, 1.442695
    %v1106 = vpow.pop %v1105
    %v1107 = vmul.f32 %v1045, 1.442695
    %v1108 = vpow.pop %v1107
    %v1109 = vmul.f32 %v1046, 1.442695
    %v1110 = vpow.pop %v1109
    %v1111 = vmul.f32 %v951, %v1048
    %v1112 = vmul.f32 %v952, %v1050
    %v1113 = vmul.f32 %v953, %v1052
    %v1114 = vmul.f32 %v954, %v1054
    %v1115 = vmul.f32 %v955, %v1056
    %v1116 = vmul.f32 %v956, %v1058
    %v1117 = vmul.f32 %v957, %v1060
    %v1118 = vmul.f32 %v958, %v1062
    %v1119 = vmul.f32 %v959, %v1064
    %v1120 = vmul.f32 %v960, %v1066
    %v1121 = vmul.f32 %v961, %v1068
    %v1122 = vmul.f32 %v962, %v1070
    %v1123 = vmul.f32 %v963, %v1072
    %v1124 = vmul.f32 %v964, %v1074
    %v1125 = vmul.f32 %v965, %v1076
    %v1126 = vmul.f32 %v966, %v1078
    %v1127 = vmul.f32 %v967, %v1080
    %v1128 = vmul.f32 %v968, %v1082
    %v1129 = vmul.f32 %v969, %v1084
    %v1130 = vmul.f32 %v970, %v1086
    %v1131 = vmul.f32 %v971, %v1088
    %v1132 = vmul.f32 %v972, %v1090
    %v1133 = vmul.f32 %v973, %v1092
    %v1134 = vmul.f32 %v974, %v1094
    %v1135 = vmul.f32 %v975, %v1096
    %v1136 = vmul.f32 %v976, %v1098
    %v1137 = vmul.f32 %v977, %v1100
    %v1138 = vmul.f32 %v978, %v1102
    %v1139 = vmul.f32 %v979, %v1104
    %v1140 = vmul.f32 %v980, %v1106
    %v1141 = vmul.f32 %v981, %v1108
    %v1142 = vmul.f32 %v982, %v1110
    %v1143 = vsub.f32 1.0, %v1111
    %v1144 = vsub.f32 1.0, %v1112
    %v1145 = vsub.f32 1.0, %v1113
    %v1146 = vsub.f32 1.0, %v1114
    %v1147 = vsub.f32 1.0, %v1115
    %v1148 = vsub.f32 1.0, %v1116
    %v1149 = vsub.f32 1.0, %v1117
    %v1150 = vsub.f32 1.0, %v1118
    %v1151 = vsub.f32 1.0, %v1119
    %v1152 = vsub.f32 1.0, %v1120
    %v1153 = vsub.f32 1.0, %v1121
    %v1154 = vsub.f32 1.0, %v1122
    %v1155 = vsub.f32 1.0, %v1123
    %v1156 = vsub.f32 1.0, %v1124
    %v1157 = vsub.f32 1.0, %v1125
    %v1158 = vsub.f32 1.0, %v1126
    %v1159 = vsub.f32 1.0, %v1127
    %v1160 = vsub.f32 1.0, %v1128
    %v1161 = vsub.f32 1.0, %v1129
    %v1162 = vsub.f32 1.0, %v1130
    %v1163 = vsub.f32 1.0, %v1131
    %v1164 = vsub.f32 1.0, %v1132
    %v1165 = vsub.f32 1.0, %v1133
    %v1166 = vsub.f32 1.0, %v1134
    %v1167 = vsub.f32 1.0, %v1135
    %v1168 = vsub.f32 1.0, %v1136
    %v1169 = vsub.f32 1.0, %v1137
    %v1170 = vsub.f32 1.0, %v1138
    %v1171 = vsub.f32 1.0, %v1139
    %v1172 = vsub.f32 1.0, %v1140
    %v1173 = vsub.f32 1.0, %v1141
    %v1174 = vsub.f32 1.0, %v1142
    %vm1175 = vcmp.lt.f32.partialorder %v503, 0.0
    %vm1176 = vcmp.lt.f32.partialorder %v504, 0.0
    %vm1177 = vcmp.lt.f32.partialorder %v505, 0.0
    %vm1178 = vcmp.lt.f32.partialorder %v506, 0.0
    %vm1179 = vcmp.lt.f32.partialorder %v507, 0.0
    %vm1180 = vcmp.lt.f32.partialorder %v508, 0.0
    %vm1181 = vcmp.lt.f32.partialorder %v509, 0.0
    %vm1182 = vcmp.lt.f32.partialorder %v510, 0.0
    %vm1183 = vcmp.lt.f32.partialorder %v511, 0.0
    %vm1184 = vcmp.lt.f32.partialorder %v512, 0.0
    %vm1185 = vcmp.lt.f32.partialorder %v513, 0.0
    %vm1186 = vcmp.lt.f32.partialorder %v514, 0.0
    %vm1187 = vcmp.lt.f32.partialorder %v515, 0.0
    %vm1188 = vcmp.lt.f32.partialorder %v516, 0.0
    %vm1189 = vcmp.lt.f32.partialorder %v517, 0.0
    %vm1190 = vcmp.lt.f32.partialorder %v518, 0.0
    %vm1191 = vcmp.lt.f32.partialorder %v519, 0.0
    %vm1192 = vcmp.lt.f32.partialorder %v520, 0.0
    %vm1193 = vcmp.lt.f32.partialorder %v521, 0.0
    %vm1194 = vcmp.lt.f32.partialorder %v522, 0.0
    %vm1195 = vcmp.lt.f32.partialorder %v523, 0.0
    %vm1196 = vcmp.lt.f32.partialorder %v524, 0.0
    %vm1197 = vcmp.lt.f32.partialorder %v525, 0.0
    %vm1198 = vcmp.lt.f32.partialorder %v526, 0.0
    %vm1199 = vcmp.lt.f32.partialorder %v527, 0.0
    %vm1200 = vcmp.lt.f32.partialorder %v528, 0.0
    %vm1201 = vcmp.lt.f32.partialorder %v529, 0.0
    %vm1202 = vcmp.lt.f32.partialorder %v530, 0.0
    %vm1203 = vcmp.lt.f32.partialorder %v531, 0.0
    %vm1204 = vcmp.lt.f32.partialorder %v532, 0.0
    %vm1205 = vcmp.lt.f32.partialorder %v533, 0.0
    %vm1206 = vcmp.lt.f32.partialorder %v534, 0.0
    %v1207 = vsub.f32 0.0, %v1143
    %v1208 = vsub.f32 0.0, %v1144
    %v1209 = vsub.f32 0.0, %v1145
    %v1210 = vsub.f32 0.0, %v1146
    %v1211 = vsub.f32 0.0, %v1147
    %v1212 = vsub.f32 0.0, %v1148
    %v1213 = vsub.f32 0.0, %v1149
    %v1214 = vsub.f32 0.0, %v1150
    %v1215 = vsub.f32 0.0, %v1151
    %v1216 = vsub.f32 0.0, %v1152
    %v1217 = vsub.f32 0.0, %v1153
    %v1218 = vsub.f32 0.0, %v1154
    %v1219 = vsub.f32 0.0, %v1155
    %v1220 = vsub.f32 0.0, %v1156
    %v1221 = vsub.f32 0.0, %v1157
    %v1222 = vsub.f32 0.0, %v1158
    %v1223 = vsub.f32 0.0, %v1159
    %v1224 = vsub.f32 0.0, %v1160
    %v1225 = vsub.f32 0.0, %v1161
    %v1226 = vsub.f32 0.0, %v1162
    %v1227 = vsub.f32 0.0, %v1163
    %v1228 = vsub.f32 0.0, %v1164
    %v1229 = vsub.f32 0.0, %v1165
    %v1230 = vsub.f32 0.0, %v1166
    %v1231 = vsub.f32 0.0, %v1167
    %v1232 = vsub.f32 0.0, %v1168
    %v1233 = vsub.f32 0.0, %v1169
    %v1234 = vsub.f32 0.0, %v1170
    %v1235 = vsub.f32 0.0, %v1171
    %v1236 = vsub.f32 0.0, %v1172
    %v1237 = vsub.f32 0.0, %v1173
    %v1238 = vsub.f32 0.0, %v1174
    %v1239 = vsel %vm1175, %v1207, %v1143
    %v1240 = vsel %vm1176, %v1208, %v1144
    %v1241 = vsel %vm1177, %v1209, %v1145
    %v1242 = vsel %vm1178, %v1210, %v1146
    %v1243 = vsel %vm1179, %v1211, %v1147
    %v1244 = vsel %vm1180, %v1212, %v1148
    %v1245 = vsel %vm1181, %v1213, %v1149
    %v1246 = vsel %vm1182, %v1214, %v1150
    %v1247 = vsel %vm1183, %v1215, %v1151
    %v1248 = vsel %vm1184, %v1216, %v1152
    %v1249 = vsel %vm1185, %v1217, %v1153
    %v1250 = vsel %vm1186, %v1218, %v1154
    %v1251 = vsel %vm1187, %v1219, %v1155
    %v1252 = vsel %vm1188, %v1220, %v1156
    %v1253 = vsel %vm1189, %v1221, %v1157
    %v1254 = vsel %vm1190, %v1222, %v1158
    %v1255 = vsel %vm1191, %v1223, %v1159
    %v1256 = vsel %vm1192, %v1224, %v1160
    %v1257 = vsel %vm1193, %v1225, %v1161
    %v1258 = vsel %vm1194, %v1226, %v1162
    %v1259 = vsel %vm1195, %v1227, %v1163
    %v1260 = vsel %vm1196, %v1228, %v1164
    %v1261 = vsel %vm1197, %v1229, %v1165
    %v1262 = vsel %vm1198, %v1230, %v1166
    %v1263 = vsel %vm1199, %v1231, %v1167
    %v1264 = vsel %vm1200, %v1232, %v1168
    %v1265 = vsel %vm1201, %v1233, %v1169
    %v1266 = vsel %vm1202, %v1234, %v1170
    %v1267 = vsel %vm1203, %v1235, %v1171
    %v1268 = vsel %vm1204, %v1236, %v1172
    %v1269 = vsel %vm1205, %v1237, %v1173
    %v1270 = vsel %vm1206, %v1238, %v1174
    %v1271 = vadd.f32 %v1239, 1.0
    %v1272 = vadd.f32 %v1240, 1.0
    %v1273 = vadd.f32 %v1241, 1.0
    %v1274 = vadd.f32 %v1242, 1.0
    %v1275 = vadd.f32 %v1243, 1.0
    %v1276 = vadd.f32 %v1244, 1.0
    %v1277 = vadd.f32 %v1245, 1.0
    %v1278 = vadd.f32 %v1246, 1.0
    %v1279 = vadd.f32 %v1247, 1.0
    %v1280 = vadd.f32 %v1248, 1.0
    %v1281 = vadd.f32 %v1249, 1.0
    %v1282 = vadd.f32 %v1250, 1.0
    %v1283 = vadd.f32 %v1251, 1.0
    %v1284 = vadd.f32 %v1252, 1.0
    %v1285 = vadd.f32 %v1253, 1.0
    %v1286 = vadd.f32 %v1254, 1.0
    %v1287 = vadd.f32 %v1255, 1.0
    %v1288 = vadd.f32 %v1256, 1.0
    %v1289 = vadd.f32 %v1257, 1.0
    %v1290 = vadd.f32 %v1258, 1.0
    %v1291 = vadd.f32 %v1259, 1.0
    %v1292 = vadd.f32 %v1260, 1.0
    %v1293 = vadd.f32 %v1261, 1.0
    %v1294 = vadd.f32 %v1262, 1.0
    %v1295 = vadd.f32 %v1263, 1.0
    %v1296 = vadd.f32 %v1264, 1.0
    %v1297 = vadd.f32 %v1265, 1.0
    %v1298 = vadd.f32 %v1266, 1.0
    %v1299 = vadd.f32 %v1267, 1.0
    %v1300 = vadd.f32 %v1268, 1.0
    %v1301 = vadd.f32 %v1269, 1.0
    %v1302 = vadd.f32 %v1270, 1.0
    %v1303 = vmul.f32 %v471, %v1271
    %v1304 = vmul.f32 %v472, %v1272
    %v1305 = vmul.f32 %v473, %v1273
    %v1306 = vmul.f32 %v474, %v1274
    %v1307 = vmul.f32 %v475, %v1275
    %v1308 = vmul.f32 %v476, %v1276
    %v1309 = vmul.f32 %v477, %v1277
    %v1310 = vmul.f32 %v478, %v1278
    %v1311 = vmul.f32 %v479, %v1279
    %v1312 = vmul.f32 %v480, %v1280
    %v1313 = vmul.f32 %v481, %v1281
    %v1314 = vmul.f32 %v482, %v1282
    %v1315 = vmul.f32 %v483, %v1283
    %v1316 = vmul.f32 %v484, %v1284
    %v1317 = vmul.f32 %v485, %v1285
    %v1318 = vmul.f32 %v486, %v1286
    %v1319 = vmul.f32 %v487, %v1287
    %v1320 = vmul.f32 %v488, %v1288
    %v1321 = vmul.f32 %v489, %v1289
    %v1322 = vmul.f32 %v490, %v1290
    %v1323 = vmul.f32 %v491, %v1291
    %v1324 = vmul.f32 %v492, %v1292
    %v1325 = vmul.f32 %v493, %v1293
    %v1326 = vmul.f32 %v494, %v1294
    %v1327 = vmul.f32 %v495, %v1295
    %v1328 = vmul.f32 %v496, %v1296
    %v1329 = vmul.f32 %v497, %v1297
    %v1330 = vmul.f32 %v498, %v1298
    %v1331 = vmul.f32 %v499, %v1299
    %v1332 = vmul.f32 %v500, %v1300
    %v1333 = vmul.f32 %v501, %v1301
    %v1334 = vmul.f32 %v502, %v1302
    %v1335 = vld [vmem:[%s5] sm:$0xff]
    %v1336 = vld [vmem:[%s5 + $0x8] sm:$0xff]
    %v1337 = vld [vmem:[%s5 + $0x10] sm:$0xff]
    %v1338 = vld [vmem:[%s5 + $0x18] sm:$0xff]
    %v1339 = vld [vmem:[%s5 + $0x20] sm:$0xff]
    %v1340 = vld [vmem:[%s5 + $0x28] sm:$0xff]
    %v1341 = vld [vmem:[%s5 + $0x30] sm:$0xff]
    %v1342 = vld [vmem:[%s5 + $0x38] sm:$0xff]
    %v1343 = vld [vmem:[%s5 + $0x40] sm:$0xff]
    %v1344 = vld [vmem:[%s5 + $0x48] sm:$0xff]
    %v1345 = vld [vmem:[%s5 + $0x50] sm:$0xff]
    %v1346 = vld [vmem:[%s5 + $0x58] sm:$0xff]
    %v1347 = vld [vmem:[%s5 + $0x60] sm:$0xff]
    %v1348 = vld [vmem:[%s5 + $0x68] sm:$0xff]
    %v1349 = vld [vmem:[%s5 + $0x70] sm:$0xff]
    %v1350 = vld [vmem:[%s5 + $0x78] sm:$0xff]
    %v1351 = vld [vmem:[%s5 + $0x80] sm:$0xff]
    %v1352 = vld [vmem:[%s5 + $0x88] sm:$0xff]
    %v1353 = vld [vmem:[%s5 + $0x90] sm:$0xff]
    %v1354 = vld [vmem:[%s5 + $0x98] sm:$0xff]
    %v1355 = vld [vmem:[%s5 + $0xa0] sm:$0xff]
    %v1356 = vld [vmem:[%s5 + $0xa8] sm:$0xff]
    %v1357 = vld [vmem:[%s5 + $0xb0] sm:$0xff]
    %v1358 = vld [vmem:[%s5 + $0xb8] sm:$0xff]
    %v1359 = vld [vmem:[%s5 + $0xc0] sm:$0xff]
    %v1360 = vld [vmem:[%s5 + $0xc8] sm:$0xff]
    %v1361 = vld [vmem:[%s5 + $0xd0] sm:$0xff]
    %v1362 = vld [vmem:[%s5 + $0xd8] sm:$0xff]
    %v1363 = vld [vmem:[%s5 + $0xe0] sm:$0xff]
    %v1364 = vld [vmem:[%s5 + $0xe8] sm:$0xff]
    %v1365 = vld [vmem:[%s5 + $0xf0] sm:$0xff]
    %v1366 = vld [vmem:[%s5 + $0xf8] sm:$0xff]
    %v1367 = vld [vmem:[%s6] sm:$0x1]
    %v1369 = vlaneseq
    %v1370 = vshrl.u32 %v1369, 7
    %v1371 = vsub.s32 0, %v1370
    %v1372 = vrot.slane %v1367, %v1371
    %1374 = vmatprep.subr.mxu0 0.0
    %1375 = vmatpush1.msra.mxu0 %v1350
    %1376 = vmatprep.subr.mxu0 0.0
    %1377 = vmatpush1.msra.mxu0 %v1349
    %1378 = vmatprep.subr.mxu0 0.0
    %1379 = vmatpush1.msra.mxu0 %v1348
    %1380 = vmatprep.subr.mxu0 0.0
    %1381 = vmatpush1.msra.mxu0 %v1347
    %1382 = vmatprep.subr.mxu0 0.0
    %1383 = vmatpush1.msra.mxu0 %v1346
    %1384 = vmatprep.subr.mxu0 0.0
    %1385 = vmatpush1.msra.mxu0 %v1345
    %1386 = vmatprep.subr.mxu0 0.0
    %1387 = vmatpush1.msra.mxu0 %v1344
    %1388 = vmatprep.subr.mxu0 0.0
    %1389 = vmatpush1.msra.mxu0 %v1343
    %1390 = vmatprep.subr.mxu0 0.0
    %1391 = vmatpush1.msra.mxu0 %v1342
    %1392 = vmatprep.subr.mxu0 0.0
    %1393 = vmatpush1.msra.mxu0 %v1341
    %1394 = vmatprep.subr.mxu0 0.0
    %1395 = vmatpush1.msra.mxu0 %v1340
    %1396 = vmatprep.subr.mxu0 0.0
    %1397 = vmatpush1.msra.mxu0 %v1339
    %1398 = vmatprep.subr.mxu0 0.0
    %1399 = vmatpush1.msra.mxu0 %v1338
    %1400 = vmatprep.subr.mxu0 0.0
    %1401 = vmatpush1.msra.mxu0 %v1337
    %1402 = vmatprep.subr.mxu0 0.0
    %1403 = vmatpush1.msra.mxu0 %v1336
    %1404 = vmatprep.subr.mxu0 0.0
    %1405 = vmatpush1.msra.mxu0 %v1335
    %1406 = vmatprep.subr.mxu0 0.0
    %1407 = vmatpush2.msra.mxu0 %v1366
    %1408 = vmatprep.subr.mxu0 0.0
    %1409 = vmatpush2.msra.mxu0 %v1365
    %1410 = vmatprep.subr.mxu0 0.0
    %1411 = vmatpush2.msra.mxu0 %v1364
    %1412 = vmatprep.subr.mxu0 0.0
    %1413 = vmatpush2.msra.mxu0 %v1363
    %1414 = vmatprep.subr.mxu0 0.0
    %1415 = vmatpush2.msra.mxu0 %v1362
    %1416 = vmatprep.subr.mxu0 0.0
    %1417 = vmatpush2.msra.mxu0 %v1361
    %1418 = vmatprep.subr.mxu0 0.0
    %1419 = vmatpush2.msra.mxu0 %v1360
    %1420 = vmatprep.subr.mxu0 0.0
    %1421 = vmatpush2.msra.mxu0 %v1359
    %1422 = vmatprep.subr.mxu0 0.0
    %1423 = vmatpush2.msra.mxu0 %v1358
    %1424 = vmatprep.subr.mxu0 0.0
    %1425 = vmatpush2.msra.mxu0 %v1357
    %1426 = vmatprep.subr.mxu0 0.0
    %1427 = vmatpush2.msra.mxu0 %v1356
    %1428 = vmatprep.subr.mxu0 0.0
    %1429 = vmatpush2.msra.mxu0 %v1355
    %1430 = vmatprep.subr.mxu0 0.0
    %1431 = vmatpush2.msra.mxu0 %v1354
    %1432 = vmatprep.subr.mxu0 0.0
    %1433 = vmatpush2.msra.mxu0 %v1353
    %1434 = vmatprep.subr.mxu0 0.0
    %1435 = vmatpush2.msra.mxu0 %v1352
    %1436 = vmatprep.subr.mxu0 0.0
    %1437 = vmatpush2.msra.mxu0 %v1351
    %1438 = vmatprep.mubr.f32.mxu0 %v1304
    %1439 = vmatmul.mubr.f32.gmra.mxu0 %v1303
    %v1440 = vpop.f32.mrf.mxu0
    %v1441 = vadd.f32 %v1372, %v1440
    %v1442 = vpop.f32.mrf.mxu0
    %1443 = vmatprep.mubr.f32.mxu0 %v1306
    %1444 = vmatmul.mubr.f32.gmra.mxu0 %v1305
    %v1445 = vpop.f32.mrf.mxu0
    %v1446 = vadd.f32 %v1372, %v1445
    %v1447 = vpop.f32.mrf.mxu0
    %1448 = vmatprep.mubr.f32.mxu0 %v1308
    %1449 = vmatmul.mubr.f32.gmra.mxu0 %v1307
    %v1450 = vpop.f32.mrf.mxu0
    %v1451 = vadd.f32 %v1372, %v1450
    %v1452 = vpop.f32.mrf.mxu0
    %1453 = vmatprep.mubr.f32.mxu0 %v1310
    %1454 = vmatmul.mubr.f32.gmra.mxu0 %v1309
    %v1455 = vpop.f32.mrf.mxu0
    %v1456 = vadd.f32 %v1372, %v1455
    %v1457 = vpop.f32.mrf.mxu0
    %1458 = vmatprep.mubr.f32.mxu0 %v1312
    %1459 = vmatmul.mubr.f32.gmra.mxu0 %v1311
    %v1460 = vpop.f32.mrf.mxu0
    %v1461 = vadd.f32 %v1372, %v1460
    %v1462 = vpop.f32.mrf.mxu0
    %1463 = vmatprep.mubr.f32.mxu0 %v1314
    %1464 = vmatmul.mubr.f32.gmra.mxu0 %v1313
    %v1465 = vpop.f32.mrf.mxu0
    %v1466 = vadd.f32 %v1372, %v1465
    %v1467 = vpop.f32.mrf.mxu0
    %1468 = vmatprep.mubr.f32.mxu0 %v1316
    %1469 = vmatmul.mubr.f32.gmra.mxu0 %v1315
    %v1470 = vpop.f32.mrf.mxu0
    %v1471 = vadd.f32 %v1372, %v1470
    %v1472 = vpop.f32.mrf.mxu0
    %1473 = vmatprep.mubr.f32.mxu0 %v1318
    %1474 = vmatmul.mubr.f32.gmra.mxu0 %v1317
    %v1475 = vpop.f32.mrf.mxu0
    %v1476 = vadd.f32 %v1372, %v1475
    %v1477 = vpop.f32.mrf.mxu0
    %1478 = vmatprep.mubr.f32.mxu0 %v1320
    %1479 = vmatmul.mubr.f32.gmra.mxu0 %v1319
    %v1480 = vpop.f32.mrf.mxu0
    %v1481 = vadd.f32 %v1372, %v1480
    %v1482 = vpop.f32.mrf.mxu0
    %1483 = vmatprep.mubr.f32.mxu0 %v1322
    %1484 = vmatmul.mubr.f32.gmra.mxu0 %v1321
    %v1485 = vpop.f32.mrf.mxu0
    %v1486 = vadd.f32 %v1372, %v1485
    %v1487 = vpop.f32.mrf.mxu0
    %1488 = vmatprep.mubr.f32.mxu0 %v1324
    %1489 = vmatmul.mubr.f32.gmra.mxu0 %v1323
    %v1490 = vpop.f32.mrf.mxu0
    %v1491 = vadd.f32 %v1372, %v1490
    %v1492 = vpop.f32.mrf.mxu0
    %1493 = vmatprep.mubr.f32.mxu0 %v1326
    %1494 = vmatmul.mubr.f32.gmra.mxu0 %v1325
    %v1495 = vpop.f32.mrf.mxu0
    %v1496 = vadd.f32 %v1372, %v1495
    %v1497 = vpop.f32.mrf.mxu0
    %1498 = vmatprep.mubr.f32.mxu0 %v1328
    %1499 = vmatmul.mubr.f32.gmra.mxu0 %v1327
    %v1500 = vpop.f32.mrf.mxu0
    %v1501 = vadd.f32 %v1372, %v1500
    %v1502 = vpop.f32.mrf.mxu0
    %1503 = vmatprep.mubr.f32.mxu0 %v1330
    %1504 = vmatmul.mubr.f32.gmra.mxu0 %v1329
    %v1505 = vpop.f32.mrf.mxu0
    %v1506 = vadd.f32 %v1372, %v1505
    %v1507 = vpop.f32.mrf.mxu0
    %1508 = vmatprep.mubr.f32.mxu0 %v1332
    %1509 = vmatmul.mubr.f32.gmra.mxu0 %v1331
    %v1510 = vpop.f32.mrf.mxu0
    %v1511 = vadd.f32 %v1372, %v1510
    %v1512 = vpop.f32.mrf.mxu0
    %1513 = vmatprep.mubr.f32.mxu0 %v1334
    %1514 = vmatmul.mubr.f32.gmra.mxu0 %v1333
    %v1515 = vpop.f32.mrf.mxu0
    %v1516 = vadd.f32 %v1372, %v1515
    %v1517 = vpop.f32.mrf.mxu0
    %1518 = vdwg.mxu0
    %v1519 = vadd.f32 %v27, %v1441
    %v1520 = vadd.f32 %v28, %v1446
    %v1521 = vadd.f32 %v29, %v1451
    %v1522 = vadd.f32 %v30, %v1456
    %v1523 = vadd.f32 %v31, %v1461
    %v1524 = vadd.f32 %v32, %v1466
    %v1525 = vadd.f32 %v33, %v1471
    %v1526 = vadd.f32 %v34, %v1476
    %v1527 = vadd.f32 %v35, %v1481
    %v1528 = vadd.f32 %v36, %v1486
    %v1529 = vadd.f32 %v37, %v1491
    %v1530 = vadd.f32 %v38, %v1496
    %v1531 = vadd.f32 %v39, %v1501
    %v1532 = vadd.f32 %v40, %v1506
    %v1533 = vadd.f32 %v41, %v1511
    %v1534 = vadd.f32 %v42, %v1516
    %1535 = vst [vmem:[#allocation2] sm:$0xff] %v1519
    %1536 = vst [vmem:[#allocation2 + $0x8] sm:$0xff] %v1520
    %1537 = vst [vmem:[#allocation2 + $0x10] sm:$0xff] %v1521
    %1538 = vst [vmem:[#allocation2 + $0x18] sm:$0xff] %v1522
    %1539 = vst [vmem:[#allocation2 + $0x20] sm:$0xff] %v1523
    %1540 = vst [vmem:[#allocation2 + $0x28] sm:$0xff] %v1524
    %1541 = vst [vmem:[#allocation2 + $0x30] sm:$0xff] %v1525
    %1542 = vst [vmem:[#allocation2 + $0x38] sm:$0xff] %v1526
    %1543 = vst [vmem:[#allocation2 + $0x40] sm:$0xff] %v1527
    %1544 = vst [vmem:[#allocation2 + $0x48] sm:$0xff] %v1528
    %1545 = vst [vmem:[#allocation2 + $0x50] sm:$0xff] %v1529
    %1546 = vst [vmem:[#allocation2 + $0x58] sm:$0xff] %v1530
    %1547 = vst [vmem:[#allocation2 + $0x60] sm:$0xff] %v1531
    %1548 = vst [vmem:[#allocation2 + $0x68] sm:$0xff] %v1532
    %1549 = vst [vmem:[#allocation2 + $0x70] sm:$0xff] %v1533
    %1550 = vst [vmem:[#allocation2 + $0x78] sm:$0xff] %v1534
    // Predicated region
    $region30: #{mixed_transformer_cell.3} parent=1 // pred_check
      _
    $region31: #{mixed_transformer_cell.3} parent=1 // pred_check_branch
      %1552 = sbr.rel (0) target = $region33
    $region32: #{mixed_transformer_cell.3} parent=1 // pred_region
      %s1554 = ssub.s32 2048, 2048
      %1555 = vsyncadd [#allocation3], %s1554
      %s1556 = sshll.u32 [#allocation2], 4
      %s1557 = int_to_ptr.vmem [resolvable:$true] %s1556
      %1562 = dma.vmem_to_hbm [thread:$0]  %s1557, 2048, %s7, [#allocation3], 128, 128, 8
    $region33: #{mixed_transformer_cell.3} parent=1 // pred_fallthru
      _
    // Predicated region
    $region34: #{mixed_transformer_cell.3} parent=1 // pred_check
      _
    $region35: #{mixed_transformer_cell.3} parent=1 // pred_check_branch
      %1564 = sbr.rel (0) target = $region37
    $region36: #{mixed_transformer_cell.3} parent=1 // pred_region
      %1565 = dma.done [#allocation3], 2048
    $region37: #{mixed_transformer_cell.3} parent=1 // pred_fallthru
      _
    %1566 = vsyncpa [#allocation3], 1

// kernel: mixed_transformer_cell.2
$region0: #{mixed_transformer_cell.2}
  #allocation0 [shape = 'u32[]', space=smem, size = 0x4, offset = 0x4, fixed_abs, tag = 'smem constant byte address 0x4 - core index']
  #allocation1 [shape = 'u32[144,128]{1,0:T(1,128)}', space=vmem, size = 0x12000, scoped, tag = 'internal scratch']
  %s0 = inlined_call_operand.hbm [shape: f32[2,64,128], index: 0, kind: input, shape index: {}]
  %s1 = inlined_call_operand.vmem [shape: f32[1,128], index: 1, kind: input, shape index: {}]
  %s2 = inlined_call_operand.vmem [shape: f32[1,128], index: 2, kind: input, shape index: {}]
  %s3 = inlined_call_operand.hbm [shape: f32[128,128], index: 3, kind: input, shape index: {}]
  %s4 = inlined_call_operand.hbm [shape: f32[128,384], index: 4, kind: input, shape index: {}]
  %s5 = inlined_call_operand.vmem [shape: f32[1,384], index: 5, kind: input, shape index: {}]
  %s6 = inlined_call_operand.hbm [shape: f32[128,128], index: 6, kind: input, shape index: {}]
  %s7 = inlined_call_operand.vmem [shape: f32[1,128], index: 7, kind: input, shape index: {}]
  %s8 = inlined_call_operand.vmem [shape: f32[2,64,128], index: 8, kind: output, shape index: {}]
  %s9 = sld [smem:[#allocation0]]
  $region58: #{mixed_transformer_cell.2} parent=0
    _
  %s11 = ssub.s32 1, %s9
  %s12 = scalar_select 0, %s11, %s9
  $region1: #{mixed_transformer_cell.2} parent=0
    #allocation2 [shape = 'u8[65536]{0}', space=vmem, size = 0x10000, scoped, tag = 'input window, operand 0, single buffered']
    #allocation3 [shape = 's32[1]{0}', space=sflag, size = 0x4, scoped, tag = 'scoped memory for mixed_transformer_cell.2']
    #allocation4 [shape = 'u8[65536]{0}', space=vmem, size = 0x10000, scoped, tag = 'input window, operand 3, single buffered']
    #allocation5 [shape = 's32[1]{0}', space=sflag, size = 0x4, scoped, tag = 'scoped memory for mixed_transformer_cell.2']
    #allocation6 [shape = 'u8[196608]{0}', space=vmem, size = 0x30000, scoped, tag = 'input window, operand 4, single buffered']
    #allocation7 [shape = 'u8[65536]{0}', space=vmem, size = 0x10000, scoped, tag = 'input window, operand 6, single buffered']
    #allocation8 [shape = 's32[1]{0}', space=sflag, size = 0x4, scoped, tag = 'scoped memory for mixed_transformer_cell.2']
    %13 = vsyncpa [#allocation3], 0
    %14 = vsyncpa [#allocation5], 0
    %15 = vsyncpa [#allocation8], 0
    // Predicated region
    $region2: #{mixed_transformer_cell.2} parent=1 // pred_check
      _
    $region3: #{mixed_transformer_cell.2} parent=1 // pred_check_branch
      %17 = sbr.rel (0) target = $region5
    $region4: #{mixed_transformer_cell.2} parent=1 // pred_region
      %s19 = ssub.s32 2048, 2048
      %20 = vsyncadd [#allocation3], %s19
      %s21 = sshll.u32 [#allocation2], 4
      %s22 = int_to_ptr.vmem [resolvable:$true] %s21
      %27 = dma.hbm_to_vmem [thread:$0]  %s0, 2048, %s22, [#allocation3], 128, 128, 8
    $region5: #{mixed_transformer_cell.2} parent=1 // pred_fallthru
      _
    // Predicated region
    $region6: #{mixed_transformer_cell.2} parent=1 // pred_check
      _
    $region7: #{mixed_transformer_cell.2} parent=1 // pred_check_branch
      %29 = sbr.rel (0) target = $region9
    $region8: #{mixed_transformer_cell.2} parent=1 // pred_region
      _
    $region9: #{mixed_transformer_cell.2} parent=1 // pred_fallthru
      _
    // Predicated region
    $region10: #{mixed_transformer_cell.2} parent=1 // pred_check
      _
    $region11: #{mixed_transformer_cell.2} parent=1 // pred_check_branch
      %31 = sbr.rel (0) target = $region13
    $region12: #{mixed_transformer_cell.2} parent=1 // pred_region
      _
    $region13: #{mixed_transformer_cell.2} parent=1 // pred_fallthru
      _
    // Predicated region
    $region14: #{mixed_transformer_cell.2} parent=1 // pred_check
      _
    $region15: #{mixed_transformer_cell.2} parent=1 // pred_check_branch
      %33 = sbr.rel (0) target = $region17
    $region16: #{mixed_transformer_cell.2} parent=1 // pred_region
      %s35 = ssub.s32 2048, 2048
      %36 = vsyncadd [#allocation5], %s35
      %s37 = sshll.u32 [#allocation4], 4
      %s38 = int_to_ptr.vmem [resolvable:$true] %s37
      %43 = dma.hbm_to_vmem [thread:$0]  %s3, 2048, %s38, [#allocation5], 128, 128, 8
    $region17: #{mixed_transformer_cell.2} parent=1 // pred_fallthru
      _
    // Predicated region
    $region18: #{mixed_transformer_cell.2} parent=1 // pred_check
      _
    $region19: #{mixed_transformer_cell.2} parent=1 // pred_check_branch
      %45 = sbr.rel (0) target = $region21
    $region20: #{mixed_transformer_cell.2} parent=1 // pred_region
      %s47 = ssub.s32 6144, 6144
      %48 = vsyncadd [#allocation5], %s47
      %s49 = sshll.u32 [#allocation6], 4
      %s50 = int_to_ptr.vmem [resolvable:$true] %s49
      %55 = dma.hbm_to_vmem [thread:$0]  %s4, 6144, %s50, [#allocation5], 384, 384, 24
    $region21: #{mixed_transformer_cell.2} parent=1 // pred_fallthru
      _
    // Predicated region
    $region22: #{mixed_transformer_cell.2} parent=1 // pred_check
      _
    $region23: #{mixed_transformer_cell.2} parent=1 // pred_check_branch
      %57 = sbr.rel (0) target = $region25
    $region24: #{mixed_transformer_cell.2} parent=1 // pred_region
      _
    $region25: #{mixed_transformer_cell.2} parent=1 // pred_fallthru
      _
    // Predicated region
    $region26: #{mixed_transformer_cell.2} parent=1 // pred_check
      _
    $region27: #{mixed_transformer_cell.2} parent=1 // pred_check_branch
      %59 = sbr.rel (0) target = $region29
    $region28: #{mixed_transformer_cell.2} parent=1 // pred_region
      %s61 = ssub.s32 2048, 2048
      %62 = vsyncadd [#allocation8], %s61
      %s63 = sshll.u32 [#allocation7], 4
      %s64 = int_to_ptr.vmem [resolvable:$true] %s63
      %69 = dma.hbm_to_vmem [thread:$0]  %s6, 2048, %s64, [#allocation8], 128, 128, 8
    $region29: #{mixed_transformer_cell.2} parent=1 // pred_fallthru
      _
    // Predicated region
    $region30: #{mixed_transformer_cell.2} parent=1 // pred_check
      _
    $region31: #{mixed_transformer_cell.2} parent=1 // pred_check_branch
      %71 = sbr.rel (0) target = $region33
    $region32: #{mixed_transformer_cell.2} parent=1 // pred_region
      _
    $region33: #{mixed_transformer_cell.2} parent=1 // pred_fallthru
      _
    // Predicated region
    $region34: #{mixed_transformer_cell.2} parent=1 // pred_check
      _
    $region35: #{mixed_transformer_cell.2} parent=1 // pred_check_branch
      %73 = sbr.rel (0) target = $region37
    $region36: #{mixed_transformer_cell.2} parent=1 // pred_region
      %74 = dma.done [#allocation3], 2048
    $region37: #{mixed_transformer_cell.2} parent=1 // pred_fallthru
      _
    // Predicated region
    $region38: #{mixed_transformer_cell.2} parent=1 // pred_check
      _
    $region39: #{mixed_transformer_cell.2} parent=1 // pred_check_branch
      %76 = sbr.rel (0) target = $region41
    $region40: #{mixed_transformer_cell.2} parent=1 // pred_region
      %77 = dma.done [#allocation5], 2048
    $region41: #{mixed_transformer_cell.2} parent=1 // pred_fallthru
      _
    // Predicated region
    $region42: #{mixed_transformer_cell.2} parent=1 // pred_check
      _
    $region43: #{mixed_transformer_cell.2} parent=1 // pred_check_branch
      %79 = sbr.rel (0) target = $region45
    $region44: #{mixed_transformer_cell.2} parent=1 // pred_region
      %80 = dma.done [#allocation5], 6144
    $region45: #{mixed_transformer_cell.2} parent=1 // pred_fallthru
      _
    // Predicated region
    $region46: #{mixed_transformer_cell.2} parent=1 // pred_check
      _
    $region47: #{mixed_transformer_cell.2} parent=1 // pred_check_branch
      %82 = sbr.rel (0) target = $region49
    $region48: #{mixed_transformer_cell.2} parent=1 // pred_region
      %83 = dma.done [#allocation8], 2048
    $region49: #{mixed_transformer_cell.2} parent=1 // pred_fallthru
      _
    %v84 = vld [vmem:[#allocation2] sm:$0xff]
    %v85 = vld [vmem:[#allocation2 + $0x8] sm:$0xff]
    %v86 = vld [vmem:[#allocation2 + $0x10] sm:$0xff]
    %v87 = vld [vmem:[#allocation2 + $0x18] sm:$0xff]
    %v88 = vld [vmem:[#allocation2 + $0x20] sm:$0xff]
    %v89 = vld [vmem:[#allocation2 + $0x28] sm:$0xff]
    %v90 = vld [vmem:[#allocation2 + $0x30] sm:$0xff]
    %v91 = vld [vmem:[#allocation2 + $0x38] sm:$0xff]
    %v92 = vld [vmem:[#allocation2 + $0x40] sm:$0xff]
    %v93 = vld [vmem:[#allocation2 + $0x48] sm:$0xff]
    %v94 = vld [vmem:[#allocation2 + $0x50] sm:$0xff]
    %v95 = vld [vmem:[#allocation2 + $0x58] sm:$0xff]
    %v96 = vld [vmem:[#allocation2 + $0x60] sm:$0xff]
    %v97 = vld [vmem:[#allocation2 + $0x68] sm:$0xff]
    %v98 = vld [vmem:[#allocation2 + $0x70] sm:$0xff]
    %v99 = vld [vmem:[#allocation2 + $0x78] sm:$0xff]
    %v100 = vld [vmem:[%s1] sm:$0x1]
    %v101 = vld [vmem:[%s2] sm:$0x1]
    %102 = vadd.xlane.f32.xlu0 %v84
    %v103 = vpop.xlane.xlu0 %102
    %104 = vadd.xlane.f32.xlu0 %v85
    %v105 = vpop.xlane.xlu0 %104
    %106 = vadd.xlane.f32.xlu0 %v86
    %v107 = vpop.xlane.xlu0 %106
    %108 = vadd.xlane.f32.xlu0 %v87
    %v109 = vpop.xlane.xlu0 %108
    %110 = vadd.xlane.f32.xlu0 %v88
    %v111 = vpop.xlane.xlu0 %110
    %112 = vadd.xlane.f32.xlu0 %v89
    %v113 = vpop.xlane.xlu0 %112
    %114 = vadd.xlane.f32.xlu0 %v90
    %v115 = vpop.xlane.xlu0 %114
    %116 = vadd.xlane.f32.xlu0 %v91
    %v117 = vpop.xlane.xlu0 %116
    %118 = vadd.xlane.f32.xlu0 %v92
    %v119 = vpop.xlane.xlu0 %118
    %120 = vadd.xlane.f32.xlu0 %v93
    %v121 = vpop.xlane.xlu0 %120
    %122 = vadd.xlane.f32.xlu0 %v94
    %v123 = vpop.xlane.xlu0 %122
    %124 = vadd.xlane.f32.xlu0 %v95
    %v125 = vpop.xlane.xlu0 %124
    %126 = vadd.xlane.f32.xlu0 %v96
    %v127 = vpop.xlane.xlu0 %126
    %128 = vadd.xlane.f32.xlu0 %v97
    %v129 = vpop.xlane.xlu0 %128
    %130 = vadd.xlane.f32.xlu0 %v98
    %v131 = vpop.xlane.xlu0 %130
    %132 = vadd.xlane.f32.xlu0 %v99
    %v133 = vpop.xlane.xlu0 %132
    %v134 = vrcp.pop 128.0
    %v135 = vmul.f32 %v103, %v134
    %v136 = vmul.f32 %v105, %v134
    %v137 = vmul.f32 %v107, %v134
    %v138 = vmul.f32 %v109, %v134
    %v139 = vmul.f32 %v111, %v134
    %v140 = vmul.f32 %v113, %v134
    %v141 = vmul.f32 %v115, %v134
    %v142 = vmul.f32 %v117, %v134
    %v143 = vmul.f32 %v119, %v134
    %v144 = vmul.f32 %v121, %v134
    %v145 = vmul.f32 %v123, %v134
    %v146 = vmul.f32 %v125, %v134
    %v147 = vmul.f32 %v127, %v134
    %v148 = vmul.f32 %v129, %v134
    %v149 = vmul.f32 %v131, %v134
    %v150 = vmul.f32 %v133, %v134
    %v151 = vsub.f32 %v84, %v135
    %v152 = vsub.f32 %v85, %v136
    %v153 = vsub.f32 %v86, %v137
    %v154 = vsub.f32 %v87, %v138
    %v155 = vsub.f32 %v88, %v139
    %v156 = vsub.f32 %v89, %v140
    %v157 = vsub.f32 %v90, %v141
    %v158 = vsub.f32 %v91, %v142
    %v159 = vsub.f32 %v92, %v143
    %v160 = vsub.f32 %v93, %v144
    %v161 = vsub.f32 %v94, %v145
    %v162 = vsub.f32 %v95, %v146
    %v163 = vsub.f32 %v96, %v147
    %v164 = vsub.f32 %v97, %v148
    %v165 = vsub.f32 %v98, %v149
    %v166 = vsub.f32 %v99, %v150
    %v167 = vmul.f32 %v151, %v151
    %v168 = vmul.f32 %v152, %v152
    %v169 = vmul.f32 %v153, %v153
    %v170 = vmul.f32 %v154, %v154
    %v171 = vmul.f32 %v155, %v155
    %v172 = vmul.f32 %v156, %v156
    %v173 = vmul.f32 %v157, %v157
    %v174 = vmul.f32 %v158, %v158
    %v175 = vmul.f32 %v159, %v159
    %v176 = vmul.f32 %v160, %v160
    %v177 = vmul.f32 %v161, %v161
    %v178 = vmul.f32 %v162, %v162
    %v179 = vmul.f32 %v163, %v163
    %v180 = vmul.f32 %v164, %v164
    %v181 = vmul.f32 %v165, %v165
    %v182 = vmul.f32 %v166, %v166
    %183 = vadd.xlane.f32.xlu0 %v167
    %v184 = vpop.xlane.xlu0 %183
    %185 = vadd.xlane.f32.xlu0 %v168
    %v186 = vpop.xlane.xlu0 %185
    %187 = vadd.xlane.f32.xlu0 %v169
    %v188 = vpop.xlane.xlu0 %187
    %189 = vadd.xlane.f32.xlu0 %v170
    %v190 = vpop.xlane.xlu0 %189
    %191 = vadd.xlane.f32.xlu0 %v171
    %v192 = vpop.xlane.xlu0 %191
    %193 = vadd.xlane.f32.xlu0 %v172
    %v194 = vpop.xlane.xlu0 %193
    %195 = vadd.xlane.f32.xlu0 %v173
    %v196 = vpop.xlane.xlu0 %195
    %197 = vadd.xlane.f32.xlu0 %v174
    %v198 = vpop.xlane.xlu0 %197
    %199 = vadd.xlane.f32.xlu0 %v175
    %v200 = vpop.xlane.xlu0 %199
    %201 = vadd.xlane.f32.xlu0 %v176
    %v202 = vpop.xlane.xlu0 %201
    %203 = vadd.xlane.f32.xlu0 %v177
    %v204 = vpop.xlane.xlu0 %203
    %205 = vadd.xlane.f32.xlu0 %v178
    %v206 = vpop.xlane.xlu0 %205
    %207 = vadd.xlane.f32.xlu0 %v179
    %v208 = vpop.xlane.xlu0 %207
    %209 = vadd.xlane.f32.xlu0 %v180
    %v210 = vpop.xlane.xlu0 %209
    %211 = vadd.xlane.f32.xlu0 %v181
    %v212 = vpop.xlane.xlu0 %211
    %213 = vadd.xlane.f32.xlu0 %v182
    %v214 = vpop.xlane.xlu0 %213
    %v215 = vmul.f32 %v184, %v134
    %v216 = vmul.f32 %v186, %v134
    %v217 = vmul.f32 %v188, %v134
    %v218 = vmul.f32 %v190, %v134
    %v219 = vmul.f32 %v192, %v134
    %v220 = vmul.f32 %v194, %v134
    %v221 = vmul.f32 %v196, %v134
    %v222 = vmul.f32 %v198, %v134
    %v223 = vmul.f32 %v200, %v134
    %v224 = vmul.f32 %v202, %v134
    %v225 = vmul.f32 %v204, %v134
    %v226 = vmul.f32 %v206, %v134
    %v227 = vmul.f32 %v208, %v134
    %v228 = vmul.f32 %v210, %v134
    %v229 = vmul.f32 %v212, %v134
    %v230 = vmul.f32 %v214, %v134
    %v231 = vadd.f32 %v215, 1e-05
    %v232 = vadd.f32 %v216, 1e-05
    %v233 = vadd.f32 %v217, 1e-05
    %v234 = vadd.f32 %v218, 1e-05
    %v235 = vadd.f32 %v219, 1e-05
    %v236 = vadd.f32 %v220, 1e-05
    %v237 = vadd.f32 %v221, 1e-05
    %v238 = vadd.f32 %v222, 1e-05
    %v239 = vadd.f32 %v223, 1e-05
    %v240 = vadd.f32 %v224, 1e-05
    %v241 = vadd.f32 %v225, 1e-05
    %v242 = vadd.f32 %v226, 1e-05
    %v243 = vadd.f32 %v227, 1e-05
    %v244 = vadd.f32 %v228, 1e-05
    %v245 = vadd.f32 %v229, 1e-05
    %v246 = vadd.f32 %v230, 1e-05
    %v247 = vrsqrt.pop %v231
    %v248 = vrsqrt.pop %v232
    %v249 = vrsqrt.pop %v233
    %v250 = vrsqrt.pop %v234
    %v251 = vrsqrt.pop %v235
    %v252 = vrsqrt.pop %v236
    %v253 = vrsqrt.pop %v237
    %v254 = vrsqrt.pop %v238
    %v255 = vrsqrt.pop %v239
    %v256 = vrsqrt.pop %v240
    %v257 = vrsqrt.pop %v241
    %v258 = vrsqrt.pop %v242
    %v259 = vrsqrt.pop %v243
    %v260 = vrsqrt.pop %v244
    %v261 = vrsqrt.pop %v245
    %v262 = vrsqrt.pop %v246
    %v263 = vmul.f32 %v151, %v247
    %v264 = vmul.f32 %v152, %v248
    %v265 = vmul.f32 %v153, %v249
    %v266 = vmul.f32 %v154, %v250
    %v267 = vmul.f32 %v155, %v251
    %v268 = vmul.f32 %v156, %v252
    %v269 = vmul.f32 %v157, %v253
    %v270 = vmul.f32 %v158, %v254
    %v271 = vmul.f32 %v159, %v255
    %v272 = vmul.f32 %v160, %v256
    %v273 = vmul.f32 %v161, %v257
    %v274 = vmul.f32 %v162, %v258
    %v275 = vmul.f32 %v163, %v259
    %v276 = vmul.f32 %v164, %v260
    %v277 = vmul.f32 %v165, %v261
    %v278 = vmul.f32 %v166, %v262
    %v280 = vlaneseq
    %v281 = vshrl.u32 %v280, 7
    %v282 = vsub.s32 0, %v281
    %v283 = vrot.slane %v100, %v282
    %v285 = vmul.f32 %v263, %v283
    %v286 = vmul.f32 %v264, %v283
    %v287 = vmul.f32 %v265, %v283
    %v288 = vmul.f32 %v266, %v283
    %v289 = vmul.f32 %v267, %v283
    %v290 = vmul.f32 %v268, %v283
    %v291 = vmul.f32 %v269, %v283
    %v292 = vmul.f32 %v270, %v283
    %v293 = vmul.f32 %v271, %v283
    %v294 = vmul.f32 %v272, %v283
    %v295 = vmul.f32 %v273, %v283
    %v296 = vmul.f32 %v274, %v283
    %v297 = vmul.f32 %v275, %v283
    %v298 = vmul.f32 %v276, %v283
    %v299 = vmul.f32 %v277, %v283
    %v300 = vmul.f32 %v278, %v283
    %v302 = vlaneseq
    %v303 = vshrl.u32 %v302, 7
    %v304 = vsub.s32 0, %v303
    %v305 = vrot.slane %v101, %v304
    %v307 = vadd.f32 %v285, %v305
    %v308 = vadd.f32 %v286, %v305
    %v309 = vadd.f32 %v287, %v305
    %v310 = vadd.f32 %v288, %v305
    %v311 = vadd.f32 %v289, %v305
    %v312 = vadd.f32 %v290, %v305
    %v313 = vadd.f32 %v291, %v305
    %v314 = vadd.f32 %v292, %v305
    %v315 = vadd.f32 %v293, %v305
    %v316 = vadd.f32 %v294, %v305
    %v317 = vadd.f32 %v295, %v305
    %v318 = vadd.f32 %v296, %v305
    %v319 = vadd.f32 %v297, %v305
    %v320 = vadd.f32 %v298, %v305
    %v321 = vadd.f32 %v299, %v305
    %v322 = vadd.f32 %v300, %v305
    %v323 = vld [vmem:[#allocation6] sm:$0xff]
    %v324 = vld [vmem:[#allocation6 + $0x8] sm:$0xff]
    %v325 = vld [vmem:[#allocation6 + $0x10] sm:$0xff]
    %v326 = vld [vmem:[#allocation6 + $0x18] sm:$0xff]
    %v327 = vld [vmem:[#allocation6 + $0x20] sm:$0xff]
    %v328 = vld [vmem:[#allocation6 + $0x28] sm:$0xff]
    %v329 = vld [vmem:[#allocation6 + $0x30] sm:$0xff]
    %v330 = vld [vmem:[#allocation6 + $0x38] sm:$0xff]
    %v331 = vld [vmem:[#allocation6 + $0x40] sm:$0xff]
    %v332 = vld [vmem:[#allocation6 + $0x48] sm:$0xff]
    %v333 = vld [vmem:[#allocation6 + $0x50] sm:$0xff]
    %v334 = vld [vmem:[#allocation6 + $0x58] sm:$0xff]
    %v335 = vld [vmem:[#allocation6 + $0x60] sm:$0xff]
    %v336 = vld [vmem:[#allocation6 + $0x68] sm:$0xff]
    %v337 = vld [vmem:[#allocation6 + $0x70] sm:$0xff]
    %v338 = vld [vmem:[#allocation6 + $0x78] sm:$0xff]
    %v339 = vld [vmem:[#allocation6 + $0x80] sm:$0xff]
    %v340 = vld [vmem:[#allocation6 + $0x88] sm:$0xff]
    %v341 = vld [vmem:[#allocation6 + $0x90] sm:$0xff]
    %v342 = vld [vmem:[#allocation6 + $0x98] sm:$0xff]
    %v343 = vld [vmem:[#allocation6 + $0xa0] sm:$0xff]
    %v344 = vld [vmem:[#allocation6 + $0xa8] sm:$0xff]
    %v345 = vld [vmem:[#allocation6 + $0xb0] sm:$0xff]
    %v346 = vld [vmem:[#allocation6 + $0xb8] sm:$0xff]
    %v347 = vld [vmem:[#allocation6 + $0xc0] sm:$0xff]
    %v348 = vld [vmem:[#allocation6 + $0xc8] sm:$0xff]
    %v349 = vld [vmem:[#allocation6 + $0xd0] sm:$0xff]
    %v350 = vld [vmem:[#allocation6 + $0xd8] sm:$0xff]
    %v351 = vld [vmem:[#allocation6 + $0xe0] sm:$0xff]
    %v352 = vld [vmem:[#allocation6 + $0xe8] sm:$0xff]
    %v353 = vld [vmem:[#allocation6 + $0xf0] sm:$0xff]
    %v354 = vld [vmem:[#allocation6 + $0xf8] sm:$0xff]
    %v355 = vld [vmem:[#allocation6 + $0x100] sm:$0xff]
    %v356 = vld [vmem:[#allocation6 + $0x108] sm:$0xff]
    %v357 = vld [vmem:[#allocation6 + $0x110] sm:$0xff]
    %v358 = vld [vmem:[#allocation6 + $0x118] sm:$0xff]
    %v359 = vld [vmem:[#allocation6 + $0x120] sm:$0xff]
    %v360 = vld [vmem:[#allocation6 + $0x128] sm:$0xff]
    %v361 = vld [vmem:[#allocation6 + $0x130] sm:$0xff]
    %v362 = vld [vmem:[#allocation6 + $0x138] sm:$0xff]
    %v363 = vld [vmem:[#allocation6 + $0x140] sm:$0xff]
    %v364 = vld [vmem:[#allocation6 + $0x148] sm:$0xff]
    %v365 = vld [vmem:[#allocation6 + $0x150] sm:$0xff]
    %v366 = vld [vmem:[#allocation6 + $0x158] sm:$0xff]
    %v367 = vld [vmem:[#allocation6 + $0x160] sm:$0xff]
    %v368 = vld [vmem:[#allocation6 + $0x168] sm:$0xff]
    %v369 = vld [vmem:[#allocation6 + $0x170] sm:$0xff]
    %v370 = vld [vmem:[#allocation6 + $0x178] sm:$0xff]
    %v371 = vld [vmem:[%s5] sm:$0x7]
    %v373 = vlaneseq
    %v374 = vshrl.u32 %v373, 7
    %v375 = vsub.s32 0, %v374
    %v376 = vrot.slane %v371, %v375
    %v377 = vlaneseq
    %v378 = vshrl.u32 %v377, 7
    %v379 = vsub.s32 1, %v378
    %v380 = vrot.slane %v371, %v379
    %v381 = vlaneseq
    %v382 = vshrl.u32 %v381, 7
    %v383 = vsub.s32 2, %v382
    %v384 = vrot.slane %v371, %v383
    %388 = vmatprep.subr.mxu0 %v369
    %389 = vmatpush1.msra.mxu0 %v368
    %390 = vmatprep.subr.mxu0 %v366
    %391 = vmatpush1.msra.mxu0 %v365
    %392 = vmatprep.subr.mxu0 %v363
    %393 = vmatpush1.msra.mxu0 %v362
    %394 = vmatprep.subr.mxu0 %v360
    %395 = vmatpush1.msra.mxu0 %v359
    %396 = vmatprep.subr.mxu0 %v357
    %397 = vmatpush1.msra.mxu0 %v356
    %398 = vmatprep.subr.mxu0 %v354
    %399 = vmatpush1.msra.mxu0 %v353
    %400 = vmatprep.subr.mxu0 %v351
    %401 = vmatpush1.msra.mxu0 %v350
    %402 = vmatprep.subr.mxu0 %v348
    %403 = vmatpush1.msra.mxu0 %v347
    %404 = vmatprep.subr.mxu0 %v345
    %405 = vmatpush1.msra.mxu0 %v344
    %406 = vmatprep.subr.mxu0 %v342
    %407 = vmatpush1.msra.mxu0 %v341
    %408 = vmatprep.subr.mxu0 %v339
    %409 = vmatpush1.msra.mxu0 %v338
    %410 = vmatprep.subr.mxu0 %v336
    %411 = vmatpush1.msra.mxu0 %v335
    %412 = vmatprep.subr.mxu0 %v333
    %413 = vmatpush1.msra.mxu0 %v332
    %414 = vmatprep.subr.mxu0 %v330
    %415 = vmatpush1.msra.mxu0 %v329
    %416 = vmatprep.subr.mxu0 %v327
    %417 = vmatpush1.msra.mxu0 %v326
    %418 = vmatprep.subr.mxu0 %v324
    %419 = vmatpush1.msra.mxu0 %v323
    %420 = vmatprep.subr.mxu0 0.0
    %421 = vmatpush2.msra.mxu0 0.0
    %422 = vmatprep.subr.mxu0 0.0
    %423 = vmatpush2.msra.mxu0 0.0
    %424 = vmatprep.subr.mxu0 0.0
    %425 = vmatpush2.msra.mxu0 0.0
    %426 = vmatprep.subr.mxu0 0.0
    %427 = vmatpush2.msra.mxu0 0.0
    %428 = vmatprep.subr.mxu0 0.0
    %429 = vmatpush2.msra.mxu0 0.0
    %430 = vmatprep.subr.mxu0 0.0
    %431 = vmatpush2.msra.mxu0 0.0
    %432 = vmatprep.subr.mxu0 0.0
    %433 = vmatpush2.msra.mxu0 0.0
    %434 = vmatprep.subr.mxu0 0.0
    %435 = vmatpush2.msra.mxu0 0.0
    %436 = vmatprep.subr.mxu0 0.0
    %437 = vmatpush2.msra.mxu0 0.0
    %438 = vmatprep.subr.mxu0 0.0
    %439 = vmatpush2.msra.mxu0 0.0
    %440 = vmatprep.subr.mxu0 0.0
    %441 = vmatpush2.msra.mxu0 0.0
    %442 = vmatprep.subr.mxu0 0.0
    %443 = vmatpush2.msra.mxu0 0.0
    %444 = vmatprep.subr.mxu0 0.0
    %445 = vmatpush2.msra.mxu0 0.0
    %446 = vmatprep.subr.mxu0 0.0
    %447 = vmatpush2.msra.mxu0 0.0
    %448 = vmatprep.subr.mxu0 0.0
    %449 = vmatpush2.msra.mxu0 0.0
    %450 = vmatprep.subr.mxu0 0.0
    %451 = vmatpush2.msra.mxu0 0.0
    %452 = vmatprep.mubr.f32.mxu0 0.0
    %453 = vmatmul.mubr.f32.gmra.mxu0 %v307
    %v454 = vpop.f32.mrf.mxu0
    %v455 = vadd.f32 %v376, %v454
    %v456 = vpop.f32.mrf.mxu0
    %v457 = vadd.f32 %v380, %v456
    %458 = vmatprep.mubr.f32.mxu0 0.0
    %459 = vmatmul.mubr.f32.gmra.mxu0 %v308
    %v460 = vpop.f32.mrf.mxu0
    %v461 = vadd.f32 %v376, %v460
    %v462 = vpop.f32.mrf.mxu0
    %v463 = vadd.f32 %v380, %v462
    %464 = vmatprep.mubr.f32.mxu0 0.0
    %465 = vmatmul.mubr.f32.gmra.mxu0 %v309
    %v466 = vpop.f32.mrf.mxu0
    %v467 = vadd.f32 %v376, %v466
    %v468 = vpop.f32.mrf.mxu0
    %v469 = vadd.f32 %v380, %v468
    %470 = vmatprep.mubr.f32.mxu0 0.0
    %471 = vmatmul.mubr.f32.gmra.mxu0 %v310
    %v472 = vpop.f32.mrf.mxu0
    %v473 = vadd.f32 %v376, %v472
    %v474 = vpop.f32.mrf.mxu0
    %v475 = vadd.f32 %v380, %v474
    %476 = vmatprep.mubr.f32.mxu0 0.0
    %477 = vmatmul.mubr.f32.gmra.mxu0 %v311
    %v478 = vpop.f32.mrf.mxu0
    %v479 = vadd.f32 %v376, %v478
    %v480 = vpop.f32.mrf.mxu0
    %v481 = vadd.f32 %v380, %v480
    %482 = vmatprep.mubr.f32.mxu0 0.0
    %483 = vmatmul.mubr.f32.gmra.mxu0 %v312
    %v484 = vpop.f32.mrf.mxu0
    %v485 = vadd.f32 %v376, %v484
    %v486 = vpop.f32.mrf.mxu0
    %v487 = vadd.f32 %v380, %v486
    %488 = vmatprep.mubr.f32.mxu0 0.0
    %489 = vmatmul.mubr.f32.gmra.mxu0 %v313
    %v490 = vpop.f32.mrf.mxu0
    %v491 = vadd.f32 %v376, %v490
    %v492 = vpop.f32.mrf.mxu0
    %v493 = vadd.f32 %v380, %v492
    %494 = vmatprep.mubr.f32.mxu0 0.0
    %495 = vmatmul.mubr.f32.gmra.mxu0 %v314
    %v496 = vpop.f32.mrf.mxu0
    %v497 = vadd.f32 %v376, %v496
    %v498 = vpop.f32.mrf.mxu0
    %v499 = vadd.f32 %v380, %v498
    %500 = vmatprep.mubr.f32.mxu0 0.0
    %501 = vmatmul.mubr.f32.gmra.mxu0 %v315
    %v502 = vpop.f32.mrf.mxu0
    %v503 = vadd.f32 %v376, %v502
    %v504 = vpop.f32.mrf.mxu0
    %v505 = vadd.f32 %v380, %v504
    %506 = vmatprep.mubr.f32.mxu0 0.0
    %507 = vmatmul.mubr.f32.gmra.mxu0 %v316
    %v508 = vpop.f32.mrf.mxu0
    %v509 = vadd.f32 %v376, %v508
    %v510 = vpop.f32.mrf.mxu0
    %v511 = vadd.f32 %v380, %v510
    %512 = vmatprep.mubr.f32.mxu0 0.0
    %513 = vmatmul.mubr.f32.gmra.mxu0 %v317
    %v514 = vpop.f32.mrf.mxu0
    %v515 = vadd.f32 %v376, %v514
    %v516 = vpop.f32.mrf.mxu0
    %v517 = vadd.f32 %v380, %v516
    %518 = vmatprep.mubr.f32.mxu0 0.0
    %519 = vmatmul.mubr.f32.gmra.mxu0 %v318
    %v520 = vpop.f32.mrf.mxu0
    %v521 = vadd.f32 %v376, %v520
    %v522 = vpop.f32.mrf.mxu0
    %v523 = vadd.f32 %v380, %v522
    %524 = vmatprep.mubr.f32.mxu0 0.0
    %525 = vmatmul.mubr.f32.gmra.mxu0 %v319
    %v526 = vpop.f32.mrf.mxu0
    %v527 = vadd.f32 %v376, %v526
    %v528 = vpop.f32.mrf.mxu0
    %v529 = vadd.f32 %v380, %v528
    %530 = vmatprep.mubr.f32.mxu0 0.0
    %531 = vmatmul.mubr.f32.gmra.mxu0 %v320
    %v532 = vpop.f32.mrf.mxu0
    %v533 = vadd.f32 %v376, %v532
    %v534 = vpop.f32.mrf.mxu0
    %v535 = vadd.f32 %v380, %v534
    %536 = vmatprep.mubr.f32.mxu0 0.0
    %537 = vmatmul.mubr.f32.gmra.mxu0 %v321
    %v538 = vpop.f32.mrf.mxu0
    %v539 = vadd.f32 %v376, %v538
    %v540 = vpop.f32.mrf.mxu0
    %v541 = vadd.f32 %v380, %v540
    %542 = vmatprep.mubr.f32.mxu0 0.0
    %543 = vmatmul.mubr.f32.gmra.mxu0 %v322
    %v544 = vpop.f32.mrf.mxu0
    %v545 = vadd.f32 %v376, %v544
    %v546 = vpop.f32.mrf.mxu0
    %v547 = vadd.f32 %v380, %v546
    %548 = vdwg.mxu0
    %549 = vmatprep.subr.mxu0 0.0
    %550 = vmatpush1.msra.mxu0 %v370
    %551 = vmatprep.subr.mxu0 0.0
    %552 = vmatpush1.msra.mxu0 %v367
    %553 = vmatprep.subr.mxu0 0.0
    %554 = vmatpush1.msra.mxu0 %v364
    %555 = vmatprep.subr.mxu0 0.0
    %556 = vmatpush1.msra.mxu0 %v361
    %557 = vmatprep.subr.mxu0 0.0
    %558 = vmatpush1.msra.mxu0 %v358
    %559 = vmatprep.subr.mxu0 0.0
    %560 = vmatpush1.msra.mxu0 %v355
    %561 = vmatprep.subr.mxu0 0.0
    %562 = vmatpush1.msra.mxu0 %v352
    %563 = vmatprep.subr.mxu0 0.0
    %564 = vmatpush1.msra.mxu0 %v349
    %565 = vmatprep.subr.mxu0 0.0
    %566 = vmatpush1.msra.mxu0 %v346
    %567 = vmatprep.subr.mxu0 0.0
    %568 = vmatpush1.msra.mxu0 %v343
    %569 = vmatprep.subr.mxu0 0.0
    %570 = vmatpush1.msra.mxu0 %v340
    %571 = vmatprep.subr.mxu0 0.0
    %572 = vmatpush1.msra.mxu0 %v337
    %573 = vmatprep.subr.mxu0 0.0
    %574 = vmatpush1.msra.mxu0 %v334
    %575 = vmatprep.subr.mxu0 0.0
    %576 = vmatpush1.msra.mxu0 %v331
    %577 = vmatprep.subr.mxu0 0.0
    %578 = vmatpush1.msra.mxu0 %v328
    %579 = vmatprep.subr.mxu0 0.0
    %580 = vmatpush1.msra.mxu0 %v325
    %581 = vmatprep.subr.mxu0 0.0
    %582 = vmatpush2.msra.mxu0 0.0
    %583 = vmatprep.subr.mxu0 0.0
    %584 = vmatpush2.msra.mxu0 0.0
    %585 = vmatprep.subr.mxu0 0.0
    %586 = vmatpush2.msra.mxu0 0.0
    %587 = vmatprep.subr.mxu0 0.0
    %588 = vmatpush2.msra.mxu0 0.0
    %589 = vmatprep.subr.mxu0 0.0
    %590 = vmatpush2.msra.mxu0 0.0
    %591 = vmatprep.subr.mxu0 0.0
    %592 = vmatpush2.msra.mxu0 0.0
    %593 = vmatprep.subr.mxu0 0.0
    %594 = vmatpush2.msra.mxu0 0.0
    %595 = vmatprep.subr.mxu0 0.0
    %596 = vmatpush2.msra.mxu0 0.0
    %597 = vmatprep.subr.mxu0 0.0
    %598 = vmatpush2.msra.mxu0 0.0
    %599 = vmatprep.subr.mxu0 0.0
    %600 = vmatpush2.msra.mxu0 0.0
    %601 = vmatprep.subr.mxu0 0.0
    %602 = vmatpush2.msra.mxu0 0.0
    %603 = vmatprep.subr.mxu0 0.0
    %604 = vmatpush2.msra.mxu0 0.0
    %605 = vmatprep.subr.mxu0 0.0
    %606 = vmatpush2.msra.mxu0 0.0
    %607 = vmatprep.subr.mxu0 0.0
    %608 = vmatpush2.msra.mxu0 0.0
    %609 = vmatprep.subr.mxu0 0.0
    %610 = vmatpush2.msra.mxu0 0.0
    %611 = vmatprep.subr.mxu0 0.0
    %612 = vmatpush2.msra.mxu0 0.0
    %613 = vmatprep.mubr.f32.mxu0 0.0
    %614 = vmatmul.mubr.f32.gmra.mxu0 %v307
    %v615 = vpop.f32.mrf.mxu0
    %v616 = vadd.f32 %v384, %v615
    %v617 = vpop.f32.mrf.mxu0
    %618 = vmatprep.mubr.f32.mxu0 0.0
    %619 = vmatmul.mubr.f32.gmra.mxu0 %v308
    %v620 = vpop.f32.mrf.mxu0
    %v621 = vadd.f32 %v384, %v620
    %v622 = vpop.f32.mrf.mxu0
    %623 = vmatprep.mubr.f32.mxu0 0.0
    %624 = vmatmul.mubr.f32.gmra.mxu0 %v309
    %v625 = vpop.f32.mrf.mxu0
    %v626 = vadd.f32 %v384, %v625
    %v627 = vpop.f32.mrf.mxu0
    %628 = vmatprep.mubr.f32.mxu0 0.0
    %629 = vmatmul.mubr.f32.gmra.mxu0 %v310
    %v630 = vpop.f32.mrf.mxu0
    %v631 = vadd.f32 %v384, %v630
    %v632 = vpop.f32.mrf.mxu0
    %633 = vmatprep.mubr.f32.mxu0 0.0
    %634 = vmatmul.mubr.f32.gmra.mxu0 %v311
    %v635 = vpop.f32.mrf.mxu0
    %v636 = vadd.f32 %v384, %v635
    %v637 = vpop.f32.mrf.mxu0
    %638 = vmatprep.mubr.f32.mxu0 0.0
    %639 = vmatmul.mubr.f32.gmra.mxu0 %v312
    %v640 = vpop.f32.mrf.mxu0
    %v641 = vadd.f32 %v384, %v640
    %v642 = vpop.f32.mrf.mxu0
    %643 = vmatprep.mubr.f32.mxu0 0.0
    %644 = vmatmul.mubr.f32.gmra.mxu0 %v313
    %v645 = vpop.f32.mrf.mxu0
    %v646 = vadd.f32 %v384, %v645
    %v647 = vpop.f32.mrf.mxu0
    %648 = vmatprep.mubr.f32.mxu0 0.0
    %649 = vmatmul.mubr.f32.gmra.mxu0 %v314
    %v650 = vpop.f32.mrf.mxu0
    %v651 = vadd.f32 %v384, %v650
    %v652 = vpop.f32.mrf.mxu0
    %653 = vmatprep.mubr.f32.mxu0 0.0
    %654 = vmatmul.mubr.f32.gmra.mxu0 %v315
    %v655 = vpop.f32.mrf.mxu0
    %v656 = vadd.f32 %v384, %v655
    %v657 = vpop.f32.mrf.mxu0
    %658 = vmatprep.mubr.f32.mxu0 0.0
    %659 = vmatmul.mubr.f32.gmra.mxu0 %v316
    %v660 = vpop.f32.mrf.mxu0
    %v661 = vadd.f32 %v384, %v660
    %v662 = vpop.f32.mrf.mxu0
    %663 = vmatprep.mubr.f32.mxu0 0.0
    %664 = vmatmul.mubr.f32.gmra.mxu0 %v317
    %v665 = vpop.f32.mrf.mxu0
    %v666 = vadd.f32 %v384, %v665
    %v667 = vpop.f32.mrf.mxu0
    %668 = vmatprep.mubr.f32.mxu0 0.0
    %669 = vmatmul.mubr.f32.gmra.mxu0 %v318
    %v670 = vpop.f32.mrf.mxu0
    %v671 = vadd.f32 %v384, %v670
    %v672 = vpop.f32.mrf.mxu0
    %673 = vmatprep.mubr.f32.mxu0 0.0
    %674 = vmatmul.mubr.f32.gmra.mxu0 %v319
    %v675 = vpop.f32.mrf.mxu0
    %v676 = vadd.f32 %v384, %v675
    %v677 = vpop.f32.mrf.mxu0
    %678 = vmatprep.mubr.f32.mxu0 0.0
    %679 = vmatmul.mubr.f32.gmra.mxu0 %v320
    %v680 = vpop.f32.mrf.mxu0
    %v681 = vadd.f32 %v384, %v680
    %v682 = vpop.f32.mrf.mxu0
    %683 = vmatprep.mubr.f32.mxu0 0.0
    %684 = vmatmul.mubr.f32.gmra.mxu0 %v321
    %v685 = vpop.f32.mrf.mxu0
    %v686 = vadd.f32 %v384, %v685
    %v687 = vpop.f32.mrf.mxu0
    %688 = vmatprep.mubr.f32.mxu0 0.0
    %689 = vmatmul.mubr.f32.gmra.mxu0 %v322
    %v690 = vpop.f32.mrf.mxu0
    %v691 = vadd.f32 %v384, %v690
    %v692 = vpop.f32.mrf.mxu0
    %693 = vdwg.mxu0
    %v694 = vld [vmem:[#allocation4] sm:$0xff]
    %v695 = vld [vmem:[#allocation4 + $0x8] sm:$0xff]
    %v696 = vld [vmem:[#allocation4 + $0x10] sm:$0xff]
    %v697 = vld [vmem:[#allocation4 + $0x18] sm:$0xff]
    %v698 = vld [vmem:[#allocation4 + $0x20] sm:$0xff]
    %v699 = vld [vmem:[#allocation4 + $0x28] sm:$0xff]
    %v700 = vld [vmem:[#allocation4 + $0x30] sm:$0xff]
    %v701 = vld [vmem:[#allocation4 + $0x38] sm:$0xff]
    %v702 = vld [vmem:[#allocation4 + $0x40] sm:$0xff]
    %v703 = vld [vmem:[#allocation4 + $0x48] sm:$0xff]
    %v704 = vld [vmem:[#allocation4 + $0x50] sm:$0xff]
    %v705 = vld [vmem:[#allocation4 + $0x58] sm:$0xff]
    %v706 = vld [vmem:[#allocation4 + $0x60] sm:$0xff]
    %v707 = vld [vmem:[#allocation4 + $0x68] sm:$0xff]
    %v708 = vld [vmem:[#allocation4 + $0x70] sm:$0xff]
    %v709 = vld [vmem:[#allocation4 + $0x78] sm:$0xff]
    %v710 = vld [vmem:[#allocation7] sm:$0xff]
    %v711 = vld [vmem:[#allocation7 + $0x8] sm:$0xff]
    %v712 = vld [vmem:[#allocation7 + $0x10] sm:$0xff]
    %v713 = vld [vmem:[#allocation7 + $0x18] sm:$0xff]
    %v714 = vld [vmem:[#allocation7 + $0x20] sm:$0xff]
    %v715 = vld [vmem:[#allocation7 + $0x28] sm:$0xff]
    %v716 = vld [vmem:[#allocation7 + $0x30] sm:$0xff]
    %v717 = vld [vmem:[#allocation7 + $0x38] sm:$0xff]
    %v718 = vld [vmem:[#allocation7 + $0x40] sm:$0xff]
    %v719 = vld [vmem:[#allocation7 + $0x48] sm:$0xff]
    %v720 = vld [vmem:[#allocation7 + $0x50] sm:$0xff]
    %v721 = vld [vmem:[#allocation7 + $0x58] sm:$0xff]
    %v722 = vld [vmem:[#allocation7 + $0x60] sm:$0xff]
    %v723 = vld [vmem:[#allocation7 + $0x68] sm:$0xff]
    %v724 = vld [vmem:[#allocation7 + $0x70] sm:$0xff]
    %v725 = vld [vmem:[#allocation7 + $0x78] sm:$0xff]
    %v726 = vmul.f32 %v455, 0.25
    %v727 = vmul.f32 %v461, 0.25
    %v728 = vmul.f32 %v467, 0.25
    %v729 = vmul.f32 %v473, 0.25
    %v730 = vmul.f32 %v479, 0.25
    %v731 = vmul.f32 %v485, 0.25
    %v732 = vmul.f32 %v491, 0.25
    %v733 = vmul.f32 %v497, 0.25
    %v734 = vmul.f32 %v503, 0.25
    %v735 = vmul.f32 %v509, 0.25
    %v736 = vmul.f32 %v515, 0.25
    %v737 = vmul.f32 %v521, 0.25
    %v738 = vmul.f32 %v527, 0.25
    %v739 = vmul.f32 %v533, 0.25
    %v740 = vmul.f32 %v539, 0.25
    %v741 = vmul.f32 %v545, 0.25
    %vm742 = vcmask 130048
    %v744 = vsel %vm742, %v726, 0
    %v747 = vsel %vm742, %v727, 0
    %v750 = vsel %vm742, %v728, 0
    %v753 = vsel %vm742, %v729, 0
    %v756 = vsel %vm742, %v730, 0
    %v759 = vsel %vm742, %v731, 0
    %v762 = vsel %vm742, %v732, 0
    %v765 = vsel %vm742, %v733, 0
    %v768 = vsel %vm742, %v734, 0
    %v771 = vsel %vm742, %v735, 0
    %v774 = vsel %vm742, %v736, 0
    %v777 = vsel %vm742, %v737, 0
    %v780 = vsel %vm742, %v738, 0
    %v783 = vsel %vm742, %v739, 0
    %v786 = vsel %vm742, %v740, 0
    %v789 = vsel %vm742, %v741, 0
    %v792 = vsel %vm742, %v457, 0
    %v795 = vsel %vm742, %v463, 0
    %v798 = vsel %vm742, %v469, 0
    %v801 = vsel %vm742, %v475, 0
    %v804 = vsel %vm742, %v481, 0
    %v807 = vsel %vm742, %v487, 0
    %v810 = vsel %vm742, %v493, 0
    %v813 = vsel %vm742, %v499, 0
    %v816 = vsel %vm742, %v505, 0
    %v819 = vsel %vm742, %v511, 0
    %v822 = vsel %vm742, %v517, 0
    %v825 = vsel %vm742, %v523, 0
    %v828 = vsel %vm742, %v529, 0
    %v831 = vsel %vm742, %v535, 0
    %v834 = vsel %vm742, %v541, 0
    %v837 = vsel %vm742, %v547, 0
    %839 = vmatprep.subr.mxu0 0.0
    %840 = vmatpush1.xpose.msra.mxu0 %v837
    %841 = vmatprep.subr.mxu0 0.0
    %842 = vmatpush1.xpose.msra.mxu0 %v834
    %843 = vmatprep.subr.mxu0 0.0
    %844 = vmatpush1.xpose.msra.mxu0 %v831
    %845 = vmatprep.subr.mxu0 0.0
    %846 = vmatpush1.xpose.msra.mxu0 %v828
    %847 = vmatprep.subr.mxu0 0.0
    %848 = vmatpush1.xpose.msra.mxu0 %v825
    %849 = vmatprep.subr.mxu0 0.0
    %850 = vmatpush1.xpose.msra.mxu0 %v822
    %851 = vmatprep.subr.mxu0 0.0
    %852 = vmatpush1.xpose.msra.mxu0 %v819
    %853 = vmatprep.subr.mxu0 0.0
    %854 = vmatpush1.xpose.msra.mxu0 %v816
    %855 = vmatprep.subr.mxu0 0.0
    %856 = vmatpush1.xpose.msra.mxu0 %v813
    %857 = vmatprep.subr.mxu0 0.0
    %858 = vmatpush1.xpose.msra.mxu0 %v810
    %859 = vmatprep.subr.mxu0 0.0
    %860 = vmatpush1.xpose.msra.mxu0 %v807
    %861 = vmatprep.subr.mxu0 0.0
    %862 = vmatpush1.xpose.msra.mxu0 %v804
    %863 = vmatprep.subr.mxu0 0.0
    %864 = vmatpush1.xpose.msra.mxu0 %v801
    %865 = vmatprep.subr.mxu0 0.0
    %866 = vmatpush1.xpose.msra.mxu0 %v798
    %867 = vmatprep.subr.mxu0 0.0
    %868 = vmatpush1.xpose.msra.mxu0 %v795
    %869 = vmatprep.subr.mxu0 0.0
    %870 = vmatpush1.xpose.msra.mxu0 %v792
    %871 = vmatprep.subr.mxu0 0.0
    %872 = vmatpush2.xpose.msra.mxu0 0.0
    %873 = vmatprep.subr.mxu0 0.0
    %874 = vmatpush2.xpose.msra.mxu0 0.0
    %875 = vmatprep.subr.mxu0 0.0
    %876 = vmatpush2.xpose.msra.mxu0 0.0
    %877 = vmatprep.subr.mxu0 0.0
    %878 = vmatpush2.xpose.msra.mxu0 0.0
    %879 = vmatprep.subr.mxu0 0.0
    %880 = vmatpush2.xpose.msra.mxu0 0.0
    %881 = vmatprep.subr.mxu0 0.0
    %882 = vmatpush2.xpose.msra.mxu0 0.0
    %883 = vmatprep.subr.mxu0 0.0
    %884 = vmatpush2.xpose.msra.mxu0 0.0
    %885 = vmatprep.subr.mxu0 0.0
    %886 = vmatpush2.xpose.msra.mxu0 0.0
    %887 = vmatprep.subr.mxu0 0.0
    %888 = vmatpush2.xpose.msra.mxu0 0.0
    %889 = vmatprep.subr.mxu0 0.0
    %890 = vmatpush2.xpose.msra.mxu0 0.0
    %891 = vmatprep.subr.mxu0 0.0
    %892 = vmatpush2.xpose.msra.mxu0 0.0
    %893 = vmatprep.subr.mxu0 0.0
    %894 = vmatpush2.xpose.msra.mxu0 0.0
    %895 = vmatprep.subr.mxu0 0.0
    %896 = vmatpush2.xpose.msra.mxu0 0.0
    %897 = vmatprep.subr.mxu0 0.0
    %898 = vmatpush2.xpose.msra.mxu0 0.0
    %899 = vmatprep.subr.mxu0 0.0
    %900 = vmatpush2.xpose.msra.mxu0 0.0
    %901 = vmatprep.subr.mxu0 0.0
    %902 = vmatpush2.xpose.msra.mxu0 0.0
    %903 = vmatprep.mubr.f32.mxu0 0.0
    %904 = vmatmul.mubr.f32.gmra.mxu0 %v744
    %v905 = vpop.f32.mrf.mxu0
    %v906 = vadd.f32 %v694, %v905
    %v907 = vpop.f32.mrf.mxu0
    %908 = vmatprep.mubr.f32.mxu0 0.0
    %909 = vmatmul.mubr.f32.gmra.mxu0 %v747
    %v910 = vpop.f32.mrf.mxu0
    %v911 = vadd.f32 %v695, %v910
    %v912 = vpop.f32.mrf.mxu0
    %913 = vmatprep.mubr.f32.mxu0 0.0
    %914 = vmatmul.mubr.f32.gmra.mxu0 %v750
    %v915 = vpop.f32.mrf.mxu0
    %v916 = vadd.f32 %v696, %v915
    %v917 = vpop.f32.mrf.mxu0
    %918 = vmatprep.mubr.f32.mxu0 0.0
    %919 = vmatmul.mubr.f32.gmra.mxu0 %v753
    %v920 = vpop.f32.mrf.mxu0
    %v921 = vadd.f32 %v697, %v920
    %v922 = vpop.f32.mrf.mxu0
    %923 = vmatprep.mubr.f32.mxu0 0.0
    %924 = vmatmul.mubr.f32.gmra.mxu0 %v756
    %v925 = vpop.f32.mrf.mxu0
    %v926 = vadd.f32 %v698, %v925
    %v927 = vpop.f32.mrf.mxu0
    %928 = vmatprep.mubr.f32.mxu0 0.0
    %929 = vmatmul.mubr.f32.gmra.mxu0 %v759
    %v930 = vpop.f32.mrf.mxu0
    %v931 = vadd.f32 %v699, %v930
    %v932 = vpop.f32.mrf.mxu0
    %933 = vmatprep.mubr.f32.mxu0 0.0
    %934 = vmatmul.mubr.f32.gmra.mxu0 %v762
    %v935 = vpop.f32.mrf.mxu0
    %v936 = vadd.f32 %v700, %v935
    %v937 = vpop.f32.mrf.mxu0
    %938 = vmatprep.mubr.f32.mxu0 0.0
    %939 = vmatmul.mubr.f32.gmra.mxu0 %v765
    %v940 = vpop.f32.mrf.mxu0
    %v941 = vadd.f32 %v701, %v940
    %v942 = vpop.f32.mrf.mxu0
    %943 = vmatprep.mubr.f32.mxu0 0.0
    %944 = vmatmul.mubr.f32.gmra.mxu0 %v768
    %v945 = vpop.f32.mrf.mxu0
    %v946 = vadd.f32 %v702, %v945
    %v947 = vpop.f32.mrf.mxu0
    %948 = vmatprep.mubr.f32.mxu0 0.0
    %949 = vmatmul.mubr.f32.gmra.mxu0 %v771
    %v950 = vpop.f32.mrf.mxu0
    %v951 = vadd.f32 %v703, %v950
    %v952 = vpop.f32.mrf.mxu0
    %953 = vmatprep.mubr.f32.mxu0 0.0
    %954 = vmatmul.mubr.f32.gmra.mxu0 %v774
    %v955 = vpop.f32.mrf.mxu0
    %v956 = vadd.f32 %v704, %v955
    %v957 = vpop.f32.mrf.mxu0
    %958 = vmatprep.mubr.f32.mxu0 0.0
    %959 = vmatmul.mubr.f32.gmra.mxu0 %v777
    %v960 = vpop.f32.mrf.mxu0
    %v961 = vadd.f32 %v705, %v960
    %v962 = vpop.f32.mrf.mxu0
    %963 = vmatprep.mubr.f32.mxu0 0.0
    %964 = vmatmul.mubr.f32.gmra.mxu0 %v780
    %v965 = vpop.f32.mrf.mxu0
    %v966 = vadd.f32 %v706, %v965
    %v967 = vpop.f32.mrf.mxu0
    %968 = vmatprep.mubr.f32.mxu0 0.0
    %969 = vmatmul.mubr.f32.gmra.mxu0 %v783
    %v970 = vpop.f32.mrf.mxu0
    %v971 = vadd.f32 %v707, %v970
    %v972 = vpop.f32.mrf.mxu0
    %973 = vmatprep.mubr.f32.mxu0 0.0
    %974 = vmatmul.mubr.f32.gmra.mxu0 %v786
    %v975 = vpop.f32.mrf.mxu0
    %v976 = vadd.f32 %v708, %v975
    %v977 = vpop.f32.mrf.mxu0
    %978 = vmatprep.mubr.f32.mxu0 0.0
    %979 = vmatmul.mubr.f32.gmra.mxu0 %v789
    %v980 = vpop.f32.mrf.mxu0
    %v981 = vadd.f32 %v709, %v980
    %v982 = vpop.f32.mrf.mxu0
    %983 = vdwg.mxu0
    %984 = vmax.xlane.f32.xlu0 %v906
    %v985 = vpop.xlane.xlu0 %984
    %986 = vmax.xlane.f32.xlu0 %v911
    %v987 = vpop.xlane.xlu0 %986
    %988 = vmax.xlane.f32.xlu0 %v916
    %v989 = vpop.xlane.xlu0 %988
    %990 = vmax.xlane.f32.xlu0 %v921
    %v991 = vpop.xlane.xlu0 %990
    %992 = vmax.xlane.f32.xlu0 %v926
    %v993 = vpop.xlane.xlu0 %992
    %994 = vmax.xlane.f32.xlu0 %v931
    %v995 = vpop.xlane.xlu0 %994
    %996 = vmax.xlane.f32.xlu0 %v936
    %v997 = vpop.xlane.xlu0 %996
    %998 = vmax.xlane.f32.xlu0 %v941
    %v999 = vpop.xlane.xlu0 %998
    %1000 = vmax.xlane.f32.xlu0 %v946
    %v1001 = vpop.xlane.xlu0 %1000
    %1002 = vmax.xlane.f32.xlu0 %v951
    %v1003 = vpop.xlane.xlu0 %1002
    %1004 = vmax.xlane.f32.xlu0 %v956
    %v1005 = vpop.xlane.xlu0 %1004
    %1006 = vmax.xlane.f32.xlu0 %v961
    %v1007 = vpop.xlane.xlu0 %1006
    %1008 = vmax.xlane.f32.xlu0 %v966
    %v1009 = vpop.xlane.xlu0 %1008
    %1010 = vmax.xlane.f32.xlu0 %v971
    %v1011 = vpop.xlane.xlu0 %1010
    %1012 = vmax.xlane.f32.xlu0 %v976
    %v1013 = vpop.xlane.xlu0 %1012
    %1014 = vmax.xlane.f32.xlu0 %v981
    %v1015 = vpop.xlane.xlu0 %1014
    %v1016 = vsub.f32 %v906, %v985
    %v1017 = vsub.f32 %v911, %v987
    %v1018 = vsub.f32 %v916, %v989
    %v1019 = vsub.f32 %v921, %v991
    %v1020 = vsub.f32 %v926, %v993
    %v1021 = vsub.f32 %v931, %v995
    %v1022 = vsub.f32 %v936, %v997
    %v1023 = vsub.f32 %v941, %v999
    %v1024 = vsub.f32 %v946, %v1001
    %v1025 = vsub.f32 %v951, %v1003
    %v1026 = vsub.f32 %v956, %v1005
    %v1027 = vsub.f32 %v961, %v1007
    %v1028 = vsub.f32 %v966, %v1009
    %v1029 = vsub.f32 %v971, %v1011
    %v1030 = vsub.f32 %v976, %v1013
    %v1031 = vsub.f32 %v981, %v1015
    %v1032 = vmul.f32 %v1016, 1.442695
    %v1033 = vpow.pop %v1032
    %v1034 = vmul.f32 %v1017, 1.442695
    %v1035 = vpow.pop %v1034
    %v1036 = vmul.f32 %v1018, 1.442695
    %v1037 = vpow.pop %v1036
    %v1038 = vmul.f32 %v1019, 1.442695
    %v1039 = vpow.pop %v1038
    %v1040 = vmul.f32 %v1020, 1.442695
    %v1041 = vpow.pop %v1040
    %v1042 = vmul.f32 %v1021, 1.442695
    %v1043 = vpow.pop %v1042
    %v1044 = vmul.f32 %v1022, 1.442695
    %v1045 = vpow.pop %v1044
    %v1046 = vmul.f32 %v1023, 1.442695
    %v1047 = vpow.pop %v1046
    %v1048 = vmul.f32 %v1024, 1.442695
    %v1049 = vpow.pop %v1048
    %v1050 = vmul.f32 %v1025, 1.442695
    %v1051 = vpow.pop %v1050
    %v1052 = vmul.f32 %v1026, 1.442695
    %v1053 = vpow.pop %v1052
    %v1054 = vmul.f32 %v1027, 1.442695
    %v1055 = vpow.pop %v1054
    %v1056 = vmul.f32 %v1028, 1.442695
    %v1057 = vpow.pop %v1056
    %v1058 = vmul.f32 %v1029, 1.442695
    %v1059 = vpow.pop %v1058
    %v1060 = vmul.f32 %v1030, 1.442695
    %v1061 = vpow.pop %v1060
    %v1062 = vmul.f32 %v1031, 1.442695
    %v1063 = vpow.pop %v1062
    %1064 = vadd.xlane.f32.xlu0 %v1033
    %v1065 = vpop.xlane.xlu0 %1064
    %1066 = vadd.xlane.f32.xlu0 %v1035
    %v1067 = vpop.xlane.xlu0 %1066
    %1068 = vadd.xlane.f32.xlu0 %v1037
    %v1069 = vpop.xlane.xlu0 %1068
    %1070 = vadd.xlane.f32.xlu0 %v1039
    %v1071 = vpop.xlane.xlu0 %1070
    %1072 = vadd.xlane.f32.xlu0 %v1041
    %v1073 = vpop.xlane.xlu0 %1072
    %1074 = vadd.xlane.f32.xlu0 %v1043
    %v1075 = vpop.xlane.xlu0 %1074
    %1076 = vadd.xlane.f32.xlu0 %v1045
    %v1077 = vpop.xlane.xlu0 %1076
    %1078 = vadd.xlane.f32.xlu0 %v1047
    %v1079 = vpop.xlane.xlu0 %1078
    %1080 = vadd.xlane.f32.xlu0 %v1049
    %v1081 = vpop.xlane.xlu0 %1080
    %1082 = vadd.xlane.f32.xlu0 %v1051
    %v1083 = vpop.xlane.xlu0 %1082
    %1084 = vadd.xlane.f32.xlu0 %v1053
    %v1085 = vpop.xlane.xlu0 %1084
    %1086 = vadd.xlane.f32.xlu0 %v1055
    %v1087 = vpop.xlane.xlu0 %1086
    %1088 = vadd.xlane.f32.xlu0 %v1057
    %v1089 = vpop.xlane.xlu0 %1088
    %1090 = vadd.xlane.f32.xlu0 %v1059
    %v1091 = vpop.xlane.xlu0 %1090
    %1092 = vadd.xlane.f32.xlu0 %v1061
    %v1093 = vpop.xlane.xlu0 %1092
    %1094 = vadd.xlane.f32.xlu0 %v1063
    %v1095 = vpop.xlane.xlu0 %1094
    %v1096 = vrcp.pop %v1065
    %v1097 = vmul.f32 1.0, %v1096
    %v1098 = vrcp.pop %v1067
    %v1099 = vmul.f32 1.0, %v1098
    %v1100 = vrcp.pop %v1069
    %v1101 = vmul.f32 1.0, %v1100
    %v1102 = vrcp.pop %v1071
    %v1103 = vmul.f32 1.0, %v1102
    %v1104 = vrcp.pop %v1073
    %v1105 = vmul.f32 1.0, %v1104
    %v1106 = vrcp.pop %v1075
    %v1107 = vmul.f32 1.0, %v1106
    %v1108 = vrcp.pop %v1077
    %v1109 = vmul.f32 1.0, %v1108
    %v1110 = vrcp.pop %v1079
    %v1111 = vmul.f32 1.0, %v1110
    %v1112 = vrcp.pop %v1081
    %v1113 = vmul.f32 1.0, %v1112
    %v1114 = vrcp.pop %v1083
    %v1115 = vmul.f32 1.0, %v1114
    %v1116 = vrcp.pop %v1085
    %v1117 = vmul.f32 1.0, %v1116
    %v1118 = vrcp.pop %v1087
    %v1119 = vmul.f32 1.0, %v1118
    %v1120 = vrcp.pop %v1089
    %v1121 = vmul.f32 1.0, %v1120
    %v1122 = vrcp.pop %v1091
    %v1123 = vmul.f32 1.0, %v1122
    %v1124 = vrcp.pop %v1093
    %v1125 = vmul.f32 1.0, %v1124
    %v1126 = vrcp.pop %v1095
    %v1127 = vmul.f32 1.0, %v1126
    %v1128 = vmul.f32 %v1033, %v1097
    %v1129 = vmul.f32 %v1035, %v1099
    %v1130 = vmul.f32 %v1037, %v1101
    %v1131 = vmul.f32 %v1039, %v1103
    %v1132 = vmul.f32 %v1041, %v1105
    %v1133 = vmul.f32 %v1043, %v1107
    %v1134 = vmul.f32 %v1045, %v1109
    %v1135 = vmul.f32 %v1047, %v1111
    %v1136 = vmul.f32 %v1049, %v1113
    %v1137 = vmul.f32 %v1051, %v1115
    %v1138 = vmul.f32 %v1053, %v1117
    %v1139 = vmul.f32 %v1055, %v1119
    %v1140 = vmul.f32 %v1057, %v1121
    %v1141 = vmul.f32 %v1059, %v1123
    %v1142 = vmul.f32 %v1061, %v1125
    %v1143 = vmul.f32 %v1063, %v1127
    %1144 = vmatprep.subr.mxu0 0.0
    %1145 = vmatpush1.msra.mxu0 %v691
    %1146 = vmatprep.subr.mxu0 0.0
    %1147 = vmatpush1.msra.mxu0 %v686
    %1148 = vmatprep.subr.mxu0 0.0
    %1149 = vmatpush1.msra.mxu0 %v681
    %1150 = vmatprep.subr.mxu0 0.0
    %1151 = vmatpush1.msra.mxu0 %v676
    %1152 = vmatprep.subr.mxu0 0.0
    %1153 = vmatpush1.msra.mxu0 %v671
    %1154 = vmatprep.subr.mxu0 0.0
    %1155 = vmatpush1.msra.mxu0 %v666
    %1156 = vmatprep.subr.mxu0 0.0
    %1157 = vmatpush1.msra.mxu0 %v661
    %1158 = vmatprep.subr.mxu0 0.0
    %1159 = vmatpush1.msra.mxu0 %v656
    %1160 = vmatprep.subr.mxu0 0.0
    %1161 = vmatpush1.msra.mxu0 %v651
    %1162 = vmatprep.subr.mxu0 0.0
    %1163 = vmatpush1.msra.mxu0 %v646
    %1164 = vmatprep.subr.mxu0 0.0
    %1165 = vmatpush1.msra.mxu0 %v641
    %1166 = vmatprep.subr.mxu0 0.0
    %1167 = vmatpush1.msra.mxu0 %v636
    %1168 = vmatprep.subr.mxu0 0.0
    %1169 = vmatpush1.msra.mxu0 %v631
    %1170 = vmatprep.subr.mxu0 0.0
    %1171 = vmatpush1.msra.mxu0 %v626
    %1172 = vmatprep.subr.mxu0 0.0
    %1173 = vmatpush1.msra.mxu0 %v621
    %1174 = vmatprep.subr.mxu0 0.0
    %1175 = vmatpush1.msra.mxu0 %v616
    %1176 = vmatprep.subr.mxu0 0.0
    %1177 = vmatpush2.msra.mxu0 0.0
    %1178 = vmatprep.subr.mxu0 0.0
    %1179 = vmatpush2.msra.mxu0 0.0
    %1180 = vmatprep.subr.mxu0 0.0
    %1181 = vmatpush2.msra.mxu0 0.0
    %1182 = vmatprep.subr.mxu0 0.0
    %1183 = vmatpush2.msra.mxu0 0.0
    %1184 = vmatprep.subr.mxu0 0.0
    %1185 = vmatpush2.msra.mxu0 0.0
    %1186 = vmatprep.subr.mxu0 0.0
    %1187 = vmatpush2.msra.mxu0 0.0
    %1188 = vmatprep.subr.mxu0 0.0
    %1189 = vmatpush2.msra.mxu0 0.0
    %1190 = vmatprep.subr.mxu0 0.0
    %1191 = vmatpush2.msra.mxu0 0.0
    %1192 = vmatprep.subr.mxu0 0.0
    %1193 = vmatpush2.msra.mxu0 0.0
    %1194 = vmatprep.subr.mxu0 0.0
    %1195 = vmatpush2.msra.mxu0 0.0
    %1196 = vmatprep.subr.mxu0 0.0
    %1197 = vmatpush2.msra.mxu0 0.0
    %1198 = vmatprep.subr.mxu0 0.0
    %1199 = vmatpush2.msra.mxu0 0.0
    %1200 = vmatprep.subr.mxu0 0.0
    %1201 = vmatpush2.msra.mxu0 0.0
    %1202 = vmatprep.subr.mxu0 0.0
    %1203 = vmatpush2.msra.mxu0 0.0
    %1204 = vmatprep.subr.mxu0 0.0
    %1205 = vmatpush2.msra.mxu0 0.0
    %1206 = vmatprep.subr.mxu0 0.0
    %1207 = vmatpush2.msra.mxu0 0.0
    %1208 = vmatprep.mubr.f32.mxu0 0.0
    %1209 = vmatmul.mubr.f32.gmra.mxu0 %v1128
    %v1210 = vpop.f32.mrf.mxu0
    %v1211 = vadd.f32 0.0, %v1210
    %v1212 = vpop.f32.mrf.mxu0
    %1213 = vmatprep.mubr.f32.mxu0 0.0
    %1214 = vmatmul.mubr.f32.gmra.mxu0 %v1129
    %v1215 = vpop.f32.mrf.mxu0
    %v1216 = vadd.f32 0.0, %v1215
    %v1217 = vpop.f32.mrf.mxu0
    %1218 = vmatprep.mubr.f32.mxu0 0.0
    %1219 = vmatmul.mubr.f32.gmra.mxu0 %v1130
    %v1220 = vpop.f32.mrf.mxu0
    %v1221 = vadd.f32 0.0, %v1220
    %v1222 = vpop.f32.mrf.mxu0
    %1223 = vmatprep.mubr.f32.mxu0 0.0
    %1224 = vmatmul.mubr.f32.gmra.mxu0 %v1131
    %v1225 = vpop.f32.mrf.mxu0
    %v1226 = vadd.f32 0.0, %v1225
    %v1227 = vpop.f32.mrf.mxu0
    %1228 = vmatprep.mubr.f32.mxu0 0.0
    %1229 = vmatmul.mubr.f32.gmra.mxu0 %v1132
    %v1230 = vpop.f32.mrf.mxu0
    %v1231 = vadd.f32 0.0, %v1230
    %v1232 = vpop.f32.mrf.mxu0
    %1233 = vmatprep.mubr.f32.mxu0 0.0
    %1234 = vmatmul.mubr.f32.gmra.mxu0 %v1133
    %v1235 = vpop.f32.mrf.mxu0
    %v1236 = vadd.f32 0.0, %v1235
    %v1237 = vpop.f32.mrf.mxu0
    %1238 = vmatprep.mubr.f32.mxu0 0.0
    %1239 = vmatmul.mubr.f32.gmra.mxu0 %v1134
    %v1240 = vpop.f32.mrf.mxu0
    %v1241 = vadd.f32 0.0, %v1240
    %v1242 = vpop.f32.mrf.mxu0
    %1243 = vmatprep.mubr.f32.mxu0 0.0
    %1244 = vmatmul.mubr.f32.gmra.mxu0 %v1135
    %v1245 = vpop.f32.mrf.mxu0
    %v1246 = vadd.f32 0.0, %v1245
    %v1247 = vpop.f32.mrf.mxu0
    %1248 = vmatprep.mubr.f32.mxu0 0.0
    %1249 = vmatmul.mubr.f32.gmra.mxu0 %v1136
    %v1250 = vpop.f32.mrf.mxu0
    %v1251 = vadd.f32 0.0, %v1250
    %v1252 = vpop.f32.mrf.mxu0
    %1253 = vmatprep.mubr.f32.mxu0 0.0
    %1254 = vmatmul.mubr.f32.gmra.mxu0 %v1137
    %v1255 = vpop.f32.mrf.mxu0
    %v1256 = vadd.f32 0.0, %v1255
    %v1257 = vpop.f32.mrf.mxu0
    %1258 = vmatprep.mubr.f32.mxu0 0.0
    %1259 = vmatmul.mubr.f32.gmra.mxu0 %v1138
    %v1260 = vpop.f32.mrf.mxu0
    %v1261 = vadd.f32 0.0, %v1260
    %v1262 = vpop.f32.mrf.mxu0
    %1263 = vmatprep.mubr.f32.mxu0 0.0
    %1264 = vmatmul.mubr.f32.gmra.mxu0 %v1139
    %v1265 = vpop.f32.mrf.mxu0
    %v1266 = vadd.f32 0.0, %v1265
    %v1267 = vpop.f32.mrf.mxu0
    %1268 = vmatprep.mubr.f32.mxu0 0.0
    %1269 = vmatmul.mubr.f32.gmra.mxu0 %v1140
    %v1270 = vpop.f32.mrf.mxu0
    %v1271 = vadd.f32 0.0, %v1270
    %v1272 = vpop.f32.mrf.mxu0
    %1273 = vmatprep.mubr.f32.mxu0 0.0
    %1274 = vmatmul.mubr.f32.gmra.mxu0 %v1141
    %v1275 = vpop.f32.mrf.mxu0
    %v1276 = vadd.f32 0.0, %v1275
    %v1277 = vpop.f32.mrf.mxu0
    %1278 = vmatprep.mubr.f32.mxu0 0.0
    %1279 = vmatmul.mubr.f32.gmra.mxu0 %v1142
    %v1280 = vpop.f32.mrf.mxu0
    %v1281 = vadd.f32 0.0, %v1280
    %v1282 = vpop.f32.mrf.mxu0
    %1283 = vmatprep.mubr.f32.mxu0 0.0
    %1284 = vmatmul.mubr.f32.gmra.mxu0 %v1143
    %v1285 = vpop.f32.mrf.mxu0
    %v1286 = vadd.f32 0.0, %v1285
    %v1287 = vpop.f32.mrf.mxu0
    %1288 = vdwg.mxu0
    %1289 = vrot.lane.b32.xlu0 %v726, 112
    %v1290 = vpop.permute.xlu0 %1289
    %1291 = vrot.lane.b32.xlu0 %v727, 112
    %v1292 = vpop.permute.xlu0 %1291
    %1293 = vrot.lane.b32.xlu0 %v728, 112
    %v1294 = vpop.permute.xlu0 %1293
    %1295 = vrot.lane.b32.xlu0 %v729, 112
    %v1296 = vpop.permute.xlu0 %1295
    %1297 = vrot.lane.b32.xlu0 %v730, 112
    %v1298 = vpop.permute.xlu0 %1297
    %1299 = vrot.lane.b32.xlu0 %v731, 112
    %v1300 = vpop.permute.xlu0 %1299
    %1301 = vrot.lane.b32.xlu0 %v732, 112
    %v1302 = vpop.permute.xlu0 %1301
    %1303 = vrot.lane.b32.xlu0 %v733, 112
    %v1304 = vpop.permute.xlu0 %1303
    %1305 = vrot.lane.b32.xlu0 %v734, 112
    %v1306 = vpop.permute.xlu0 %1305
    %1307 = vrot.lane.b32.xlu0 %v735, 112
    %v1308 = vpop.permute.xlu0 %1307
    %1309 = vrot.lane.b32.xlu0 %v736, 112
    %v1310 = vpop.permute.xlu0 %1309
    %1311 = vrot.lane.b32.xlu0 %v737, 112
    %v1312 = vpop.permute.xlu0 %1311
    %1313 = vrot.lane.b32.xlu0 %v738, 112
    %v1314 = vpop.permute.xlu0 %1313
    %1315 = vrot.lane.b32.xlu0 %v739, 112
    %v1316 = vpop.permute.xlu0 %1315
    %1317 = vrot.lane.b32.xlu0 %v740, 112
    %v1318 = vpop.permute.xlu0 %1317
    %1319 = vrot.lane.b32.xlu0 %v741, 112
    %v1320 = vpop.permute.xlu0 %1319
    %1321 = vrot.lane.b32.xlu0 %v457, 112
    %v1322 = vpop.permute.xlu0 %1321
    %1323 = vrot.lane.b32.xlu0 %v463, 112
    %v1324 = vpop.permute.xlu0 %1323
    %1325 = vrot.lane.b32.xlu0 %v469, 112
    %v1326 = vpop.permute.xlu0 %1325
    %1327 = vrot.lane.b32.xlu0 %v475, 112
    %v1328 = vpop.permute.xlu0 %1327
    %1329 = vrot.lane.b32.xlu0 %v481, 112
    %v1330 = vpop.permute.xlu0 %1329
    %1331 = vrot.lane.b32.xlu0 %v487, 112
    %v1332 = vpop.permute.xlu0 %1331
    %1333 = vrot.lane.b32.xlu0 %v493, 112
    %v1334 = vpop.permute.xlu0 %1333
    %1335 = vrot.lane.b32.xlu0 %v499, 112
    %v1336 = vpop.permute.xlu0 %1335
    %1337 = vrot.lane.b32.xlu0 %v505, 112
    %v1338 = vpop.permute.xlu0 %1337
    %1339 = vrot.lane.b32.xlu0 %v511, 112
    %v1340 = vpop.permute.xlu0 %1339
    %1341 = vrot.lane.b32.xlu0 %v517, 112
    %v1342 = vpop.permute.xlu0 %1341
    %1343 = vrot.lane.b32.xlu0 %v523, 112
    %v1344 = vpop.permute.xlu0 %1343
    %1345 = vrot.lane.b32.xlu0 %v529, 112
    %v1346 = vpop.permute.xlu0 %1345
    %1347 = vrot.lane.b32.xlu0 %v535, 112
    %v1348 = vpop.permute.xlu0 %1347
    %1349 = vrot.lane.b32.xlu0 %v541, 112
    %v1350 = vpop.permute.xlu0 %1349
    %1351 = vrot.lane.b32.xlu0 %v547, 112
    %v1352 = vpop.permute.xlu0 %1351
    %v1353 = vsel %vm742, %v1290, 0
    %v1355 = vsel %vm742, %v1292, 0
    %v1357 = vsel %vm742, %v1294, 0
    %v1359 = vsel %vm742, %v1296, 0
    %v1361 = vsel %vm742, %v1298, 0
    %v1363 = vsel %vm742, %v1300, 0
    %v1365 = vsel %vm742, %v1302, 0
    %v1367 = vsel %vm742, %v1304, 0
    %v1369 = vsel %vm742, %v1306, 0
    %v1371 = vsel %vm742, %v1308, 0
    %v1373 = vsel %vm742, %v1310, 0
    %v1375 = vsel %vm742, %v1312, 0
    %v1377 = vsel %vm742, %v1314, 0
    %v1379 = vsel %vm742, %v1316, 0
    %v1381 = vsel %vm742, %v1318, 0
    %v1383 = vsel %vm742, %v1320, 0
    %v1385 = vsel %vm742, %v1322, 0
    %v1387 = vsel %vm742, %v1324, 0
    %v1389 = vsel %vm742, %v1326, 0
    %v1391 = vsel %vm742, %v1328, 0
    %v1393 = vsel %vm742, %v1330, 0
    %v1395 = vsel %vm742, %v1332, 0
    %v1397 = vsel %vm742, %v1334, 0
    %v1399 = vsel %vm742, %v1336, 0
    %v1401 = vsel %vm742, %v1338, 0
    %v1403 = vsel %vm742, %v1340, 0
    %v1405 = vsel %vm742, %v1342, 0
    %v1407 = vsel %vm742, %v1344, 0
    %v1409 = vsel %vm742, %v1346, 0
    %v1411 = vsel %vm742, %v1348, 0
    %v1413 = vsel %vm742, %v1350, 0
    %v1415 = vsel %vm742, %v1352, 0
    %1417 = vmatprep.subr.mxu0 0.0
    %1418 = vmatpush1.xpose.msra.mxu0 %v1415
    %1419 = vmatprep.subr.mxu0 0.0
    %1420 = vmatpush1.xpose.msra.mxu0 %v1413
    %1421 = vmatprep.subr.mxu0 0.0
    %1422 = vmatpush1.xpose.msra.mxu0 %v1411
    %1423 = vmatprep.subr.mxu0 0.0
    %1424 = vmatpush1.xpose.msra.mxu0 %v1409
    %1425 = vmatprep.subr.mxu0 0.0
    %1426 = vmatpush1.xpose.msra.mxu0 %v1407
    %1427 = vmatprep.subr.mxu0 0.0
    %1428 = vmatpush1.xpose.msra.mxu0 %v1405
    %1429 = vmatprep.subr.mxu0 0.0
    %1430 = vmatpush1.xpose.msra.mxu0 %v1403
    %1431 = vmatprep.subr.mxu0 0.0
    %1432 = vmatpush1.xpose.msra.mxu0 %v1401
    %1433 = vmatprep.subr.mxu0 0.0
    %1434 = vmatpush1.xpose.msra.mxu0 %v1399
    %1435 = vmatprep.subr.mxu0 0.0
    %1436 = vmatpush1.xpose.msra.mxu0 %v1397
    %1437 = vmatprep.subr.mxu0 0.0
    %1438 = vmatpush1.xpose.msra.mxu0 %v1395
    %1439 = vmatprep.subr.mxu0 0.0
    %1440 = vmatpush1.xpose.msra.mxu0 %v1393
    %1441 = vmatprep.subr.mxu0 0.0
    %1442 = vmatpush1.xpose.msra.mxu0 %v1391
    %1443 = vmatprep.subr.mxu0 0.0
    %1444 = vmatpush1.xpose.msra.mxu0 %v1389
    %1445 = vmatprep.subr.mxu0 0.0
    %1446 = vmatpush1.xpose.msra.mxu0 %v1387
    %1447 = vmatprep.subr.mxu0 0.0
    %1448 = vmatpush1.xpose.msra.mxu0 %v1385
    %1449 = vmatprep.subr.mxu0 0.0
    %1450 = vmatpush2.xpose.msra.mxu0 0.0
    %1451 = vmatprep.subr.mxu0 0.0
    %1452 = vmatpush2.xpose.msra.mxu0 0.0
    %1453 = vmatprep.subr.mxu0 0.0
    %1454 = vmatpush2.xpose.msra.mxu0 0.0
    %1455 = vmatprep.subr.mxu0 0.0
    %1456 = vmatpush2.xpose.msra.mxu0 0.0
    %1457 = vmatprep.subr.mxu0 0.0
    %1458 = vmatpush2.xpose.msra.mxu0 0.0
    %1459 = vmatprep.subr.mxu0 0.0
    %1460 = vmatpush2.xpose.msra.mxu0 0.0
    %1461 = vmatprep.subr.mxu0 0.0
    %1462 = vmatpush2.xpose.msra.mxu0 0.0
    %1463 = vmatprep.subr.mxu0 0.0
    %1464 = vmatpush2.xpose.msra.mxu0 0.0
    %1465 = vmatprep.subr.mxu0 0.0
    %1466 = vmatpush2.xpose.msra.mxu0 0.0
    %1467 = vmatprep.subr.mxu0 0.0
    %1468 = vmatpush2.xpose.msra.mxu0 0.0
    %1469 = vmatprep.subr.mxu0 0.0
    %1470 = vmatpush2.xpose.msra.mxu0 0.0
    %1471 = vmatprep.subr.mxu0 0.0
    %1472 = vmatpush2.xpose.msra.mxu0 0.0
    %1473 = vmatprep.subr.mxu0 0.0
    %1474 = vmatpush2.xpose.msra.mxu0 0.0
    %1475 = vmatprep.subr.mxu0 0.0
    %1476 = vmatpush2.xpose.msra.mxu0 0.0
    %1477 = vmatprep.subr.mxu0 0.0
    %1478 = vmatpush2.xpose.msra.mxu0 0.0
    %1479 = vmatprep.subr.mxu0 0.0
    %1480 = vmatpush2.xpose.msra.mxu0 0.0
    %1481 = vmatprep.mubr.f32.mxu0 0.0
    %1482 = vmatmul.mubr.f32.gmra.mxu0 %v1353
    %v1483 = vpop.f32.mrf.mxu0
    %v1484 = vadd.f32 %v694, %v1483
    %v1485 = vpop.f32.mrf.mxu0
    %1486 = vmatprep.mubr.f32.mxu0 0.0
    %1487 = vmatmul.mubr.f32.gmra.mxu0 %v1355
    %v1488 = vpop.f32.mrf.mxu0
    %v1489 = vadd.f32 %v695, %v1488
    %v1490 = vpop.f32.mrf.mxu0
    %1491 = vmatprep.mubr.f32.mxu0 0.0
    %1492 = vmatmul.mubr.f32.gmra.mxu0 %v1357
    %v1493 = vpop.f32.mrf.mxu0
    %v1494 = vadd.f32 %v696, %v1493
    %v1495 = vpop.f32.mrf.mxu0
    %1496 = vmatprep.mubr.f32.mxu0 0.0
    %1497 = vmatmul.mubr.f32.gmra.mxu0 %v1359
    %v1498 = vpop.f32.mrf.mxu0
    %v1499 = vadd.f32 %v697, %v1498
    %v1500 = vpop.f32.mrf.mxu0
    %1501 = vmatprep.mubr.f32.mxu0 0.0
    %1502 = vmatmul.mubr.f32.gmra.mxu0 %v1361
    %v1503 = vpop.f32.mrf.mxu0
    %v1504 = vadd.f32 %v698, %v1503
    %v1505 = vpop.f32.mrf.mxu0
    %1506 = vmatprep.mubr.f32.mxu0 0.0
    %1507 = vmatmul.mubr.f32.gmra.mxu0 %v1363
    %v1508 = vpop.f32.mrf.mxu0
    %v1509 = vadd.f32 %v699, %v1508
    %v1510 = vpop.f32.mrf.mxu0
    %1511 = vmatprep.mubr.f32.mxu0 0.0
    %1512 = vmatmul.mubr.f32.gmra.mxu0 %v1365
    %v1513 = vpop.f32.mrf.mxu0
    %v1514 = vadd.f32 %v700, %v1513
    %v1515 = vpop.f32.mrf.mxu0
    %1516 = vmatprep.mubr.f32.mxu0 0.0
    %1517 = vmatmul.mubr.f32.gmra.mxu0 %v1367
    %v1518 = vpop.f32.mrf.mxu0
    %v1519 = vadd.f32 %v701, %v1518
    %v1520 = vpop.f32.mrf.mxu0
    %1521 = vmatprep.mubr.f32.mxu0 0.0
    %1522 = vmatmul.mubr.f32.gmra.mxu0 %v1369
    %v1523 = vpop.f32.mrf.mxu0
    %v1524 = vadd.f32 %v702, %v1523
    %v1525 = vpop.f32.mrf.mxu0
    %1526 = vmatprep.mubr.f32.mxu0 0.0
    %1527 = vmatmul.mubr.f32.gmra.mxu0 %v1371
    %v1528 = vpop.f32.mrf.mxu0
    %v1529 = vadd.f32 %v703, %v1528
    %v1530 = vpop.f32.mrf.mxu0
    %1531 = vmatprep.mubr.f32.mxu0 0.0
    %1532 = vmatmul.mubr.f32.gmra.mxu0 %v1373
    %v1533 = vpop.f32.mrf.mxu0
    %v1534 = vadd.f32 %v704, %v1533
    %v1535 = vpop.f32.mrf.mxu0
    %1536 = vmatprep.mubr.f32.mxu0 0.0
    %1537 = vmatmul.mubr.f32.gmra.mxu0 %v1375
    %v1538 = vpop.f32.mrf.mxu0
    %v1539 = vadd.f32 %v705, %v1538
    %v1540 = vpop.f32.mrf.mxu0
    %1541 = vmatprep.mubr.f32.mxu0 0.0
    %1542 = vmatmul.mubr.f32.gmra.mxu0 %v1377
    %v1543 = vpop.f32.mrf.mxu0
    %v1544 = vadd.f32 %v706, %v1543
    %v1545 = vpop.f32.mrf.mxu0
    %1546 = vmatprep.mubr.f32.mxu0 0.0
    %1547 = vmatmul.mubr.f32.gmra.mxu0 %v1379
    %v1548 = vpop.f32.mrf.mxu0
    %v1549 = vadd.f32 %v707, %v1548
    %v1550 = vpop.f32.mrf.mxu0
    %1551 = vmatprep.mubr.f32.mxu0 0.0
    %1552 = vmatmul.mubr.f32.gmra.mxu0 %v1381
    %v1553 = vpop.f32.mrf.mxu0
    %v1554 = vadd.f32 %v708, %v1553
    %v1555 = vpop.f32.mrf.mxu0
    %1556 = vmatprep.mubr.f32.mxu0 0.0
    %1557 = vmatmul.mubr.f32.gmra.mxu0 %v1383
    %v1558 = vpop.f32.mrf.mxu0
    %v1559 = vadd.f32 %v709, %v1558
    %v1560 = vpop.f32.mrf.mxu0
    %1561 = vdwg.mxu0
    %1562 = vmax.xlane.f32.xlu0 %v1484
    %v1563 = vpop.xlane.xlu0 %1562
    %1564 = vmax.xlane.f32.xlu0 %v1489
    %v1565 = vpop.xlane.xlu0 %1564
    %1566 = vmax.xlane.f32.xlu0 %v1494
    %v1567 = vpop.xlane.xlu0 %1566
    %1568 = vmax.xlane.f32.xlu0 %v1499
    %v1569 = vpop.xlane.xlu0 %1568
    %1570 = vmax.xlane.f32.xlu0 %v1504
    %v1571 = vpop.xlane.xlu0 %1570
    %1572 = vmax.xlane.f32.xlu0 %v1509
    %v1573 = vpop.xlane.xlu0 %1572
    %1574 = vmax.xlane.f32.xlu0 %v1514
    %v1575 = vpop.xlane.xlu0 %1574
    %1576 = vmax.xlane.f32.xlu0 %v1519
    %v1577 = vpop.xlane.xlu0 %1576
    %1578 = vmax.xlane.f32.xlu0 %v1524
    %v1579 = vpop.xlane.xlu0 %1578
    %1580 = vmax.xlane.f32.xlu0 %v1529
    %v1581 = vpop.xlane.xlu0 %1580
    %1582 = vmax.xlane.f32.xlu0 %v1534
    %v1583 = vpop.xlane.xlu0 %1582
    %1584 = vmax.xlane.f32.xlu0 %v1539
    %v1585 = vpop.xlane.xlu0 %1584
    %1586 = vmax.xlane.f32.xlu0 %v1544
    %v1587 = vpop.xlane.xlu0 %1586
    %1588 = vmax.xlane.f32.xlu0 %v1549
    %v1589 = vpop.xlane.xlu0 %1588
    %1590 = vmax.xlane.f32.xlu0 %v1554
    %v1591 = vpop.xlane.xlu0 %1590
    %1592 = vmax.xlane.f32.xlu0 %v1559
    %v1593 = vpop.xlane.xlu0 %1592
    %v1594 = vsub.f32 %v1484, %v1563
    %v1595 = vsub.f32 %v1489, %v1565
    %v1596 = vsub.f32 %v1494, %v1567
    %v1597 = vsub.f32 %v1499, %v1569
    %v1598 = vsub.f32 %v1504, %v1571
    %v1599 = vsub.f32 %v1509, %v1573
    %v1600 = vsub.f32 %v1514, %v1575
    %v1601 = vsub.f32 %v1519, %v1577
    %v1602 = vsub.f32 %v1524, %v1579
    %v1603 = vsub.f32 %v1529, %v1581
    %v1604 = vsub.f32 %v1534, %v1583
    %v1605 = vsub.f32 %v1539, %v1585
    %v1606 = vsub.f32 %v1544, %v1587
    %v1607 = vsub.f32 %v1549, %v1589
    %v1608 = vsub.f32 %v1554, %v1591
    %v1609 = vsub.f32 %v1559, %v1593
    %v1610 = vmul.f32 %v1594, 1.442695
    %v1611 = vpow.pop %v1610
    %v1612 = vmul.f32 %v1595, 1.442695
    %v1613 = vpow.pop %v1612
    %v1614 = vmul.f32 %v1596, 1.442695
    %v1615 = vpow.pop %v1614
    %v1616 = vmul.f32 %v1597, 1.442695
    %v1617 = vpow.pop %v1616
    %v1618 = vmul.f32 %v1598, 1.442695
    %v1619 = vpow.pop %v1618
    %v1620 = vmul.f32 %v1599, 1.442695
    %v1621 = vpow.pop %v1620
    %v1622 = vmul.f32 %v1600, 1.442695
    %v1623 = vpow.pop %v1622
    %v1624 = vmul.f32 %v1601, 1.442695
    %v1625 = vpow.pop %v1624
    %v1626 = vmul.f32 %v1602, 1.442695
    %v1627 = vpow.pop %v1626
    %v1628 = vmul.f32 %v1603, 1.442695
    %v1629 = vpow.pop %v1628
    %v1630 = vmul.f32 %v1604, 1.442695
    %v1631 = vpow.pop %v1630
    %v1632 = vmul.f32 %v1605, 1.442695
    %v1633 = vpow.pop %v1632
    %v1634 = vmul.f32 %v1606, 1.442695
    %v1635 = vpow.pop %v1634
    %v1636 = vmul.f32 %v1607, 1.442695
    %v1637 = vpow.pop %v1636
    %v1638 = vmul.f32 %v1608, 1.442695
    %v1639 = vpow.pop %v1638
    %v1640 = vmul.f32 %v1609, 1.442695
    %v1641 = vpow.pop %v1640
    %1642 = vadd.xlane.f32.xlu0 %v1611
    %v1643 = vpop.xlane.xlu0 %1642
    %1644 = vadd.xlane.f32.xlu0 %v1613
    %v1645 = vpop.xlane.xlu0 %1644
    %1646 = vadd.xlane.f32.xlu0 %v1615
    %v1647 = vpop.xlane.xlu0 %1646
    %1648 = vadd.xlane.f32.xlu0 %v1617
    %v1649 = vpop.xlane.xlu0 %1648
    %1650 = vadd.xlane.f32.xlu0 %v1619
    %v1651 = vpop.xlane.xlu0 %1650
    %1652 = vadd.xlane.f32.xlu0 %v1621
    %v1653 = vpop.xlane.xlu0 %1652
    %1654 = vadd.xlane.f32.xlu0 %v1623
    %v1655 = vpop.xlane.xlu0 %1654
    %1656 = vadd.xlane.f32.xlu0 %v1625
    %v1657 = vpop.xlane.xlu0 %1656
    %1658 = vadd.xlane.f32.xlu0 %v1627
    %v1659 = vpop.xlane.xlu0 %1658
    %1660 = vadd.xlane.f32.xlu0 %v1629
    %v1661 = vpop.xlane.xlu0 %1660
    %1662 = vadd.xlane.f32.xlu0 %v1631
    %v1663 = vpop.xlane.xlu0 %1662
    %1664 = vadd.xlane.f32.xlu0 %v1633
    %v1665 = vpop.xlane.xlu0 %1664
    %1666 = vadd.xlane.f32.xlu0 %v1635
    %v1667 = vpop.xlane.xlu0 %1666
    %1668 = vadd.xlane.f32.xlu0 %v1637
    %v1669 = vpop.xlane.xlu0 %1668
    %1670 = vadd.xlane.f32.xlu0 %v1639
    %v1671 = vpop.xlane.xlu0 %1670
    %1672 = vadd.xlane.f32.xlu0 %v1641
    %v1673 = vpop.xlane.xlu0 %1672
    %v1674 = vrcp.pop %v1643
    %v1675 = vmul.f32 1.0, %v1674
    %v1676 = vrcp.pop %v1645
    %v1677 = vmul.f32 1.0, %v1676
    %v1678 = vrcp.pop %v1647
    %v1679 = vmul.f32 1.0, %v1678
    %v1680 = vrcp.pop %v1649
    %v1681 = vmul.f32 1.0, %v1680
    %v1682 = vrcp.pop %v1651
    %v1683 = vmul.f32 1.0, %v1682
    %v1684 = vrcp.pop %v1653
    %v1685 = vmul.f32 1.0, %v1684
    %v1686 = vrcp.pop %v1655
    %v1687 = vmul.f32 1.0, %v1686
    %v1688 = vrcp.pop %v1657
    %v1689 = vmul.f32 1.0, %v1688
    %v1690 = vrcp.pop %v1659
    %v1691 = vmul.f32 1.0, %v1690
    %v1692 = vrcp.pop %v1661
    %v1693 = vmul.f32 1.0, %v1692
    %v1694 = vrcp.pop %v1663
    %v1695 = vmul.f32 1.0, %v1694
    %v1696 = vrcp.pop %v1665
    %v1697 = vmul.f32 1.0, %v1696
    %v1698 = vrcp.pop %v1667
    %v1699 = vmul.f32 1.0, %v1698
    %v1700 = vrcp.pop %v1669
    %v1701 = vmul.f32 1.0, %v1700
    %v1702 = vrcp.pop %v1671
    %v1703 = vmul.f32 1.0, %v1702
    %v1704 = vrcp.pop %v1673
    %v1705 = vmul.f32 1.0, %v1704
    %v1706 = vmul.f32 %v1611, %v1675
    %v1707 = vmul.f32 %v1613, %v1677
    %v1708 = vmul.f32 %v1615, %v1679
    %v1709 = vmul.f32 %v1617, %v1681
    %v1710 = vmul.f32 %v1619, %v1683
    %v1711 = vmul.f32 %v1621, %v1685
    %v1712 = vmul.f32 %v1623, %v1687
    %v1713 = vmul.f32 %v1625, %v1689
    %v1714 = vmul.f32 %v1627, %v1691
    %v1715 = vmul.f32 %v1629, %v1693
    %v1716 = vmul.f32 %v1631, %v1695
    %v1717 = vmul.f32 %v1633, %v1697
    %v1718 = vmul.f32 %v1635, %v1699
    %v1719 = vmul.f32 %v1637, %v1701
    %v1720 = vmul.f32 %v1639, %v1703
    %v1721 = vmul.f32 %v1641, %v1705
    %1738 = vrot.lane.b32.xlu0 %v616, 112
    %v1739 = vpop.permute.xlu0 %1738
    %1740 = vrot.lane.b32.xlu0 %v621, 112
    %v1741 = vpop.permute.xlu0 %1740
    %1742 = vrot.lane.b32.xlu0 %v626, 112
    %v1743 = vpop.permute.xlu0 %1742
    %1744 = vrot.lane.b32.xlu0 %v631, 112
    %v1745 = vpop.permute.xlu0 %1744
    %1746 = vrot.lane.b32.xlu0 %v636, 112
    %v1747 = vpop.permute.xlu0 %1746
    %1748 = vrot.lane.b32.xlu0 %v641, 112
    %v1749 = vpop.permute.xlu0 %1748
    %1750 = vrot.lane.b32.xlu0 %v646, 112
    %v1751 = vpop.permute.xlu0 %1750
    %1752 = vrot.lane.b32.xlu0 %v651, 112
    %v1753 = vpop.permute.xlu0 %1752
    %1754 = vrot.lane.b32.xlu0 %v656, 112
    %v1755 = vpop.permute.xlu0 %1754
    %1756 = vrot.lane.b32.xlu0 %v661, 112
    %v1757 = vpop.permute.xlu0 %1756
    %1758 = vrot.lane.b32.xlu0 %v666, 112
    %v1759 = vpop.permute.xlu0 %1758
    %1760 = vrot.lane.b32.xlu0 %v671, 112
    %v1761 = vpop.permute.xlu0 %1760
    %1762 = vrot.lane.b32.xlu0 %v676, 112
    %v1763 = vpop.permute.xlu0 %1762
    %1764 = vrot.lane.b32.xlu0 %v681, 112
    %v1765 = vpop.permute.xlu0 %1764
    %1766 = vrot.lane.b32.xlu0 %v686, 112
    %v1767 = vpop.permute.xlu0 %1766
    %1768 = vrot.lane.b32.xlu0 %v691, 112
    %v1769 = vpop.permute.xlu0 %1768
    %1786 = vmatprep.subr.mxu0 0.0
    %1787 = vmatpush1.msra.mxu0 %v1769
    %1788 = vmatprep.subr.mxu0 0.0
    %1789 = vmatpush1.msra.mxu0 %v1767
    %1790 = vmatprep.subr.mxu0 0.0
    %1791 = vmatpush1.msra.mxu0 %v1765
    %1792 = vmatprep.subr.mxu0 0.0
    %1793 = vmatpush1.msra.mxu0 %v1763
    %1794 = vmatprep.subr.mxu0 0.0
    %1795 = vmatpush1.msra.mxu0 %v1761
    %1796 = vmatprep.subr.mxu0 0.0
    %1797 = vmatpush1.msra.mxu0 %v1759
    %1798 = vmatprep.subr.mxu0 0.0
    %1799 = vmatpush1.msra.mxu0 %v1757
    %1800 = vmatprep.subr.mxu0 0.0
    %1801 = vmatpush1.msra.mxu0 %v1755
    %1802 = vmatprep.subr.mxu0 0.0
    %1803 = vmatpush1.msra.mxu0 %v1753
    %1804 = vmatprep.subr.mxu0 0.0
    %1805 = vmatpush1.msra.mxu0 %v1751
    %1806 = vmatprep.subr.mxu0 0.0
    %1807 = vmatpush1.msra.mxu0 %v1749
    %1808 = vmatprep.subr.mxu0 0.0
    %1809 = vmatpush1.msra.mxu0 %v1747
    %1810 = vmatprep.subr.mxu0 0.0
    %1811 = vmatpush1.msra.mxu0 %v1745
    %1812 = vmatprep.subr.mxu0 0.0
    %1813 = vmatpush1.msra.mxu0 %v1743
    %1814 = vmatprep.subr.mxu0 0.0
    %1815 = vmatpush1.msra.mxu0 %v1741
    %1816 = vmatprep.subr.mxu0 0.0
    %1817 = vmatpush1.msra.mxu0 %v1739
    %1818 = vmatprep.subr.mxu0 0.0
    %1819 = vmatpush2.msra.mxu0 0.0
    %1820 = vmatprep.subr.mxu0 0.0
    %1821 = vmatpush2.msra.mxu0 0.0
    %1822 = vmatprep.subr.mxu0 0.0
    %1823 = vmatpush2.msra.mxu0 0.0
    %1824 = vmatprep.subr.mxu0 0.0
    %1825 = vmatpush2.msra.mxu0 0.0
    %1826 = vmatprep.subr.mxu0 0.0
    %1827 = vmatpush2.msra.mxu0 0.0
    %1828 = vmatprep.subr.mxu0 0.0
    %1829 = vmatpush2.msra.mxu0 0.0
    %1830 = vmatprep.subr.mxu0 0.0
    %1831 = vmatpush2.msra.mxu0 0.0
    %1832 = vmatprep.subr.mxu0 0.0
    %1833 = vmatpush2.msra.mxu0 0.0
    %1834 = vmatprep.subr.mxu0 0.0
    %1835 = vmatpush2.msra.mxu0 0.0
    %1836 = vmatprep.subr.mxu0 0.0
    %1837 = vmatpush2.msra.mxu0 0.0
    %1838 = vmatprep.subr.mxu0 0.0
    %1839 = vmatpush2.msra.mxu0 0.0
    %1840 = vmatprep.subr.mxu0 0.0
    %1841 = vmatpush2.msra.mxu0 0.0
    %1842 = vmatprep.subr.mxu0 0.0
    %1843 = vmatpush2.msra.mxu0 0.0
    %1844 = vmatprep.subr.mxu0 0.0
    %1845 = vmatpush2.msra.mxu0 0.0
    %1846 = vmatprep.subr.mxu0 0.0
    %1847 = vmatpush2.msra.mxu0 0.0
    %1848 = vmatprep.subr.mxu0 0.0
    %1849 = vmatpush2.msra.mxu0 0.0
    %1850 = vmatprep.mubr.f32.mxu0 0.0
    %1851 = vmatmul.mubr.f32.gmra.mxu0 %v1706
    %v1852 = vpop.f32.mrf.mxu0
    %v1853 = vadd.f32 0.0, %v1852
    %v1854 = vpop.f32.mrf.mxu0
    %1855 = vmatprep.mubr.f32.mxu0 0.0
    %1856 = vmatmul.mubr.f32.gmra.mxu0 %v1707
    %v1857 = vpop.f32.mrf.mxu0
    %v1858 = vadd.f32 0.0, %v1857
    %v1859 = vpop.f32.mrf.mxu0
    %1860 = vmatprep.mubr.f32.mxu0 0.0
    %1861 = vmatmul.mubr.f32.gmra.mxu0 %v1708
    %v1862 = vpop.f32.mrf.mxu0
    %v1863 = vadd.f32 0.0, %v1862
    %v1864 = vpop.f32.mrf.mxu0
    %1865 = vmatprep.mubr.f32.mxu0 0.0
    %1866 = vmatmul.mubr.f32.gmra.mxu0 %v1709
    %v1867 = vpop.f32.mrf.mxu0
    %v1868 = vadd.f32 0.0, %v1867
    %v1869 = vpop.f32.mrf.mxu0
    %1870 = vmatprep.mubr.f32.mxu0 0.0
    %1871 = vmatmul.mubr.f32.gmra.mxu0 %v1710
    %v1872 = vpop.f32.mrf.mxu0
    %v1873 = vadd.f32 0.0, %v1872
    %v1874 = vpop.f32.mrf.mxu0
    %1875 = vmatprep.mubr.f32.mxu0 0.0
    %1876 = vmatmul.mubr.f32.gmra.mxu0 %v1711
    %v1877 = vpop.f32.mrf.mxu0
    %v1878 = vadd.f32 0.0, %v1877
    %v1879 = vpop.f32.mrf.mxu0
    %1880 = vmatprep.mubr.f32.mxu0 0.0
    %1881 = vmatmul.mubr.f32.gmra.mxu0 %v1712
    %v1882 = vpop.f32.mrf.mxu0
    %v1883 = vadd.f32 0.0, %v1882
    %v1884 = vpop.f32.mrf.mxu0
    %1885 = vmatprep.mubr.f32.mxu0 0.0
    %1886 = vmatmul.mubr.f32.gmra.mxu0 %v1713
    %v1887 = vpop.f32.mrf.mxu0
    %v1888 = vadd.f32 0.0, %v1887
    %v1889 = vpop.f32.mrf.mxu0
    %1890 = vmatprep.mubr.f32.mxu0 0.0
    %1891 = vmatmul.mubr.f32.gmra.mxu0 %v1714
    %v1892 = vpop.f32.mrf.mxu0
    %v1893 = vadd.f32 0.0, %v1892
    %v1894 = vpop.f32.mrf.mxu0
    %1895 = vmatprep.mubr.f32.mxu0 0.0
    %1896 = vmatmul.mubr.f32.gmra.mxu0 %v1715
    %v1897 = vpop.f32.mrf.mxu0
    %v1898 = vadd.f32 0.0, %v1897
    %v1899 = vpop.f32.mrf.mxu0
    %1900 = vmatprep.mubr.f32.mxu0 0.0
    %1901 = vmatmul.mubr.f32.gmra.mxu0 %v1716
    %v1902 = vpop.f32.mrf.mxu0
    %v1903 = vadd.f32 0.0, %v1902
    %v1904 = vpop.f32.mrf.mxu0
    %1905 = vmatprep.mubr.f32.mxu0 0.0
    %1906 = vmatmul.mubr.f32.gmra.mxu0 %v1717
    %v1907 = vpop.f32.mrf.mxu0
    %v1908 = vadd.f32 0.0, %v1907
    %v1909 = vpop.f32.mrf.mxu0
    %1910 = vmatprep.mubr.f32.mxu0 0.0
    %1911 = vmatmul.mubr.f32.gmra.mxu0 %v1718
    %v1912 = vpop.f32.mrf.mxu0
    %v1913 = vadd.f32 0.0, %v1912
    %v1914 = vpop.f32.mrf.mxu0
    %1915 = vmatprep.mubr.f32.mxu0 0.0
    %1916 = vmatmul.mubr.f32.gmra.mxu0 %v1719
    %v1917 = vpop.f32.mrf.mxu0
    %v1918 = vadd.f32 0.0, %v1917
    %v1919 = vpop.f32.mrf.mxu0
    %1920 = vmatprep.mubr.f32.mxu0 0.0
    %1921 = vmatmul.mubr.f32.gmra.mxu0 %v1720
    %v1922 = vpop.f32.mrf.mxu0
    %v1923 = vadd.f32 0.0, %v1922
    %v1924 = vpop.f32.mrf.mxu0
    %1925 = vmatprep.mubr.f32.mxu0 0.0
    %1926 = vmatmul.mubr.f32.gmra.mxu0 %v1721
    %v1927 = vpop.f32.mrf.mxu0
    %v1928 = vadd.f32 0.0, %v1927
    %v1929 = vpop.f32.mrf.mxu0
    %1930 = vdwg.mxu0
    %v1932 = vsel %vm742, %v1853, 0
    %v1935 = vsel %vm742, %v1858, 0
    %v1938 = vsel %vm742, %v1863, 0
    %v1941 = vsel %vm742, %v1868, 0
    %v1944 = vsel %vm742, %v1873, 0
    %v1947 = vsel %vm742, %v1878, 0
    %v1950 = vsel %vm742, %v1883, 0
    %v1953 = vsel %vm742, %v1888, 0
    %v1956 = vsel %vm742, %v1893, 0
    %v1959 = vsel %vm742, %v1898, 0
    %v1962 = vsel %vm742, %v1903, 0
    %v1965 = vsel %vm742, %v1908, 0
    %v1968 = vsel %vm742, %v1913, 0
    %v1971 = vsel %vm742, %v1918, 0
    %v1974 = vsel %vm742, %v1923, 0
    %v1977 = vsel %vm742, %v1928, 0
    %1979 = vmatprep.subr.mxu0 0.0
    %1980 = vmatpush1.msra.mxu0 0.0
    %1981 = vmatprep.subr.mxu0 0.0
    %1982 = vmatpush1.msra.mxu0 0.0
    %1983 = vmatprep.subr.mxu0 0.0
    %1984 = vmatpush1.msra.mxu0 0.0
    %1985 = vmatprep.subr.mxu0 0.0
    %1986 = vmatpush1.msra.mxu0 0.0
    %1987 = vmatprep.subr.mxu0 0.0
    %1988 = vmatpush1.msra.mxu0 0.0
    %1989 = vmatprep.subr.mxu0 0.0
    %1990 = vmatpush1.msra.mxu0 0.0
    %1991 = vmatprep.subr.mxu0 0.0
    %1992 = vmatpush1.msra.mxu0 0.0
    %1993 = vmatprep.subr.mxu0 0.0
    %1994 = vmatpush1.msra.mxu0 0.0
    %1995 = vmatprep.subr.mxu0 0.0
    %1996 = vmatpush1.msra.mxu0 0.0
    %1997 = vmatprep.subr.mxu0 0.0
    %1998 = vmatpush1.msra.mxu0 0.0
    %1999 = vmatprep.subr.mxu0 0.0
    %2000 = vmatpush1.msra.mxu0 0.0
    %2001 = vmatprep.subr.mxu0 0.0
    %2002 = vmatpush1.msra.mxu0 0.0
    %2003 = vmatprep.subr.mxu0 0.0
    %2004 = vmatpush1.msra.mxu0 0.0
    %2005 = vmatprep.subr.mxu0 0.0
    %2006 = vmatpush1.msra.mxu0 0.0
    %2007 = vmatprep.subr.mxu0 0.0
    %2008 = vmatpush1.msra.mxu0 %v713
    %2009 = vmatprep.subr.mxu0 0.0
    %2010 = vmatpush1.msra.mxu0 %v712
    %2011 = vmatprep.subr.mxu0 0.0
    %2012 = vmatpush2.msra.mxu0 0.0
    %2013 = vmatprep.subr.mxu0 0.0
    %2014 = vmatpush2.msra.mxu0 0.0
    %2015 = vmatprep.subr.mxu0 0.0
    %2016 = vmatpush2.msra.mxu0 0.0
    %2017 = vmatprep.subr.mxu0 0.0
    %2018 = vmatpush2.msra.mxu0 0.0
    %2019 = vmatprep.subr.mxu0 0.0
    %2020 = vmatpush2.msra.mxu0 0.0
    %2021 = vmatprep.subr.mxu0 0.0
    %2022 = vmatpush2.msra.mxu0 0.0
    %2023 = vmatprep.subr.mxu0 0.0
    %2024 = vmatpush2.msra.mxu0 0.0
    %2025 = vmatprep.subr.mxu0 0.0
    %2026 = vmatpush2.msra.mxu0 0.0
    %2027 = vmatprep.subr.mxu0 0.0
    %2028 = vmatpush2.msra.mxu0 0.0
    %2029 = vmatprep.subr.mxu0 0.0
    %2030 = vmatpush2.msra.mxu0 0.0
    %2031 = vmatprep.subr.mxu0 0.0
    %2032 = vmatpush2.msra.mxu0 0.0
    %2033 = vmatprep.subr.mxu0 0.0
    %2034 = vmatpush2.msra.mxu0 0.0
    %2035 = vmatprep.subr.mxu0 0.0
    %2036 = vmatpush2.msra.mxu0 0.0
    %2037 = vmatprep.subr.mxu0 0.0
    %2038 = vmatpush2.msra.mxu0 0.0
    %2039 = vmatprep.subr.mxu0 0.0
    %2040 = vmatpush2.msra.mxu0 0.0
    %2041 = vmatprep.subr.mxu0 0.0
    %2042 = vmatpush2.msra.mxu0 0.0
    %2043 = vmatprep.mubr.f32.mxu0 0.0
    %2044 = vmatmul.mubr.f32.gmra.mxu0 %v1932
    %v2045 = vpop.f32.mrf.mxu0
    %v2046 = vadd.f32 0.0, %v2045
    %v2047 = vpop.f32.mrf.mxu0
    %2048 = vmatprep.mubr.f32.mxu0 0.0
    %2049 = vmatmul.mubr.f32.gmra.mxu0 %v1935
    %v2050 = vpop.f32.mrf.mxu0
    %v2051 = vadd.f32 0.0, %v2050
    %v2052 = vpop.f32.mrf.mxu0
    %2053 = vmatprep.mubr.f32.mxu0 0.0
    %2054 = vmatmul.mubr.f32.gmra.mxu0 %v1938
    %v2055 = vpop.f32.mrf.mxu0
    %v2056 = vadd.f32 0.0, %v2055
    %v2057 = vpop.f32.mrf.mxu0
    %2058 = vmatprep.mubr.f32.mxu0 0.0
    %2059 = vmatmul.mubr.f32.gmra.mxu0 %v1941
    %v2060 = vpop.f32.mrf.mxu0
    %v2061 = vadd.f32 0.0, %v2060
    %v2062 = vpop.f32.mrf.mxu0
    %2063 = vmatprep.mubr.f32.mxu0 0.0
    %2064 = vmatmul.mubr.f32.gmra.mxu0 %v1944
    %v2065 = vpop.f32.mrf.mxu0
    %v2066 = vadd.f32 0.0, %v2065
    %v2067 = vpop.f32.mrf.mxu0
    %2068 = vmatprep.mubr.f32.mxu0 0.0
    %2069 = vmatmul.mubr.f32.gmra.mxu0 %v1947
    %v2070 = vpop.f32.mrf.mxu0
    %v2071 = vadd.f32 0.0, %v2070
    %v2072 = vpop.f32.mrf.mxu0
    %2073 = vmatprep.mubr.f32.mxu0 0.0
    %2074 = vmatmul.mubr.f32.gmra.mxu0 %v1950
    %v2075 = vpop.f32.mrf.mxu0
    %v2076 = vadd.f32 0.0, %v2075
    %v2077 = vpop.f32.mrf.mxu0
    %2078 = vmatprep.mubr.f32.mxu0 0.0
    %2079 = vmatmul.mubr.f32.gmra.mxu0 %v1953
    %v2080 = vpop.f32.mrf.mxu0
    %v2081 = vadd.f32 0.0, %v2080
    %v2082 = vpop.f32.mrf.mxu0
    %2083 = vmatprep.mubr.f32.mxu0 0.0
    %2084 = vmatmul.mubr.f32.gmra.mxu0 %v1956
    %v2085 = vpop.f32.mrf.mxu0
    %v2086 = vadd.f32 0.0, %v2085
    %v2087 = vpop.f32.mrf.mxu0
    %2088 = vmatprep.mubr.f32.mxu0 0.0
    %2089 = vmatmul.mubr.f32.gmra.mxu0 %v1959
    %v2090 = vpop.f32.mrf.mxu0
    %v2091 = vadd.f32 0.0, %v2090
    %v2092 = vpop.f32.mrf.mxu0
    %2093 = vmatprep.mubr.f32.mxu0 0.0
    %2094 = vmatmul.mubr.f32.gmra.mxu0 %v1962
    %v2095 = vpop.f32.mrf.mxu0
    %v2096 = vadd.f32 0.0, %v2095
    %v2097 = vpop.f32.mrf.mxu0
    %2098 = vmatprep.mubr.f32.mxu0 0.0
    %2099 = vmatmul.mubr.f32.gmra.mxu0 %v1965
    %v2100 = vpop.f32.mrf.mxu0
    %v2101 = vadd.f32 0.0, %v2100
    %v2102 = vpop.f32.mrf.mxu0
    %2103 = vmatprep.mubr.f32.mxu0 0.0
    %2104 = vmatmul.mubr.f32.gmra.mxu0 %v1968
    %v2105 = vpop.f32.mrf.mxu0
    %v2106 = vadd.f32 0.0, %v2105
    %v2107 = vpop.f32.mrf.mxu0
    %2108 = vmatprep.mubr.f32.mxu0 0.0
    %2109 = vmatmul.mubr.f32.gmra.mxu0 %v1971
    %v2110 = vpop.f32.mrf.mxu0
    %v2111 = vadd.f32 0.0, %v2110
    %v2112 = vpop.f32.mrf.mxu0
    %2113 = vmatprep.mubr.f32.mxu0 0.0
    %2114 = vmatmul.mubr.f32.gmra.mxu0 %v1974
    %v2115 = vpop.f32.mrf.mxu0
    %v2116 = vadd.f32 0.0, %v2115
    %v2117 = vpop.f32.mrf.mxu0
    %2118 = vmatprep.mubr.f32.mxu0 0.0
    %2119 = vmatmul.mubr.f32.gmra.mxu0 %v1977
    %v2120 = vpop.f32.mrf.mxu0
    %v2121 = vadd.f32 0.0, %v2120
    %v2122 = vpop.f32.mrf.mxu0
    %2123 = vdwg.mxu0
    %v2125 = vsel %vm742, %v1211, 0
    %v2128 = vsel %vm742, %v1216, 0
    %v2131 = vsel %vm742, %v1221, 0
    %v2134 = vsel %vm742, %v1226, 0
    %v2137 = vsel %vm742, %v1231, 0
    %v2140 = vsel %vm742, %v1236, 0
    %v2143 = vsel %vm742, %v1241, 0
    %v2146 = vsel %vm742, %v1246, 0
    %v2149 = vsel %vm742, %v1251, 0
    %v2152 = vsel %vm742, %v1256, 0
    %v2155 = vsel %vm742, %v1261, 0
    %v2158 = vsel %vm742, %v1266, 0
    %v2161 = vsel %vm742, %v1271, 0
    %v2164 = vsel %vm742, %v1276, 0
    %v2167 = vsel %vm742, %v1281, 0
    %v2170 = vsel %vm742, %v1286, 0
    %2172 = vmatprep.subr.mxu0 0.0
    %2173 = vmatpush1.msra.mxu0 0.0
    %2174 = vmatprep.subr.mxu0 0.0
    %2175 = vmatpush1.msra.mxu0 0.0
    %2176 = vmatprep.subr.mxu0 0.0
    %2177 = vmatpush1.msra.mxu0 0.0
    %2178 = vmatprep.subr.mxu0 0.0
    %2179 = vmatpush1.msra.mxu0 0.0
    %2180 = vmatprep.subr.mxu0 0.0
    %2181 = vmatpush1.msra.mxu0 0.0
    %2182 = vmatprep.subr.mxu0 0.0
    %2183 = vmatpush1.msra.mxu0 0.0
    %2184 = vmatprep.subr.mxu0 0.0
    %2185 = vmatpush1.msra.mxu0 0.0
    %2186 = vmatprep.subr.mxu0 0.0
    %2187 = vmatpush1.msra.mxu0 0.0
    %2188 = vmatprep.subr.mxu0 0.0
    %2189 = vmatpush1.msra.mxu0 0.0
    %2190 = vmatprep.subr.mxu0 0.0
    %2191 = vmatpush1.msra.mxu0 0.0
    %2192 = vmatprep.subr.mxu0 0.0
    %2193 = vmatpush1.msra.mxu0 0.0
    %2194 = vmatprep.subr.mxu0 0.0
    %2195 = vmatpush1.msra.mxu0 0.0
    %2196 = vmatprep.subr.mxu0 0.0
    %2197 = vmatpush1.msra.mxu0 0.0
    %2198 = vmatprep.subr.mxu0 0.0
    %2199 = vmatpush1.msra.mxu0 0.0
    %2200 = vmatprep.subr.mxu0 0.0
    %2201 = vmatpush1.msra.mxu0 %v711
    %2202 = vmatprep.subr.mxu0 0.0
    %2203 = vmatpush1.msra.mxu0 %v710
    %2204 = vmatprep.subr.mxu0 0.0
    %2205 = vmatpush2.msra.mxu0 0.0
    %2206 = vmatprep.subr.mxu0 0.0
    %2207 = vmatpush2.msra.mxu0 0.0
    %2208 = vmatprep.subr.mxu0 0.0
    %2209 = vmatpush2.msra.mxu0 0.0
    %2210 = vmatprep.subr.mxu0 0.0
    %2211 = vmatpush2.msra.mxu0 0.0
    %2212 = vmatprep.subr.mxu0 0.0
    %2213 = vmatpush2.msra.mxu0 0.0
    %2214 = vmatprep.subr.mxu0 0.0
    %2215 = vmatpush2.msra.mxu0 0.0
    %2216 = vmatprep.subr.mxu0 0.0
    %2217 = vmatpush2.msra.mxu0 0.0
    %2218 = vmatprep.subr.mxu0 0.0
    %2219 = vmatpush2.msra.mxu0 0.0
    %2220 = vmatprep.subr.mxu0 0.0
    %2221 = vmatpush2.msra.mxu0 0.0
    %2222 = vmatprep.subr.mxu0 0.0
    %2223 = vmatpush2.msra.mxu0 0.0
    %2224 = vmatprep.subr.mxu0 0.0
    %2225 = vmatpush2.msra.mxu0 0.0
    %2226 = vmatprep.subr.mxu0 0.0
    %2227 = vmatpush2.msra.mxu0 0.0
    %2228 = vmatprep.subr.mxu0 0.0
    %2229 = vmatpush2.msra.mxu0 0.0
    %2230 = vmatprep.subr.mxu0 0.0
    %2231 = vmatpush2.msra.mxu0 0.0
    %2232 = vmatprep.subr.mxu0 0.0
    %2233 = vmatpush2.msra.mxu0 0.0
    %2234 = vmatprep.subr.mxu0 0.0
    %2235 = vmatpush2.msra.mxu0 0.0
    %2236 = vmatprep.mubr.f32.mxu0 0.0
    %2237 = vmatmul.mubr.f32.gmra.mxu0 %v2125
    %v2238 = vpop.f32.mrf.mxu0
    %v2239 = vadd.f32 %v2046, %v2238
    %v2240 = vpop.f32.mrf.mxu0
    %2241 = vmatprep.mubr.f32.mxu0 0.0
    %2242 = vmatmul.mubr.f32.gmra.mxu0 %v2128
    %v2243 = vpop.f32.mrf.mxu0
    %v2244 = vadd.f32 %v2051, %v2243
    %v2245 = vpop.f32.mrf.mxu0
    %2246 = vmatprep.mubr.f32.mxu0 0.0
    %2247 = vmatmul.mubr.f32.gmra.mxu0 %v2131
    %v2248 = vpop.f32.mrf.mxu0
    %v2249 = vadd.f32 %v2056, %v2248
    %v2250 = vpop.f32.mrf.mxu0
    %2251 = vmatprep.mubr.f32.mxu0 0.0
    %2252 = vmatmul.mubr.f32.gmra.mxu0 %v2134
    %v2253 = vpop.f32.mrf.mxu0
    %v2254 = vadd.f32 %v2061, %v2253
    %v2255 = vpop.f32.mrf.mxu0
    %2256 = vmatprep.mubr.f32.mxu0 0.0
    %2257 = vmatmul.mubr.f32.gmra.mxu0 %v2137
    %v2258 = vpop.f32.mrf.mxu0
    %v2259 = vadd.f32 %v2066, %v2258
    %v2260 = vpop.f32.mrf.mxu0
    %2261 = vmatprep.mubr.f32.mxu0 0.0
    %2262 = vmatmul.mubr.f32.gmra.mxu0 %v2140
    %v2263 = vpop.f32.mrf.mxu0
    %v2264 = vadd.f32 %v2071, %v2263
    %v2265 = vpop.f32.mrf.mxu0
    %2266 = vmatprep.mubr.f32.mxu0 0.0
    %2267 = vmatmul.mubr.f32.gmra.mxu0 %v2143
    %v2268 = vpop.f32.mrf.mxu0
    %v2269 = vadd.f32 %v2076, %v2268
    %v2270 = vpop.f32.mrf.mxu0
    %2271 = vmatprep.mubr.f32.mxu0 0.0
    %2272 = vmatmul.mubr.f32.gmra.mxu0 %v2146
    %v2273 = vpop.f32.mrf.mxu0
    %v2274 = vadd.f32 %v2081, %v2273
    %v2275 = vpop.f32.mrf.mxu0
    %2276 = vmatprep.mubr.f32.mxu0 0.0
    %2277 = vmatmul.mubr.f32.gmra.mxu0 %v2149
    %v2278 = vpop.f32.mrf.mxu0
    %v2279 = vadd.f32 %v2086, %v2278
    %v2280 = vpop.f32.mrf.mxu0
    %2281 = vmatprep.mubr.f32.mxu0 0.0
    %2282 = vmatmul.mubr.f32.gmra.mxu0 %v2152
    %v2283 = vpop.f32.mrf.mxu0
    %v2284 = vadd.f32 %v2091, %v2283
    %v2285 = vpop.f32.mrf.mxu0
    %2286 = vmatprep.mubr.f32.mxu0 0.0
    %2287 = vmatmul.mubr.f32.gmra.mxu0 %v2155
    %v2288 = vpop.f32.mrf.mxu0
    %v2289 = vadd.f32 %v2096, %v2288
    %v2290 = vpop.f32.mrf.mxu0
    %2291 = vmatprep.mubr.f32.mxu0 0.0
    %2292 = vmatmul.mubr.f32.gmra.mxu0 %v2158
    %v2293 = vpop.f32.mrf.mxu0
    %v2294 = vadd.f32 %v2101, %v2293
    %v2295 = vpop.f32.mrf.mxu0
    %2296 = vmatprep.mubr.f32.mxu0 0.0
    %2297 = vmatmul.mubr.f32.gmra.mxu0 %v2161
    %v2298 = vpop.f32.mrf.mxu0
    %v2299 = vadd.f32 %v2106, %v2298
    %v2300 = vpop.f32.mrf.mxu0
    %2301 = vmatprep.mubr.f32.mxu0 0.0
    %2302 = vmatmul.mubr.f32.gmra.mxu0 %v2164
    %v2303 = vpop.f32.mrf.mxu0
    %v2304 = vadd.f32 %v2111, %v2303
    %v2305 = vpop.f32.mrf.mxu0
    %2306 = vmatprep.mubr.f32.mxu0 0.0
    %2307 = vmatmul.mubr.f32.gmra.mxu0 %v2167
    %v2308 = vpop.f32.mrf.mxu0
    %v2309 = vadd.f32 %v2116, %v2308
    %v2310 = vpop.f32.mrf.mxu0
    %2311 = vmatprep.mubr.f32.mxu0 0.0
    %2312 = vmatmul.mubr.f32.gmra.mxu0 %v2170
    %v2313 = vpop.f32.mrf.mxu0
    %v2314 = vadd.f32 %v2121, %v2313
    %v2315 = vpop.f32.mrf.mxu0
    %2316 = vdwg.mxu0
    %2317 = vrot.lane.b32.xlu0 %v726, 96
    %v2318 = vpop.permute.xlu0 %2317
    %2319 = vrot.lane.b32.xlu0 %v727, 96
    %v2320 = vpop.permute.xlu0 %2319
    %2321 = vrot.lane.b32.xlu0 %v728, 96
    %v2322 = vpop.permute.xlu0 %2321
    %2323 = vrot.lane.b32.xlu0 %v729, 96
    %v2324 = vpop.permute.xlu0 %2323
    %2325 = vrot.lane.b32.xlu0 %v730, 96
    %v2326 = vpop.permute.xlu0 %2325
    %2327 = vrot.lane.b32.xlu0 %v731, 96
    %v2328 = vpop.permute.xlu0 %2327
    %2329 = vrot.lane.b32.xlu0 %v732, 96
    %v2330 = vpop.permute.xlu0 %2329
    %2331 = vrot.lane.b32.xlu0 %v733, 96
    %v2332 = vpop.permute.xlu0 %2331
    %2333 = vrot.lane.b32.xlu0 %v734, 96
    %v2334 = vpop.permute.xlu0 %2333
    %2335 = vrot.lane.b32.xlu0 %v735, 96
    %v2336 = vpop.permute.xlu0 %2335
    %2337 = vrot.lane.b32.xlu0 %v736, 96
    %v2338 = vpop.permute.xlu0 %2337
    %2339 = vrot.lane.b32.xlu0 %v737, 96
    %v2340 = vpop.permute.xlu0 %2339
    %2341 = vrot.lane.b32.xlu0 %v738, 96
    %v2342 = vpop.permute.xlu0 %2341
    %2343 = vrot.lane.b32.xlu0 %v739, 96
    %v2344 = vpop.permute.xlu0 %2343
    %2345 = vrot.lane.b32.xlu0 %v740, 96
    %v2346 = vpop.permute.xlu0 %2345
    %2347 = vrot.lane.b32.xlu0 %v741, 96
    %v2348 = vpop.permute.xlu0 %2347
    %2349 = vrot.lane.b32.xlu0 %v457, 96
    %v2350 = vpop.permute.xlu0 %2349
    %2351 = vrot.lane.b32.xlu0 %v463, 96
    %v2352 = vpop.permute.xlu0 %2351
    %2353 = vrot.lane.b32.xlu0 %v469, 96
    %v2354 = vpop.permute.xlu0 %2353
    %2355 = vrot.lane.b32.xlu0 %v475, 96
    %v2356 = vpop.permute.xlu0 %2355
    %2357 = vrot.lane.b32.xlu0 %v481, 96
    %v2358 = vpop.permute.xlu0 %2357
    %2359 = vrot.lane.b32.xlu0 %v487, 96
    %v2360 = vpop.permute.xlu0 %2359
    %2361 = vrot.lane.b32.xlu0 %v493, 96
    %v2362 = vpop.permute.xlu0 %2361
    %2363 = vrot.lane.b32.xlu0 %v499, 96
    %v2364 = vpop.permute.xlu0 %2363
    %2365 = vrot.lane.b32.xlu0 %v505, 96
    %v2366 = vpop.permute.xlu0 %2365
    %2367 = vrot.lane.b32.xlu0 %v511, 96
    %v2368 = vpop.permute.xlu0 %2367
    %2369 = vrot.lane.b32.xlu0 %v517, 96
    %v2370 = vpop.permute.xlu0 %2369
    %2371 = vrot.lane.b32.xlu0 %v523, 96
    %v2372 = vpop.permute.xlu0 %2371
    %2373 = vrot.lane.b32.xlu0 %v529, 96
    %v2374 = vpop.permute.xlu0 %2373
    %2375 = vrot.lane.b32.xlu0 %v535, 96
    %v2376 = vpop.permute.xlu0 %2375
    %2377 = vrot.lane.b32.xlu0 %v541, 96
    %v2378 = vpop.permute.xlu0 %2377
    %2379 = vrot.lane.b32.xlu0 %v547, 96
    %v2380 = vpop.permute.xlu0 %2379
    %v2381 = vsel %vm742, %v2318, 0
    %v2383 = vsel %vm742, %v2320, 0
    %v2385 = vsel %vm742, %v2322, 0
    %v2387 = vsel %vm742, %v2324, 0
    %v2389 = vsel %vm742, %v2326, 0
    %v2391 = vsel %vm742, %v2328, 0
    %v2393 = vsel %vm742, %v2330, 0
    %v2395 = vsel %vm742, %v2332, 0
    %v2397 = vsel %vm742, %v2334, 0
    %v2399 = vsel %vm742, %v2336, 0
    %v2401 = vsel %vm742, %v2338, 0
    %v2403 = vsel %vm742, %v2340, 0
    %v2405 = vsel %vm742, %v2342, 0
    %v2407 = vsel %vm742, %v2344, 0
    %v2409 = vsel %vm742, %v2346, 0
    %v2411 = vsel %vm742, %v2348, 0
    %v2413 = vsel %vm742, %v2350, 0
    %v2415 = vsel %vm742, %v2352, 0
    %v2417 = vsel %vm742, %v2354, 0
    %v2419 = vsel %vm742, %v2356, 0
    %v2421 = vsel %vm742, %v2358, 0
    %v2423 = vsel %vm742, %v2360, 0
    %v2425 = vsel %vm742, %v2362, 0
    %v2427 = vsel %vm742, %v2364, 0
    %v2429 = vsel %vm742, %v2366, 0
    %v2431 = vsel %vm742, %v2368, 0
    %v2433 = vsel %vm742, %v2370, 0
    %v2435 = vsel %vm742, %v2372, 0
    %v2437 = vsel %vm742, %v2374, 0
    %v2439 = vsel %vm742, %v2376, 0
    %v2441 = vsel %vm742, %v2378, 0
    %v2443 = vsel %vm742, %v2380, 0
    %2445 = vmatprep.subr.mxu0 0.0
    %2446 = vmatpush1.xpose.msra.mxu0 %v2443
    %2447 = vmatprep.subr.mxu0 0.0
    %2448 = vmatpush1.xpose.msra.mxu0 %v2441
    %2449 = vmatprep.subr.mxu0 0.0
    %2450 = vmatpush1.xpose.msra.mxu0 %v2439
    %2451 = vmatprep.subr.mxu0 0.0
    %2452 = vmatpush1.xpose.msra.mxu0 %v2437
    %2453 = vmatprep.subr.mxu0 0.0
    %2454 = vmatpush1.xpose.msra.mxu0 %v2435
    %2455 = vmatprep.subr.mxu0 0.0
    %2456 = vmatpush1.xpose.msra.mxu0 %v2433
    %2457 = vmatprep.subr.mxu0 0.0
    %2458 = vmatpush1.xpose.msra.mxu0 %v2431
    %2459 = vmatprep.subr.mxu0 0.0
    %2460 = vmatpush1.xpose.msra.mxu0 %v2429
    %2461 = vmatprep.subr.mxu0 0.0
    %2462 = vmatpush1.xpose.msra.mxu0 %v2427
    %2463 = vmatprep.subr.mxu0 0.0
    %2464 = vmatpush1.xpose.msra.mxu0 %v2425
    %2465 = vmatprep.subr.mxu0 0.0
    %2466 = vmatpush1.xpose.msra.mxu0 %v2423
    %2467 = vmatprep.subr.mxu0 0.0
    %2468 = vmatpush1.xpose.msra.mxu0 %v2421
    %2469 = vmatprep.subr.mxu0 0.0
    %2470 = vmatpush1.xpose.msra.mxu0 %v2419
    %2471 = vmatprep.subr.mxu0 0.0
    %2472 = vmatpush1.xpose.msra.mxu0 %v2417
    %2473 = vmatprep.subr.mxu0 0.0
    %2474 = vmatpush1.xpose.msra.mxu0 %v2415
    %2475 = vmatprep.subr.mxu0 0.0
    %2476 = vmatpush1.xpose.msra.mxu0 %v2413
    %2477 = vmatprep.subr.mxu0 0.0
    %2478 = vmatpush2.xpose.msra.mxu0 0.0
    %2479 = vmatprep.subr.mxu0 0.0
    %2480 = vmatpush2.xpose.msra.mxu0 0.0
    %2481 = vmatprep.subr.mxu0 0.0
    %2482 = vmatpush2.xpose.msra.mxu0 0.0
    %2483 = vmatprep.subr.mxu0 0.0
    %2484 = vmatpush2.xpose.msra.mxu0 0.0
    %2485 = vmatprep.subr.mxu0 0.0
    %2486 = vmatpush2.xpose.msra.mxu0 0.0
    %2487 = vmatprep.subr.mxu0 0.0
    %2488 = vmatpush2.xpose.msra.mxu0 0.0
    %2489 = vmatprep.subr.mxu0 0.0
    %2490 = vmatpush2.xpose.msra.mxu0 0.0
    %2491 = vmatprep.subr.mxu0 0.0
    %2492 = vmatpush2.xpose.msra.mxu0 0.0
    %2493 = vmatprep.subr.mxu0 0.0
    %2494 = vmatpush2.xpose.msra.mxu0 0.0
    %2495 = vmatprep.subr.mxu0 0.0
    %2496 = vmatpush2.xpose.msra.mxu0 0.0
    %2497 = vmatprep.subr.mxu0 0.0
    %2498 = vmatpush2.xpose.msra.mxu0 0.0
    %2499 = vmatprep.subr.mxu0 0.0
    %2500 = vmatpush2.xpose.msra.mxu0 0.0
    %2501 = vmatprep.subr.mxu0 0.0
    %2502 = vmatpush2.xpose.msra.mxu0 0.0
    %2503 = vmatprep.subr.mxu0 0.0
    %2504 = vmatpush2.xpose.msra.mxu0 0.0
    %2505 = vmatprep.subr.mxu0 0.0
    %2506 = vmatpush2.xpose.msra.mxu0 0.0
    %2507 = vmatprep.subr.mxu0 0.0
    %2508 = vmatpush2.xpose.msra.mxu0 0.0
    %2509 = vmatprep.mubr.f32.mxu0 0.0
    %2510 = vmatmul.mubr.f32.gmra.mxu0 %v2381
    %v2511 = vpop.f32.mrf.mxu0
    %v2512 = vadd.f32 %v694, %v2511
    %v2513 = vpop.f32.mrf.mxu0
    %2514 = vmatprep.mubr.f32.mxu0 0.0
    %2515 = vmatmul.mubr.f32.gmra.mxu0 %v2383
    %v2516 = vpop.f32.mrf.mxu0
    %v2517 = vadd.f32 %v695, %v2516
    %v2518 = vpop.f32.mrf.mxu0
    %2519 = vmatprep.mubr.f32.mxu0 0.0
    %2520 = vmatmul.mubr.f32.gmra.mxu0 %v2385
    %v2521 = vpop.f32.mrf.mxu0
    %v2522 = vadd.f32 %v696, %v2521
    %v2523 = vpop.f32.mrf.mxu0
    %2524 = vmatprep.mubr.f32.mxu0 0.0
    %2525 = vmatmul.mubr.f32.gmra.mxu0 %v2387
    %v2526 = vpop.f32.mrf.mxu0
    %v2527 = vadd.f32 %v697, %v2526
    %v2528 = vpop.f32.mrf.mxu0
    %2529 = vmatprep.mubr.f32.mxu0 0.0
    %2530 = vmatmul.mubr.f32.gmra.mxu0 %v2389
    %v2531 = vpop.f32.mrf.mxu0
    %v2532 = vadd.f32 %v698, %v2531
    %v2533 = vpop.f32.mrf.mxu0
    %2534 = vmatprep.mubr.f32.mxu0 0.0
    %2535 = vmatmul.mubr.f32.gmra.mxu0 %v2391
    %v2536 = vpop.f32.mrf.mxu0
    %v2537 = vadd.f32 %v699, %v2536
    %v2538 = vpop.f32.mrf.mxu0
    %2539 = vmatprep.mubr.f32.mxu0 0.0
    %2540 = vmatmul.mubr.f32.gmra.mxu0 %v2393
    %v2541 = vpop.f32.mrf.mxu0
    %v2542 = vadd.f32 %v700, %v2541
    %v2543 = vpop.f32.mrf.mxu0
    %2544 = vmatprep.mubr.f32.mxu0 0.0
    %2545 = vmatmul.mubr.f32.gmra.mxu0 %v2395
    %v2546 = vpop.f32.mrf.mxu0
    %v2547 = vadd.f32 %v701, %v2546
    %v2548 = vpop.f32.mrf.mxu0
    %2549 = vmatprep.mubr.f32.mxu0 0.0
    %2550 = vmatmul.mubr.f32.gmra.mxu0 %v2397
    %v2551 = vpop.f32.mrf.mxu0
    %v2552 = vadd.f32 %v702, %v2551
    %v2553 = vpop.f32.mrf.mxu0
    %2554 = vmatprep.mubr.f32.mxu0 0.0
    %2555 = vmatmul.mubr.f32.gmra.mxu0 %v2399
    %v2556 = vpop.f32.mrf.mxu0
    %v2557 = vadd.f32 %v703, %v2556
    %v2558 = vpop.f32.mrf.mxu0
    %2559 = vmatprep.mubr.f32.mxu0 0.0
    %2560 = vmatmul.mubr.f32.gmra.mxu0 %v2401
    %v2561 = vpop.f32.mrf.mxu0
    %v2562 = vadd.f32 %v704, %v2561
    %v2563 = vpop.f32.mrf.mxu0
    %2564 = vmatprep.mubr.f32.mxu0 0.0
    %2565 = vmatmul.mubr.f32.gmra.mxu0 %v2403
    %v2566 = vpop.f32.mrf.mxu0
    %v2567 = vadd.f32 %v705, %v2566
    %v2568 = vpop.f32.mrf.mxu0
    %2569 = vmatprep.mubr.f32.mxu0 0.0
    %2570 = vmatmul.mubr.f32.gmra.mxu0 %v2405
    %v2571 = vpop.f32.mrf.mxu0
    %v2572 = vadd.f32 %v706, %v2571
    %v2573 = vpop.f32.mrf.mxu0
    %2574 = vmatprep.mubr.f32.mxu0 0.0
    %2575 = vmatmul.mubr.f32.gmra.mxu0 %v2407
    %v2576 = vpop.f32.mrf.mxu0
    %v2577 = vadd.f32 %v707, %v2576
    %v2578 = vpop.f32.mrf.mxu0
    %2579 = vmatprep.mubr.f32.mxu0 0.0
    %2580 = vmatmul.mubr.f32.gmra.mxu0 %v2409
    %v2581 = vpop.f32.mrf.mxu0
    %v2582 = vadd.f32 %v708, %v2581
    %v2583 = vpop.f32.mrf.mxu0
    %2584 = vmatprep.mubr.f32.mxu0 0.0
    %2585 = vmatmul.mubr.f32.gmra.mxu0 %v2411
    %v2586 = vpop.f32.mrf.mxu0
    %v2587 = vadd.f32 %v709, %v2586
    %v2588 = vpop.f32.mrf.mxu0
    %2589 = vdwg.mxu0
    %2590 = vmax.xlane.f32.xlu0 %v2512
    %v2591 = vpop.xlane.xlu0 %2590
    %2592 = vmax.xlane.f32.xlu0 %v2517
    %v2593 = vpop.xlane.xlu0 %2592
    %2594 = vmax.xlane.f32.xlu0 %v2522
    %v2595 = vpop.xlane.xlu0 %2594
    %2596 = vmax.xlane.f32.xlu0 %v2527
    %v2597 = vpop.xlane.xlu0 %2596
    %2598 = vmax.xlane.f32.xlu0 %v2532
    %v2599 = vpop.xlane.xlu0 %2598
    %2600 = vmax.xlane.f32.xlu0 %v2537
    %v2601 = vpop.xlane.xlu0 %2600
    %2602 = vmax.xlane.f32.xlu0 %v2542
    %v2603 = vpop.xlane.xlu0 %2602
    %2604 = vmax.xlane.f32.xlu0 %v2547
    %v2605 = vpop.xlane.xlu0 %2604
    %2606 = vmax.xlane.f32.xlu0 %v2552
    %v2607 = vpop.xlane.xlu0 %2606
    %2608 = vmax.xlane.f32.xlu0 %v2557
    %v2609 = vpop.xlane.xlu0 %2608
    %2610 = vmax.xlane.f32.xlu0 %v2562
    %v2611 = vpop.xlane.xlu0 %2610
    %2612 = vmax.xlane.f32.xlu0 %v2567
    %v2613 = vpop.xlane.xlu0 %2612
    %2614 = vmax.xlane.f32.xlu0 %v2572
    %v2615 = vpop.xlane.xlu0 %2614
    %2616 = vmax.xlane.f32.xlu0 %v2577
    %v2617 = vpop.xlane.xlu0 %2616
    %2618 = vmax.xlane.f32.xlu0 %v2582
    %v2619 = vpop.xlane.xlu0 %2618
    %2620 = vmax.xlane.f32.xlu0 %v2587
    %v2621 = vpop.xlane.xlu0 %2620
    %v2622 = vsub.f32 %v2512, %v2591
    %v2623 = vsub.f32 %v2517, %v2593
    %v2624 = vsub.f32 %v2522, %v2595
    %v2625 = vsub.f32 %v2527, %v2597
    %v2626 = vsub.f32 %v2532, %v2599
    %v2627 = vsub.f32 %v2537, %v2601
    %v2628 = vsub.f32 %v2542, %v2603
    %v2629 = vsub.f32 %v2547, %v2605
    %v2630 = vsub.f32 %v2552, %v2607
    %v2631 = vsub.f32 %v2557, %v2609
    %v2632 = vsub.f32 %v2562, %v2611
    %v2633 = vsub.f32 %v2567, %v2613
    %v2634 = vsub.f32 %v2572, %v2615
    %v2635 = vsub.f32 %v2577, %v2617
    %v2636 = vsub.f32 %v2582, %v2619
    %v2637 = vsub.f32 %v2587, %v2621
    %v2638 = vmul.f32 %v2622, 1.442695
    %v2639 = vpow.pop %v2638
    %v2640 = vmul.f32 %v2623, 1.442695
    %v2641 = vpow.pop %v2640
    %v2642 = vmul.f32 %v2624, 1.442695
    %v2643 = vpow.pop %v2642
    %v2644 = vmul.f32 %v2625, 1.442695
    %v2645 = vpow.pop %v2644
    %v2646 = vmul.f32 %v2626, 1.442695
    %v2647 = vpow.pop %v2646
    %v2648 = vmul.f32 %v2627, 1.442695
    %v2649 = vpow.pop %v2648
    %v2650 = vmul.f32 %v2628, 1.442695
    %v2651 = vpow.pop %v2650
    %v2652 = vmul.f32 %v2629, 1.442695
    %v2653 = vpow.pop %v2652
    %v2654 = vmul.f32 %v2630, 1.442695
    %v2655 = vpow.pop %v2654
    %v2656 = vmul.f32 %v2631, 1.442695
    %v2657 = vpow.pop %v2656
    %v2658 = vmul.f32 %v2632, 1.442695
    %v2659 = vpow.pop %v2658
    %v2660 = vmul.f32 %v2633, 1.442695
    %v2661 = vpow.pop %v2660
    %v2662 = vmul.f32 %v2634, 1.442695
    %v2663 = vpow.pop %v2662
    %v2664 = vmul.f32 %v2635, 1.442695
    %v2665 = vpow.pop %v2664
    %v2666 = vmul.f32 %v2636, 1.442695
    %v2667 = vpow.pop %v2666
    %v2668 = vmul.f32 %v2637, 1.442695
    %v2669 = vpow.pop %v2668
    %2670 = vadd.xlane.f32.xlu0 %v2639
    %v2671 = vpop.xlane.xlu0 %2670
    %2672 = vadd.xlane.f32.xlu0 %v2641
    %v2673 = vpop.xlane.xlu0 %2672
    %2674 = vadd.xlane.f32.xlu0 %v2643
    %v2675 = vpop.xlane.xlu0 %2674
    %2676 = vadd.xlane.f32.xlu0 %v2645
    %v2677 = vpop.xlane.xlu0 %2676
    %2678 = vadd.xlane.f32.xlu0 %v2647
    %v2679 = vpop.xlane.xlu0 %2678
    %2680 = vadd.xlane.f32.xlu0 %v2649
    %v2681 = vpop.xlane.xlu0 %2680
    %2682 = vadd.xlane.f32.xlu0 %v2651
    %v2683 = vpop.xlane.xlu0 %2682
    %2684 = vadd.xlane.f32.xlu0 %v2653
    %v2685 = vpop.xlane.xlu0 %2684
    %2686 = vadd.xlane.f32.xlu0 %v2655
    %v2687 = vpop.xlane.xlu0 %2686
    %2688 = vadd.xlane.f32.xlu0 %v2657
    %v2689 = vpop.xlane.xlu0 %2688
    %2690 = vadd.xlane.f32.xlu0 %v2659
    %v2691 = vpop.xlane.xlu0 %2690
    %2692 = vadd.xlane.f32.xlu0 %v2661
    %v2693 = vpop.xlane.xlu0 %2692
    %2694 = vadd.xlane.f32.xlu0 %v2663
    %v2695 = vpop.xlane.xlu0 %2694
    %2696 = vadd.xlane.f32.xlu0 %v2665
    %v2697 = vpop.xlane.xlu0 %2696
    %2698 = vadd.xlane.f32.xlu0 %v2667
    %v2699 = vpop.xlane.xlu0 %2698
    %2700 = vadd.xlane.f32.xlu0 %v2669
    %v2701 = vpop.xlane.xlu0 %2700
    %v2702 = vrcp.pop %v2671
    %v2703 = vmul.f32 1.0, %v2702
    %v2704 = vrcp.pop %v2673
    %v2705 = vmul.f32 1.0, %v2704
    %v2706 = vrcp.pop %v2675
    %v2707 = vmul.f32 1.0, %v2706
    %v2708 = vrcp.pop %v2677
    %v2709 = vmul.f32 1.0, %v2708
    %v2710 = vrcp.pop %v2679
    %v2711 = vmul.f32 1.0, %v2710
    %v2712 = vrcp.pop %v2681
    %v2713 = vmul.f32 1.0, %v2712
    %v2714 = vrcp.pop %v2683
    %v2715 = vmul.f32 1.0, %v2714
    %v2716 = vrcp.pop %v2685
    %v2717 = vmul.f32 1.0, %v2716
    %v2718 = vrcp.pop %v2687
    %v2719 = vmul.f32 1.0, %v2718
    %v2720 = vrcp.pop %v2689
    %v2721 = vmul.f32 1.0, %v2720
    %v2722 = vrcp.pop %v2691
    %v2723 = vmul.f32 1.0, %v2722
    %v2724 = vrcp.pop %v2693
    %v2725 = vmul.f32 1.0, %v2724
    %v2726 = vrcp.pop %v2695
    %v2727 = vmul.f32 1.0, %v2726
    %v2728 = vrcp.pop %v2697
    %v2729 = vmul.f32 1.0, %v2728
    %v2730 = vrcp.pop %v2699
    %v2731 = vmul.f32 1.0, %v2730
    %v2732 = vrcp.pop %v2701
    %v2733 = vmul.f32 1.0, %v2732
    %v2734 = vmul.f32 %v2639, %v2703
    %v2735 = vmul.f32 %v2641, %v2705
    %v2736 = vmul.f32 %v2643, %v2707
    %v2737 = vmul.f32 %v2645, %v2709
    %v2738 = vmul.f32 %v2647, %v2711
    %v2739 = vmul.f32 %v2649, %v2713
    %v2740 = vmul.f32 %v2651, %v2715
    %v2741 = vmul.f32 %v2653, %v2717
    %v2742 = vmul.f32 %v2655, %v2719
    %v2743 = vmul.f32 %v2657, %v2721
    %v2744 = vmul.f32 %v2659, %v2723
    %v2745 = vmul.f32 %v2661, %v2725
    %v2746 = vmul.f32 %v2663, %v2727
    %v2747 = vmul.f32 %v2665, %v2729
    %v2748 = vmul.f32 %v2667, %v2731
    %v2749 = vmul.f32 %v2669, %v2733
    %2750 = vrot.lane.b32.xlu0 %v616, 96
    %v2751 = vpop.permute.xlu0 %2750
    %2752 = vrot.lane.b32.xlu0 %v621, 96
    %v2753 = vpop.permute.xlu0 %2752
    %2754 = vrot.lane.b32.xlu0 %v626, 96
    %v2755 = vpop.permute.xlu0 %2754
    %2756 = vrot.lane.b32.xlu0 %v631, 96
    %v2757 = vpop.permute.xlu0 %2756
    %2758 = vrot.lane.b32.xlu0 %v636, 96
    %v2759 = vpop.permute.xlu0 %2758
    %2760 = vrot.lane.b32.xlu0 %v641, 96
    %v2761 = vpop.permute.xlu0 %2760
    %2762 = vrot.lane.b32.xlu0 %v646, 96
    %v2763 = vpop.permute.xlu0 %2762
    %2764 = vrot.lane.b32.xlu0 %v651, 96
    %v2765 = vpop.permute.xlu0 %2764
    %2766 = vrot.lane.b32.xlu0 %v656, 96
    %v2767 = vpop.permute.xlu0 %2766
    %2768 = vrot.lane.b32.xlu0 %v661, 96
    %v2769 = vpop.permute.xlu0 %2768
    %2770 = vrot.lane.b32.xlu0 %v666, 96
    %v2771 = vpop.permute.xlu0 %2770
    %2772 = vrot.lane.b32.xlu0 %v671, 96
    %v2773 = vpop.permute.xlu0 %2772
    %2774 = vrot.lane.b32.xlu0 %v676, 96
    %v2775 = vpop.permute.xlu0 %2774
    %2776 = vrot.lane.b32.xlu0 %v681, 96
    %v2777 = vpop.permute.xlu0 %2776
    %2778 = vrot.lane.b32.xlu0 %v686, 96
    %v2779 = vpop.permute.xlu0 %2778
    %2780 = vrot.lane.b32.xlu0 %v691, 96
    %v2781 = vpop.permute.xlu0 %2780
    %2798 = vmatprep.subr.mxu0 0.0
    %2799 = vmatpush1.msra.mxu0 %v2781
    %2800 = vmatprep.subr.mxu0 0.0
    %2801 = vmatpush1.msra.mxu0 %v2779
    %2802 = vmatprep.subr.mxu0 0.0
    %2803 = vmatpush1.msra.mxu0 %v2777
    %2804 = vmatprep.subr.mxu0 0.0
    %2805 = vmatpush1.msra.mxu0 %v2775
    %2806 = vmatprep.subr.mxu0 0.0
    %2807 = vmatpush1.msra.mxu0 %v2773
    %2808 = vmatprep.subr.mxu0 0.0
    %2809 = vmatpush1.msra.mxu0 %v2771
    %2810 = vmatprep.subr.mxu0 0.0
    %2811 = vmatpush1.msra.mxu0 %v2769
    %2812 = vmatprep.subr.mxu0 0.0
    %2813 = vmatpush1.msra.mxu0 %v2767
    %2814 = vmatprep.subr.mxu0 0.0
    %2815 = vmatpush1.msra.mxu0 %v2765
    %2816 = vmatprep.subr.mxu0 0.0
    %2817 = vmatpush1.msra.mxu0 %v2763
    %2818 = vmatprep.subr.mxu0 0.0
    %2819 = vmatpush1.msra.mxu0 %v2761
    %2820 = vmatprep.subr.mxu0 0.0
    %2821 = vmatpush1.msra.mxu0 %v2759
    %2822 = vmatprep.subr.mxu0 0.0
    %2823 = vmatpush1.msra.mxu0 %v2757
    %2824 = vmatprep.subr.mxu0 0.0
    %2825 = vmatpush1.msra.mxu0 %v2755
    %2826 = vmatprep.subr.mxu0 0.0
    %2827 = vmatpush1.msra.mxu0 %v2753
    %2828 = vmatprep.subr.mxu0 0.0
    %2829 = vmatpush1.msra.mxu0 %v2751
    %2830 = vmatprep.subr.mxu0 0.0
    %2831 = vmatpush2.msra.mxu0 0.0
    %2832 = vmatprep.subr.mxu0 0.0
    %2833 = vmatpush2.msra.mxu0 0.0
    %2834 = vmatprep.subr.mxu0 0.0
    %2835 = vmatpush2.msra.mxu0 0.0
    %2836 = vmatprep.subr.mxu0 0.0
    %2837 = vmatpush2.msra.mxu0 0.0
    %2838 = vmatprep.subr.mxu0 0.0
    %2839 = vmatpush2.msra.mxu0 0.0
    %2840 = vmatprep.subr.mxu0 0.0
    %2841 = vmatpush2.msra.mxu0 0.0
    %2842 = vmatprep.subr.mxu0 0.0
    %2843 = vmatpush2.msra.mxu0 0.0
    %2844 = vmatprep.subr.mxu0 0.0
    %2845 = vmatpush2.msra.mxu0 0.0
    %2846 = vmatprep.subr.mxu0 0.0
    %2847 = vmatpush2.msra.mxu0 0.0
    %2848 = vmatprep.subr.mxu0 0.0
    %2849 = vmatpush2.msra.mxu0 0.0
    %2850 = vmatprep.subr.mxu0 0.0
    %2851 = vmatpush2.msra.mxu0 0.0
    %2852 = vmatprep.subr.mxu0 0.0
    %2853 = vmatpush2.msra.mxu0 0.0
    %2854 = vmatprep.subr.mxu0 0.0
    %2855 = vmatpush2.msra.mxu0 0.0
    %2856 = vmatprep.subr.mxu0 0.0
    %2857 = vmatpush2.msra.mxu0 0.0
    %2858 = vmatprep.subr.mxu0 0.0
    %2859 = vmatpush2.msra.mxu0 0.0
    %2860 = vmatprep.subr.mxu0 0.0
    %2861 = vmatpush2.msra.mxu0 0.0
    %2862 = vmatprep.mubr.f32.mxu0 0.0
    %2863 = vmatmul.mubr.f32.gmra.mxu0 %v2734
    %v2864 = vpop.f32.mrf.mxu0
    %v2865 = vadd.f32 0.0, %v2864
    %v2866 = vpop.f32.mrf.mxu0
    %2867 = vmatprep.mubr.f32.mxu0 0.0
    %2868 = vmatmul.mubr.f32.gmra.mxu0 %v2735
    %v2869 = vpop.f32.mrf.mxu0
    %v2870 = vadd.f32 0.0, %v2869
    %v2871 = vpop.f32.mrf.mxu0
    %2872 = vmatprep.mubr.f32.mxu0 0.0
    %2873 = vmatmul.mubr.f32.gmra.mxu0 %v2736
    %v2874 = vpop.f32.mrf.mxu0
    %v2875 = vadd.f32 0.0, %v2874
    %v2876 = vpop.f32.mrf.mxu0
    %2877 = vmatprep.mubr.f32.mxu0 0.0
    %2878 = vmatmul.mubr.f32.gmra.mxu0 %v2737
    %v2879 = vpop.f32.mrf.mxu0
    %v2880 = vadd.f32 0.0, %v2879
    %v2881 = vpop.f32.mrf.mxu0
    %2882 = vmatprep.mubr.f32.mxu0 0.0
    %2883 = vmatmul.mubr.f32.gmra.mxu0 %v2738
    %v2884 = vpop.f32.mrf.mxu0
    %v2885 = vadd.f32 0.0, %v2884
    %v2886 = vpop.f32.mrf.mxu0
    %2887 = vmatprep.mubr.f32.mxu0 0.0
    %2888 = vmatmul.mubr.f32.gmra.mxu0 %v2739
    %v2889 = vpop.f32.mrf.mxu0
    %v2890 = vadd.f32 0.0, %v2889
    %v2891 = vpop.f32.mrf.mxu0
    %2892 = vmatprep.mubr.f32.mxu0 0.0
    %2893 = vmatmul.mubr.f32.gmra.mxu0 %v2740
    %v2894 = vpop.f32.mrf.mxu0
    %v2895 = vadd.f32 0.0, %v2894
    %v2896 = vpop.f32.mrf.mxu0
    %2897 = vmatprep.mubr.f32.mxu0 0.0
    %2898 = vmatmul.mubr.f32.gmra.mxu0 %v2741
    %v2899 = vpop.f32.mrf.mxu0
    %v2900 = vadd.f32 0.0, %v2899
    %v2901 = vpop.f32.mrf.mxu0
    %2902 = vmatprep.mubr.f32.mxu0 0.0
    %2903 = vmatmul.mubr.f32.gmra.mxu0 %v2742
    %v2904 = vpop.f32.mrf.mxu0
    %v2905 = vadd.f32 0.0, %v2904
    %v2906 = vpop.f32.mrf.mxu0
    %2907 = vmatprep.mubr.f32.mxu0 0.0
    %2908 = vmatmul.mubr.f32.gmra.mxu0 %v2743
    %v2909 = vpop.f32.mrf.mxu0
    %v2910 = vadd.f32 0.0, %v2909
    %v2911 = vpop.f32.mrf.mxu0
    %2912 = vmatprep.mubr.f32.mxu0 0.0
    %2913 = vmatmul.mubr.f32.gmra.mxu0 %v2744
    %v2914 = vpop.f32.mrf.mxu0
    %v2915 = vadd.f32 0.0, %v2914
    %v2916 = vpop.f32.mrf.mxu0
    %2917 = vmatprep.mubr.f32.mxu0 0.0
    %2918 = vmatmul.mubr.f32.gmra.mxu0 %v2745
    %v2919 = vpop.f32.mrf.mxu0
    %v2920 = vadd.f32 0.0, %v2919
    %v2921 = vpop.f32.mrf.mxu0
    %2922 = vmatprep.mubr.f32.mxu0 0.0
    %2923 = vmatmul.mubr.f32.gmra.mxu0 %v2746
    %v2924 = vpop.f32.mrf.mxu0
    %v2925 = vadd.f32 0.0, %v2924
    %v2926 = vpop.f32.mrf.mxu0
    %2927 = vmatprep.mubr.f32.mxu0 0.0
    %2928 = vmatmul.mubr.f32.gmra.mxu0 %v2747
    %v2929 = vpop.f32.mrf.mxu0
    %v2930 = vadd.f32 0.0, %v2929
    %v2931 = vpop.f32.mrf.mxu0
    %2932 = vmatprep.mubr.f32.mxu0 0.0
    %2933 = vmatmul.mubr.f32.gmra.mxu0 %v2748
    %v2934 = vpop.f32.mrf.mxu0
    %v2935 = vadd.f32 0.0, %v2934
    %v2936 = vpop.f32.mrf.mxu0
    %2937 = vmatprep.mubr.f32.mxu0 0.0
    %2938 = vmatmul.mubr.f32.gmra.mxu0 %v2749
    %v2939 = vpop.f32.mrf.mxu0
    %v2940 = vadd.f32 0.0, %v2939
    %v2941 = vpop.f32.mrf.mxu0
    %2942 = vdwg.mxu0
    %v2944 = vsel %vm742, %v2865, 0
    %v2947 = vsel %vm742, %v2870, 0
    %v2950 = vsel %vm742, %v2875, 0
    %v2953 = vsel %vm742, %v2880, 0
    %v2956 = vsel %vm742, %v2885, 0
    %v2959 = vsel %vm742, %v2890, 0
    %v2962 = vsel %vm742, %v2895, 0
    %v2965 = vsel %vm742, %v2900, 0
    %v2968 = vsel %vm742, %v2905, 0
    %v2971 = vsel %vm742, %v2910, 0
    %v2974 = vsel %vm742, %v2915, 0
    %v2977 = vsel %vm742, %v2920, 0
    %v2980 = vsel %vm742, %v2925, 0
    %v2983 = vsel %vm742, %v2930, 0
    %v2986 = vsel %vm742, %v2935, 0
    %v2989 = vsel %vm742, %v2940, 0
    %2991 = vmatprep.subr.mxu0 0.0
    %2992 = vmatpush1.msra.mxu0 0.0
    %2993 = vmatprep.subr.mxu0 0.0
    %2994 = vmatpush1.msra.mxu0 0.0
    %2995 = vmatprep.subr.mxu0 0.0
    %2996 = vmatpush1.msra.mxu0 0.0
    %2997 = vmatprep.subr.mxu0 0.0
    %2998 = vmatpush1.msra.mxu0 0.0
    %2999 = vmatprep.subr.mxu0 0.0
    %3000 = vmatpush1.msra.mxu0 0.0
    %3001 = vmatprep.subr.mxu0 0.0
    %3002 = vmatpush1.msra.mxu0 0.0
    %3003 = vmatprep.subr.mxu0 0.0
    %3004 = vmatpush1.msra.mxu0 0.0
    %3005 = vmatprep.subr.mxu0 0.0
    %3006 = vmatpush1.msra.mxu0 0.0
    %3007 = vmatprep.subr.mxu0 0.0
    %3008 = vmatpush1.msra.mxu0 0.0
    %3009 = vmatprep.subr.mxu0 0.0
    %3010 = vmatpush1.msra.mxu0 0.0
    %3011 = vmatprep.subr.mxu0 0.0
    %3012 = vmatpush1.msra.mxu0 0.0
    %3013 = vmatprep.subr.mxu0 0.0
    %3014 = vmatpush1.msra.mxu0 0.0
    %3015 = vmatprep.subr.mxu0 0.0
    %3016 = vmatpush1.msra.mxu0 0.0
    %3017 = vmatprep.subr.mxu0 0.0
    %3018 = vmatpush1.msra.mxu0 0.0
    %3019 = vmatprep.subr.mxu0 0.0
    %3020 = vmatpush1.msra.mxu0 %v715
    %3021 = vmatprep.subr.mxu0 0.0
    %3022 = vmatpush1.msra.mxu0 %v714
    %3023 = vmatprep.subr.mxu0 0.0
    %3024 = vmatpush2.msra.mxu0 0.0
    %3025 = vmatprep.subr.mxu0 0.0
    %3026 = vmatpush2.msra.mxu0 0.0
    %3027 = vmatprep.subr.mxu0 0.0
    %3028 = vmatpush2.msra.mxu0 0.0
    %3029 = vmatprep.subr.mxu0 0.0
    %3030 = vmatpush2.msra.mxu0 0.0
    %3031 = vmatprep.subr.mxu0 0.0
    %3032 = vmatpush2.msra.mxu0 0.0
    %3033 = vmatprep.subr.mxu0 0.0
    %3034 = vmatpush2.msra.mxu0 0.0
    %3035 = vmatprep.subr.mxu0 0.0
    %3036 = vmatpush2.msra.mxu0 0.0
    %3037 = vmatprep.subr.mxu0 0.0
    %3038 = vmatpush2.msra.mxu0 0.0
    %3039 = vmatprep.subr.mxu0 0.0
    %3040 = vmatpush2.msra.mxu0 0.0
    %3041 = vmatprep.subr.mxu0 0.0
    %3042 = vmatpush2.msra.mxu0 0.0
    %3043 = vmatprep.subr.mxu0 0.0
    %3044 = vmatpush2.msra.mxu0 0.0
    %3045 = vmatprep.subr.mxu0 0.0
    %3046 = vmatpush2.msra.mxu0 0.0
    %3047 = vmatprep.subr.mxu0 0.0
    %3048 = vmatpush2.msra.mxu0 0.0
    %3049 = vmatprep.subr.mxu0 0.0
    %3050 = vmatpush2.msra.mxu0 0.0
    %3051 = vmatprep.subr.mxu0 0.0
    %3052 = vmatpush2.msra.mxu0 0.0
    %3053 = vmatprep.subr.mxu0 0.0
    %3054 = vmatpush2.msra.mxu0 0.0
    %3055 = vmatprep.mubr.f32.mxu0 0.0
    %3056 = vmatmul.mubr.f32.gmra.mxu0 %v2944
    %v3057 = vpop.f32.mrf.mxu0
    %v3058 = vadd.f32 0.0, %v3057
    %v3059 = vpop.f32.mrf.mxu0
    %3060 = vmatprep.mubr.f32.mxu0 0.0
    %3061 = vmatmul.mubr.f32.gmra.mxu0 %v2947
    %v3062 = vpop.f32.mrf.mxu0
    %v3063 = vadd.f32 0.0, %v3062
    %v3064 = vpop.f32.mrf.mxu0
    %3065 = vmatprep.mubr.f32.mxu0 0.0
    %3066 = vmatmul.mubr.f32.gmra.mxu0 %v2950
    %v3067 = vpop.f32.mrf.mxu0
    %v3068 = vadd.f32 0.0, %v3067
    %v3069 = vpop.f32.mrf.mxu0
    %3070 = vmatprep.mubr.f32.mxu0 0.0
    %3071 = vmatmul.mubr.f32.gmra.mxu0 %v2953
    %v3072 = vpop.f32.mrf.mxu0
    %v3073 = vadd.f32 0.0, %v3072
    %v3074 = vpop.f32.mrf.mxu0
    %3075 = vmatprep.mubr.f32.mxu0 0.0
    %3076 = vmatmul.mubr.f32.gmra.mxu0 %v2956
    %v3077 = vpop.f32.mrf.mxu0
    %v3078 = vadd.f32 0.0, %v3077
    %v3079 = vpop.f32.mrf.mxu0
    %3080 = vmatprep.mubr.f32.mxu0 0.0
    %3081 = vmatmul.mubr.f32.gmra.mxu0 %v2959
    %v3082 = vpop.f32.mrf.mxu0
    %v3083 = vadd.f32 0.0, %v3082
    %v3084 = vpop.f32.mrf.mxu0
    %3085 = vmatprep.mubr.f32.mxu0 0.0
    %3086 = vmatmul.mubr.f32.gmra.mxu0 %v2962
    %v3087 = vpop.f32.mrf.mxu0
    %v3088 = vadd.f32 0.0, %v3087
    %v3089 = vpop.f32.mrf.mxu0
    %3090 = vmatprep.mubr.f32.mxu0 0.0
    %3091 = vmatmul.mubr.f32.gmra.mxu0 %v2965
    %v3092 = vpop.f32.mrf.mxu0
    %v3093 = vadd.f32 0.0, %v3092
    %v3094 = vpop.f32.mrf.mxu0
    %3095 = vmatprep.mubr.f32.mxu0 0.0
    %3096 = vmatmul.mubr.f32.gmra.mxu0 %v2968
    %v3097 = vpop.f32.mrf.mxu0
    %v3098 = vadd.f32 0.0, %v3097
    %v3099 = vpop.f32.mrf.mxu0
    %3100 = vmatprep.mubr.f32.mxu0 0.0
    %3101 = vmatmul.mubr.f32.gmra.mxu0 %v2971
    %v3102 = vpop.f32.mrf.mxu0
    %v3103 = vadd.f32 0.0, %v3102
    %v3104 = vpop.f32.mrf.mxu0
    %3105 = vmatprep.mubr.f32.mxu0 0.0
    %3106 = vmatmul.mubr.f32.gmra.mxu0 %v2974
    %v3107 = vpop.f32.mrf.mxu0
    %v3108 = vadd.f32 0.0, %v3107
    %v3109 = vpop.f32.mrf.mxu0
    %3110 = vmatprep.mubr.f32.mxu0 0.0
    %3111 = vmatmul.mubr.f32.gmra.mxu0 %v2977
    %v3112 = vpop.f32.mrf.mxu0
    %v3113 = vadd.f32 0.0, %v3112
    %v3114 = vpop.f32.mrf.mxu0
    %3115 = vmatprep.mubr.f32.mxu0 0.0
    %3116 = vmatmul.mubr.f32.gmra.mxu0 %v2980
    %v3117 = vpop.f32.mrf.mxu0
    %v3118 = vadd.f32 0.0, %v3117
    %v3119 = vpop.f32.mrf.mxu0
    %3120 = vmatprep.mubr.f32.mxu0 0.0
    %3121 = vmatmul.mubr.f32.gmra.mxu0 %v2983
    %v3122 = vpop.f32.mrf.mxu0
    %v3123 = vadd.f32 0.0, %v3122
    %v3124 = vpop.f32.mrf.mxu0
    %3125 = vmatprep.mubr.f32.mxu0 0.0
    %3126 = vmatmul.mubr.f32.gmra.mxu0 %v2986
    %v3127 = vpop.f32.mrf.mxu0
    %v3128 = vadd.f32 0.0, %v3127
    %v3129 = vpop.f32.mrf.mxu0
    %3130 = vmatprep.mubr.f32.mxu0 0.0
    %3131 = vmatmul.mubr.f32.gmra.mxu0 %v2989
    %v3132 = vpop.f32.mrf.mxu0
    %v3133 = vadd.f32 0.0, %v3132
    %v3134 = vpop.f32.mrf.mxu0
    %3135 = vdwg.mxu0
    %v3136 = vadd.f32 %v2239, %v3058
    %v3137 = vadd.f32 %v2244, %v3063
    %v3138 = vadd.f32 %v2249, %v3068
    %v3139 = vadd.f32 %v2254, %v3073
    %v3140 = vadd.f32 %v2259, %v3078
    %v3141 = vadd.f32 %v2264, %v3083
    %v3142 = vadd.f32 %v2269, %v3088
    %v3143 = vadd.f32 %v2274, %v3093
    %v3144 = vadd.f32 %v2279, %v3098
    %v3145 = vadd.f32 %v2284, %v3103
    %v3146 = vadd.f32 %v2289, %v3108
    %v3147 = vadd.f32 %v2294, %v3113
    %v3148 = vadd.f32 %v2299, %v3118
    %v3149 = vadd.f32 %v2304, %v3123
    %v3150 = vadd.f32 %v2309, %v3128
    %v3151 = vadd.f32 %v2314, %v3133
    %3152 = vrot.lane.b32.xlu0 %v726, 80
    %v3153 = vpop.permute.xlu0 %3152
    %3154 = vrot.lane.b32.xlu0 %v727, 80
    %v3155 = vpop.permute.xlu0 %3154
    %3156 = vrot.lane.b32.xlu0 %v728, 80
    %v3157 = vpop.permute.xlu0 %3156
    %3158 = vrot.lane.b32.xlu0 %v729, 80
    %v3159 = vpop.permute.xlu0 %3158
    %3160 = vrot.lane.b32.xlu0 %v730, 80
    %v3161 = vpop.permute.xlu0 %3160
    %3162 = vrot.lane.b32.xlu0 %v731, 80
    %v3163 = vpop.permute.xlu0 %3162
    %3164 = vrot.lane.b32.xlu0 %v732, 80
    %v3165 = vpop.permute.xlu0 %3164
    %3166 = vrot.lane.b32.xlu0 %v733, 80
    %v3167 = vpop.permute.xlu0 %3166
    %3168 = vrot.lane.b32.xlu0 %v734, 80
    %v3169 = vpop.permute.xlu0 %3168
    %3170 = vrot.lane.b32.xlu0 %v735, 80
    %v3171 = vpop.permute.xlu0 %3170
    %3172 = vrot.lane.b32.xlu0 %v736, 80
    %v3173 = vpop.permute.xlu0 %3172
    %3174 = vrot.lane.b32.xlu0 %v737, 80
    %v3175 = vpop.permute.xlu0 %3174
    %3176 = vrot.lane.b32.xlu0 %v738, 80
    %v3177 = vpop.permute.xlu0 %3176
    %3178 = vrot.lane.b32.xlu0 %v739, 80
    %v3179 = vpop.permute.xlu0 %3178
    %3180 = vrot.lane.b32.xlu0 %v740, 80
    %v3181 = vpop.permute.xlu0 %3180
    %3182 = vrot.lane.b32.xlu0 %v741, 80
    %v3183 = vpop.permute.xlu0 %3182
    %3184 = vrot.lane.b32.xlu0 %v457, 80
    %v3185 = vpop.permute.xlu0 %3184
    %3186 = vrot.lane.b32.xlu0 %v463, 80
    %v3187 = vpop.permute.xlu0 %3186
    %3188 = vrot.lane.b32.xlu0 %v469, 80
    %v3189 = vpop.permute.xlu0 %3188
    %3190 = vrot.lane.b32.xlu0 %v475, 80
    %v3191 = vpop.permute.xlu0 %3190
    %3192 = vrot.lane.b32.xlu0 %v481, 80
    %v3193 = vpop.permute.xlu0 %3192
    %3194 = vrot.lane.b32.xlu0 %v487, 80
    %v3195 = vpop.permute.xlu0 %3194
    %3196 = vrot.lane.b32.xlu0 %v493, 80
    %v3197 = vpop.permute.xlu0 %3196
    %3198 = vrot.lane.b32.xlu0 %v499, 80
    %v3199 = vpop.permute.xlu0 %3198
    %3200 = vrot.lane.b32.xlu0 %v505, 80
    %v3201 = vpop.permute.xlu0 %3200
    %3202 = vrot.lane.b32.xlu0 %v511, 80
    %v3203 = vpop.permute.xlu0 %3202
    %3204 = vrot.lane.b32.xlu0 %v517, 80
    %v3205 = vpop.permute.xlu0 %3204
    %3206 = vrot.lane.b32.xlu0 %v523, 80
    %v3207 = vpop.permute.xlu0 %3206
    %3208 = vrot.lane.b32.xlu0 %v529, 80
    %v3209 = vpop.permute.xlu0 %3208
    %3210 = vrot.lane.b32.xlu0 %v535, 80
    %v3211 = vpop.permute.xlu0 %3210
    %3212 = vrot.lane.b32.xlu0 %v541, 80
    %v3213 = vpop.permute.xlu0 %3212
    %3214 = vrot.lane.b32.xlu0 %v547, 80
    %v3215 = vpop.permute.xlu0 %3214
    %v3216 = vsel %vm742, %v3153, 0
    %v3218 = vsel %vm742, %v3155, 0
    %v3220 = vsel %vm742, %v3157, 0
    %v3222 = vsel %vm742, %v3159, 0
    %v3224 = vsel %vm742, %v3161, 0
    %v3226 = vsel %vm742, %v3163, 0
    %v3228 = vsel %vm742, %v3165, 0
    %v3230 = vsel %vm742, %v3167, 0
    %v3232 = vsel %vm742, %v3169, 0
    %v3234 = vsel %vm742, %v3171, 0
    %v3236 = vsel %vm742, %v3173, 0
    %v3238 = vsel %vm742, %v3175, 0
    %v3240 = vsel %vm742, %v3177, 0
    %v3242 = vsel %vm742, %v3179, 0
    %v3244 = vsel %vm742, %v3181, 0
    %v3246 = vsel %vm742, %v3183, 0
    %v3248 = vsel %vm742, %v3185, 0
    %v3250 = vsel %vm742, %v3187, 0
    %v3252 = vsel %vm742, %v3189, 0
    %v3254 = vsel %vm742, %v3191, 0
    %v3256 = vsel %vm742, %v3193, 0
    %v3258 = vsel %vm742, %v3195, 0
    %v3260 = vsel %vm742, %v3197, 0
    %v3262 = vsel %vm742, %v3199, 0
    %v3264 = vsel %vm742, %v3201, 0
    %v3266 = vsel %vm742, %v3203, 0
    %v3268 = vsel %vm742, %v3205, 0
    %v3270 = vsel %vm742, %v3207, 0
    %v3272 = vsel %vm742, %v3209, 0
    %v3274 = vsel %vm742, %v3211, 0
    %v3276 = vsel %vm742, %v3213, 0
    %v3278 = vsel %vm742, %v3215, 0
    %3280 = vmatprep.subr.mxu0 0.0
    %3281 = vmatpush1.xpose.msra.mxu0 %v3278
    %3282 = vmatprep.subr.mxu0 0.0
    %3283 = vmatpush1.xpose.msra.mxu0 %v3276
    %3284 = vmatprep.subr.mxu0 0.0
    %3285 = vmatpush1.xpose.msra.mxu0 %v3274
    %3286 = vmatprep.subr.mxu0 0.0
    %3287 = vmatpush1.xpose.msra.mxu0 %v3272
    %3288 = vmatprep.subr.mxu0 0.0
    %3289 = vmatpush1.xpose.msra.mxu0 %v3270
    %3290 = vmatprep.subr.mxu0 0.0
    %3291 = vmatpush1.xpose.msra.mxu0 %v3268
    %3292 = vmatprep.subr.mxu0 0.0
    %3293 = vmatpush1.xpose.msra.mxu0 %v3266
    %3294 = vmatprep.subr.mxu0 0.0
    %3295 = vmatpush1.xpose.msra.mxu0 %v3264
    %3296 = vmatprep.subr.mxu0 0.0
    %3297 = vmatpush1.xpose.msra.mxu0 %v3262
    %3298 = vmatprep.subr.mxu0 0.0
    %3299 = vmatpush1.xpose.msra.mxu0 %v3260
    %3300 = vmatprep.subr.mxu0 0.0
    %3301 = vmatpush1.xpose.msra.mxu0 %v3258
    %3302 = vmatprep.subr.mxu0 0.0
    %3303 = vmatpush1.xpose.msra.mxu0 %v3256
    %3304 = vmatprep.subr.mxu0 0.0
    %3305 = vmatpush1.xpose.msra.mxu0 %v3254
    %3306 = vmatprep.subr.mxu0 0.0
    %3307 = vmatpush1.xpose.msra.mxu0 %v3252
    %3308 = vmatprep.subr.mxu0 0.0
    %3309 = vmatpush1.xpose.msra.mxu0 %v3250
    %3310 = vmatprep.subr.mxu0 0.0
    %3311 = vmatpush1.xpose.msra.mxu0 %v3248
    %3312 = vmatprep.subr.mxu0 0.0
    %3313 = vmatpush2.xpose.msra.mxu0 0.0
    %3314 = vmatprep.subr.mxu0 0.0
    %3315 = vmatpush2.xpose.msra.mxu0 0.0
    %3316 = vmatprep.subr.mxu0 0.0
    %3317 = vmatpush2.xpose.msra.mxu0 0.0
    %3318 = vmatprep.subr.mxu0 0.0
    %3319 = vmatpush2.xpose.msra.mxu0 0.0
    %3320 = vmatprep.subr.mxu0 0.0
    %3321 = vmatpush2.xpose.msra.mxu0 0.0
    %3322 = vmatprep.subr.mxu0 0.0
    %3323 = vmatpush2.xpose.msra.mxu0 0.0
    %3324 = vmatprep.subr.mxu0 0.0
    %3325 = vmatpush2.xpose.msra.mxu0 0.0
    %3326 = vmatprep.subr.mxu0 0.0
    %3327 = vmatpush2.xpose.msra.mxu0 0.0
    %3328 = vmatprep.subr.mxu0 0.0
    %3329 = vmatpush2.xpose.msra.mxu0 0.0
    %3330 = vmatprep.subr.mxu0 0.0
    %3331 = vmatpush2.xpose.msra.mxu0 0.0
    %3332 = vmatprep.subr.mxu0 0.0
    %3333 = vmatpush2.xpose.msra.mxu0 0.0
    %3334 = vmatprep.subr.mxu0 0.0
    %3335 = vmatpush2.xpose.msra.mxu0 0.0
    %3336 = vmatprep.subr.mxu0 0.0
    %3337 = vmatpush2.xpose.msra.mxu0 0.0
    %3338 = vmatprep.subr.mxu0 0.0
    %3339 = vmatpush2.xpose.msra.mxu0 0.0
    %3340 = vmatprep.subr.mxu0 0.0
    %3341 = vmatpush2.xpose.msra.mxu0 0.0
    %3342 = vmatprep.subr.mxu0 0.0
    %3343 = vmatpush2.xpose.msra.mxu0 0.0
    %3344 = vmatprep.mubr.f32.mxu0 0.0
    %3345 = vmatmul.mubr.f32.gmra.mxu0 %v3216
    %v3346 = vpop.f32.mrf.mxu0
    %v3347 = vadd.f32 %v694, %v3346
    %v3348 = vpop.f32.mrf.mxu0
    %3349 = vmatprep.mubr.f32.mxu0 0.0
    %3350 = vmatmul.mubr.f32.gmra.mxu0 %v3218
    %v3351 = vpop.f32.mrf.mxu0
    %v3352 = vadd.f32 %v695, %v3351
    %v3353 = vpop.f32.mrf.mxu0
    %3354 = vmatprep.mubr.f32.mxu0 0.0
    %3355 = vmatmul.mubr.f32.gmra.mxu0 %v3220
    %v3356 = vpop.f32.mrf.mxu0
    %v3357 = vadd.f32 %v696, %v3356
    %v3358 = vpop.f32.mrf.mxu0
    %3359 = vmatprep.mubr.f32.mxu0 0.0
    %3360 = vmatmul.mubr.f32.gmra.mxu0 %v3222
    %v3361 = vpop.f32.mrf.mxu0
    %v3362 = vadd.f32 %v697, %v3361
    %v3363 = vpop.f32.mrf.mxu0
    %3364 = vmatprep.mubr.f32.mxu0 0.0
    %3365 = vmatmul.mubr.f32.gmra.mxu0 %v3224
    %v3366 = vpop.f32.mrf.mxu0
    %v3367 = vadd.f32 %v698, %v3366
    %v3368 = vpop.f32.mrf.mxu0
    %3369 = vmatprep.mubr.f32.mxu0 0.0
    %3370 = vmatmul.mubr.f32.gmra.mxu0 %v3226
    %v3371 = vpop.f32.mrf.mxu0
    %v3372 = vadd.f32 %v699, %v3371
    %v3373 = vpop.f32.mrf.mxu0
    %3374 = vmatprep.mubr.f32.mxu0 0.0
    %3375 = vmatmul.mubr.f32.gmra.mxu0 %v3228
    %v3376 = vpop.f32.mrf.mxu0
    %v3377 = vadd.f32 %v700, %v3376
    %v3378 = vpop.f32.mrf.mxu0
    %3379 = vmatprep.mubr.f32.mxu0 0.0
    %3380 = vmatmul.mubr.f32.gmra.mxu0 %v3230
    %v3381 = vpop.f32.mrf.mxu0
    %v3382 = vadd.f32 %v701, %v3381
    %v3383 = vpop.f32.mrf.mxu0
    %3384 = vmatprep.mubr.f32.mxu0 0.0
    %3385 = vmatmul.mubr.f32.gmra.mxu0 %v3232
    %v3386 = vpop.f32.mrf.mxu0
    %v3387 = vadd.f32 %v702, %v3386
    %v3388 = vpop.f32.mrf.mxu0
    %3389 = vmatprep.mubr.f32.mxu0 0.0
    %3390 = vmatmul.mubr.f32.gmra.mxu0 %v3234
    %v3391 = vpop.f32.mrf.mxu0
    %v3392 = vadd.f32 %v703, %v3391
    %v3393 = vpop.f32.mrf.mxu0
    %3394 = vmatprep.mubr.f32.mxu0 0.0
    %3395 = vmatmul.mubr.f32.gmra.mxu0 %v3236
    %v3396 = vpop.f32.mrf.mxu0
    %v3397 = vadd.f32 %v704, %v3396
    %v3398 = vpop.f32.mrf.mxu0
    %3399 = vmatprep.mubr.f32.mxu0 0.0
    %3400 = vmatmul.mubr.f32.gmra.mxu0 %v3238
    %v3401 = vpop.f32.mrf.mxu0
    %v3402 = vadd.f32 %v705, %v3401
    %v3403 = vpop.f32.mrf.mxu0
    %3404 = vmatprep.mubr.f32.mxu0 0.0
    %3405 = vmatmul.mubr.f32.gmra.mxu0 %v3240
    %v3406 = vpop.f32.mrf.mxu0
    %v3407 = vadd.f32 %v706, %v3406
    %v3408 = vpop.f32.mrf.mxu0
    %3409 = vmatprep.mubr.f32.mxu0 0.0
    %3410 = vmatmul.mubr.f32.gmra.mxu0 %v3242
    %v3411 = vpop.f32.mrf.mxu0
    %v3412 = vadd.f32 %v707, %v3411
    %v3413 = vpop.f32.mrf.mxu0
    %3414 = vmatprep.mubr.f32.mxu0 0.0
    %3415 = vmatmul.mubr.f32.gmra.mxu0 %v3244
    %v3416 = vpop.f32.mrf.mxu0
    %v3417 = vadd.f32 %v708, %v3416
    %v3418 = vpop.f32.mrf.mxu0
    %3419 = vmatprep.mubr.f32.mxu0 0.0
    %3420 = vmatmul.mubr.f32.gmra.mxu0 %v3246
    %v3421 = vpop.f32.mrf.mxu0
    %v3422 = vadd.f32 %v709, %v3421
    %v3423 = vpop.f32.mrf.mxu0
    %3424 = vdwg.mxu0
    %3425 = vmax.xlane.f32.xlu0 %v3347
    %v3426 = vpop.xlane.xlu0 %3425
    %3427 = vmax.xlane.f32.xlu0 %v3352
    %v3428 = vpop.xlane.xlu0 %3427
    %3429 = vmax.xlane.f32.xlu0 %v3357
    %v3430 = vpop.xlane.xlu0 %3429
    %3431 = vmax.xlane.f32.xlu0 %v3362
    %v3432 = vpop.xlane.xlu0 %3431
    %3433 = vmax.xlane.f32.xlu0 %v3367
    %v3434 = vpop.xlane.xlu0 %3433
    %3435 = vmax.xlane.f32.xlu0 %v3372
    %v3436 = vpop.xlane.xlu0 %3435
    %3437 = vmax.xlane.f32.xlu0 %v3377
    %v3438 = vpop.xlane.xlu0 %3437
    %3439 = vmax.xlane.f32.xlu0 %v3382
    %v3440 = vpop.xlane.xlu0 %3439
    %3441 = vmax.xlane.f32.xlu0 %v3387
    %v3442 = vpop.xlane.xlu0 %3441
    %3443 = vmax.xlane.f32.xlu0 %v3392
    %v3444 = vpop.xlane.xlu0 %3443
    %3445 = vmax.xlane.f32.xlu0 %v3397
    %v3446 = vpop.xlane.xlu0 %3445
    %3447 = vmax.xlane.f32.xlu0 %v3402
    %v3448 = vpop.xlane.xlu0 %3447
    %3449 = vmax.xlane.f32.xlu0 %v3407
    %v3450 = vpop.xlane.xlu0 %3449
    %3451 = vmax.xlane.f32.xlu0 %v3412
    %v3452 = vpop.xlane.xlu0 %3451
    %3453 = vmax.xlane.f32.xlu0 %v3417
    %v3454 = vpop.xlane.xlu0 %3453
    %3455 = vmax.xlane.f32.xlu0 %v3422
    %v3456 = vpop.xlane.xlu0 %3455
    %v3457 = vsub.f32 %v3347, %v3426
    %v3458 = vsub.f32 %v3352, %v3428
    %v3459 = vsub.f32 %v3357, %v3430
    %v3460 = vsub.f32 %v3362, %v3432
    %v3461 = vsub.f32 %v3367, %v3434
    %v3462 = vsub.f32 %v3372, %v3436
    %v3463 = vsub.f32 %v3377, %v3438
    %v3464 = vsub.f32 %v3382, %v3440
    %v3465 = vsub.f32 %v3387, %v3442
    %v3466 = vsub.f32 %v3392, %v3444
    %v3467 = vsub.f32 %v3397, %v3446
    %v3468 = vsub.f32 %v3402, %v3448
    %v3469 = vsub.f32 %v3407, %v3450
    %v3470 = vsub.f32 %v3412, %v3452
    %v3471 = vsub.f32 %v3417, %v3454
    %v3472 = vsub.f32 %v3422, %v3456
    %v3473 = vmul.f32 %v3457, 1.442695
    %v3474 = vpow.pop %v3473
    %v3475 = vmul.f32 %v3458, 1.442695
    %v3476 = vpow.pop %v3475
    %v3477 = vmul.f32 %v3459, 1.442695
    %v3478 = vpow.pop %v3477
    %v3479 = vmul.f32 %v3460, 1.442695
    %v3480 = vpow.pop %v3479
    %v3481 = vmul.f32 %v3461, 1.442695
    %v3482 = vpow.pop %v3481
    %v3483 = vmul.f32 %v3462, 1.442695
    %v3484 = vpow.pop %v3483
    %v3485 = vmul.f32 %v3463, 1.442695
    %v3486 = vpow.pop %v3485
    %v3487 = vmul.f32 %v3464, 1.442695
    %v3488 = vpow.pop %v3487
    %v3489 = vmul.f32 %v3465, 1.442695
    %v3490 = vpow.pop %v3489
    %v3491 = vmul.f32 %v3466, 1.442695
    %v3492 = vpow.pop %v3491
    %v3493 = vmul.f32 %v3467, 1.442695
    %v3494 = vpow.pop %v3493
    %v3495 = vmul.f32 %v3468, 1.442695
    %v3496 = vpow.pop %v3495
    %v3497 = vmul.f32 %v3469, 1.442695
    %v3498 = vpow.pop %v3497
    %v3499 = vmul.f32 %v3470, 1.442695
    %v3500 = vpow.pop %v3499
    %v3501 = vmul.f32 %v3471, 1.442695
    %v3502 = vpow.pop %v3501
    %v3503 = vmul.f32 %v3472, 1.442695
    %v3504 = vpow.pop %v3503
    %3505 = vadd.xlane.f32.xlu0 %v3474
    %v3506 = vpop.xlane.xlu0 %3505
    %3507 = vadd.xlane.f32.xlu0 %v3476
    %v3508 = vpop.xlane.xlu0 %3507
    %3509 = vadd.xlane.f32.xlu0 %v3478
    %v3510 = vpop.xlane.xlu0 %3509
    %3511 = vadd.xlane.f32.xlu0 %v3480
    %v3512 = vpop.xlane.xlu0 %3511
    %3513 = vadd.xlane.f32.xlu0 %v3482
    %v3514 = vpop.xlane.xlu0 %3513
    %3515 = vadd.xlane.f32.xlu0 %v3484
    %v3516 = vpop.xlane.xlu0 %3515
    %3517 = vadd.xlane.f32.xlu0 %v3486
    %v3518 = vpop.xlane.xlu0 %3517
    %3519 = vadd.xlane.f32.xlu0 %v3488
    %v3520 = vpop.xlane.xlu0 %3519
    %3521 = vadd.xlane.f32.xlu0 %v3490
    %v3522 = vpop.xlane.xlu0 %3521
    %3523 = vadd.xlane.f32.xlu0 %v3492
    %v3524 = vpop.xlane.xlu0 %3523
    %3525 = vadd.xlane.f32.xlu0 %v3494
    %v3526 = vpop.xlane.xlu0 %3525
    %3527 = vadd.xlane.f32.xlu0 %v3496
    %v3528 = vpop.xlane.xlu0 %3527
    %3529 = vadd.xlane.f32.xlu0 %v3498
    %v3530 = vpop.xlane.xlu0 %3529
    %3531 = vadd.xlane.f32.xlu0 %v3500
    %v3532 = vpop.xlane.xlu0 %3531
    %3533 = vadd.xlane.f32.xlu0 %v3502
    %v3534 = vpop.xlane.xlu0 %3533
    %3535 = vadd.xlane.f32.xlu0 %v3504
    %v3536 = vpop.xlane.xlu0 %3535
    %v3537 = vrcp.pop %v3506
    %v3538 = vmul.f32 1.0, %v3537
    %v3539 = vrcp.pop %v3508
    %v3540 = vmul.f32 1.0, %v3539
    %v3541 = vrcp.pop %v3510
    %v3542 = vmul.f32 1.0, %v3541
    %v3543 = vrcp.pop %v3512
    %v3544 = vmul.f32 1.0, %v3543
    %v3545 = vrcp.pop %v3514
    %v3546 = vmul.f32 1.0, %v3545
    %v3547 = vrcp.pop %v3516
    %v3548 = vmul.f32 1.0, %v3547
    %v3549 = vrcp.pop %v3518
    %v3550 = vmul.f32 1.0, %v3549
    %v3551 = vrcp.pop %v3520
    %v3552 = vmul.f32 1.0, %v3551
    %v3553 = vrcp.pop %v3522
    %v3554 = vmul.f32 1.0, %v3553
    %v3555 = vrcp.pop %v3524
    %v3556 = vmul.f32 1.0, %v3555
    %v3557 = vrcp.pop %v3526
    %v3558 = vmul.f32 1.0, %v3557
    %v3559 = vrcp.pop %v3528
    %v3560 = vmul.f32 1.0, %v3559
    %v3561 = vrcp.pop %v3530
    %v3562 = vmul.f32 1.0, %v3561
    %v3563 = vrcp.pop %v3532
    %v3564 = vmul.f32 1.0, %v3563
    %v3565 = vrcp.pop %v3534
    %v3566 = vmul.f32 1.0, %v3565
    %v3567 = vrcp.pop %v3536
    %v3568 = vmul.f32 1.0, %v3567
    %v3569 = vmul.f32 %v3474, %v3538
    %v3570 = vmul.f32 %v3476, %v3540
    %v3571 = vmul.f32 %v3478, %v3542
    %v3572 = vmul.f32 %v3480, %v3544
    %v3573 = vmul.f32 %v3482, %v3546
    %v3574 = vmul.f32 %v3484, %v3548
    %v3575 = vmul.f32 %v3486, %v3550
    %v3576 = vmul.f32 %v3488, %v3552
    %v3577 = vmul.f32 %v3490, %v3554
    %v3578 = vmul.f32 %v3492, %v3556
    %v3579 = vmul.f32 %v3494, %v3558
    %v3580 = vmul.f32 %v3496, %v3560
    %v3581 = vmul.f32 %v3498, %v3562
    %v3582 = vmul.f32 %v3500, %v3564
    %v3583 = vmul.f32 %v3502, %v3566
    %v3584 = vmul.f32 %v3504, %v3568
    %3585 = vrot.lane.b32.xlu0 %v616, 80
    %v3586 = vpop.permute.xlu0 %3585
    %3587 = vrot.lane.b32.xlu0 %v621, 80
    %v3588 = vpop.permute.xlu0 %3587
    %3589 = vrot.lane.b32.xlu0 %v626, 80
    %v3590 = vpop.permute.xlu0 %3589
    %3591 = vrot.lane.b32.xlu0 %v631, 80
    %v3592 = vpop.permute.xlu0 %3591
    %3593 = vrot.lane.b32.xlu0 %v636, 80
    %v3594 = vpop.permute.xlu0 %3593
    %3595 = vrot.lane.b32.xlu0 %v641, 80
    %v3596 = vpop.permute.xlu0 %3595
    %3597 = vrot.lane.b32.xlu0 %v646, 80
    %v3598 = vpop.permute.xlu0 %3597
    %3599 = vrot.lane.b32.xlu0 %v651, 80
    %v3600 = vpop.permute.xlu0 %3599
    %3601 = vrot.lane.b32.xlu0 %v656, 80
    %v3602 = vpop.permute.xlu0 %3601
    %3603 = vrot.lane.b32.xlu0 %v661, 80
    %v3604 = vpop.permute.xlu0 %3603
    %3605 = vrot.lane.b32.xlu0 %v666, 80
    %v3606 = vpop.permute.xlu0 %3605
    %3607 = vrot.lane.b32.xlu0 %v671, 80
    %v3608 = vpop.permute.xlu0 %3607
    %3609 = vrot.lane.b32.xlu0 %v676, 80
    %v3610 = vpop.permute.xlu0 %3609
    %3611 = vrot.lane.b32.xlu0 %v681, 80
    %v3612 = vpop.permute.xlu0 %3611
    %3613 = vrot.lane.b32.xlu0 %v686, 80
    %v3614 = vpop.permute.xlu0 %3613
    %3615 = vrot.lane.b32.xlu0 %v691, 80
    %v3616 = vpop.permute.xlu0 %3615
    %3633 = vmatprep.subr.mxu0 0.0
    %3634 = vmatpush1.msra.mxu0 %v3616
    %3635 = vmatprep.subr.mxu0 0.0
    %3636 = vmatpush1.msra.mxu0 %v3614
    %3637 = vmatprep.subr.mxu0 0.0
    %3638 = vmatpush1.msra.mxu0 %v3612
    %3639 = vmatprep.subr.mxu0 0.0
    %3640 = vmatpush1.msra.mxu0 %v3610
    %3641 = vmatprep.subr.mxu0 0.0
    %3642 = vmatpush1.msra.mxu0 %v3608
    %3643 = vmatprep.subr.mxu0 0.0
    %3644 = vmatpush1.msra.mxu0 %v3606
    %3645 = vmatprep.subr.mxu0 0.0
    %3646 = vmatpush1.msra.mxu0 %v3604
    %3647 = vmatprep.subr.mxu0 0.0
    %3648 = vmatpush1.msra.mxu0 %v3602
    %3649 = vmatprep.subr.mxu0 0.0
    %3650 = vmatpush1.msra.mxu0 %v3600
    %3651 = vmatprep.subr.mxu0 0.0
    %3652 = vmatpush1.msra.mxu0 %v3598
    %3653 = vmatprep.subr.mxu0 0.0
    %3654 = vmatpush1.msra.mxu0 %v3596
    %3655 = vmatprep.subr.mxu0 0.0
    %3656 = vmatpush1.msra.mxu0 %v3594
    %3657 = vmatprep.subr.mxu0 0.0
    %3658 = vmatpush1.msra.mxu0 %v3592
    %3659 = vmatprep.subr.mxu0 0.0
    %3660 = vmatpush1.msra.mxu0 %v3590
    %3661 = vmatprep.subr.mxu0 0.0
    %3662 = vmatpush1.msra.mxu0 %v3588
    %3663 = vmatprep.subr.mxu0 0.0
    %3664 = vmatpush1.msra.mxu0 %v3586
    %3665 = vmatprep.subr.mxu0 0.0
    %3666 = vmatpush2.msra.mxu0 0.0
    %3667 = vmatprep.subr.mxu0 0.0
    %3668 = vmatpush2.msra.mxu0 0.0
    %3669 = vmatprep.subr.mxu0 0.0
    %3670 = vmatpush2.msra.mxu0 0.0
    %3671 = vmatprep.subr.mxu0 0.0
    %3672 = vmatpush2.msra.mxu0 0.0
    %3673 = vmatprep.subr.mxu0 0.0
    %3674 = vmatpush2.msra.mxu0 0.0
    %3675 = vmatprep.subr.mxu0 0.0
    %3676 = vmatpush2.msra.mxu0 0.0
    %3677 = vmatprep.subr.mxu0 0.0
    %3678 = vmatpush2.msra.mxu0 0.0
    %3679 = vmatprep.subr.mxu0 0.0
    %3680 = vmatpush2.msra.mxu0 0.0
    %3681 = vmatprep.subr.mxu0 0.0
    %3682 = vmatpush2.msra.mxu0 0.0
    %3683 = vmatprep.subr.mxu0 0.0
    %3684 = vmatpush2.msra.mxu0 0.0
    %3685 = vmatprep.subr.mxu0 0.0
    %3686 = vmatpush2.msra.mxu0 0.0
    %3687 = vmatprep.subr.mxu0 0.0
    %3688 = vmatpush2.msra.mxu0 0.0
    %3689 = vmatprep.subr.mxu0 0.0
    %3690 = vmatpush2.msra.mxu0 0.0
    %3691 = vmatprep.subr.mxu0 0.0
    %3692 = vmatpush2.msra.mxu0 0.0
    %3693 = vmatprep.subr.mxu0 0.0
    %3694 = vmatpush2.msra.mxu0 0.0
    %3695 = vmatprep.subr.mxu0 0.0
    %3696 = vmatpush2.msra.mxu0 0.0
    %3697 = vmatprep.mubr.f32.mxu0 0.0
    %3698 = vmatmul.mubr.f32.gmra.mxu0 %v3569
    %v3699 = vpop.f32.mrf.mxu0
    %v3700 = vadd.f32 0.0, %v3699
    %v3701 = vpop.f32.mrf.mxu0
    %3702 = vmatprep.mubr.f32.mxu0 0.0
    %3703 = vmatmul.mubr.f32.gmra.mxu0 %v3570
    %v3704 = vpop.f32.mrf.mxu0
    %v3705 = vadd.f32 0.0, %v3704
    %v3706 = vpop.f32.mrf.mxu0
    %3707 = vmatprep.mubr.f32.mxu0 0.0
    %3708 = vmatmul.mubr.f32.gmra.mxu0 %v3571
    %v3709 = vpop.f32.mrf.mxu0
    %v3710 = vadd.f32 0.0, %v3709
    %v3711 = vpop.f32.mrf.mxu0
    %3712 = vmatprep.mubr.f32.mxu0 0.0
    %3713 = vmatmul.mubr.f32.gmra.mxu0 %v3572
    %v3714 = vpop.f32.mrf.mxu0
    %v3715 = vadd.f32 0.0, %v3714
    %v3716 = vpop.f32.mrf.mxu0
    %3717 = vmatprep.mubr.f32.mxu0 0.0
    %3718 = vmatmul.mubr.f32.gmra.mxu0 %v3573
    %v3719 = vpop.f32.mrf.mxu0
    %v3720 = vadd.f32 0.0, %v3719
    %v3721 = vpop.f32.mrf.mxu0
    %3722 = vmatprep.mubr.f32.mxu0 0.0
    %3723 = vmatmul.mubr.f32.gmra.mxu0 %v3574
    %v3724 = vpop.f32.mrf.mxu0
    %v3725 = vadd.f32 0.0, %v3724
    %v3726 = vpop.f32.mrf.mxu0
    %3727 = vmatprep.mubr.f32.mxu0 0.0
    %3728 = vmatmul.mubr.f32.gmra.mxu0 %v3575
    %v3729 = vpop.f32.mrf.mxu0
    %v3730 = vadd.f32 0.0, %v3729
    %v3731 = vpop.f32.mrf.mxu0
    %3732 = vmatprep.mubr.f32.mxu0 0.0
    %3733 = vmatmul.mubr.f32.gmra.mxu0 %v3576
    %v3734 = vpop.f32.mrf.mxu0
    %v3735 = vadd.f32 0.0, %v3734
    %v3736 = vpop.f32.mrf.mxu0
    %3737 = vmatprep.mubr.f32.mxu0 0.0
    %3738 = vmatmul.mubr.f32.gmra.mxu0 %v3577
    %v3739 = vpop.f32.mrf.mxu0
    %v3740 = vadd.f32 0.0, %v3739
    %v3741 = vpop.f32.mrf.mxu0
    %3742 = vmatprep.mubr.f32.mxu0 0.0
    %3743 = vmatmul.mubr.f32.gmra.mxu0 %v3578
    %v3744 = vpop.f32.mrf.mxu0
    %v3745 = vadd.f32 0.0, %v3744
    %v3746 = vpop.f32.mrf.mxu0
    %3747 = vmatprep.mubr.f32.mxu0 0.0
    %3748 = vmatmul.mubr.f32.gmra.mxu0 %v3579
    %v3749 = vpop.f32.mrf.mxu0
    %v3750 = vadd.f32 0.0, %v3749
    %v3751 = vpop.f32.mrf.mxu0
    %3752 = vmatprep.mubr.f32.mxu0 0.0
    %3753 = vmatmul.mubr.f32.gmra.mxu0 %v3580
    %v3754 = vpop.f32.mrf.mxu0
    %v3755 = vadd.f32 0.0, %v3754
    %v3756 = vpop.f32.mrf.mxu0
    %3757 = vmatprep.mubr.f32.mxu0 0.0
    %3758 = vmatmul.mubr.f32.gmra.mxu0 %v3581
    %v3759 = vpop.f32.mrf.mxu0
    %v3760 = vadd.f32 0.0, %v3759
    %v3761 = vpop.f32.mrf.mxu0
    %3762 = vmatprep.mubr.f32.mxu0 0.0
    %3763 = vmatmul.mubr.f32.gmra.mxu0 %v3582
    %v3764 = vpop.f32.mrf.mxu0
    %v3765 = vadd.f32 0.0, %v3764
    %v3766 = vpop.f32.mrf.mxu0
    %3767 = vmatprep.mubr.f32.mxu0 0.0
    %3768 = vmatmul.mubr.f32.gmra.mxu0 %v3583
    %v3769 = vpop.f32.mrf.mxu0
    %v3770 = vadd.f32 0.0, %v3769
    %v3771 = vpop.f32.mrf.mxu0
    %3772 = vmatprep.mubr.f32.mxu0 0.0
    %3773 = vmatmul.mubr.f32.gmra.mxu0 %v3584
    %v3774 = vpop.f32.mrf.mxu0
    %v3775 = vadd.f32 0.0, %v3774
    %v3776 = vpop.f32.mrf.mxu0
    %3777 = vdwg.mxu0
    %v3779 = vsel %vm742, %v3700, 0
    %v3782 = vsel %vm742, %v3705, 0
    %v3785 = vsel %vm742, %v3710, 0
    %v3788 = vsel %vm742, %v3715, 0
    %v3791 = vsel %vm742, %v3720, 0
    %v3794 = vsel %vm742, %v3725, 0
    %v3797 = vsel %vm742, %v3730, 0
    %v3800 = vsel %vm742, %v3735, 0
    %v3803 = vsel %vm742, %v3740, 0
    %v3806 = vsel %vm742, %v3745, 0
    %v3809 = vsel %vm742, %v3750, 0
    %v3812 = vsel %vm742, %v3755, 0
    %v3815 = vsel %vm742, %v3760, 0
    %v3818 = vsel %vm742, %v3765, 0
    %v3821 = vsel %vm742, %v3770, 0
    %v3824 = vsel %vm742, %v3775, 0
    %3826 = vmatprep.subr.mxu0 0.0
    %3827 = vmatpush1.msra.mxu0 0.0
    %3828 = vmatprep.subr.mxu0 0.0
    %3829 = vmatpush1.msra.mxu0 0.0
    %3830 = vmatprep.subr.mxu0 0.0
    %3831 = vmatpush1.msra.mxu0 0.0
    %3832 = vmatprep.subr.mxu0 0.0
    %3833 = vmatpush1.msra.mxu0 0.0
    %3834 = vmatprep.subr.mxu0 0.0
    %3835 = vmatpush1.msra.mxu0 0.0
    %3836 = vmatprep.subr.mxu0 0.0
    %3837 = vmatpush1.msra.mxu0 0.0
    %3838 = vmatprep.subr.mxu0 0.0
    %3839 = vmatpush1.msra.mxu0 0.0
    %3840 = vmatprep.subr.mxu0 0.0
    %3841 = vmatpush1.msra.mxu0 0.0
    %3842 = vmatprep.subr.mxu0 0.0
    %3843 = vmatpush1.msra.mxu0 0.0
    %3844 = vmatprep.subr.mxu0 0.0
    %3845 = vmatpush1.msra.mxu0 0.0
    %3846 = vmatprep.subr.mxu0 0.0
    %3847 = vmatpush1.msra.mxu0 0.0
    %3848 = vmatprep.subr.mxu0 0.0
    %3849 = vmatpush1.msra.mxu0 0.0
    %3850 = vmatprep.subr.mxu0 0.0
    %3851 = vmatpush1.msra.mxu0 0.0
    %3852 = vmatprep.subr.mxu0 0.0
    %3853 = vmatpush1.msra.mxu0 0.0
    %3854 = vmatprep.subr.mxu0 0.0
    %3855 = vmatpush1.msra.mxu0 %v717
    %3856 = vmatprep.subr.mxu0 0.0
    %3857 = vmatpush1.msra.mxu0 %v716
    %3858 = vmatprep.subr.mxu0 0.0
    %3859 = vmatpush2.msra.mxu0 0.0
    %3860 = vmatprep.subr.mxu0 0.0
    %3861 = vmatpush2.msra.mxu0 0.0
    %3862 = vmatprep.subr.mxu0 0.0
    %3863 = vmatpush2.msra.mxu0 0.0
    %3864 = vmatprep.subr.mxu0 0.0
    %3865 = vmatpush2.msra.mxu0 0.0
    %3866 = vmatprep.subr.mxu0 0.0
    %3867 = vmatpush2.msra.mxu0 0.0
    %3868 = vmatprep.subr.mxu0 0.0
    %3869 = vmatpush2.msra.mxu0 0.0
    %3870 = vmatprep.subr.mxu0 0.0
    %3871 = vmatpush2.msra.mxu0 0.0
    %3872 = vmatprep.subr.mxu0 0.0
    %3873 = vmatpush2.msra.mxu0 0.0
    %3874 = vmatprep.subr.mxu0 0.0
    %3875 = vmatpush2.msra.mxu0 0.0
    %3876 = vmatprep.subr.mxu0 0.0
    %3877 = vmatpush2.msra.mxu0 0.0
    %3878 = vmatprep.subr.mxu0 0.0
    %3879 = vmatpush2.msra.mxu0 0.0
    %3880 = vmatprep.subr.mxu0 0.0
    %3881 = vmatpush2.msra.mxu0 0.0
    %3882 = vmatprep.subr.mxu0 0.0
    %3883 = vmatpush2.msra.mxu0 0.0
    %3884 = vmatprep.subr.mxu0 0.0
    %3885 = vmatpush2.msra.mxu0 0.0
    %3886 = vmatprep.subr.mxu0 0.0
    %3887 = vmatpush2.msra.mxu0 0.0
    %3888 = vmatprep.subr.mxu0 0.0
    %3889 = vmatpush2.msra.mxu0 0.0
    %3890 = vmatprep.mubr.f32.mxu0 0.0
    %3891 = vmatmul.mubr.f32.gmra.mxu0 %v3779
    %v3892 = vpop.f32.mrf.mxu0
    %v3893 = vadd.f32 0.0, %v3892
    %v3894 = vpop.f32.mrf.mxu0
    %3895 = vmatprep.mubr.f32.mxu0 0.0
    %3896 = vmatmul.mubr.f32.gmra.mxu0 %v3782
    %v3897 = vpop.f32.mrf.mxu0
    %v3898 = vadd.f32 0.0, %v3897
    %v3899 = vpop.f32.mrf.mxu0
    %3900 = vmatprep.mubr.f32.mxu0 0.0
    %3901 = vmatmul.mubr.f32.gmra.mxu0 %v3785
    %v3902 = vpop.f32.mrf.mxu0
    %v3903 = vadd.f32 0.0, %v3902
    %v3904 = vpop.f32.mrf.mxu0
    %3905 = vmatprep.mubr.f32.mxu0 0.0
    %3906 = vmatmul.mubr.f32.gmra.mxu0 %v3788
    %v3907 = vpop.f32.mrf.mxu0
    %v3908 = vadd.f32 0.0, %v3907
    %v3909 = vpop.f32.mrf.mxu0
    %3910 = vmatprep.mubr.f32.mxu0 0.0
    %3911 = vmatmul.mubr.f32.gmra.mxu0 %v3791
    %v3912 = vpop.f32.mrf.mxu0
    %v3913 = vadd.f32 0.0, %v3912
    %v3914 = vpop.f32.mrf.mxu0
    %3915 = vmatprep.mubr.f32.mxu0 0.0
    %3916 = vmatmul.mubr.f32.gmra.mxu0 %v3794
    %v3917 = vpop.f32.mrf.mxu0
    %v3918 = vadd.f32 0.0, %v3917
    %v3919 = vpop.f32.mrf.mxu0
    %3920 = vmatprep.mubr.f32.mxu0 0.0
    %3921 = vmatmul.mubr.f32.gmra.mxu0 %v3797
    %v3922 = vpop.f32.mrf.mxu0
    %v3923 = vadd.f32 0.0, %v3922
    %v3924 = vpop.f32.mrf.mxu0
    %3925 = vmatprep.mubr.f32.mxu0 0.0
    %3926 = vmatmul.mubr.f32.gmra.mxu0 %v3800
    %v3927 = vpop.f32.mrf.mxu0
    %v3928 = vadd.f32 0.0, %v3927
    %v3929 = vpop.f32.mrf.mxu0
    %3930 = vmatprep.mubr.f32.mxu0 0.0
    %3931 = vmatmul.mubr.f32.gmra.mxu0 %v3803
    %v3932 = vpop.f32.mrf.mxu0
    %v3933 = vadd.f32 0.0, %v3932
    %v3934 = vpop.f32.mrf.mxu0
    %3935 = vmatprep.mubr.f32.mxu0 0.0
    %3936 = vmatmul.mubr.f32.gmra.mxu0 %v3806
    %v3937 = vpop.f32.mrf.mxu0
    %v3938 = vadd.f32 0.0, %v3937
    %v3939 = vpop.f32.mrf.mxu0
    %3940 = vmatprep.mubr.f32.mxu0 0.0
    %3941 = vmatmul.mubr.f32.gmra.mxu0 %v3809
    %v3942 = vpop.f32.mrf.mxu0
    %v3943 = vadd.f32 0.0, %v3942
    %v3944 = vpop.f32.mrf.mxu0
    %3945 = vmatprep.mubr.f32.mxu0 0.0
    %3946 = vmatmul.mubr.f32.gmra.mxu0 %v3812
    %v3947 = vpop.f32.mrf.mxu0
    %v3948 = vadd.f32 0.0, %v3947
    %v3949 = vpop.f32.mrf.mxu0
    %3950 = vmatprep.mubr.f32.mxu0 0.0
    %3951 = vmatmul.mubr.f32.gmra.mxu0 %v3815
    %v3952 = vpop.f32.mrf.mxu0
    %v3953 = vadd.f32 0.0, %v3952
    %v3954 = vpop.f32.mrf.mxu0
    %3955 = vmatprep.mubr.f32.mxu0 0.0
    %3956 = vmatmul.mubr.f32.gmra.mxu0 %v3818
    %v3957 = vpop.f32.mrf.mxu0
    %v3958 = vadd.f32 0.0, %v3957
    %v3959 = vpop.f32.mrf.mxu0
    %3960 = vmatprep.mubr.f32.mxu0 0.0
    %3961 = vmatmul.mubr.f32.gmra.mxu0 %v3821
    %v3962 = vpop.f32.mrf.mxu0
    %v3963 = vadd.f32 0.0, %v3962
    %v3964 = vpop.f32.mrf.mxu0
    %3965 = vmatprep.mubr.f32.mxu0 0.0
    %3966 = vmatmul.mubr.f32.gmra.mxu0 %v3824
    %v3967 = vpop.f32.mrf.mxu0
    %v3968 = vadd.f32 0.0, %v3967
    %v3969 = vpop.f32.mrf.mxu0
    %3970 = vdwg.mxu0
    %v3971 = vadd.f32 %v3136, %v3893
    %v3972 = vadd.f32 %v3137, %v3898
    %v3973 = vadd.f32 %v3138, %v3903
    %v3974 = vadd.f32 %v3139, %v3908
    %v3975 = vadd.f32 %v3140, %v3913
    %v3976 = vadd.f32 %v3141, %v3918
    %v3977 = vadd.f32 %v3142, %v3923
    %v3978 = vadd.f32 %v3143, %v3928
    %v3979 = vadd.f32 %v3144, %v3933
    %v3980 = vadd.f32 %v3145, %v3938
    %v3981 = vadd.f32 %v3146, %v3943
    %v3982 = vadd.f32 %v3147, %v3948
    %v3983 = vadd.f32 %v3148, %v3953
    %v3984 = vadd.f32 %v3149, %v3958
    %v3985 = vadd.f32 %v3150, %v3963
    %v3986 = vadd.f32 %v3151, %v3968
    %3987 = vrot.lane.b32.xlu0 %v726, 64
    %v3988 = vpop.permute.xlu0 %3987
    %3989 = vrot.lane.b32.xlu0 %v727, 64
    %v3990 = vpop.permute.xlu0 %3989
    %3991 = vrot.lane.b32.xlu0 %v728, 64
    %v3992 = vpop.permute.xlu0 %3991
    %3993 = vrot.lane.b32.xlu0 %v729, 64
    %v3994 = vpop.permute.xlu0 %3993
    %3995 = vrot.lane.b32.xlu0 %v730, 64
    %v3996 = vpop.permute.xlu0 %3995
    %3997 = vrot.lane.b32.xlu0 %v731, 64
    %v3998 = vpop.permute.xlu0 %3997
    %3999 = vrot.lane.b32.xlu0 %v732, 64
    %v4000 = vpop.permute.xlu0 %3999
    %4001 = vrot.lane.b32.xlu0 %v733, 64
    %v4002 = vpop.permute.xlu0 %4001
    %4003 = vrot.lane.b32.xlu0 %v734, 64
    %v4004 = vpop.permute.xlu0 %4003
    %4005 = vrot.lane.b32.xlu0 %v735, 64
    %v4006 = vpop.permute.xlu0 %4005
    %4007 = vrot.lane.b32.xlu0 %v736, 64
    %v4008 = vpop.permute.xlu0 %4007
    %4009 = vrot.lane.b32.xlu0 %v737, 64
    %v4010 = vpop.permute.xlu0 %4009
    %4011 = vrot.lane.b32.xlu0 %v738, 64
    %v4012 = vpop.permute.xlu0 %4011
    %4013 = vrot.lane.b32.xlu0 %v739, 64
    %v4014 = vpop.permute.xlu0 %4013
    %4015 = vrot.lane.b32.xlu0 %v740, 64
    %v4016 = vpop.permute.xlu0 %4015
    %4017 = vrot.lane.b32.xlu0 %v741, 64
    %v4018 = vpop.permute.xlu0 %4017
    %4019 = vrot.lane.b32.xlu0 %v457, 64
    %v4020 = vpop.permute.xlu0 %4019
    %4021 = vrot.lane.b32.xlu0 %v463, 64
    %v4022 = vpop.permute.xlu0 %4021
    %4023 = vrot.lane.b32.xlu0 %v469, 64
    %v4024 = vpop.permute.xlu0 %4023
    %4025 = vrot.lane.b32.xlu0 %v475, 64
    %v4026 = vpop.permute.xlu0 %4025
    %4027 = vrot.lane.b32.xlu0 %v481, 64
    %v4028 = vpop.permute.xlu0 %4027
    %4029 = vrot.lane.b32.xlu0 %v487, 64
    %v4030 = vpop.permute.xlu0 %4029
    %4031 = vrot.lane.b32.xlu0 %v493, 64
    %v4032 = vpop.permute.xlu0 %4031
    %4033 = vrot.lane.b32.xlu0 %v499, 64
    %v4034 = vpop.permute.xlu0 %4033
    %4035 = vrot.lane.b32.xlu0 %v505, 64
    %v4036 = vpop.permute.xlu0 %4035
    %4037 = vrot.lane.b32.xlu0 %v511, 64
    %v4038 = vpop.permute.xlu0 %4037
    %4039 = vrot.lane.b32.xlu0 %v517, 64
    %v4040 = vpop.permute.xlu0 %4039
    %4041 = vrot.lane.b32.xlu0 %v523, 64
    %v4042 = vpop.permute.xlu0 %4041
    %4043 = vrot.lane.b32.xlu0 %v529, 64
    %v4044 = vpop.permute.xlu0 %4043
    %4045 = vrot.lane.b32.xlu0 %v535, 64
    %v4046 = vpop.permute.xlu0 %4045
    %4047 = vrot.lane.b32.xlu0 %v541, 64
    %v4048 = vpop.permute.xlu0 %4047
    %4049 = vrot.lane.b32.xlu0 %v547, 64
    %v4050 = vpop.permute.xlu0 %4049
    %v4051 = vsel %vm742, %v3988, 0
    %v4053 = vsel %vm742, %v3990, 0
    %v4055 = vsel %vm742, %v3992, 0
    %v4057 = vsel %vm742, %v3994, 0
    %v4059 = vsel %vm742, %v3996, 0
    %v4061 = vsel %vm742, %v3998, 0
    %v4063 = vsel %vm742, %v4000, 0
    %v4065 = vsel %vm742, %v4002, 0
    %v4067 = vsel %vm742, %v4004, 0
    %v4069 = vsel %vm742, %v4006, 0
    %v4071 = vsel %vm742, %v4008, 0
    %v4073 = vsel %vm742, %v4010, 0
    %v4075 = vsel %vm742, %v4012, 0
    %v4077 = vsel %vm742, %v4014, 0
    %v4079 = vsel %vm742, %v4016, 0
    %v4081 = vsel %vm742, %v4018, 0
    %v4083 = vsel %vm742, %v4020, 0
    %v4085 = vsel %vm742, %v4022, 0
    %v4087 = vsel %vm742, %v4024, 0
    %v4089 = vsel %vm742, %v4026, 0
    %v4091 = vsel %vm742, %v4028, 0
    %v4093 = vsel %vm742, %v4030, 0
    %v4095 = vsel %vm742, %v4032, 0
    %v4097 = vsel %vm742, %v4034, 0
    %v4099 = vsel %vm742, %v4036, 0
    %v4101 = vsel %vm742, %v4038, 0
    %v4103 = vsel %vm742, %v4040, 0
    %v4105 = vsel %vm742, %v4042, 0
    %v4107 = vsel %vm742, %v4044, 0
    %v4109 = vsel %vm742, %v4046, 0
    %v4111 = vsel %vm742, %v4048, 0
    %v4113 = vsel %vm742, %v4050, 0
    %4115 = vmatprep.subr.mxu0 0.0
    %4116 = vmatpush1.xpose.msra.mxu0 %v4113
    %4117 = vmatprep.subr.mxu0 0.0
    %4118 = vmatpush1.xpose.msra.mxu0 %v4111
    %4119 = vmatprep.subr.mxu0 0.0
    %4120 = vmatpush1.xpose.msra.mxu0 %v4109
    %4121 = vmatprep.subr.mxu0 0.0
    %4122 = vmatpush1.xpose.msra.mxu0 %v4107
    %4123 = vmatprep.subr.mxu0 0.0
    %4124 = vmatpush1.xpose.msra.mxu0 %v4105
    %4125 = vmatprep.subr.mxu0 0.0
    %4126 = vmatpush1.xpose.msra.mxu0 %v4103
    %4127 = vmatprep.subr.mxu0 0.0
    %4128 = vmatpush1.xpose.msra.mxu0 %v4101
    %4129 = vmatprep.subr.mxu0 0.0
    %4130 = vmatpush1.xpose.msra.mxu0 %v4099
    %4131 = vmatprep.subr.mxu0 0.0
    %4132 = vmatpush1.xpose.msra.mxu0 %v4097
    %4133 = vmatprep.subr.mxu0 0.0
    %4134 = vmatpush1.xpose.msra.mxu0 %v4095
    %4135 = vmatprep.subr.mxu0 0.0
    %4136 = vmatpush1.xpose.msra.mxu0 %v4093
    %4137 = vmatprep.subr.mxu0 0.0
    %4138 = vmatpush1.xpose.msra.mxu0 %v4091
    %4139 = vmatprep.subr.mxu0 0.0
    %4140 = vmatpush1.xpose.msra.mxu0 %v4089
    %4141 = vmatprep.subr.mxu0 0.0
    %4142 = vmatpush1.xpose.msra.mxu0 %v4087
    %4143 = vmatprep.subr.mxu0 0.0
    %4144 = vmatpush1.xpose.msra.mxu0 %v4085
    %4145 = vmatprep.subr.mxu0 0.0
    %4146 = vmatpush1.xpose.msra.mxu0 %v4083
    %4147 = vmatprep.subr.mxu0 0.0
    %4148 = vmatpush2.xpose.msra.mxu0 0.0
    %4149 = vmatprep.subr.mxu0 0.0
    %4150 = vmatpush2.xpose.msra.mxu0 0.0
    %4151 = vmatprep.subr.mxu0 0.0
    %4152 = vmatpush2.xpose.msra.mxu0 0.0
    %4153 = vmatprep.subr.mxu0 0.0
    %4154 = vmatpush2.xpose.msra.mxu0 0.0
    %4155 = vmatprep.subr.mxu0 0.0
    %4156 = vmatpush2.xpose.msra.mxu0 0.0
    %4157 = vmatprep.subr.mxu0 0.0
    %4158 = vmatpush2.xpose.msra.mxu0 0.0
    %4159 = vmatprep.subr.mxu0 0.0
    %4160 = vmatpush2.xpose.msra.mxu0 0.0
    %4161 = vmatprep.subr.mxu0 0.0
    %4162 = vmatpush2.xpose.msra.mxu0 0.0
    %4163 = vmatprep.subr.mxu0 0.0
    %4164 = vmatpush2.xpose.msra.mxu0 0.0
    %4165 = vmatprep.subr.mxu0 0.0
    %4166 = vmatpush2.xpose.msra.mxu0 0.0
    %4167 = vmatprep.subr.mxu0 0.0
    %4168 = vmatpush2.xpose.msra.mxu0 0.0
    %4169 = vmatprep.subr.mxu0 0.0
    %4170 = vmatpush2.xpose.msra.mxu0 0.0
    %4171 = vmatprep.subr.mxu0 0.0
    %4172 = vmatpush2.xpose.msra.mxu0 0.0
    %4173 = vmatprep.subr.mxu0 0.0
    %4174 = vmatpush2.xpose.msra.mxu0 0.0
    %4175 = vmatprep.subr.mxu0 0.0
    %4176 = vmatpush2.xpose.msra.mxu0 0.0
    %4177 = vmatprep.subr.mxu0 0.0
    %4178 = vmatpush2.xpose.msra.mxu0 0.0
    %4179 = vmatprep.mubr.f32.mxu0 0.0
    %4180 = vmatmul.mubr.f32.gmra.mxu0 %v4051
    %v4181 = vpop.f32.mrf.mxu0
    %v4182 = vadd.f32 %v694, %v4181
    %v4183 = vpop.f32.mrf.mxu0
    %4184 = vmatprep.mubr.f32.mxu0 0.0
    %4185 = vmatmul.mubr.f32.gmra.mxu0 %v4053
    %v4186 = vpop.f32.mrf.mxu0
    %v4187 = vadd.f32 %v695, %v4186
    %v4188 = vpop.f32.mrf.mxu0
    %4189 = vmatprep.mubr.f32.mxu0 0.0
    %4190 = vmatmul.mubr.f32.gmra.mxu0 %v4055
    %v4191 = vpop.f32.mrf.mxu0
    %v4192 = vadd.f32 %v696, %v4191
    %v4193 = vpop.f32.mrf.mxu0
    %4194 = vmatprep.mubr.f32.mxu0 0.0
    %4195 = vmatmul.mubr.f32.gmra.mxu0 %v4057
    %v4196 = vpop.f32.mrf.mxu0
    %v4197 = vadd.f32 %v697, %v4196
    %v4198 = vpop.f32.mrf.mxu0
    %4199 = vmatprep.mubr.f32.mxu0 0.0
    %4200 = vmatmul.mubr.f32.gmra.mxu0 %v4059
    %v4201 = vpop.f32.mrf.mxu0
    %v4202 = vadd.f32 %v698, %v4201
    %v4203 = vpop.f32.mrf.mxu0
    %4204 = vmatprep.mubr.f32.mxu0 0.0
    %4205 = vmatmul.mubr.f32.gmra.mxu0 %v4061
    %v4206 = vpop.f32.mrf.mxu0
    %v4207 = vadd.f32 %v699, %v4206
    %v4208 = vpop.f32.mrf.mxu0
    %4209 = vmatprep.mubr.f32.mxu0 0.0
    %4210 = vmatmul.mubr.f32.gmra.mxu0 %v4063
    %v4211 = vpop.f32.mrf.mxu0
    %v4212 = vadd.f32 %v700, %v4211
    %v4213 = vpop.f32.mrf.mxu0
    %4214 = vmatprep.mubr.f32.mxu0 0.0
    %4215 = vmatmul.mubr.f32.gmra.mxu0 %v4065
    %v4216 = vpop.f32.mrf.mxu0
    %v4217 = vadd.f32 %v701, %v4216
    %v4218 = vpop.f32.mrf.mxu0
    %4219 = vmatprep.mubr.f32.mxu0 0.0
    %4220 = vmatmul.mubr.f32.gmra.mxu0 %v4067
    %v4221 = vpop.f32.mrf.mxu0
    %v4222 = vadd.f32 %v702, %v4221
    %v4223 = vpop.f32.mrf.mxu0
    %4224 = vmatprep.mubr.f32.mxu0 0.0
    %4225 = vmatmul.mubr.f32.gmra.mxu0 %v4069
    %v4226 = vpop.f32.mrf.mxu0
    %v4227 = vadd.f32 %v703, %v4226
    %v4228 = vpop.f32.mrf.mxu0
    %4229 = vmatprep.mubr.f32.mxu0 0.0
    %4230 = vmatmul.mubr.f32.gmra.mxu0 %v4071
    %v4231 = vpop.f32.mrf.mxu0
    %v4232 = vadd.f32 %v704, %v4231
    %v4233 = vpop.f32.mrf.mxu0
    %4234 = vmatprep.mubr.f32.mxu0 0.0
    %4235 = vmatmul.mubr.f32.gmra.mxu0 %v4073
    %v4236 = vpop.f32.mrf.mxu0
    %v4237 = vadd.f32 %v705, %v4236
    %v4238 = vpop.f32.mrf.mxu0
    %4239 = vmatprep.mubr.f32.mxu0 0.0
    %4240 = vmatmul.mubr.f32.gmra.mxu0 %v4075
    %v4241 = vpop.f32.mrf.mxu0
    %v4242 = vadd.f32 %v706, %v4241
    %v4243 = vpop.f32.mrf.mxu0
    %4244 = vmatprep.mubr.f32.mxu0 0.0
    %4245 = vmatmul.mubr.f32.gmra.mxu0 %v4077
    %v4246 = vpop.f32.mrf.mxu0
    %v4247 = vadd.f32 %v707, %v4246
    %v4248 = vpop.f32.mrf.mxu0
    %4249 = vmatprep.mubr.f32.mxu0 0.0
    %4250 = vmatmul.mubr.f32.gmra.mxu0 %v4079
    %v4251 = vpop.f32.mrf.mxu0
    %v4252 = vadd.f32 %v708, %v4251
    %v4253 = vpop.f32.mrf.mxu0
    %4254 = vmatprep.mubr.f32.mxu0 0.0
    %4255 = vmatmul.mubr.f32.gmra.mxu0 %v4081
    %v4256 = vpop.f32.mrf.mxu0
    %v4257 = vadd.f32 %v709, %v4256
    %v4258 = vpop.f32.mrf.mxu0
    %4259 = vdwg.mxu0
    %4260 = vmax.xlane.f32.xlu0 %v4182
    %v4261 = vpop.xlane.xlu0 %4260
    %4262 = vmax.xlane.f32.xlu0 %v4187
    %v4263 = vpop.xlane.xlu0 %4262
    %4264 = vmax.xlane.f32.xlu0 %v4192
    %v4265 = vpop.xlane.xlu0 %4264
    %4266 = vmax.xlane.f32.xlu0 %v4197
    %v4267 = vpop.xlane.xlu0 %4266
    %4268 = vmax.xlane.f32.xlu0 %v4202
    %v4269 = vpop.xlane.xlu0 %4268
    %4270 = vmax.xlane.f32.xlu0 %v4207
    %v4271 = vpop.xlane.xlu0 %4270
    %4272 = vmax.xlane.f32.xlu0 %v4212
    %v4273 = vpop.xlane.xlu0 %4272
    %4274 = vmax.xlane.f32.xlu0 %v4217
    %v4275 = vpop.xlane.xlu0 %4274
    %4276 = vmax.xlane.f32.xlu0 %v4222
    %v4277 = vpop.xlane.xlu0 %4276
    %4278 = vmax.xlane.f32.xlu0 %v4227
    %v4279 = vpop.xlane.xlu0 %4278
    %4280 = vmax.xlane.f32.xlu0 %v4232
    %v4281 = vpop.xlane.xlu0 %4280
    %4282 = vmax.xlane.f32.xlu0 %v4237
    %v4283 = vpop.xlane.xlu0 %4282
    %4284 = vmax.xlane.f32.xlu0 %v4242
    %v4285 = vpop.xlane.xlu0 %4284
    %4286 = vmax.xlane.f32.xlu0 %v4247
    %v4287 = vpop.xlane.xlu0 %4286
    %4288 = vmax.xlane.f32.xlu0 %v4252
    %v4289 = vpop.xlane.xlu0 %4288
    %4290 = vmax.xlane.f32.xlu0 %v4257
    %v4291 = vpop.xlane.xlu0 %4290
    %v4292 = vsub.f32 %v4182, %v4261
    %v4293 = vsub.f32 %v4187, %v4263
    %v4294 = vsub.f32 %v4192, %v4265
    %v4295 = vsub.f32 %v4197, %v4267
    %v4296 = vsub.f32 %v4202, %v4269
    %v4297 = vsub.f32 %v4207, %v4271
    %v4298 = vsub.f32 %v4212, %v4273
    %v4299 = vsub.f32 %v4217, %v4275
    %v4300 = vsub.f32 %v4222, %v4277
    %v4301 = vsub.f32 %v4227, %v4279
    %v4302 = vsub.f32 %v4232, %v4281
    %v4303 = vsub.f32 %v4237, %v4283
    %v4304 = vsub.f32 %v4242, %v4285
    %v4305 = vsub.f32 %v4247, %v4287
    %v4306 = vsub.f32 %v4252, %v4289
    %v4307 = vsub.f32 %v4257, %v4291
    %v4308 = vmul.f32 %v4292, 1.442695
    %v4309 = vpow.pop %v4308
    %v4310 = vmul.f32 %v4293, 1.442695
    %v4311 = vpow.pop %v4310
    %v4312 = vmul.f32 %v4294, 1.442695
    %v4313 = vpow.pop %v4312
    %v4314 = vmul.f32 %v4295, 1.442695
    %v4315 = vpow.pop %v4314
    %v4316 = vmul.f32 %v4296, 1.442695
    %v4317 = vpow.pop %v4316
    %v4318 = vmul.f32 %v4297, 1.442695
    %v4319 = vpow.pop %v4318
    %v4320 = vmul.f32 %v4298, 1.442695
    %v4321 = vpow.pop %v4320
    %v4322 = vmul.f32 %v4299, 1.442695
    %v4323 = vpow.pop %v4322
    %v4324 = vmul.f32 %v4300, 1.442695
    %v4325 = vpow.pop %v4324
    %v4326 = vmul.f32 %v4301, 1.442695
    %v4327 = vpow.pop %v4326
    %v4328 = vmul.f32 %v4302, 1.442695
    %v4329 = vpow.pop %v4328
    %v4330 = vmul.f32 %v4303, 1.442695
    %v4331 = vpow.pop %v4330
    %v4332 = vmul.f32 %v4304, 1.442695
    %v4333 = vpow.pop %v4332
    %v4334 = vmul.f32 %v4305, 1.442695
    %v4335 = vpow.pop %v4334
    %v4336 = vmul.f32 %v4306, 1.442695
    %v4337 = vpow.pop %v4336
    %v4338 = vmul.f32 %v4307, 1.442695
    %v4339 = vpow.pop %v4338
    %4340 = vadd.xlane.f32.xlu0 %v4309
    %v4341 = vpop.xlane.xlu0 %4340
    %4342 = vadd.xlane.f32.xlu0 %v4311
    %v4343 = vpop.xlane.xlu0 %4342
    %4344 = vadd.xlane.f32.xlu0 %v4313
    %v4345 = vpop.xlane.xlu0 %4344
    %4346 = vadd.xlane.f32.xlu0 %v4315
    %v4347 = vpop.xlane.xlu0 %4346
    %4348 = vadd.xlane.f32.xlu0 %v4317
    %v4349 = vpop.xlane.xlu0 %4348
    %4350 = vadd.xlane.f32.xlu0 %v4319
    %v4351 = vpop.xlane.xlu0 %4350
    %4352 = vadd.xlane.f32.xlu0 %v4321
    %v4353 = vpop.xlane.xlu0 %4352
    %4354 = vadd.xlane.f32.xlu0 %v4323
    %v4355 = vpop.xlane.xlu0 %4354
    %4356 = vadd.xlane.f32.xlu0 %v4325
    %v4357 = vpop.xlane.xlu0 %4356
    %4358 = vadd.xlane.f32.xlu0 %v4327
    %v4359 = vpop.xlane.xlu0 %4358
    %4360 = vadd.xlane.f32.xlu0 %v4329
    %v4361 = vpop.xlane.xlu0 %4360
    %4362 = vadd.xlane.f32.xlu0 %v4331
    %v4363 = vpop.xlane.xlu0 %4362
    %4364 = vadd.xlane.f32.xlu0 %v4333
    %v4365 = vpop.xlane.xlu0 %4364
    %4366 = vadd.xlane.f32.xlu0 %v4335
    %v4367 = vpop.xlane.xlu0 %4366
    %4368 = vadd.xlane.f32.xlu0 %v4337
    %v4369 = vpop.xlane.xlu0 %4368
    %4370 = vadd.xlane.f32.xlu0 %v4339
    %v4371 = vpop.xlane.xlu0 %4370
    %v4372 = vrcp.pop %v4341
    %v4373 = vmul.f32 1.0, %v4372
    %v4374 = vrcp.pop %v4343
    %v4375 = vmul.f32 1.0, %v4374
    %v4376 = vrcp.pop %v4345
    %v4377 = vmul.f32 1.0, %v4376
    %v4378 = vrcp.pop %v4347
    %v4379 = vmul.f32 1.0, %v4378
    %v4380 = vrcp.pop %v4349
    %v4381 = vmul.f32 1.0, %v4380
    %v4382 = vrcp.pop %v4351
    %v4383 = vmul.f32 1.0, %v4382
    %v4384 = vrcp.pop %v4353
    %v4385 = vmul.f32 1.0, %v4384
    %v4386 = vrcp.pop %v4355
    %v4387 = vmul.f32 1.0, %v4386
    %v4388 = vrcp.pop %v4357
    %v4389 = vmul.f32 1.0, %v4388
    %v4390 = vrcp.pop %v4359
    %v4391 = vmul.f32 1.0, %v4390
    %v4392 = vrcp.pop %v4361
    %v4393 = vmul.f32 1.0, %v4392
    %v4394 = vrcp.pop %v4363
    %v4395 = vmul.f32 1.0, %v4394
    %v4396 = vrcp.pop %v4365
    %v4397 = vmul.f32 1.0, %v4396
    %v4398 = vrcp.pop %v4367
    %v4399 = vmul.f32 1.0, %v4398
    %v4400 = vrcp.pop %v4369
    %v4401 = vmul.f32 1.0, %v4400
    %v4402 = vrcp.pop %v4371
    %v4403 = vmul.f32 1.0, %v4402
    %v4404 = vmul.f32 %v4309, %v4373
    %v4405 = vmul.f32 %v4311, %v4375
    %v4406 = vmul.f32 %v4313, %v4377
    %v4407 = vmul.f32 %v4315, %v4379
    %v4408 = vmul.f32 %v4317, %v4381
    %v4409 = vmul.f32 %v4319, %v4383
    %v4410 = vmul.f32 %v4321, %v4385
    %v4411 = vmul.f32 %v4323, %v4387
    %v4412 = vmul.f32 %v4325, %v4389
    %v4413 = vmul.f32 %v4327, %v4391
    %v4414 = vmul.f32 %v4329, %v4393
    %v4415 = vmul.f32 %v4331, %v4395
    %v4416 = vmul.f32 %v4333, %v4397
    %v4417 = vmul.f32 %v4335, %v4399
    %v4418 = vmul.f32 %v4337, %v4401
    %v4419 = vmul.f32 %v4339, %v4403
    %4420 = vrot.lane.b32.xlu0 %v616, 64
    %v4421 = vpop.permute.xlu0 %4420
    %4422 = vrot.lane.b32.xlu0 %v621, 64
    %v4423 = vpop.permute.xlu0 %4422
    %4424 = vrot.lane.b32.xlu0 %v626, 64
    %v4425 = vpop.permute.xlu0 %4424
    %4426 = vrot.lane.b32.xlu0 %v631, 64
    %v4427 = vpop.permute.xlu0 %4426
    %4428 = vrot.lane.b32.xlu0 %v636, 64
    %v4429 = vpop.permute.xlu0 %4428
    %4430 = vrot.lane.b32.xlu0 %v641, 64
    %v4431 = vpop.permute.xlu0 %4430
    %4432 = vrot.lane.b32.xlu0 %v646, 64
    %v4433 = vpop.permute.xlu0 %4432
    %4434 = vrot.lane.b32.xlu0 %v651, 64
    %v4435 = vpop.permute.xlu0 %4434
    %4436 = vrot.lane.b32.xlu0 %v656, 64
    %v4437 = vpop.permute.xlu0 %4436
    %4438 = vrot.lane.b32.xlu0 %v661, 64
    %v4439 = vpop.permute.xlu0 %4438
    %4440 = vrot.lane.b32.xlu0 %v666, 64
    %v4441 = vpop.permute.xlu0 %4440
    %4442 = vrot.lane.b32.xlu0 %v671, 64
    %v4443 = vpop.permute.xlu0 %4442
    %4444 = vrot.lane.b32.xlu0 %v676, 64
    %v4445 = vpop.permute.xlu0 %4444
    %4446 = vrot.lane.b32.xlu0 %v681, 64
    %v4447 = vpop.permute.xlu0 %4446
    %4448 = vrot.lane.b32.xlu0 %v686, 64
    %v4449 = vpop.permute.xlu0 %4448
    %4450 = vrot.lane.b32.xlu0 %v691, 64
    %v4451 = vpop.permute.xlu0 %4450
    %4468 = vmatprep.subr.mxu0 0.0
    %4469 = vmatpush1.msra.mxu0 %v4451
    %4470 = vmatprep.subr.mxu0 0.0
    %4471 = vmatpush1.msra.mxu0 %v4449
    %4472 = vmatprep.subr.mxu0 0.0
    %4473 = vmatpush1.msra.mxu0 %v4447
    %4474 = vmatprep.subr.mxu0 0.0
    %4475 = vmatpush1.msra.mxu0 %v4445
    %4476 = vmatprep.subr.mxu0 0.0
    %4477 = vmatpush1.msra.mxu0 %v4443
    %4478 = vmatprep.subr.mxu0 0.0
    %4479 = vmatpush1.msra.mxu0 %v4441
    %4480 = vmatprep.subr.mxu0 0.0
    %4481 = vmatpush1.msra.mxu0 %v4439
    %4482 = vmatprep.subr.mxu0 0.0
    %4483 = vmatpush1.msra.mxu0 %v4437
    %4484 = vmatprep.subr.mxu0 0.0
    %4485 = vmatpush1.msra.mxu0 %v4435
    %4486 = vmatprep.subr.mxu0 0.0
    %4487 = vmatpush1.msra.mxu0 %v4433
    %4488 = vmatprep.subr.mxu0 0.0
    %4489 = vmatpush1.msra.mxu0 %v4431
    %4490 = vmatprep.subr.mxu0 0.0
    %4491 = vmatpush1.msra.mxu0 %v4429
    %4492 = vmatprep.subr.mxu0 0.0
    %4493 = vmatpush1.msra.mxu0 %v4427
    %4494 = vmatprep.subr.mxu0 0.0
    %4495 = vmatpush1.msra.mxu0 %v4425
    %4496 = vmatprep.subr.mxu0 0.0
    %4497 = vmatpush1.msra.mxu0 %v4423
    %4498 = vmatprep.subr.mxu0 0.0
    %4499 = vmatpush1.msra.mxu0 %v4421
    %4500 = vmatprep.subr.mxu0 0.0
    %4501 = vmatpush2.msra.mxu0 0.0
    %4502 = vmatprep.subr.mxu0 0.0
    %4503 = vmatpush2.msra.mxu0 0.0
    %4504 = vmatprep.subr.mxu0 0.0
    %4505 = vmatpush2.msra.mxu0 0.0
    %4506 = vmatprep.subr.mxu0 0.0
    %4507 = vmatpush2.msra.mxu0 0.0
    %4508 = vmatprep.subr.mxu0 0.0
    %4509 = vmatpush2.msra.mxu0 0.0
    %4510 = vmatprep.subr.mxu0 0.0
    %4511 = vmatpush2.msra.mxu0 0.0
    %4512 = vmatprep.subr.mxu0 0.0
    %4513 = vmatpush2.msra.mxu0 0.0
    %4514 = vmatprep.subr.mxu0 0.0
    %4515 = vmatpush2.msra.mxu0 0.0
    %4516 = vmatprep.subr.mxu0 0.0
    %4517 = vmatpush2.msra.mxu0 0.0
    %4518 = vmatprep.subr.mxu0 0.0
    %4519 = vmatpush2.msra.mxu0 0.0
    %4520 = vmatprep.subr.mxu0 0.0
    %4521 = vmatpush2.msra.mxu0 0.0
    %4522 = vmatprep.subr.mxu0 0.0
    %4523 = vmatpush2.msra.mxu0 0.0
    %4524 = vmatprep.subr.mxu0 0.0
    %4525 = vmatpush2.msra.mxu0 0.0
    %4526 = vmatprep.subr.mxu0 0.0
    %4527 = vmatpush2.msra.mxu0 0.0
    %4528 = vmatprep.subr.mxu0 0.0
    %4529 = vmatpush2.msra.mxu0 0.0
    %4530 = vmatprep.subr.mxu0 0.0
    %4531 = vmatpush2.msra.mxu0 0.0
    %4532 = vmatprep.mubr.f32.mxu0 0.0
    %4533 = vmatmul.mubr.f32.gmra.mxu0 %v4404
    %v4534 = vpop.f32.mrf.mxu0
    %v4535 = vadd.f32 0.0, %v4534
    %v4536 = vpop.f32.mrf.mxu0
    %4537 = vmatprep.mubr.f32.mxu0 0.0
    %4538 = vmatmul.mubr.f32.gmra.mxu0 %v4405
    %v4539 = vpop.f32.mrf.mxu0
    %v4540 = vadd.f32 0.0, %v4539
    %v4541 = vpop.f32.mrf.mxu0
    %4542 = vmatprep.mubr.f32.mxu0 0.0
    %4543 = vmatmul.mubr.f32.gmra.mxu0 %v4406
    %v4544 = vpop.f32.mrf.mxu0
    %v4545 = vadd.f32 0.0, %v4544
    %v4546 = vpop.f32.mrf.mxu0
    %4547 = vmatprep.mubr.f32.mxu0 0.0
    %4548 = vmatmul.mubr.f32.gmra.mxu0 %v4407
    %v4549 = vpop.f32.mrf.mxu0
    %v4550 = vadd.f32 0.0, %v4549
    %v4551 = vpop.f32.mrf.mxu0
    %4552 = vmatprep.mubr.f32.mxu0 0.0
    %4553 = vmatmul.mubr.f32.gmra.mxu0 %v4408
    %v4554 = vpop.f32.mrf.mxu0
    %v4555 = vadd.f32 0.0, %v4554
    %v4556 = vpop.f32.mrf.mxu0
    %4557 = vmatprep.mubr.f32.mxu0 0.0
    %4558 = vmatmul.mubr.f32.gmra.mxu0 %v4409
    %v4559 = vpop.f32.mrf.mxu0
    %v4560 = vadd.f32 0.0, %v4559
    %v4561 = vpop.f32.mrf.mxu0
    %4562 = vmatprep.mubr.f32.mxu0 0.0
    %4563 = vmatmul.mubr.f32.gmra.mxu0 %v4410
    %v4564 = vpop.f32.mrf.mxu0
    %v4565 = vadd.f32 0.0, %v4564
    %v4566 = vpop.f32.mrf.mxu0
    %4567 = vmatprep.mubr.f32.mxu0 0.0
    %4568 = vmatmul.mubr.f32.gmra.mxu0 %v4411
    %v4569 = vpop.f32.mrf.mxu0
    %v4570 = vadd.f32 0.0, %v4569
    %v4571 = vpop.f32.mrf.mxu0
    %4572 = vmatprep.mubr.f32.mxu0 0.0
    %4573 = vmatmul.mubr.f32.gmra.mxu0 %v4412
    %v4574 = vpop.f32.mrf.mxu0
    %v4575 = vadd.f32 0.0, %v4574
    %v4576 = vpop.f32.mrf.mxu0
    %4577 = vmatprep.mubr.f32.mxu0 0.0
    %4578 = vmatmul.mubr.f32.gmra.mxu0 %v4413
    %v4579 = vpop.f32.mrf.mxu0
    %v4580 = vadd.f32 0.0, %v4579
    %v4581 = vpop.f32.mrf.mxu0
    %4582 = vmatprep.mubr.f32.mxu0 0.0
    %4583 = vmatmul.mubr.f32.gmra.mxu0 %v4414
    %v4584 = vpop.f32.mrf.mxu0
    %v4585 = vadd.f32 0.0, %v4584
    %v4586 = vpop.f32.mrf.mxu0
    %4587 = vmatprep.mubr.f32.mxu0 0.0
    %4588 = vmatmul.mubr.f32.gmra.mxu0 %v4415
    %v4589 = vpop.f32.mrf.mxu0
    %v4590 = vadd.f32 0.0, %v4589
    %v4591 = vpop.f32.mrf.mxu0
    %4592 = vmatprep.mubr.f32.mxu0 0.0
    %4593 = vmatmul.mubr.f32.gmra.mxu0 %v4416
    %v4594 = vpop.f32.mrf.mxu0
    %v4595 = vadd.f32 0.0, %v4594
    %v4596 = vpop.f32.mrf.mxu0
    %4597 = vmatprep.mubr.f32.mxu0 0.0
    %4598 = vmatmul.mubr.f32.gmra.mxu0 %v4417
    %v4599 = vpop.f32.mrf.mxu0
    %v4600 = vadd.f32 0.0, %v4599
    %v4601 = vpop.f32.mrf.mxu0
    %4602 = vmatprep.mubr.f32.mxu0 0.0
    %4603 = vmatmul.mubr.f32.gmra.mxu0 %v4418
    %v4604 = vpop.f32.mrf.mxu0
    %v4605 = vadd.f32 0.0, %v4604
    %v4606 = vpop.f32.mrf.mxu0
    %4607 = vmatprep.mubr.f32.mxu0 0.0
    %4608 = vmatmul.mubr.f32.gmra.mxu0 %v4419
    %v4609 = vpop.f32.mrf.mxu0
    %v4610 = vadd.f32 0.0, %v4609
    %v4611 = vpop.f32.mrf.mxu0
    %4612 = vdwg.mxu0
    %v4614 = vsel %vm742, %v4535, 0
    %v4617 = vsel %vm742, %v4540, 0
    %v4620 = vsel %vm742, %v4545, 0
    %v4623 = vsel %vm742, %v4550, 0
    %v4626 = vsel %vm742, %v4555, 0
    %v4629 = vsel %vm742, %v4560, 0
    %v4632 = vsel %vm742, %v4565, 0
    %v4635 = vsel %vm742, %v4570, 0
    %v4638 = vsel %vm742, %v4575, 0
    %v4641 = vsel %vm742, %v4580, 0
    %v4644 = vsel %vm742, %v4585, 0
    %v4647 = vsel %vm742, %v4590, 0
    %v4650 = vsel %vm742, %v4595, 0
    %v4653 = vsel %vm742, %v4600, 0
    %v4656 = vsel %vm742, %v4605, 0
    %v4659 = vsel %vm742, %v4610, 0
    %4661 = vmatprep.subr.mxu0 0.0
    %4662 = vmatpush1.msra.mxu0 0.0
    %4663 = vmatprep.subr.mxu0 0.0
    %4664 = vmatpush1.msra.mxu0 0.0
    %4665 = vmatprep.subr.mxu0 0.0
    %4666 = vmatpush1.msra.mxu0 0.0
    %4667 = vmatprep.subr.mxu0 0.0
    %4668 = vmatpush1.msra.mxu0 0.0
    %4669 = vmatprep.subr.mxu0 0.0
    %4670 = vmatpush1.msra.mxu0 0.0
    %4671 = vmatprep.subr.mxu0 0.0
    %4672 = vmatpush1.msra.mxu0 0.0
    %4673 = vmatprep.subr.mxu0 0.0
    %4674 = vmatpush1.msra.mxu0 0.0
    %4675 = vmatprep.subr.mxu0 0.0
    %4676 = vmatpush1.msra.mxu0 0.0
    %4677 = vmatprep.subr.mxu0 0.0
    %4678 = vmatpush1.msra.mxu0 0.0
    %4679 = vmatprep.subr.mxu0 0.0
    %4680 = vmatpush1.msra.mxu0 0.0
    %4681 = vmatprep.subr.mxu0 0.0
    %4682 = vmatpush1.msra.mxu0 0.0
    %4683 = vmatprep.subr.mxu0 0.0
    %4684 = vmatpush1.msra.mxu0 0.0
    %4685 = vmatprep.subr.mxu0 0.0
    %4686 = vmatpush1.msra.mxu0 0.0
    %4687 = vmatprep.subr.mxu0 0.0
    %4688 = vmatpush1.msra.mxu0 0.0
    %4689 = vmatprep.subr.mxu0 0.0
    %4690 = vmatpush1.msra.mxu0 %v719
    %4691 = vmatprep.subr.mxu0 0.0
    %4692 = vmatpush1.msra.mxu0 %v718
    %4693 = vmatprep.subr.mxu0 0.0
    %4694 = vmatpush2.msra.mxu0 0.0
    %4695 = vmatprep.subr.mxu0 0.0
    %4696 = vmatpush2.msra.mxu0 0.0
    %4697 = vmatprep.subr.mxu0 0.0
    %4698 = vmatpush2.msra.mxu0 0.0
    %4699 = vmatprep.subr.mxu0 0.0
    %4700 = vmatpush2.msra.mxu0 0.0
    %4701 = vmatprep.subr.mxu0 0.0
    %4702 = vmatpush2.msra.mxu0 0.0
    %4703 = vmatprep.subr.mxu0 0.0
    %4704 = vmatpush2.msra.mxu0 0.0
    %4705 = vmatprep.subr.mxu0 0.0
    %4706 = vmatpush2.msra.mxu0 0.0
    %4707 = vmatprep.subr.mxu0 0.0
    %4708 = vmatpush2.msra.mxu0 0.0
    %4709 = vmatprep.subr.mxu0 0.0
    %4710 = vmatpush2.msra.mxu0 0.0
    %4711 = vmatprep.subr.mxu0 0.0
    %4712 = vmatpush2.msra.mxu0 0.0
    %4713 = vmatprep.subr.mxu0 0.0
    %4714 = vmatpush2.msra.mxu0 0.0
    %4715 = vmatprep.subr.mxu0 0.0
    %4716 = vmatpush2.msra.mxu0 0.0
    %4717 = vmatprep.subr.mxu0 0.0
    %4718 = vmatpush2.msra.mxu0 0.0
    %4719 = vmatprep.subr.mxu0 0.0
    %4720 = vmatpush2.msra.mxu0 0.0
    %4721 = vmatprep.subr.mxu0 0.0
    %4722 = vmatpush2.msra.mxu0 0.0
    %4723 = vmatprep.subr.mxu0 0.0
    %4724 = vmatpush2.msra.mxu0 0.0
    %4725 = vmatprep.mubr.f32.mxu0 0.0
    %4726 = vmatmul.mubr.f32.gmra.mxu0 %v4614
    %v4727 = vpop.f32.mrf.mxu0
    %v4728 = vadd.f32 0.0, %v4727
    %v4729 = vpop.f32.mrf.mxu0
    %4730 = vmatprep.mubr.f32.mxu0 0.0
    %4731 = vmatmul.mubr.f32.gmra.mxu0 %v4617
    %v4732 = vpop.f32.mrf.mxu0
    %v4733 = vadd.f32 0.0, %v4732
    %v4734 = vpop.f32.mrf.mxu0
    %4735 = vmatprep.mubr.f32.mxu0 0.0
    %4736 = vmatmul.mubr.f32.gmra.mxu0 %v4620
    %v4737 = vpop.f32.mrf.mxu0
    %v4738 = vadd.f32 0.0, %v4737
    %v4739 = vpop.f32.mrf.mxu0
    %4740 = vmatprep.mubr.f32.mxu0 0.0
    %4741 = vmatmul.mubr.f32.gmra.mxu0 %v4623
    %v4742 = vpop.f32.mrf.mxu0
    %v4743 = vadd.f32 0.0, %v4742
    %v4744 = vpop.f32.mrf.mxu0
    %4745 = vmatprep.mubr.f32.mxu0 0.0
    %4746 = vmatmul.mubr.f32.gmra.mxu0 %v4626
    %v4747 = vpop.f32.mrf.mxu0
    %v4748 = vadd.f32 0.0, %v4747
    %v4749 = vpop.f32.mrf.mxu0
    %4750 = vmatprep.mubr.f32.mxu0 0.0
    %4751 = vmatmul.mubr.f32.gmra.mxu0 %v4629
    %v4752 = vpop.f32.mrf.mxu0
    %v4753 = vadd.f32 0.0, %v4752
    %v4754 = vpop.f32.mrf.mxu0
    %4755 = vmatprep.mubr.f32.mxu0 0.0
    %4756 = vmatmul.mubr.f32.gmra.mxu0 %v4632
    %v4757 = vpop.f32.mrf.mxu0
    %v4758 = vadd.f32 0.0, %v4757
    %v4759 = vpop.f32.mrf.mxu0
    %4760 = vmatprep.mubr.f32.mxu0 0.0
    %4761 = vmatmul.mubr.f32.gmra.mxu0 %v4635
    %v4762 = vpop.f32.mrf.mxu0
    %v4763 = vadd.f32 0.0, %v4762
    %v4764 = vpop.f32.mrf.mxu0
    %4765 = vmatprep.mubr.f32.mxu0 0.0
    %4766 = vmatmul.mubr.f32.gmra.mxu0 %v4638
    %v4767 = vpop.f32.mrf.mxu0
    %v4768 = vadd.f32 0.0, %v4767
    %v4769 = vpop.f32.mrf.mxu0
    %4770 = vmatprep.mubr.f32.mxu0 0.0
    %4771 = vmatmul.mubr.f32.gmra.mxu0 %v4641
    %v4772 = vpop.f32.mrf.mxu0
    %v4773 = vadd.f32 0.0, %v4772
    %v4774 = vpop.f32.mrf.mxu0
    %4775 = vmatprep.mubr.f32.mxu0 0.0
    %4776 = vmatmul.mubr.f32.gmra.mxu0 %v4644
    %v4777 = vpop.f32.mrf.mxu0
    %v4778 = vadd.f32 0.0, %v4777
    %v4779 = vpop.f32.mrf.mxu0
    %4780 = vmatprep.mubr.f32.mxu0 0.0
    %4781 = vmatmul.mubr.f32.gmra.mxu0 %v4647
    %v4782 = vpop.f32.mrf.mxu0
    %v4783 = vadd.f32 0.0, %v4782
    %v4784 = vpop.f32.mrf.mxu0
    %4785 = vmatprep.mubr.f32.mxu0 0.0
    %4786 = vmatmul.mubr.f32.gmra.mxu0 %v4650
    %v4787 = vpop.f32.mrf.mxu0
    %v4788 = vadd.f32 0.0, %v4787
    %v4789 = vpop.f32.mrf.mxu0
    %4790 = vmatprep.mubr.f32.mxu0 0.0
    %4791 = vmatmul.mubr.f32.gmra.mxu0 %v4653
    %v4792 = vpop.f32.mrf.mxu0
    %v4793 = vadd.f32 0.0, %v4792
    %v4794 = vpop.f32.mrf.mxu0
    %4795 = vmatprep.mubr.f32.mxu0 0.0
    %4796 = vmatmul.mubr.f32.gmra.mxu0 %v4656
    %v4797 = vpop.f32.mrf.mxu0
    %v4798 = vadd.f32 0.0, %v4797
    %v4799 = vpop.f32.mrf.mxu0
    %4800 = vmatprep.mubr.f32.mxu0 0.0
    %4801 = vmatmul.mubr.f32.gmra.mxu0 %v4659
    %v4802 = vpop.f32.mrf.mxu0
    %v4803 = vadd.f32 0.0, %v4802
    %v4804 = vpop.f32.mrf.mxu0
    %4805 = vdwg.mxu0
    %v4806 = vadd.f32 %v3971, %v4728
    %v4807 = vadd.f32 %v3972, %v4733
    %v4808 = vadd.f32 %v3973, %v4738
    %v4809 = vadd.f32 %v3974, %v4743
    %v4810 = vadd.f32 %v3975, %v4748
    %v4811 = vadd.f32 %v3976, %v4753
    %v4812 = vadd.f32 %v3977, %v4758
    %v4813 = vadd.f32 %v3978, %v4763
    %v4814 = vadd.f32 %v3979, %v4768
    %v4815 = vadd.f32 %v3980, %v4773
    %v4816 = vadd.f32 %v3981, %v4778
    %v4817 = vadd.f32 %v3982, %v4783
    %v4818 = vadd.f32 %v3983, %v4788
    %v4819 = vadd.f32 %v3984, %v4793
    %v4820 = vadd.f32 %v3985, %v4798
    %v4821 = vadd.f32 %v3986, %v4803
    %4822 = vrot.lane.b32.xlu0 %v726, 48
    %v4823 = vpop.permute.xlu0 %4822
    %4824 = vrot.lane.b32.xlu0 %v727, 48
    %v4825 = vpop.permute.xlu0 %4824
    %4826 = vrot.lane.b32.xlu0 %v728, 48
    %v4827 = vpop.permute.xlu0 %4826
    %4828 = vrot.lane.b32.xlu0 %v729, 48
    %v4829 = vpop.permute.xlu0 %4828
    %4830 = vrot.lane.b32.xlu0 %v730, 48
    %v4831 = vpop.permute.xlu0 %4830
    %4832 = vrot.lane.b32.xlu0 %v731, 48
    %v4833 = vpop.permute.xlu0 %4832
    %4834 = vrot.lane.b32.xlu0 %v732, 48
    %v4835 = vpop.permute.xlu0 %4834
    %4836 = vrot.lane.b32.xlu0 %v733, 48
    %v4837 = vpop.permute.xlu0 %4836
    %4838 = vrot.lane.b32.xlu0 %v734, 48
    %v4839 = vpop.permute.xlu0 %4838
    %4840 = vrot.lane.b32.xlu0 %v735, 48
    %v4841 = vpop.permute.xlu0 %4840
    %4842 = vrot.lane.b32.xlu0 %v736, 48
    %v4843 = vpop.permute.xlu0 %4842
    %4844 = vrot.lane.b32.xlu0 %v737, 48
    %v4845 = vpop.permute.xlu0 %4844
    %4846 = vrot.lane.b32.xlu0 %v738, 48
    %v4847 = vpop.permute.xlu0 %4846
    %4848 = vrot.lane.b32.xlu0 %v739, 48
    %v4849 = vpop.permute.xlu0 %4848
    %4850 = vrot.lane.b32.xlu0 %v740, 48
    %v4851 = vpop.permute.xlu0 %4850
    %4852 = vrot.lane.b32.xlu0 %v741, 48
    %v4853 = vpop.permute.xlu0 %4852
    %4854 = vrot.lane.b32.xlu0 %v457, 48
    %v4855 = vpop.permute.xlu0 %4854
    %4856 = vrot.lane.b32.xlu0 %v463, 48
    %v4857 = vpop.permute.xlu0 %4856
    %4858 = vrot.lane.b32.xlu0 %v469, 48
    %v4859 = vpop.permute.xlu0 %4858
    %4860 = vrot.lane.b32.xlu0 %v475, 48
    %v4861 = vpop.permute.xlu0 %4860
    %4862 = vrot.lane.b32.xlu0 %v481, 48
    %v4863 = vpop.permute.xlu0 %4862
    %4864 = vrot.lane.b32.xlu0 %v487, 48
    %v4865 = vpop.permute.xlu0 %4864
    %4866 = vrot.lane.b32.xlu0 %v493, 48
    %v4867 = vpop.permute.xlu0 %4866
    %4868 = vrot.lane.b32.xlu0 %v499, 48
    %v4869 = vpop.permute.xlu0 %4868
    %4870 = vrot.lane.b32.xlu0 %v505, 48
    %v4871 = vpop.permute.xlu0 %4870
    %4872 = vrot.lane.b32.xlu0 %v511, 48
    %v4873 = vpop.permute.xlu0 %4872
    %4874 = vrot.lane.b32.xlu0 %v517, 48
    %v4875 = vpop.permute.xlu0 %4874
    %4876 = vrot.lane.b32.xlu0 %v523, 48
    %v4877 = vpop.permute.xlu0 %4876
    %4878 = vrot.lane.b32.xlu0 %v529, 48
    %v4879 = vpop.permute.xlu0 %4878
    %4880 = vrot.lane.b32.xlu0 %v535, 48
    %v4881 = vpop.permute.xlu0 %4880
    %4882 = vrot.lane.b32.xlu0 %v541, 48
    %v4883 = vpop.permute.xlu0 %4882
    %4884 = vrot.lane.b32.xlu0 %v547, 48
    %v4885 = vpop.permute.xlu0 %4884
    %v4886 = vsel %vm742, %v4823, 0
    %v4888 = vsel %vm742, %v4825, 0
    %v4890 = vsel %vm742, %v4827, 0
    %v4892 = vsel %vm742, %v4829, 0
    %v4894 = vsel %vm742, %v4831, 0
    %v4896 = vsel %vm742, %v4833, 0
    %v4898 = vsel %vm742, %v4835, 0
    %v4900 = vsel %vm742, %v4837, 0
    %v4902 = vsel %vm742, %v4839, 0
    %v4904 = vsel %vm742, %v4841, 0
    %v4906 = vsel %vm742, %v4843, 0
    %v4908 = vsel %vm742, %v4845, 0
    %v4910 = vsel %vm742, %v4847, 0
    %v4912 = vsel %vm742, %v4849, 0
    %v4914 = vsel %vm742, %v4851, 0
    %v4916 = vsel %vm742, %v4853, 0
    %v4918 = vsel %vm742, %v4855, 0
    %v4920 = vsel %vm742, %v4857, 0
    %v4922 = vsel %vm742, %v4859, 0
    %v4924 = vsel %vm742, %v4861, 0
    %v4926 = vsel %vm742, %v4863, 0
    %v4928 = vsel %vm742, %v4865, 0
    %v4930 = vsel %vm742, %v4867, 0
    %v4932 = vsel %vm742, %v4869, 0
    %v4934 = vsel %vm742, %v4871, 0
    %v4936 = vsel %vm742, %v4873, 0
    %v4938 = vsel %vm742, %v4875, 0
    %v4940 = vsel %vm742, %v4877, 0
    %v4942 = vsel %vm742, %v4879, 0
    %v4944 = vsel %vm742, %v4881, 0
    %v4946 = vsel %vm742, %v4883, 0
    %v4948 = vsel %vm742, %v4885, 0
    %4950 = vmatprep.subr.mxu0 0.0
    %4951 = vmatpush1.xpose.msra.mxu0 %v4948
    %4952 = vmatprep.subr.mxu0 0.0
    %4953 = vmatpush1.xpose.msra.mxu0 %v4946
    %4954 = vmatprep.subr.mxu0 0.0
    %4955 = vmatpush1.xpose.msra.mxu0 %v4944
    %4956 = vmatprep.subr.mxu0 0.0
    %4957 = vmatpush1.xpose.msra.mxu0 %v4942
    %4958 = vmatprep.subr.mxu0 0.0
    %4959 = vmatpush1.xpose.msra.mxu0 %v4940
    %4960 = vmatprep.subr.mxu0 0.0
    %4961 = vmatpush1.xpose.msra.mxu0 %v4938
    %4962 = vmatprep.subr.mxu0 0.0
    %4963 = vmatpush1.xpose.msra.mxu0 %v4936
    %4964 = vmatprep.subr.mxu0 0.0
    %4965 = vmatpush1.xpose.msra.mxu0 %v4934
    %4966 = vmatprep.subr.mxu0 0.0
    %4967 = vmatpush1.xpose.msra.mxu0 %v4932
    %4968 = vmatprep.subr.mxu0 0.0
    %4969 = vmatpush1.xpose.msra.mxu0 %v4930
    %4970 = vmatprep.subr.mxu0 0.0
    %4971 = vmatpush1.xpose.msra.mxu0 %v4928
    %4972 = vmatprep.subr.mxu0 0.0
    %4973 = vmatpush1.xpose.msra.mxu0 %v4926
    %4974 = vmatprep.subr.mxu0 0.0
    %4975 = vmatpush1.xpose.msra.mxu0 %v4924
    %4976 = vmatprep.subr.mxu0 0.0
    %4977 = vmatpush1.xpose.msra.mxu0 %v4922
    %4978 = vmatprep.subr.mxu0 0.0
    %4979 = vmatpush1.xpose.msra.mxu0 %v4920
    %4980 = vmatprep.subr.mxu0 0.0
    %4981 = vmatpush1.xpose.msra.mxu0 %v4918
    %4982 = vmatprep.subr.mxu0 0.0
    %4983 = vmatpush2.xpose.msra.mxu0 0.0
    %4984 = vmatprep.subr.mxu0 0.0
    %4985 = vmatpush2.xpose.msra.mxu0 0.0
    %4986 = vmatprep.subr.mxu0 0.0
    %4987 = vmatpush2.xpose.msra.mxu0 0.0
    %4988 = vmatprep.subr.mxu0 0.0
    %4989 = vmatpush2.xpose.msra.mxu0 0.0
    %4990 = vmatprep.subr.mxu0 0.0
    %4991 = vmatpush2.xpose.msra.mxu0 0.0
    %4992 = vmatprep.subr.mxu0 0.0
    %4993 = vmatpush2.xpose.msra.mxu0 0.0
    %4994 = vmatprep.subr.mxu0 0.0
    %4995 = vmatpush2.xpose.msra.mxu0 0.0
    %4996 = vmatprep.subr.mxu0 0.0
    %4997 = vmatpush2.xpose.msra.mxu0 0.0
    %4998 = vmatprep.subr.mxu0 0.0
    %4999 = vmatpush2.xpose.msra.mxu0 0.0
    %5000 = vmatprep.subr.mxu0 0.0
    %5001 = vmatpush2.xpose.msra.mxu0 0.0
    %5002 = vmatprep.subr.mxu0 0.0
    %5003 = vmatpush2.xpose.msra.mxu0 0.0
    %5004 = vmatprep.subr.mxu0 0.0
    %5005 = vmatpush2.xpose.msra.mxu0 0.0
    %5006 = vmatprep.subr.mxu0 0.0
    %5007 = vmatpush2.xpose.msra.mxu0 0.0
    %5008 = vmatprep.subr.mxu0 0.0
    %5009 = vmatpush2.xpose.msra.mxu0 0.0
    %5010 = vmatprep.subr.mxu0 0.0
    %5011 = vmatpush2.xpose.msra.mxu0 0.0
    %5012 = vmatprep.subr.mxu0 0.0
    %5013 = vmatpush2.xpose.msra.mxu0 0.0
    %5014 = vmatprep.mubr.f32.mxu0 0.0
    %5015 = vmatmul.mubr.f32.gmra.mxu0 %v4886
    %v5016 = vpop.f32.mrf.mxu0
    %v5017 = vadd.f32 %v694, %v5016
    %v5018 = vpop.f32.mrf.mxu0
    %5019 = vmatprep.mubr.f32.mxu0 0.0
    %5020 = vmatmul.mubr.f32.gmra.mxu0 %v4888
    %v5021 = vpop.f32.mrf.mxu0
    %v5022 = vadd.f32 %v695, %v5021
    %v5023 = vpop.f32.mrf.mxu0
    %5024 = vmatprep.mubr.f32.mxu0 0.0
    %5025 = vmatmul.mubr.f32.gmra.mxu0 %v4890
    %v5026 = vpop.f32.mrf.mxu0
    %v5027 = vadd.f32 %v696, %v5026
    %v5028 = vpop.f32.mrf.mxu0
    %5029 = vmatprep.mubr.f32.mxu0 0.0
    %5030 = vmatmul.mubr.f32.gmra.mxu0 %v4892
    %v5031 = vpop.f32.mrf.mxu0
    %v5032 = vadd.f32 %v697, %v5031
    %v5033 = vpop.f32.mrf.mxu0
    %5034 = vmatprep.mubr.f32.mxu0 0.0
    %5035 = vmatmul.mubr.f32.gmra.mxu0 %v4894
    %v5036 = vpop.f32.mrf.mxu0
    %v5037 = vadd.f32 %v698, %v5036
    %v5038 = vpop.f32.mrf.mxu0
    %5039 = vmatprep.mubr.f32.mxu0 0.0
    %5040 = vmatmul.mubr.f32.gmra.mxu0 %v4896
    %v5041 = vpop.f32.mrf.mxu0
    %v5042 = vadd.f32 %v699, %v5041
    %v5043 = vpop.f32.mrf.mxu0
    %5044 = vmatprep.mubr.f32.mxu0 0.0
    %5045 = vmatmul.mubr.f32.gmra.mxu0 %v4898
    %v5046 = vpop.f32.mrf.mxu0
    %v5047 = vadd.f32 %v700, %v5046
    %v5048 = vpop.f32.mrf.mxu0
    %5049 = vmatprep.mubr.f32.mxu0 0.0
    %5050 = vmatmul.mubr.f32.gmra.mxu0 %v4900
    %v5051 = vpop.f32.mrf.mxu0
    %v5052 = vadd.f32 %v701, %v5051
    %v5053 = vpop.f32.mrf.mxu0
    %5054 = vmatprep.mubr.f32.mxu0 0.0
    %5055 = vmatmul.mubr.f32.gmra.mxu0 %v4902
    %v5056 = vpop.f32.mrf.mxu0
    %v5057 = vadd.f32 %v702, %v5056
    %v5058 = vpop.f32.mrf.mxu0
    %5059 = vmatprep.mubr.f32.mxu0 0.0
    %5060 = vmatmul.mubr.f32.gmra.mxu0 %v4904
    %v5061 = vpop.f32.mrf.mxu0
    %v5062 = vadd.f32 %v703, %v5061
    %v5063 = vpop.f32.mrf.mxu0
    %5064 = vmatprep.mubr.f32.mxu0 0.0
    %5065 = vmatmul.mubr.f32.gmra.mxu0 %v4906
    %v5066 = vpop.f32.mrf.mxu0
    %v5067 = vadd.f32 %v704, %v5066
    %v5068 = vpop.f32.mrf.mxu0
    %5069 = vmatprep.mubr.f32.mxu0 0.0
    %5070 = vmatmul.mubr.f32.gmra.mxu0 %v4908
    %v5071 = vpop.f32.mrf.mxu0
    %v5072 = vadd.f32 %v705, %v5071
    %v5073 = vpop.f32.mrf.mxu0
    %5074 = vmatprep.mubr.f32.mxu0 0.0
    %5075 = vmatmul.mubr.f32.gmra.mxu0 %v4910
    %v5076 = vpop.f32.mrf.mxu0
    %v5077 = vadd.f32 %v706, %v5076
    %v5078 = vpop.f32.mrf.mxu0
    %5079 = vmatprep.mubr.f32.mxu0 0.0
    %5080 = vmatmul.mubr.f32.gmra.mxu0 %v4912
    %v5081 = vpop.f32.mrf.mxu0
    %v5082 = vadd.f32 %v707, %v5081
    %v5083 = vpop.f32.mrf.mxu0
    %5084 = vmatprep.mubr.f32.mxu0 0.0
    %5085 = vmatmul.mubr.f32.gmra.mxu0 %v4914
    %v5086 = vpop.f32.mrf.mxu0
    %v5087 = vadd.f32 %v708, %v5086
    %v5088 = vpop.f32.mrf.mxu0
    %5089 = vmatprep.mubr.f32.mxu0 0.0
    %5090 = vmatmul.mubr.f32.gmra.mxu0 %v4916
    %v5091 = vpop.f32.mrf.mxu0
    %v5092 = vadd.f32 %v709, %v5091
    %v5093 = vpop.f32.mrf.mxu0
    %5094 = vdwg.mxu0
    %5095 = vmax.xlane.f32.xlu0 %v5017
    %v5096 = vpop.xlane.xlu0 %5095
    %5097 = vmax.xlane.f32.xlu0 %v5022
    %v5098 = vpop.xlane.xlu0 %5097
    %5099 = vmax.xlane.f32.xlu0 %v5027
    %v5100 = vpop.xlane.xlu0 %5099
    %5101 = vmax.xlane.f32.xlu0 %v5032
    %v5102 = vpop.xlane.xlu0 %5101
    %5103 = vmax.xlane.f32.xlu0 %v5037
    %v5104 = vpop.xlane.xlu0 %5103
    %5105 = vmax.xlane.f32.xlu0 %v5042
    %v5106 = vpop.xlane.xlu0 %5105
    %5107 = vmax.xlane.f32.xlu0 %v5047
    %v5108 = vpop.xlane.xlu0 %5107
    %5109 = vmax.xlane.f32.xlu0 %v5052
    %v5110 = vpop.xlane.xlu0 %5109
    %5111 = vmax.xlane.f32.xlu0 %v5057
    %v5112 = vpop.xlane.xlu0 %5111
    %5113 = vmax.xlane.f32.xlu0 %v5062
    %v5114 = vpop.xlane.xlu0 %5113
    %5115 = vmax.xlane.f32.xlu0 %v5067
    %v5116 = vpop.xlane.xlu0 %5115
    %5117 = vmax.xlane.f32.xlu0 %v5072
    %v5118 = vpop.xlane.xlu0 %5117
    %5119 = vmax.xlane.f32.xlu0 %v5077
    %v5120 = vpop.xlane.xlu0 %5119
    %5121 = vmax.xlane.f32.xlu0 %v5082
    %v5122 = vpop.xlane.xlu0 %5121
    %5123 = vmax.xlane.f32.xlu0 %v5087
    %v5124 = vpop.xlane.xlu0 %5123
    %5125 = vmax.xlane.f32.xlu0 %v5092
    %v5126 = vpop.xlane.xlu0 %5125
    %v5127 = vsub.f32 %v5017, %v5096
    %v5128 = vsub.f32 %v5022, %v5098
    %v5129 = vsub.f32 %v5027, %v5100
    %v5130 = vsub.f32 %v5032, %v5102
    %v5131 = vsub.f32 %v5037, %v5104
    %v5132 = vsub.f32 %v5042, %v5106
    %v5133 = vsub.f32 %v5047, %v5108
    %v5134 = vsub.f32 %v5052, %v5110
    %v5135 = vsub.f32 %v5057, %v5112
    %v5136 = vsub.f32 %v5062, %v5114
    %v5137 = vsub.f32 %v5067, %v5116
    %v5138 = vsub.f32 %v5072, %v5118
    %v5139 = vsub.f32 %v5077, %v5120
    %v5140 = vsub.f32 %v5082, %v5122
    %v5141 = vsub.f32 %v5087, %v5124
    %v5142 = vsub.f32 %v5092, %v5126
    %v5143 = vmul.f32 %v5127, 1.442695
    %v5144 = vpow.pop %v5143
    %v5145 = vmul.f32 %v5128, 1.442695
    %v5146 = vpow.pop %v5145
    %v5147 = vmul.f32 %v5129, 1.442695
    %v5148 = vpow.pop %v5147
    %v5149 = vmul.f32 %v5130, 1.442695
    %v5150 = vpow.pop %v5149
    %v5151 = vmul.f32 %v5131, 1.442695
    %v5152 = vpow.pop %v5151
    %v5153 = vmul.f32 %v5132, 1.442695
    %v5154 = vpow.pop %v5153
    %v5155 = vmul.f32 %v5133, 1.442695
    %v5156 = vpow.pop %v5155
    %v5157 = vmul.f32 %v5134, 1.442695
    %v5158 = vpow.pop %v5157
    %v5159 = vmul.f32 %v5135, 1.442695
    %v5160 = vpow.pop %v5159
    %v5161 = vmul.f32 %v5136, 1.442695
    %v5162 = vpow.pop %v5161
    %v5163 = vmul.f32 %v5137, 1.442695
    %v5164 = vpow.pop %v5163
    %v5165 = vmul.f32 %v5138, 1.442695
    %v5166 = vpow.pop %v5165
    %v5167 = vmul.f32 %v5139, 1.442695
    %v5168 = vpow.pop %v5167
    %v5169 = vmul.f32 %v5140, 1.442695
    %v5170 = vpow.pop %v5169
    %v5171 = vmul.f32 %v5141, 1.442695
    %v5172 = vpow.pop %v5171
    %v5173 = vmul.f32 %v5142, 1.442695
    %v5174 = vpow.pop %v5173
    %5175 = vadd.xlane.f32.xlu0 %v5144
    %v5176 = vpop.xlane.xlu0 %5175
    %5177 = vadd.xlane.f32.xlu0 %v5146
    %v5178 = vpop.xlane.xlu0 %5177
    %5179 = vadd.xlane.f32.xlu0 %v5148
    %v5180 = vpop.xlane.xlu0 %5179
    %5181 = vadd.xlane.f32.xlu0 %v5150
    %v5182 = vpop.xlane.xlu0 %5181
    %5183 = vadd.xlane.f32.xlu0 %v5152
    %v5184 = vpop.xlane.xlu0 %5183
    %5185 = vadd.xlane.f32.xlu0 %v5154
    %v5186 = vpop.xlane.xlu0 %5185
    %5187 = vadd.xlane.f32.xlu0 %v5156
    %v5188 = vpop.xlane.xlu0 %5187
    %5189 = vadd.xlane.f32.xlu0 %v5158
    %v5190 = vpop.xlane.xlu0 %5189
    %5191 = vadd.xlane.f32.xlu0 %v5160
    %v5192 = vpop.xlane.xlu0 %5191
    %5193 = vadd.xlane.f32.xlu0 %v5162
    %v5194 = vpop.xlane.xlu0 %5193
    %5195 = vadd.xlane.f32.xlu0 %v5164
    %v5196 = vpop.xlane.xlu0 %5195
    %5197 = vadd.xlane.f32.xlu0 %v5166
    %v5198 = vpop.xlane.xlu0 %5197
    %5199 = vadd.xlane.f32.xlu0 %v5168
    %v5200 = vpop.xlane.xlu0 %5199
    %5201 = vadd.xlane.f32.xlu0 %v5170
    %v5202 = vpop.xlane.xlu0 %5201
    %5203 = vadd.xlane.f32.xlu0 %v5172
    %v5204 = vpop.xlane.xlu0 %5203
    %5205 = vadd.xlane.f32.xlu0 %v5174
    %v5206 = vpop.xlane.xlu0 %5205
    %v5207 = vrcp.pop %v5176
    %v5208 = vmul.f32 1.0, %v5207
    %v5209 = vrcp.pop %v5178
    %v5210 = vmul.f32 1.0, %v5209
    %v5211 = vrcp.pop %v5180
    %v5212 = vmul.f32 1.0, %v5211
    %v5213 = vrcp.pop %v5182
    %v5214 = vmul.f32 1.0, %v5213
    %v5215 = vrcp.pop %v5184
    %v5216 = vmul.f32 1.0, %v5215
    %v5217 = vrcp.pop %v5186
    %v5218 = vmul.f32 1.0, %v5217
    %v5219 = vrcp.pop %v5188
    %v5220 = vmul.f32 1.0, %v5219
    %v5221 = vrcp.pop %v5190
    %v5222 = vmul.f32 1.0, %v5221
    %v5223 = vrcp.pop %v5192
    %v5224 = vmul.f32 1.0, %v5223
    %v5225 = vrcp.pop %v5194
    %v5226 = vmul.f32 1.0, %v5225
    %v5227 = vrcp.pop %v5196
    %v5228 = vmul.f32 1.0, %v5227
    %v5229 = vrcp.pop %v5198
    %v5230 = vmul.f32 1.0, %v5229
    %v5231 = vrcp.pop %v5200
    %v5232 = vmul.f32 1.0, %v5231
    %v5233 = vrcp.pop %v5202
    %v5234 = vmul.f32 1.0, %v5233
    %v5235 = vrcp.pop %v5204
    %v5236 = vmul.f32 1.0, %v5235
    %v5237 = vrcp.pop %v5206
    %v5238 = vmul.f32 1.0, %v5237
    %v5239 = vmul.f32 %v5144, %v5208
    %v5240 = vmul.f32 %v5146, %v5210
    %v5241 = vmul.f32 %v5148, %v5212
    %v5242 = vmul.f32 %v5150, %v5214
    %v5243 = vmul.f32 %v5152, %v5216
    %v5244 = vmul.f32 %v5154, %v5218
    %v5245 = vmul.f32 %v5156, %v5220
    %v5246 = vmul.f32 %v5158, %v5222
    %v5247 = vmul.f32 %v5160, %v5224
    %v5248 = vmul.f32 %v5162, %v5226
    %v5249 = vmul.f32 %v5164, %v5228
    %v5250 = vmul.f32 %v5166, %v5230
    %v5251 = vmul.f32 %v5168, %v5232
    %v5252 = vmul.f32 %v5170, %v5234
    %v5253 = vmul.f32 %v5172, %v5236
    %v5254 = vmul.f32 %v5174, %v5238
    %5255 = vrot.lane.b32.xlu0 %v616, 48
    %v5256 = vpop.permute.xlu0 %5255
    %5257 = vrot.lane.b32.xlu0 %v621, 48
    %v5258 = vpop.permute.xlu0 %5257
    %5259 = vrot.lane.b32.xlu0 %v626, 48
    %v5260 = vpop.permute.xlu0 %5259
    %5261 = vrot.lane.b32.xlu0 %v631, 48
    %v5262 = vpop.permute.xlu0 %5261
    %5263 = vrot.lane.b32.xlu0 %v636, 48
    %v5264 = vpop.permute.xlu0 %5263
    %5265 = vrot.lane.b32.xlu0 %v641, 48
    %v5266 = vpop.permute.xlu0 %5265
    %5267 = vrot.lane.b32.xlu0 %v646, 48
    %v5268 = vpop.permute.xlu0 %5267
    %5269 = vrot.lane.b32.xlu0 %v651, 48
    %v5270 = vpop.permute.xlu0 %5269
    %5271 = vrot.lane.b32.xlu0 %v656, 48
    %v5272 = vpop.permute.xlu0 %5271
    %5273 = vrot.lane.b32.xlu0 %v661, 48
    %v5274 = vpop.permute.xlu0 %5273
    %5275 = vrot.lane.b32.xlu0 %v666, 48
    %v5276 = vpop.permute.xlu0 %5275
    %5277 = vrot.lane.b32.xlu0 %v671, 48
    %v5278 = vpop.permute.xlu0 %5277
    %5279 = vrot.lane.b32.xlu0 %v676, 48
    %v5280 = vpop.permute.xlu0 %5279
    %5281 = vrot.lane.b32.xlu0 %v681, 48
    %v5282 = vpop.permute.xlu0 %5281
    %5283 = vrot.lane.b32.xlu0 %v686, 48
    %v5284 = vpop.permute.xlu0 %5283
    %5285 = vrot.lane.b32.xlu0 %v691, 48
    %v5286 = vpop.permute.xlu0 %5285
    %5303 = vmatprep.subr.mxu0 0.0
    %5304 = vmatpush1.msra.mxu0 %v5286
    %5305 = vmatprep.subr.mxu0 0.0
    %5306 = vmatpush1.msra.mxu0 %v5284
    %5307 = vmatprep.subr.mxu0 0.0
    %5308 = vmatpush1.msra.mxu0 %v5282
    %5309 = vmatprep.subr.mxu0 0.0
    %5310 = vmatpush1.msra.mxu0 %v5280
    %5311 = vmatprep.subr.mxu0 0.0
    %5312 = vmatpush1.msra.mxu0 %v5278
    %5313 = vmatprep.subr.mxu0 0.0
    %5314 = vmatpush1.msra.mxu0 %v5276
    %5315 = vmatprep.subr.mxu0 0.0
    %5316 = vmatpush1.msra.mxu0 %v5274
    %5317 = vmatprep.subr.mxu0 0.0
    %5318 = vmatpush1.msra.mxu0 %v5272
    %5319 = vmatprep.subr.mxu0 0.0
    %5320 = vmatpush1.msra.mxu0 %v5270
    %5321 = vmatprep.subr.mxu0 0.0
    %5322 = vmatpush1.msra.mxu0 %v5268
    %5323 = vmatprep.subr.mxu0 0.0
    %5324 = vmatpush1.msra.mxu0 %v5266
    %5325 = vmatprep.subr.mxu0 0.0
    %5326 = vmatpush1.msra.mxu0 %v5264
    %5327 = vmatprep.subr.mxu0 0.0
    %5328 = vmatpush1.msra.mxu0 %v5262
    %5329 = vmatprep.subr.mxu0 0.0
    %5330 = vmatpush1.msra.mxu0 %v5260
    %5331 = vmatprep.subr.mxu0 0.0
    %5332 = vmatpush1.msra.mxu0 %v5258
    %5333 = vmatprep.subr.mxu0 0.0
    %5334 = vmatpush1.msra.mxu0 %v5256
    %5335 = vmatprep.subr.mxu0 0.0
    %5336 = vmatpush2.msra.mxu0 0.0
    %5337 = vmatprep.subr.mxu0 0.0
    %5338 = vmatpush2.msra.mxu0 0.0
    %5339 = vmatprep.subr.mxu0 0.0
    %5340 = vmatpush2.msra.mxu0 0.0
    %5341 = vmatprep.subr.mxu0 0.0
    %5342 = vmatpush2.msra.mxu0 0.0
    %5343 = vmatprep.subr.mxu0 0.0
    %5344 = vmatpush2.msra.mxu0 0.0
    %5345 = vmatprep.subr.mxu0 0.0
    %5346 = vmatpush2.msra.mxu0 0.0
    %5347 = vmatprep.subr.mxu0 0.0
    %5348 = vmatpush2.msra.mxu0 0.0
    %5349 = vmatprep.subr.mxu0 0.0
    %5350 = vmatpush2.msra.mxu0 0.0
    %5351 = vmatprep.subr.mxu0 0.0
    %5352 = vmatpush2.msra.mxu0 0.0
    %5353 = vmatprep.subr.mxu0 0.0
    %5354 = vmatpush2.msra.mxu0 0.0
    %5355 = vmatprep.subr.mxu0 0.0
    %5356 = vmatpush2.msra.mxu0 0.0
    %5357 = vmatprep.subr.mxu0 0.0
    %5358 = vmatpush2.msra.mxu0 0.0
    %5359 = vmatprep.subr.mxu0 0.0
    %5360 = vmatpush2.msra.mxu0 0.0
    %5361 = vmatprep.subr.mxu0 0.0
    %5362 = vmatpush2.msra.mxu0 0.0
    %5363 = vmatprep.subr.mxu0 0.0
    %5364 = vmatpush2.msra.mxu0 0.0
    %5365 = vmatprep.subr.mxu0 0.0
    %5366 = vmatpush2.msra.mxu0 0.0
    %5367 = vmatprep.mubr.f32.mxu0 0.0
    %5368 = vmatmul.mubr.f32.gmra.mxu0 %v5239
    %v5369 = vpop.f32.mrf.mxu0
    %v5370 = vadd.f32 0.0, %v5369
    %v5371 = vpop.f32.mrf.mxu0
    %5372 = vmatprep.mubr.f32.mxu0 0.0
    %5373 = vmatmul.mubr.f32.gmra.mxu0 %v5240
    %v5374 = vpop.f32.mrf.mxu0
    %v5375 = vadd.f32 0.0, %v5374
    %v5376 = vpop.f32.mrf.mxu0
    %5377 = vmatprep.mubr.f32.mxu0 0.0
    %5378 = vmatmul.mubr.f32.gmra.mxu0 %v5241
    %v5379 = vpop.f32.mrf.mxu0
    %v5380 = vadd.f32 0.0, %v5379
    %v5381 = vpop.f32.mrf.mxu0
    %5382 = vmatprep.mubr.f32.mxu0 0.0
    %5383 = vmatmul.mubr.f32.gmra.mxu0 %v5242
    %v5384 = vpop.f32.mrf.mxu0
    %v5385 = vadd.f32 0.0, %v5384
    %v5386 = vpop.f32.mrf.mxu0
    %5387 = vmatprep.mubr.f32.mxu0 0.0
    %5388 = vmatmul.mubr.f32.gmra.mxu0 %v5243
    %v5389 = vpop.f32.mrf.mxu0
    %v5390 = vadd.f32 0.0, %v5389
    %v5391 = vpop.f32.mrf.mxu0
    %5392 = vmatprep.mubr.f32.mxu0 0.0
    %5393 = vmatmul.mubr.f32.gmra.mxu0 %v5244
    %v5394 = vpop.f32.mrf.mxu0
    %v5395 = vadd.f32 0.0, %v5394
    %v5396 = vpop.f32.mrf.mxu0
    %5397 = vmatprep.mubr.f32.mxu0 0.0
    %5398 = vmatmul.mubr.f32.gmra.mxu0 %v5245
    %v5399 = vpop.f32.mrf.mxu0
    %v5400 = vadd.f32 0.0, %v5399
    %v5401 = vpop.f32.mrf.mxu0
    %5402 = vmatprep.mubr.f32.mxu0 0.0
    %5403 = vmatmul.mubr.f32.gmra.mxu0 %v5246
    %v5404 = vpop.f32.mrf.mxu0
    %v5405 = vadd.f32 0.0, %v5404
    %v5406 = vpop.f32.mrf.mxu0
    %5407 = vmatprep.mubr.f32.mxu0 0.0
    %5408 = vmatmul.mubr.f32.gmra.mxu0 %v5247
    %v5409 = vpop.f32.mrf.mxu0
    %v5410 = vadd.f32 0.0, %v5409
    %v5411 = vpop.f32.mrf.mxu0
    %5412 = vmatprep.mubr.f32.mxu0 0.0
    %5413 = vmatmul.mubr.f32.gmra.mxu0 %v5248
    %v5414 = vpop.f32.mrf.mxu0
    %v5415 = vadd.f32 0.0, %v5414
    %v5416 = vpop.f32.mrf.mxu0
    %5417 = vmatprep.mubr.f32.mxu0 0.0
    %5418 = vmatmul.mubr.f32.gmra.mxu0 %v5249
    %v5419 = vpop.f32.mrf.mxu0
    %v5420 = vadd.f32 0.0, %v5419
    %v5421 = vpop.f32.mrf.mxu0
    %5422 = vmatprep.mubr.f32.mxu0 0.0
    %5423 = vmatmul.mubr.f32.gmra.mxu0 %v5250
    %v5424 = vpop.f32.mrf.mxu0
    %v5425 = vadd.f32 0.0, %v5424
    %v5426 = vpop.f32.mrf.mxu0
    %5427 = vmatprep.mubr.f32.mxu0 0.0
    %5428 = vmatmul.mubr.f32.gmra.mxu0 %v5251
    %v5429 = vpop.f32.mrf.mxu0
    %v5430 = vadd.f32 0.0, %v5429
    %v5431 = vpop.f32.mrf.mxu0
    %5432 = vmatprep.mubr.f32.mxu0 0.0
    %5433 = vmatmul.mubr.f32.gmra.mxu0 %v5252
    %v5434 = vpop.f32.mrf.mxu0
    %v5435 = vadd.f32 0.0, %v5434
    %v5436 = vpop.f32.mrf.mxu0
    %5437 = vmatprep.mubr.f32.mxu0 0.0
    %5438 = vmatmul.mubr.f32.gmra.mxu0 %v5253
    %v5439 = vpop.f32.mrf.mxu0
    %v5440 = vadd.f32 0.0, %v5439
    %v5441 = vpop.f32.mrf.mxu0
    %5442 = vmatprep.mubr.f32.mxu0 0.0
    %5443 = vmatmul.mubr.f32.gmra.mxu0 %v5254
    %v5444 = vpop.f32.mrf.mxu0
    %v5445 = vadd.f32 0.0, %v5444
    %v5446 = vpop.f32.mrf.mxu0
    %5447 = vdwg.mxu0
    %v5449 = vsel %vm742, %v5370, 0
    %v5452 = vsel %vm742, %v5375, 0
    %v5455 = vsel %vm742, %v5380, 0
    %v5458 = vsel %vm742, %v5385, 0
    %v5461 = vsel %vm742, %v5390, 0
    %v5464 = vsel %vm742, %v5395, 0
    %v5467 = vsel %vm742, %v5400, 0
    %v5470 = vsel %vm742, %v5405, 0
    %v5473 = vsel %vm742, %v5410, 0
    %v5476 = vsel %vm742, %v5415, 0
    %v5479 = vsel %vm742, %v5420, 0
    %v5482 = vsel %vm742, %v5425, 0
    %v5485 = vsel %vm742, %v5430, 0
    %v5488 = vsel %vm742, %v5435, 0
    %v5491 = vsel %vm742, %v5440, 0
    %v5494 = vsel %vm742, %v5445, 0
    %5496 = vmatprep.subr.mxu0 0.0
    %5497 = vmatpush1.msra.mxu0 0.0
    %5498 = vmatprep.subr.mxu0 0.0
    %5499 = vmatpush1.msra.mxu0 0.0
    %5500 = vmatprep.subr.mxu0 0.0
    %5501 = vmatpush1.msra.mxu0 0.0
    %5502 = vmatprep.subr.mxu0 0.0
    %5503 = vmatpush1.msra.mxu0 0.0
    %5504 = vmatprep.subr.mxu0 0.0
    %5505 = vmatpush1.msra.mxu0 0.0
    %5506 = vmatprep.subr.mxu0 0.0
    %5507 = vmatpush1.msra.mxu0 0.0
    %5508 = vmatprep.subr.mxu0 0.0
    %5509 = vmatpush1.msra.mxu0 0.0
    %5510 = vmatprep.subr.mxu0 0.0
    %5511 = vmatpush1.msra.mxu0 0.0
    %5512 = vmatprep.subr.mxu0 0.0
    %5513 = vmatpush1.msra.mxu0 0.0
    %5514 = vmatprep.subr.mxu0 0.0
    %5515 = vmatpush1.msra.mxu0 0.0
    %5516 = vmatprep.subr.mxu0 0.0
    %5517 = vmatpush1.msra.mxu0 0.0
    %5518 = vmatprep.subr.mxu0 0.0
    %5519 = vmatpush1.msra.mxu0 0.0
    %5520 = vmatprep.subr.mxu0 0.0
    %5521 = vmatpush1.msra.mxu0 0.0
    %5522 = vmatprep.subr.mxu0 0.0
    %5523 = vmatpush1.msra.mxu0 0.0
    %5524 = vmatprep.subr.mxu0 0.0
    %5525 = vmatpush1.msra.mxu0 %v721
    %5526 = vmatprep.subr.mxu0 0.0
    %5527 = vmatpush1.msra.mxu0 %v720
    %5528 = vmatprep.subr.mxu0 0.0
    %5529 = vmatpush2.msra.mxu0 0.0
    %5530 = vmatprep.subr.mxu0 0.0
    %5531 = vmatpush2.msra.mxu0 0.0
    %5532 = vmatprep.subr.mxu0 0.0
    %5533 = vmatpush2.msra.mxu0 0.0
    %5534 = vmatprep.subr.mxu0 0.0
    %5535 = vmatpush2.msra.mxu0 0.0
    %5536 = vmatprep.subr.mxu0 0.0
    %5537 = vmatpush2.msra.mxu0 0.0
    %5538 = vmatprep.subr.mxu0 0.0
    %5539 = vmatpush2.msra.mxu0 0.0
    %5540 = vmatprep.subr.mxu0 0.0
    %5541 = vmatpush2.msra.mxu0 0.0
    %5542 = vmatprep.subr.mxu0 0.0
    %5543 = vmatpush2.msra.mxu0 0.0
    %5544 = vmatprep.subr.mxu0 0.0
    %5545 = vmatpush2.msra.mxu0 0.0
    %5546 = vmatprep.subr.mxu0 0.0
    %5547 = vmatpush2.msra.mxu0 0.0
    %5548 = vmatprep.subr.mxu0 0.0
    %5549 = vmatpush2.msra.mxu0 0.0
    %5550 = vmatprep.subr.mxu0 0.0
    %5551 = vmatpush2.msra.mxu0 0.0
    %5552 = vmatprep.subr.mxu0 0.0
    %5553 = vmatpush2.msra.mxu0 0.0
    %5554 = vmatprep.subr.mxu0 0.0
    %5555 = vmatpush2.msra.mxu0 0.0
    %5556 = vmatprep.subr.mxu0 0.0
    %5557 = vmatpush2.msra.mxu0 0.0
    %5558 = vmatprep.subr.mxu0 0.0
    %5559 = vmatpush2.msra.mxu0 0.0
    %5560 = vmatprep.mubr.f32.mxu0 0.0
    %5561 = vmatmul.mubr.f32.gmra.mxu0 %v5449
    %v5562 = vpop.f32.mrf.mxu0
    %v5563 = vadd.f32 0.0, %v5562
    %v5564 = vpop.f32.mrf.mxu0
    %5565 = vmatprep.mubr.f32.mxu0 0.0
    %5566 = vmatmul.mubr.f32.gmra.mxu0 %v5452
    %v5567 = vpop.f32.mrf.mxu0
    %v5568 = vadd.f32 0.0, %v5567
    %v5569 = vpop.f32.mrf.mxu0
    %5570 = vmatprep.mubr.f32.mxu0 0.0
    %5571 = vmatmul.mubr.f32.gmra.mxu0 %v5455
    %v5572 = vpop.f32.mrf.mxu0
    %v5573 = vadd.f32 0.0, %v5572
    %v5574 = vpop.f32.mrf.mxu0
    %5575 = vmatprep.mubr.f32.mxu0 0.0
    %5576 = vmatmul.mubr.f32.gmra.mxu0 %v5458
    %v5577 = vpop.f32.mrf.mxu0
    %v5578 = vadd.f32 0.0, %v5577
    %v5579 = vpop.f32.mrf.mxu0
    %5580 = vmatprep.mubr.f32.mxu0 0.0
    %5581 = vmatmul.mubr.f32.gmra.mxu0 %v5461
    %v5582 = vpop.f32.mrf.mxu0
    %v5583 = vadd.f32 0.0, %v5582
    %v5584 = vpop.f32.mrf.mxu0
    %5585 = vmatprep.mubr.f32.mxu0 0.0
    %5586 = vmatmul.mubr.f32.gmra.mxu0 %v5464
    %v5587 = vpop.f32.mrf.mxu0
    %v5588 = vadd.f32 0.0, %v5587
    %v5589 = vpop.f32.mrf.mxu0
    %5590 = vmatprep.mubr.f32.mxu0 0.0
    %5591 = vmatmul.mubr.f32.gmra.mxu0 %v5467
    %v5592 = vpop.f32.mrf.mxu0
    %v5593 = vadd.f32 0.0, %v5592
    %v5594 = vpop.f32.mrf.mxu0
    %5595 = vmatprep.mubr.f32.mxu0 0.0
    %5596 = vmatmul.mubr.f32.gmra.mxu0 %v5470
    %v5597 = vpop.f32.mrf.mxu0
    %v5598 = vadd.f32 0.0, %v5597
    %v5599 = vpop.f32.mrf.mxu0
    %5600 = vmatprep.mubr.f32.mxu0 0.0
    %5601 = vmatmul.mubr.f32.gmra.mxu0 %v5473
    %v5602 = vpop.f32.mrf.mxu0
    %v5603 = vadd.f32 0.0, %v5602
    %v5604 = vpop.f32.mrf.mxu0
    %5605 = vmatprep.mubr.f32.mxu0 0.0
    %5606 = vmatmul.mubr.f32.gmra.mxu0 %v5476
    %v5607 = vpop.f32.mrf.mxu0
    %v5608 = vadd.f32 0.0, %v5607
    %v5609 = vpop.f32.mrf.mxu0
    %5610 = vmatprep.mubr.f32.mxu0 0.0
    %5611 = vmatmul.mubr.f32.gmra.mxu0 %v5479
    %v5612 = vpop.f32.mrf.mxu0
    %v5613 = vadd.f32 0.0, %v5612
    %v5614 = vpop.f32.mrf.mxu0
    %5615 = vmatprep.mubr.f32.mxu0 0.0
    %5616 = vmatmul.mubr.f32.gmra.mxu0 %v5482
    %v5617 = vpop.f32.mrf.mxu0
    %v5618 = vadd.f32 0.0, %v5617
    %v5619 = vpop.f32.mrf.mxu0
    %5620 = vmatprep.mubr.f32.mxu0 0.0
    %5621 = vmatmul.mubr.f32.gmra.mxu0 %v5485
    %v5622 = vpop.f32.mrf.mxu0
    %v5623 = vadd.f32 0.0, %v5622
    %v5624 = vpop.f32.mrf.mxu0
    %5625 = vmatprep.mubr.f32.mxu0 0.0
    %5626 = vmatmul.mubr.f32.gmra.mxu0 %v5488
    %v5627 = vpop.f32.mrf.mxu0
    %v5628 = vadd.f32 0.0, %v5627
    %v5629 = vpop.f32.mrf.mxu0
    %5630 = vmatprep.mubr.f32.mxu0 0.0
    %5631 = vmatmul.mubr.f32.gmra.mxu0 %v5491
    %v5632 = vpop.f32.mrf.mxu0
    %v5633 = vadd.f32 0.0, %v5632
    %v5634 = vpop.f32.mrf.mxu0
    %5635 = vmatprep.mubr.f32.mxu0 0.0
    %5636 = vmatmul.mubr.f32.gmra.mxu0 %v5494
    %v5637 = vpop.f32.mrf.mxu0
    %v5638 = vadd.f32 0.0, %v5637
    %v5639 = vpop.f32.mrf.mxu0
    %5640 = vdwg.mxu0
    %v5641 = vadd.f32 %v4806, %v5563
    %v5642 = vadd.f32 %v4807, %v5568
    %v5643 = vadd.f32 %v4808, %v5573
    %v5644 = vadd.f32 %v4809, %v5578
    %v5645 = vadd.f32 %v4810, %v5583
    %v5646 = vadd.f32 %v4811, %v5588
    %v5647 = vadd.f32 %v4812, %v5593
    %v5648 = vadd.f32 %v4813, %v5598
    %v5649 = vadd.f32 %v4814, %v5603
    %v5650 = vadd.f32 %v4815, %v5608
    %v5651 = vadd.f32 %v4816, %v5613
    %v5652 = vadd.f32 %v4817, %v5618
    %v5653 = vadd.f32 %v4818, %v5623
    %v5654 = vadd.f32 %v4819, %v5628
    %v5655 = vadd.f32 %v4820, %v5633
    %v5656 = vadd.f32 %v4821, %v5638
    %5657 = vrot.lane.b32.xlu0 %v726, 32
    %v5658 = vpop.permute.xlu0 %5657
    %5659 = vrot.lane.b32.xlu0 %v727, 32
    %v5660 = vpop.permute.xlu0 %5659
    %5661 = vrot.lane.b32.xlu0 %v728, 32
    %v5662 = vpop.permute.xlu0 %5661
    %5663 = vrot.lane.b32.xlu0 %v729, 32
    %v5664 = vpop.permute.xlu0 %5663
    %5665 = vrot.lane.b32.xlu0 %v730, 32
    %v5666 = vpop.permute.xlu0 %5665
    %5667 = vrot.lane.b32.xlu0 %v731, 32
    %v5668 = vpop.permute.xlu0 %5667
    %5669 = vrot.lane.b32.xlu0 %v732, 32
    %v5670 = vpop.permute.xlu0 %5669
    %5671 = vrot.lane.b32.xlu0 %v733, 32
    %v5672 = vpop.permute.xlu0 %5671
    %5673 = vrot.lane.b32.xlu0 %v734, 32
    %v5674 = vpop.permute.xlu0 %5673
    %5675 = vrot.lane.b32.xlu0 %v735, 32
    %v5676 = vpop.permute.xlu0 %5675
    %5677 = vrot.lane.b32.xlu0 %v736, 32
    %v5678 = vpop.permute.xlu0 %5677
    %5679 = vrot.lane.b32.xlu0 %v737, 32
    %v5680 = vpop.permute.xlu0 %5679
    %5681 = vrot.lane.b32.xlu0 %v738, 32
    %v5682 = vpop.permute.xlu0 %5681
    %5683 = vrot.lane.b32.xlu0 %v739, 32
    %v5684 = vpop.permute.xlu0 %5683
    %5685 = vrot.lane.b32.xlu0 %v740, 32
    %v5686 = vpop.permute.xlu0 %5685
    %5687 = vrot.lane.b32.xlu0 %v741, 32
    %v5688 = vpop.permute.xlu0 %5687
    %5689 = vrot.lane.b32.xlu0 %v457, 32
    %v5690 = vpop.permute.xlu0 %5689
    %5691 = vrot.lane.b32.xlu0 %v463, 32
    %v5692 = vpop.permute.xlu0 %5691
    %5693 = vrot.lane.b32.xlu0 %v469, 32
    %v5694 = vpop.permute.xlu0 %5693
    %5695 = vrot.lane.b32.xlu0 %v475, 32
    %v5696 = vpop.permute.xlu0 %5695
    %5697 = vrot.lane.b32.xlu0 %v481, 32
    %v5698 = vpop.permute.xlu0 %5697
    %5699 = vrot.lane.b32.xlu0 %v487, 32
    %v5700 = vpop.permute.xlu0 %5699
    %5701 = vrot.lane.b32.xlu0 %v493, 32
    %v5702 = vpop.permute.xlu0 %5701
    %5703 = vrot.lane.b32.xlu0 %v499, 32
    %v5704 = vpop.permute.xlu0 %5703
    %5705 = vrot.lane.b32.xlu0 %v505, 32
    %v5706 = vpop.permute.xlu0 %5705
    %5707 = vrot.lane.b32.xlu0 %v511, 32
    %v5708 = vpop.permute.xlu0 %5707
    %5709 = vrot.lane.b32.xlu0 %v517, 32
    %v5710 = vpop.permute.xlu0 %5709
    %5711 = vrot.lane.b32.xlu0 %v523, 32
    %v5712 = vpop.permute.xlu0 %5711
    %5713 = vrot.lane.b32.xlu0 %v529, 32
    %v5714 = vpop.permute.xlu0 %5713
    %5715 = vrot.lane.b32.xlu0 %v535, 32
    %v5716 = vpop.permute.xlu0 %5715
    %5717 = vrot.lane.b32.xlu0 %v541, 32
    %v5718 = vpop.permute.xlu0 %5717
    %5719 = vrot.lane.b32.xlu0 %v547, 32
    %v5720 = vpop.permute.xlu0 %5719
    %v5721 = vsel %vm742, %v5658, 0
    %v5723 = vsel %vm742, %v5660, 0
    %v5725 = vsel %vm742, %v5662, 0
    %v5727 = vsel %vm742, %v5664, 0
    %v5729 = vsel %vm742, %v5666, 0
    %v5731 = vsel %vm742, %v5668, 0
    %v5733 = vsel %vm742, %v5670, 0
    %v5735 = vsel %vm742, %v5672, 0
    %v5737 = vsel %vm742, %v5674, 0
    %v5739 = vsel %vm742, %v5676, 0
    %v5741 = vsel %vm742, %v5678, 0
    %v5743 = vsel %vm742, %v5680, 0
    %v5745 = vsel %vm742, %v5682, 0
    %v5747 = vsel %vm742, %v5684, 0
    %v5749 = vsel %vm742, %v5686, 0
    %v5751 = vsel %vm742, %v5688, 0
    %v5753 = vsel %vm742, %v5690, 0
    %v5755 = vsel %vm742, %v5692, 0
    %v5757 = vsel %vm742, %v5694, 0
    %v5759 = vsel %vm742, %v5696, 0
    %v5761 = vsel %vm742, %v5698, 0
    %v5763 = vsel %vm742, %v5700, 0
    %v5765 = vsel %vm742, %v5702, 0
    %v5767 = vsel %vm742, %v5704, 0
    %v5769 = vsel %vm742, %v5706, 0
    %v5771 = vsel %vm742, %v5708, 0
    %v5773 = vsel %vm742, %v5710, 0
    %v5775 = vsel %vm742, %v5712, 0
    %v5777 = vsel %vm742, %v5714, 0
    %v5779 = vsel %vm742, %v5716, 0
    %v5781 = vsel %vm742, %v5718, 0
    %v5783 = vsel %vm742, %v5720, 0
    %5785 = vmatprep.subr.mxu0 0.0
    %5786 = vmatpush1.xpose.msra.mxu0 %v5783
    %5787 = vmatprep.subr.mxu0 0.0
    %5788 = vmatpush1.xpose.msra.mxu0 %v5781
    %5789 = vmatprep.subr.mxu0 0.0
    %5790 = vmatpush1.xpose.msra.mxu0 %v5779
    %5791 = vmatprep.subr.mxu0 0.0
    %5792 = vmatpush1.xpose.msra.mxu0 %v5777
    %5793 = vmatprep.subr.mxu0 0.0
    %5794 = vmatpush1.xpose.msra.mxu0 %v5775
    %5795 = vmatprep.subr.mxu0 0.0
    %5796 = vmatpush1.xpose.msra.mxu0 %v5773
    %5797 = vmatprep.subr.mxu0 0.0
    %5798 = vmatpush1.xpose.msra.mxu0 %v5771
    %5799 = vmatprep.subr.mxu0 0.0
    %5800 = vmatpush1.xpose.msra.mxu0 %v5769
    %5801 = vmatprep.subr.mxu0 0.0
    %5802 = vmatpush1.xpose.msra.mxu0 %v5767
    %5803 = vmatprep.subr.mxu0 0.0
    %5804 = vmatpush1.xpose.msra.mxu0 %v5765
    %5805 = vmatprep.subr.mxu0 0.0
    %5806 = vmatpush1.xpose.msra.mxu0 %v5763
    %5807 = vmatprep.subr.mxu0 0.0
    %5808 = vmatpush1.xpose.msra.mxu0 %v5761
    %5809 = vmatprep.subr.mxu0 0.0
    %5810 = vmatpush1.xpose.msra.mxu0 %v5759
    %5811 = vmatprep.subr.mxu0 0.0
    %5812 = vmatpush1.xpose.msra.mxu0 %v5757
    %5813 = vmatprep.subr.mxu0 0.0
    %5814 = vmatpush1.xpose.msra.mxu0 %v5755
    %5815 = vmatprep.subr.mxu0 0.0
    %5816 = vmatpush1.xpose.msra.mxu0 %v5753
    %5817 = vmatprep.subr.mxu0 0.0
    %5818 = vmatpush2.xpose.msra.mxu0 0.0
    %5819 = vmatprep.subr.mxu0 0.0
    %5820 = vmatpush2.xpose.msra.mxu0 0.0
    %5821 = vmatprep.subr.mxu0 0.0
    %5822 = vmatpush2.xpose.msra.mxu0 0.0
    %5823 = vmatprep.subr.mxu0 0.0
    %5824 = vmatpush2.xpose.msra.mxu0 0.0
    %5825 = vmatprep.subr.mxu0 0.0
    %5826 = vmatpush2.xpose.msra.mxu0 0.0
    %5827 = vmatprep.subr.mxu0 0.0
    %5828 = vmatpush2.xpose.msra.mxu0 0.0
    %5829 = vmatprep.subr.mxu0 0.0
    %5830 = vmatpush2.xpose.msra.mxu0 0.0
    %5831 = vmatprep.subr.mxu0 0.0
    %5832 = vmatpush2.xpose.msra.mxu0 0.0
    %5833 = vmatprep.subr.mxu0 0.0
    %5834 = vmatpush2.xpose.msra.mxu0 0.0
    %5835 = vmatprep.subr.mxu0 0.0
    %5836 = vmatpush2.xpose.msra.mxu0 0.0
    %5837 = vmatprep.subr.mxu0 0.0
    %5838 = vmatpush2.xpose.msra.mxu0 0.0
    %5839 = vmatprep.subr.mxu0 0.0
    %5840 = vmatpush2.xpose.msra.mxu0 0.0
    %5841 = vmatprep.subr.mxu0 0.0
    %5842 = vmatpush2.xpose.msra.mxu0 0.0
    %5843 = vmatprep.subr.mxu0 0.0
    %5844 = vmatpush2.xpose.msra.mxu0 0.0
    %5845 = vmatprep.subr.mxu0 0.0
    %5846 = vmatpush2.xpose.msra.mxu0 0.0
    %5847 = vmatprep.subr.mxu0 0.0
    %5848 = vmatpush2.xpose.msra.mxu0 0.0
    %5849 = vmatprep.mubr.f32.mxu0 0.0
    %5850 = vmatmul.mubr.f32.gmra.mxu0 %v5721
    %v5851 = vpop.f32.mrf.mxu0
    %v5852 = vadd.f32 %v694, %v5851
    %v5853 = vpop.f32.mrf.mxu0
    %5854 = vmatprep.mubr.f32.mxu0 0.0
    %5855 = vmatmul.mubr.f32.gmra.mxu0 %v5723
    %v5856 = vpop.f32.mrf.mxu0
    %v5857 = vadd.f32 %v695, %v5856
    %v5858 = vpop.f32.mrf.mxu0
    %5859 = vmatprep.mubr.f32.mxu0 0.0
    %5860 = vmatmul.mubr.f32.gmra.mxu0 %v5725
    %v5861 = vpop.f32.mrf.mxu0
    %v5862 = vadd.f32 %v696, %v5861
    %v5863 = vpop.f32.mrf.mxu0
    %5864 = vmatprep.mubr.f32.mxu0 0.0
    %5865 = vmatmul.mubr.f32.gmra.mxu0 %v5727
    %v5866 = vpop.f32.mrf.mxu0
    %v5867 = vadd.f32 %v697, %v5866
    %v5868 = vpop.f32.mrf.mxu0
    %5869 = vmatprep.mubr.f32.mxu0 0.0
    %5870 = vmatmul.mubr.f32.gmra.mxu0 %v5729
    %v5871 = vpop.f32.mrf.mxu0
    %v5872 = vadd.f32 %v698, %v5871
    %v5873 = vpop.f32.mrf.mxu0
    %5874 = vmatprep.mubr.f32.mxu0 0.0
    %5875 = vmatmul.mubr.f32.gmra.mxu0 %v5731
    %v5876 = vpop.f32.mrf.mxu0
    %v5877 = vadd.f32 %v699, %v5876
    %v5878 = vpop.f32.mrf.mxu0
    %5879 = vmatprep.mubr.f32.mxu0 0.0
    %5880 = vmatmul.mubr.f32.gmra.mxu0 %v5733
    %v5881 = vpop.f32.mrf.mxu0
    %v5882 = vadd.f32 %v700, %v5881
    %v5883 = vpop.f32.mrf.mxu0
    %5884 = vmatprep.mubr.f32.mxu0 0.0
    %5885 = vmatmul.mubr.f32.gmra.mxu0 %v5735
    %v5886 = vpop.f32.mrf.mxu0
    %v5887 = vadd.f32 %v701, %v5886
    %v5888 = vpop.f32.mrf.mxu0
    %5889 = vmatprep.mubr.f32.mxu0 0.0
    %5890 = vmatmul.mubr.f32.gmra.mxu0 %v5737
    %v5891 = vpop.f32.mrf.mxu0
    %v5892 = vadd.f32 %v702, %v5891
    %v5893 = vpop.f32.mrf.mxu0
    %5894 = vmatprep.mubr.f32.mxu0 0.0
    %5895 = vmatmul.mubr.f32.gmra.mxu0 %v5739
    %v5896 = vpop.f32.mrf.mxu0
    %v5897 = vadd.f32 %v703, %v5896
    %v5898 = vpop.f32.mrf.mxu0
    %5899 = vmatprep.mubr.f32.mxu0 0.0
    %5900 = vmatmul.mubr.f32.gmra.mxu0 %v5741
    %v5901 = vpop.f32.mrf.mxu0
    %v5902 = vadd.f32 %v704, %v5901
    %v5903 = vpop.f32.mrf.mxu0
    %5904 = vmatprep.mubr.f32.mxu0 0.0
    %5905 = vmatmul.mubr.f32.gmra.mxu0 %v5743
    %v5906 = vpop.f32.mrf.mxu0
    %v5907 = vadd.f32 %v705, %v5906
    %v5908 = vpop.f32.mrf.mxu0
    %5909 = vmatprep.mubr.f32.mxu0 0.0
    %5910 = vmatmul.mubr.f32.gmra.mxu0 %v5745
    %v5911 = vpop.f32.mrf.mxu0
    %v5912 = vadd.f32 %v706, %v5911
    %v5913 = vpop.f32.mrf.mxu0
    %5914 = vmatprep.mubr.f32.mxu0 0.0
    %5915 = vmatmul.mubr.f32.gmra.mxu0 %v5747
    %v5916 = vpop.f32.mrf.mxu0
    %v5917 = vadd.f32 %v707, %v5916
    %v5918 = vpop.f32.mrf.mxu0
    %5919 = vmatprep.mubr.f32.mxu0 0.0
    %5920 = vmatmul.mubr.f32.gmra.mxu0 %v5749
    %v5921 = vpop.f32.mrf.mxu0
    %v5922 = vadd.f32 %v708, %v5921
    %v5923 = vpop.f32.mrf.mxu0
    %5924 = vmatprep.mubr.f32.mxu0 0.0
    %5925 = vmatmul.mubr.f32.gmra.mxu0 %v5751
    %v5926 = vpop.f32.mrf.mxu0
    %v5927 = vadd.f32 %v709, %v5926
    %v5928 = vpop.f32.mrf.mxu0
    %5929 = vdwg.mxu0
    %5930 = vmax.xlane.f32.xlu0 %v5852
    %v5931 = vpop.xlane.xlu0 %5930
    %5932 = vmax.xlane.f32.xlu0 %v5857
    %v5933 = vpop.xlane.xlu0 %5932
    %5934 = vmax.xlane.f32.xlu0 %v5862
    %v5935 = vpop.xlane.xlu0 %5934
    %5936 = vmax.xlane.f32.xlu0 %v5867
    %v5937 = vpop.xlane.xlu0 %5936
    %5938 = vmax.xlane.f32.xlu0 %v5872
    %v5939 = vpop.xlane.xlu0 %5938
    %5940 = vmax.xlane.f32.xlu0 %v5877
    %v5941 = vpop.xlane.xlu0 %5940
    %5942 = vmax.xlane.f32.xlu0 %v5882
    %v5943 = vpop.xlane.xlu0 %5942
    %5944 = vmax.xlane.f32.xlu0 %v5887
    %v5945 = vpop.xlane.xlu0 %5944
    %5946 = vmax.xlane.f32.xlu0 %v5892
    %v5947 = vpop.xlane.xlu0 %5946
    %5948 = vmax.xlane.f32.xlu0 %v5897
    %v5949 = vpop.xlane.xlu0 %5948
    %5950 = vmax.xlane.f32.xlu0 %v5902
    %v5951 = vpop.xlane.xlu0 %5950
    %5952 = vmax.xlane.f32.xlu0 %v5907
    %v5953 = vpop.xlane.xlu0 %5952
    %5954 = vmax.xlane.f32.xlu0 %v5912
    %v5955 = vpop.xlane.xlu0 %5954
    %5956 = vmax.xlane.f32.xlu0 %v5917
    %v5957 = vpop.xlane.xlu0 %5956
    %5958 = vmax.xlane.f32.xlu0 %v5922
    %v5959 = vpop.xlane.xlu0 %5958
    %5960 = vmax.xlane.f32.xlu0 %v5927
    %v5961 = vpop.xlane.xlu0 %5960
    %v5962 = vsub.f32 %v5852, %v5931
    %v5963 = vsub.f32 %v5857, %v5933
    %v5964 = vsub.f32 %v5862, %v5935
    %v5965 = vsub.f32 %v5867, %v5937
    %v5966 = vsub.f32 %v5872, %v5939
    %v5967 = vsub.f32 %v5877, %v5941
    %v5968 = vsub.f32 %v5882, %v5943
    %v5969 = vsub.f32 %v5887, %v5945
    %v5970 = vsub.f32 %v5892, %v5947
    %v5971 = vsub.f32 %v5897, %v5949
    %v5972 = vsub.f32 %v5902, %v5951
    %v5973 = vsub.f32 %v5907, %v5953
    %v5974 = vsub.f32 %v5912, %v5955
    %v5975 = vsub.f32 %v5917, %v5957
    %v5976 = vsub.f32 %v5922, %v5959
    %v5977 = vsub.f32 %v5927, %v5961
    %v5978 = vmul.f32 %v5962, 1.442695
    %v5979 = vpow.pop %v5978
    %v5980 = vmul.f32 %v5963, 1.442695
    %v5981 = vpow.pop %v5980
    %v5982 = vmul.f32 %v5964, 1.442695
    %v5983 = vpow.pop %v5982
    %v5984 = vmul.f32 %v5965, 1.442695
    %v5985 = vpow.pop %v5984
    %v5986 = vmul.f32 %v5966, 1.442695
    %v5987 = vpow.pop %v5986
    %v5988 = vmul.f32 %v5967, 1.442695
    %v5989 = vpow.pop %v5988
    %v5990 = vmul.f32 %v5968, 1.442695
    %v5991 = vpow.pop %v5990
    %v5992 = vmul.f32 %v5969, 1.442695
    %v5993 = vpow.pop %v5992
    %v5994 = vmul.f32 %v5970, 1.442695
    %v5995 = vpow.pop %v5994
    %v5996 = vmul.f32 %v5971, 1.442695
    %v5997 = vpow.pop %v5996
    %v5998 = vmul.f32 %v5972, 1.442695
    %v5999 = vpow.pop %v5998
    %v6000 = vmul.f32 %v5973, 1.442695
    %v6001 = vpow.pop %v6000
    %v6002 = vmul.f32 %v5974, 1.442695
    %v6003 = vpow.pop %v6002
    %v6004 = vmul.f32 %v5975, 1.442695
    %v6005 = vpow.pop %v6004
    %v6006 = vmul.f32 %v5976, 1.442695
    %v6007 = vpow.pop %v6006
    %v6008 = vmul.f32 %v5977, 1.442695
    %v6009 = vpow.pop %v6008
    %6010 = vadd.xlane.f32.xlu0 %v5979
    %v6011 = vpop.xlane.xlu0 %6010
    %6012 = vadd.xlane.f32.xlu0 %v5981
    %v6013 = vpop.xlane.xlu0 %6012
    %6014 = vadd.xlane.f32.xlu0 %v5983
    %v6015 = vpop.xlane.xlu0 %6014
    %6016 = vadd.xlane.f32.xlu0 %v5985
    %v6017 = vpop.xlane.xlu0 %6016
    %6018 = vadd.xlane.f32.xlu0 %v5987
    %v6019 = vpop.xlane.xlu0 %6018
    %6020 = vadd.xlane.f32.xlu0 %v5989
    %v6021 = vpop.xlane.xlu0 %6020
    %6022 = vadd.xlane.f32.xlu0 %v5991
    %v6023 = vpop.xlane.xlu0 %6022
    %6024 = vadd.xlane.f32.xlu0 %v5993
    %v6025 = vpop.xlane.xlu0 %6024
    %6026 = vadd.xlane.f32.xlu0 %v5995
    %v6027 = vpop.xlane.xlu0 %6026
    %6028 = vadd.xlane.f32.xlu0 %v5997
    %v6029 = vpop.xlane.xlu0 %6028
    %6030 = vadd.xlane.f32.xlu0 %v5999
    %v6031 = vpop.xlane.xlu0 %6030
    %6032 = vadd.xlane.f32.xlu0 %v6001
    %v6033 = vpop.xlane.xlu0 %6032
    %6034 = vadd.xlane.f32.xlu0 %v6003
    %v6035 = vpop.xlane.xlu0 %6034
    %6036 = vadd.xlane.f32.xlu0 %v6005
    %v6037 = vpop.xlane.xlu0 %6036
    %6038 = vadd.xlane.f32.xlu0 %v6007
    %v6039 = vpop.xlane.xlu0 %6038
    %6040 = vadd.xlane.f32.xlu0 %v6009
    %v6041 = vpop.xlane.xlu0 %6040
    %v6042 = vrcp.pop %v6011
    %v6043 = vmul.f32 1.0, %v6042
    %v6044 = vrcp.pop %v6013
    %v6045 = vmul.f32 1.0, %v6044
    %v6046 = vrcp.pop %v6015
    %v6047 = vmul.f32 1.0, %v6046
    %v6048 = vrcp.pop %v6017
    %v6049 = vmul.f32 1.0, %v6048
    %v6050 = vrcp.pop %v6019
    %v6051 = vmul.f32 1.0, %v6050
    %v6052 = vrcp.pop %v6021
    %v6053 = vmul.f32 1.0, %v6052
    %v6054 = vrcp.pop %v6023
    %v6055 = vmul.f32 1.0, %v6054
    %v6056 = vrcp.pop %v6025
    %v6057 = vmul.f32 1.0, %v6056
    %v6058 = vrcp.pop %v6027
    %v6059 = vmul.f32 1.0, %v6058
    %v6060 = vrcp.pop %v6029
    %v6061 = vmul.f32 1.0, %v6060
    %v6062 = vrcp.pop %v6031
    %v6063 = vmul.f32 1.0, %v6062
    %v6064 = vrcp.pop %v6033
    %v6065 = vmul.f32 1.0, %v6064
    %v6066 = vrcp.pop %v6035
    %v6067 = vmul.f32 1.0, %v6066
    %v6068 = vrcp.pop %v6037
    %v6069 = vmul.f32 1.0, %v6068
    %v6070 = vrcp.pop %v6039
    %v6071 = vmul.f32 1.0, %v6070
    %v6072 = vrcp.pop %v6041
    %v6073 = vmul.f32 1.0, %v6072
    %v6074 = vmul.f32 %v5979, %v6043
    %v6075 = vmul.f32 %v5981, %v6045
    %v6076 = vmul.f32 %v5983, %v6047
    %v6077 = vmul.f32 %v5985, %v6049
    %v6078 = vmul.f32 %v5987, %v6051
    %v6079 = vmul.f32 %v5989, %v6053
    %v6080 = vmul.f32 %v5991, %v6055
    %v6081 = vmul.f32 %v5993, %v6057
    %v6082 = vmul.f32 %v5995, %v6059
    %v6083 = vmul.f32 %v5997, %v6061
    %v6084 = vmul.f32 %v5999, %v6063
    %v6085 = vmul.f32 %v6001, %v6065
    %v6086 = vmul.f32 %v6003, %v6067
    %v6087 = vmul.f32 %v6005, %v6069
    %v6088 = vmul.f32 %v6007, %v6071
    %v6089 = vmul.f32 %v6009, %v6073
    %6090 = vrot.lane.b32.xlu0 %v616, 32
    %v6091 = vpop.permute.xlu0 %6090
    %6092 = vrot.lane.b32.xlu0 %v621, 32
    %v6093 = vpop.permute.xlu0 %6092
    %6094 = vrot.lane.b32.xlu0 %v626, 32
    %v6095 = vpop.permute.xlu0 %6094
    %6096 = vrot.lane.b32.xlu0 %v631, 32
    %v6097 = vpop.permute.xlu0 %6096
    %6098 = vrot.lane.b32.xlu0 %v636, 32
    %v6099 = vpop.permute.xlu0 %6098
    %6100 = vrot.lane.b32.xlu0 %v641, 32
    %v6101 = vpop.permute.xlu0 %6100
    %6102 = vrot.lane.b32.xlu0 %v646, 32
    %v6103 = vpop.permute.xlu0 %6102
    %6104 = vrot.lane.b32.xlu0 %v651, 32
    %v6105 = vpop.permute.xlu0 %6104
    %6106 = vrot.lane.b32.xlu0 %v656, 32
    %v6107 = vpop.permute.xlu0 %6106
    %6108 = vrot.lane.b32.xlu0 %v661, 32
    %v6109 = vpop.permute.xlu0 %6108
    %6110 = vrot.lane.b32.xlu0 %v666, 32
    %v6111 = vpop.permute.xlu0 %6110
    %6112 = vrot.lane.b32.xlu0 %v671, 32
    %v6113 = vpop.permute.xlu0 %6112
    %6114 = vrot.lane.b32.xlu0 %v676, 32
    %v6115 = vpop.permute.xlu0 %6114
    %6116 = vrot.lane.b32.xlu0 %v681, 32
    %v6117 = vpop.permute.xlu0 %6116
    %6118 = vrot.lane.b32.xlu0 %v686, 32
    %v6119 = vpop.permute.xlu0 %6118
    %6120 = vrot.lane.b32.xlu0 %v691, 32
    %v6121 = vpop.permute.xlu0 %6120
    %6138 = vmatprep.subr.mxu0 0.0
    %6139 = vmatpush1.msra.mxu0 %v6121
    %6140 = vmatprep.subr.mxu0 0.0
    %6141 = vmatpush1.msra.mxu0 %v6119
    %6142 = vmatprep.subr.mxu0 0.0
    %6143 = vmatpush1.msra.mxu0 %v6117
    %6144 = vmatprep.subr.mxu0 0.0
    %6145 = vmatpush1.msra.mxu0 %v6115
    %6146 = vmatprep.subr.mxu0 0.0
    %6147 = vmatpush1.msra.mxu0 %v6113
    %6148 = vmatprep.subr.mxu0 0.0
    %6149 = vmatpush1.msra.mxu0 %v6111
    %6150 = vmatprep.subr.mxu0 0.0
    %6151 = vmatpush1.msra.mxu0 %v6109
    %6152 = vmatprep.subr.mxu0 0.0
    %6153 = vmatpush1.msra.mxu0 %v6107
    %6154 = vmatprep.subr.mxu0 0.0
    %6155 = vmatpush1.msra.mxu0 %v6105
    %6156 = vmatprep.subr.mxu0 0.0
    %6157 = vmatpush1.msra.mxu0 %v6103
    %6158 = vmatprep.subr.mxu0 0.0
    %6159 = vmatpush1.msra.mxu0 %v6101
    %6160 = vmatprep.subr.mxu0 0.0
    %6161 = vmatpush1.msra.mxu0 %v6099
    %6162 = vmatprep.subr.mxu0 0.0
    %6163 = vmatpush1.msra.mxu0 %v6097
    %6164 = vmatprep.subr.mxu0 0.0
    %6165 = vmatpush1.msra.mxu0 %v6095
    %6166 = vmatprep.subr.mxu0 0.0
    %6167 = vmatpush1.msra.mxu0 %v6093
    %6168 = vmatprep.subr.mxu0 0.0
    %6169 = vmatpush1.msra.mxu0 %v6091
    %6170 = vmatprep.subr.mxu0 0.0
    %6171 = vmatpush2.msra.mxu0 0.0
    %6172 = vmatprep.subr.mxu0 0.0
    %6173 = vmatpush2.msra.mxu0 0.0
    %6174 = vmatprep.subr.mxu0 0.0
    %6175 = vmatpush2.msra.mxu0 0.0
    %6176 = vmatprep.subr.mxu0 0.0
    %6177 = vmatpush2.msra.mxu0 0.0
    %6178 = vmatprep.subr.mxu0 0.0
    %6179 = vmatpush2.msra.mxu0 0.0
    %6180 = vmatprep.subr.mxu0 0.0
    %6181 = vmatpush2.msra.mxu0 0.0
    %6182 = vmatprep.subr.mxu0 0.0
    %6183 = vmatpush2.msra.mxu0 0.0
    %6184 = vmatprep.subr.mxu0 0.0
    %6185 = vmatpush2.msra.mxu0 0.0
    %6186 = vmatprep.subr.mxu0 0.0
    %6187 = vmatpush2.msra.mxu0 0.0
    %6188 = vmatprep.subr.mxu0 0.0
    %6189 = vmatpush2.msra.mxu0 0.0
    %6190 = vmatprep.subr.mxu0 0.0
    %6191 = vmatpush2.msra.mxu0 0.0
    %6192 = vmatprep.subr.mxu0 0.0
    %6193 = vmatpush2.msra.mxu0 0.0
    %6194 = vmatprep.subr.mxu0 0.0
    %6195 = vmatpush2.msra.mxu0 0.0
    %6196 = vmatprep.subr.mxu0 0.0
    %6197 = vmatpush2.msra.mxu0 0.0
    %6198 = vmatprep.subr.mxu0 0.0
    %6199 = vmatpush2.msra.mxu0 0.0
    %6200 = vmatprep.subr.mxu0 0.0
    %6201 = vmatpush2.msra.mxu0 0.0
    %6202 = vmatprep.mubr.f32.mxu0 0.0
    %6203 = vmatmul.mubr.f32.gmra.mxu0 %v6074
    %v6204 = vpop.f32.mrf.mxu0
    %v6205 = vadd.f32 0.0, %v6204
    %v6206 = vpop.f32.mrf.mxu0
    %6207 = vmatprep.mubr.f32.mxu0 0.0
    %6208 = vmatmul.mubr.f32.gmra.mxu0 %v6075
    %v6209 = vpop.f32.mrf.mxu0
    %v6210 = vadd.f32 0.0, %v6209
    %v6211 = vpop.f32.mrf.mxu0
    %6212 = vmatprep.mubr.f32.mxu0 0.0
    %6213 = vmatmul.mubr.f32.gmra.mxu0 %v6076
    %v6214 = vpop.f32.mrf.mxu0
    %v6215 = vadd.f32 0.0, %v6214
    %v6216 = vpop.f32.mrf.mxu0
    %6217 = vmatprep.mubr.f32.mxu0 0.0
    %6218 = vmatmul.mubr.f32.gmra.mxu0 %v6077
    %v6219 = vpop.f32.mrf.mxu0
    %v6220 = vadd.f32 0.0, %v6219
    %v6221 = vpop.f32.mrf.mxu0
    %6222 = vmatprep.mubr.f32.mxu0 0.0
    %6223 = vmatmul.mubr.f32.gmra.mxu0 %v6078
    %v6224 = vpop.f32.mrf.mxu0
    %v6225 = vadd.f32 0.0, %v6224
    %v6226 = vpop.f32.mrf.mxu0
    %6227 = vmatprep.mubr.f32.mxu0 0.0
    %6228 = vmatmul.mubr.f32.gmra.mxu0 %v6079
    %v6229 = vpop.f32.mrf.mxu0
    %v6230 = vadd.f32 0.0, %v6229
    %v6231 = vpop.f32.mrf.mxu0
    %6232 = vmatprep.mubr.f32.mxu0 0.0
    %6233 = vmatmul.mubr.f32.gmra.mxu0 %v6080
    %v6234 = vpop.f32.mrf.mxu0
    %v6235 = vadd.f32 0.0, %v6234
    %v6236 = vpop.f32.mrf.mxu0
    %6237 = vmatprep.mubr.f32.mxu0 0.0
    %6238 = vmatmul.mubr.f32.gmra.mxu0 %v6081
    %v6239 = vpop.f32.mrf.mxu0
    %v6240 = vadd.f32 0.0, %v6239
    %v6241 = vpop.f32.mrf.mxu0
    %6242 = vmatprep.mubr.f32.mxu0 0.0
    %6243 = vmatmul.mubr.f32.gmra.mxu0 %v6082
    %v6244 = vpop.f32.mrf.mxu0
    %v6245 = vadd.f32 0.0, %v6244
    %v6246 = vpop.f32.mrf.mxu0
    %6247 = vmatprep.mubr.f32.mxu0 0.0
    %6248 = vmatmul.mubr.f32.gmra.mxu0 %v6083
    %v6249 = vpop.f32.mrf.mxu0
    %v6250 = vadd.f32 0.0, %v6249
    %v6251 = vpop.f32.mrf.mxu0
    %6252 = vmatprep.mubr.f32.mxu0 0.0
    %6253 = vmatmul.mubr.f32.gmra.mxu0 %v6084
    %v6254 = vpop.f32.mrf.mxu0
    %v6255 = vadd.f32 0.0, %v6254
    %v6256 = vpop.f32.mrf.mxu0
    %6257 = vmatprep.mubr.f32.mxu0 0.0
    %6258 = vmatmul.mubr.f32.gmra.mxu0 %v6085
    %v6259 = vpop.f32.mrf.mxu0
    %v6260 = vadd.f32 0.0, %v6259
    %v6261 = vpop.f32.mrf.mxu0
    %6262 = vmatprep.mubr.f32.mxu0 0.0
    %6263 = vmatmul.mubr.f32.gmra.mxu0 %v6086
    %v6264 = vpop.f32.mrf.mxu0
    %v6265 = vadd.f32 0.0, %v6264
    %v6266 = vpop.f32.mrf.mxu0
    %6267 = vmatprep.mubr.f32.mxu0 0.0
    %6268 = vmatmul.mubr.f32.gmra.mxu0 %v6087
    %v6269 = vpop.f32.mrf.mxu0
    %v6270 = vadd.f32 0.0, %v6269
    %v6271 = vpop.f32.mrf.mxu0
    %6272 = vmatprep.mubr.f32.mxu0 0.0
    %6273 = vmatmul.mubr.f32.gmra.mxu0 %v6088
    %v6274 = vpop.f32.mrf.mxu0
    %v6275 = vadd.f32 0.0, %v6274
    %v6276 = vpop.f32.mrf.mxu0
    %6277 = vmatprep.mubr.f32.mxu0 0.0
    %6278 = vmatmul.mubr.f32.gmra.mxu0 %v6089
    %v6279 = vpop.f32.mrf.mxu0
    %v6280 = vadd.f32 0.0, %v6279
    %v6281 = vpop.f32.mrf.mxu0
    %6282 = vdwg.mxu0
    %v6284 = vsel %vm742, %v6205, 0
    %v6287 = vsel %vm742, %v6210, 0
    %v6290 = vsel %vm742, %v6215, 0
    %v6293 = vsel %vm742, %v6220, 0
    %v6296 = vsel %vm742, %v6225, 0
    %v6299 = vsel %vm742, %v6230, 0
    %v6302 = vsel %vm742, %v6235, 0
    %v6305 = vsel %vm742, %v6240, 0
    %v6308 = vsel %vm742, %v6245, 0
    %v6311 = vsel %vm742, %v6250, 0
    %v6314 = vsel %vm742, %v6255, 0
    %v6317 = vsel %vm742, %v6260, 0
    %v6320 = vsel %vm742, %v6265, 0
    %v6323 = vsel %vm742, %v6270, 0
    %v6326 = vsel %vm742, %v6275, 0
    %v6329 = vsel %vm742, %v6280, 0
    %6331 = vmatprep.subr.mxu0 0.0
    %6332 = vmatpush1.msra.mxu0 0.0
    %6333 = vmatprep.subr.mxu0 0.0
    %6334 = vmatpush1.msra.mxu0 0.0
    %6335 = vmatprep.subr.mxu0 0.0
    %6336 = vmatpush1.msra.mxu0 0.0
    %6337 = vmatprep.subr.mxu0 0.0
    %6338 = vmatpush1.msra.mxu0 0.0
    %6339 = vmatprep.subr.mxu0 0.0
    %6340 = vmatpush1.msra.mxu0 0.0
    %6341 = vmatprep.subr.mxu0 0.0
    %6342 = vmatpush1.msra.mxu0 0.0
    %6343 = vmatprep.subr.mxu0 0.0
    %6344 = vmatpush1.msra.mxu0 0.0
    %6345 = vmatprep.subr.mxu0 0.0
    %6346 = vmatpush1.msra.mxu0 0.0
    %6347 = vmatprep.subr.mxu0 0.0
    %6348 = vmatpush1.msra.mxu0 0.0
    %6349 = vmatprep.subr.mxu0 0.0
    %6350 = vmatpush1.msra.mxu0 0.0
    %6351 = vmatprep.subr.mxu0 0.0
    %6352 = vmatpush1.msra.mxu0 0.0
    %6353 = vmatprep.subr.mxu0 0.0
    %6354 = vmatpush1.msra.mxu0 0.0
    %6355 = vmatprep.subr.mxu0 0.0
    %6356 = vmatpush1.msra.mxu0 0.0
    %6357 = vmatprep.subr.mxu0 0.0
    %6358 = vmatpush1.msra.mxu0 0.0
    %6359 = vmatprep.subr.mxu0 0.0
    %6360 = vmatpush1.msra.mxu0 %v723
    %6361 = vmatprep.subr.mxu0 0.0
    %6362 = vmatpush1.msra.mxu0 %v722
    %6363 = vmatprep.subr.mxu0 0.0
    %6364 = vmatpush2.msra.mxu0 0.0
    %6365 = vmatprep.subr.mxu0 0.0
    %6366 = vmatpush2.msra.mxu0 0.0
    %6367 = vmatprep.subr.mxu0 0.0
    %6368 = vmatpush2.msra.mxu0 0.0
    %6369 = vmatprep.subr.mxu0 0.0
    %6370 = vmatpush2.msra.mxu0 0.0
    %6371 = vmatprep.subr.mxu0 0.0
    %6372 = vmatpush2.msra.mxu0 0.0
    %6373 = vmatprep.subr.mxu0 0.0
    %6374 = vmatpush2.msra.mxu0 0.0
    %6375 = vmatprep.subr.mxu0 0.0
    %6376 = vmatpush2.msra.mxu0 0.0
    %6377 = vmatprep.subr.mxu0 0.0
    %6378 = vmatpush2.msra.mxu0 0.0
    %6379 = vmatprep.subr.mxu0 0.0
    %6380 = vmatpush2.msra.mxu0 0.0
    %6381 = vmatprep.subr.mxu0 0.0
    %6382 = vmatpush2.msra.mxu0 0.0
    %6383 = vmatprep.subr.mxu0 0.0
    %6384 = vmatpush2.msra.mxu0 0.0
    %6385 = vmatprep.subr.mxu0 0.0
    %6386 = vmatpush2.msra.mxu0 0.0
    %6387 = vmatprep.subr.mxu0 0.0
    %6388 = vmatpush2.msra.mxu0 0.0
    %6389 = vmatprep.subr.mxu0 0.0
    %6390 = vmatpush2.msra.mxu0 0.0
    %6391 = vmatprep.subr.mxu0 0.0
    %6392 = vmatpush2.msra.mxu0 0.0
    %6393 = vmatprep.subr.mxu0 0.0
    %6394 = vmatpush2.msra.mxu0 0.0
    %6395 = vmatprep.mubr.f32.mxu0 0.0
    %6396 = vmatmul.mubr.f32.gmra.mxu0 %v6284
    %v6397 = vpop.f32.mrf.mxu0
    %v6398 = vadd.f32 0.0, %v6397
    %v6399 = vpop.f32.mrf.mxu0
    %6400 = vmatprep.mubr.f32.mxu0 0.0
    %6401 = vmatmul.mubr.f32.gmra.mxu0 %v6287
    %v6402 = vpop.f32.mrf.mxu0
    %v6403 = vadd.f32 0.0, %v6402
    %v6404 = vpop.f32.mrf.mxu0
    %6405 = vmatprep.mubr.f32.mxu0 0.0
    %6406 = vmatmul.mubr.f32.gmra.mxu0 %v6290
    %v6407 = vpop.f32.mrf.mxu0
    %v6408 = vadd.f32 0.0, %v6407
    %v6409 = vpop.f32.mrf.mxu0
    %6410 = vmatprep.mubr.f32.mxu0 0.0
    %6411 = vmatmul.mubr.f32.gmra.mxu0 %v6293
    %v6412 = vpop.f32.mrf.mxu0
    %v6413 = vadd.f32 0.0, %v6412
    %v6414 = vpop.f32.mrf.mxu0
    %6415 = vmatprep.mubr.f32.mxu0 0.0
    %6416 = vmatmul.mubr.f32.gmra.mxu0 %v6296
    %v6417 = vpop.f32.mrf.mxu0
    %v6418 = vadd.f32 0.0, %v6417
    %v6419 = vpop.f32.mrf.mxu0
    %6420 = vmatprep.mubr.f32.mxu0 0.0
    %6421 = vmatmul.mubr.f32.gmra.mxu0 %v6299
    %v6422 = vpop.f32.mrf.mxu0
    %v6423 = vadd.f32 0.0, %v6422
    %v6424 = vpop.f32.mrf.mxu0
    %6425 = vmatprep.mubr.f32.mxu0 0.0
    %6426 = vmatmul.mubr.f32.gmra.mxu0 %v6302
    %v6427 = vpop.f32.mrf.mxu0
    %v6428 = vadd.f32 0.0, %v6427
    %v6429 = vpop.f32.mrf.mxu0
    %6430 = vmatprep.mubr.f32.mxu0 0.0
    %6431 = vmatmul.mubr.f32.gmra.mxu0 %v6305
    %v6432 = vpop.f32.mrf.mxu0
    %v6433 = vadd.f32 0.0, %v6432
    %v6434 = vpop.f32.mrf.mxu0
    %6435 = vmatprep.mubr.f32.mxu0 0.0
    %6436 = vmatmul.mubr.f32.gmra.mxu0 %v6308
    %v6437 = vpop.f32.mrf.mxu0
    %v6438 = vadd.f32 0.0, %v6437
    %v6439 = vpop.f32.mrf.mxu0
    %6440 = vmatprep.mubr.f32.mxu0 0.0
    %6441 = vmatmul.mubr.f32.gmra.mxu0 %v6311
    %v6442 = vpop.f32.mrf.mxu0
    %v6443 = vadd.f32 0.0, %v6442
    %v6444 = vpop.f32.mrf.mxu0
    %6445 = vmatprep.mubr.f32.mxu0 0.0
    %6446 = vmatmul.mubr.f32.gmra.mxu0 %v6314
    %v6447 = vpop.f32.mrf.mxu0
    %v6448 = vadd.f32 0.0, %v6447
    %v6449 = vpop.f32.mrf.mxu0
    %6450 = vmatprep.mubr.f32.mxu0 0.0
    %6451 = vmatmul.mubr.f32.gmra.mxu0 %v6317
    %v6452 = vpop.f32.mrf.mxu0
    %v6453 = vadd.f32 0.0, %v6452
    %v6454 = vpop.f32.mrf.mxu0
    %6455 = vmatprep.mubr.f32.mxu0 0.0
    %6456 = vmatmul.mubr.f32.gmra.mxu0 %v6320
    %v6457 = vpop.f32.mrf.mxu0
    %v6458 = vadd.f32 0.0, %v6457
    %v6459 = vpop.f32.mrf.mxu0
    %6460 = vmatprep.mubr.f32.mxu0 0.0
    %6461 = vmatmul.mubr.f32.gmra.mxu0 %v6323
    %v6462 = vpop.f32.mrf.mxu0
    %v6463 = vadd.f32 0.0, %v6462
    %v6464 = vpop.f32.mrf.mxu0
    %6465 = vmatprep.mubr.f32.mxu0 0.0
    %6466 = vmatmul.mubr.f32.gmra.mxu0 %v6326
    %v6467 = vpop.f32.mrf.mxu0
    %v6468 = vadd.f32 0.0, %v6467
    %v6469 = vpop.f32.mrf.mxu0
    %6470 = vmatprep.mubr.f32.mxu0 0.0
    %6471 = vmatmul.mubr.f32.gmra.mxu0 %v6329
    %v6472 = vpop.f32.mrf.mxu0
    %v6473 = vadd.f32 0.0, %v6472
    %v6474 = vpop.f32.mrf.mxu0
    %6475 = vdwg.mxu0
    %v6476 = vadd.f32 %v5641, %v6398
    %v6477 = vadd.f32 %v5642, %v6403
    %v6478 = vadd.f32 %v5643, %v6408
    %v6479 = vadd.f32 %v5644, %v6413
    %v6480 = vadd.f32 %v5645, %v6418
    %v6481 = vadd.f32 %v5646, %v6423
    %v6482 = vadd.f32 %v5647, %v6428
    %v6483 = vadd.f32 %v5648, %v6433
    %v6484 = vadd.f32 %v5649, %v6438
    %v6485 = vadd.f32 %v5650, %v6443
    %v6486 = vadd.f32 %v5651, %v6448
    %v6487 = vadd.f32 %v5652, %v6453
    %v6488 = vadd.f32 %v5653, %v6458
    %v6489 = vadd.f32 %v5654, %v6463
    %v6490 = vadd.f32 %v5655, %v6468
    %v6491 = vadd.f32 %v5656, %v6473
    %6492 = vrot.lane.b32.xlu0 %v726, 16
    %v6493 = vpop.permute.xlu0 %6492
    %6494 = vrot.lane.b32.xlu0 %v727, 16
    %v6495 = vpop.permute.xlu0 %6494
    %6496 = vrot.lane.b32.xlu0 %v728, 16
    %v6497 = vpop.permute.xlu0 %6496
    %6498 = vrot.lane.b32.xlu0 %v729, 16
    %v6499 = vpop.permute.xlu0 %6498
    %6500 = vrot.lane.b32.xlu0 %v730, 16
    %v6501 = vpop.permute.xlu0 %6500
    %6502 = vrot.lane.b32.xlu0 %v731, 16
    %v6503 = vpop.permute.xlu0 %6502
    %6504 = vrot.lane.b32.xlu0 %v732, 16
    %v6505 = vpop.permute.xlu0 %6504
    %6506 = vrot.lane.b32.xlu0 %v733, 16
    %v6507 = vpop.permute.xlu0 %6506
    %6508 = vrot.lane.b32.xlu0 %v734, 16
    %v6509 = vpop.permute.xlu0 %6508
    %6510 = vrot.lane.b32.xlu0 %v735, 16
    %v6511 = vpop.permute.xlu0 %6510
    %6512 = vrot.lane.b32.xlu0 %v736, 16
    %v6513 = vpop.permute.xlu0 %6512
    %6514 = vrot.lane.b32.xlu0 %v737, 16
    %v6515 = vpop.permute.xlu0 %6514
    %6516 = vrot.lane.b32.xlu0 %v738, 16
    %v6517 = vpop.permute.xlu0 %6516
    %6518 = vrot.lane.b32.xlu0 %v739, 16
    %v6519 = vpop.permute.xlu0 %6518
    %6520 = vrot.lane.b32.xlu0 %v740, 16
    %v6521 = vpop.permute.xlu0 %6520
    %6522 = vrot.lane.b32.xlu0 %v741, 16
    %v6523 = vpop.permute.xlu0 %6522
    %6524 = vrot.lane.b32.xlu0 %v457, 16
    %v6525 = vpop.permute.xlu0 %6524
    %6526 = vrot.lane.b32.xlu0 %v463, 16
    %v6527 = vpop.permute.xlu0 %6526
    %6528 = vrot.lane.b32.xlu0 %v469, 16
    %v6529 = vpop.permute.xlu0 %6528
    %6530 = vrot.lane.b32.xlu0 %v475, 16
    %v6531 = vpop.permute.xlu0 %6530
    %6532 = vrot.lane.b32.xlu0 %v481, 16
    %v6533 = vpop.permute.xlu0 %6532
    %6534 = vrot.lane.b32.xlu0 %v487, 16
    %v6535 = vpop.permute.xlu0 %6534
    %6536 = vrot.lane.b32.xlu0 %v493, 16
    %v6537 = vpop.permute.xlu0 %6536
    %6538 = vrot.lane.b32.xlu0 %v499, 16
    %v6539 = vpop.permute.xlu0 %6538
    %6540 = vrot.lane.b32.xlu0 %v505, 16
    %v6541 = vpop.permute.xlu0 %6540
    %6542 = vrot.lane.b32.xlu0 %v511, 16
    %v6543 = vpop.permute.xlu0 %6542
    %6544 = vrot.lane.b32.xlu0 %v517, 16
    %v6545 = vpop.permute.xlu0 %6544
    %6546 = vrot.lane.b32.xlu0 %v523, 16
    %v6547 = vpop.permute.xlu0 %6546
    %6548 = vrot.lane.b32.xlu0 %v529, 16
    %v6549 = vpop.permute.xlu0 %6548
    %6550 = vrot.lane.b32.xlu0 %v535, 16
    %v6551 = vpop.permute.xlu0 %6550
    %6552 = vrot.lane.b32.xlu0 %v541, 16
    %v6553 = vpop.permute.xlu0 %6552
    %6554 = vrot.lane.b32.xlu0 %v547, 16
    %v6555 = vpop.permute.xlu0 %6554
    %v6556 = vsel %vm742, %v6493, 0
    %v6558 = vsel %vm742, %v6495, 0
    %v6560 = vsel %vm742, %v6497, 0
    %v6562 = vsel %vm742, %v6499, 0
    %v6564 = vsel %vm742, %v6501, 0
    %v6566 = vsel %vm742, %v6503, 0
    %v6568 = vsel %vm742, %v6505, 0
    %v6570 = vsel %vm742, %v6507, 0
    %v6572 = vsel %vm742, %v6509, 0
    %v6574 = vsel %vm742, %v6511, 0
    %v6576 = vsel %vm742, %v6513, 0
    %v6578 = vsel %vm742, %v6515, 0
    %v6580 = vsel %vm742, %v6517, 0
    %v6582 = vsel %vm742, %v6519, 0
    %v6584 = vsel %vm742, %v6521, 0
    %v6586 = vsel %vm742, %v6523, 0
    %v6588 = vsel %vm742, %v6525, 0
    %v6590 = vsel %vm742, %v6527, 0
    %v6592 = vsel %vm742, %v6529, 0
    %v6594 = vsel %vm742, %v6531, 0
    %v6596 = vsel %vm742, %v6533, 0
    %v6598 = vsel %vm742, %v6535, 0
    %v6600 = vsel %vm742, %v6537, 0
    %v6602 = vsel %vm742, %v6539, 0
    %v6604 = vsel %vm742, %v6541, 0
    %v6606 = vsel %vm742, %v6543, 0
    %v6608 = vsel %vm742, %v6545, 0
    %v6610 = vsel %vm742, %v6547, 0
    %v6612 = vsel %vm742, %v6549, 0
    %v6614 = vsel %vm742, %v6551, 0
    %v6616 = vsel %vm742, %v6553, 0
    %v6618 = vsel %vm742, %v6555, 0
    %6620 = vmatprep.subr.mxu0 0.0
    %6621 = vmatpush1.xpose.msra.mxu0 %v6618
    %6622 = vmatprep.subr.mxu0 0.0
    %6623 = vmatpush1.xpose.msra.mxu0 %v6616
    %6624 = vmatprep.subr.mxu0 0.0
    %6625 = vmatpush1.xpose.msra.mxu0 %v6614
    %6626 = vmatprep.subr.mxu0 0.0
    %6627 = vmatpush1.xpose.msra.mxu0 %v6612
    %6628 = vmatprep.subr.mxu0 0.0
    %6629 = vmatpush1.xpose.msra.mxu0 %v6610
    %6630 = vmatprep.subr.mxu0 0.0
    %6631 = vmatpush1.xpose.msra.mxu0 %v6608
    %6632 = vmatprep.subr.mxu0 0.0
    %6633 = vmatpush1.xpose.msra.mxu0 %v6606
    %6634 = vmatprep.subr.mxu0 0.0
    %6635 = vmatpush1.xpose.msra.mxu0 %v6604
    %6636 = vmatprep.subr.mxu0 0.0
    %6637 = vmatpush1.xpose.msra.mxu0 %v6602
    %6638 = vmatprep.subr.mxu0 0.0
    %6639 = vmatpush1.xpose.msra.mxu0 %v6600
    %6640 = vmatprep.subr.mxu0 0.0
    %6641 = vmatpush1.xpose.msra.mxu0 %v6598
    %6642 = vmatprep.subr.mxu0 0.0
    %6643 = vmatpush1.xpose.msra.mxu0 %v6596
    %6644 = vmatprep.subr.mxu0 0.0
    %6645 = vmatpush1.xpose.msra.mxu0 %v6594
    %6646 = vmatprep.subr.mxu0 0.0
    %6647 = vmatpush1.xpose.msra.mxu0 %v6592
    %6648 = vmatprep.subr.mxu0 0.0
    %6649 = vmatpush1.xpose.msra.mxu0 %v6590
    %6650 = vmatprep.subr.mxu0 0.0
    %6651 = vmatpush1.xpose.msra.mxu0 %v6588
    %6652 = vmatprep.subr.mxu0 0.0
    %6653 = vmatpush2.xpose.msra.mxu0 0.0
    %6654 = vmatprep.subr.mxu0 0.0
    %6655 = vmatpush2.xpose.msra.mxu0 0.0
    %6656 = vmatprep.subr.mxu0 0.0
    %6657 = vmatpush2.xpose.msra.mxu0 0.0
    %6658 = vmatprep.subr.mxu0 0.0
    %6659 = vmatpush2.xpose.msra.mxu0 0.0
    %6660 = vmatprep.subr.mxu0 0.0
    %6661 = vmatpush2.xpose.msra.mxu0 0.0
    %6662 = vmatprep.subr.mxu0 0.0
    %6663 = vmatpush2.xpose.msra.mxu0 0.0
    %6664 = vmatprep.subr.mxu0 0.0
    %6665 = vmatpush2.xpose.msra.mxu0 0.0
    %6666 = vmatprep.subr.mxu0 0.0
    %6667 = vmatpush2.xpose.msra.mxu0 0.0
    %6668 = vmatprep.subr.mxu0 0.0
    %6669 = vmatpush2.xpose.msra.mxu0 0.0
    %6670 = vmatprep.subr.mxu0 0.0
    %6671 = vmatpush2.xpose.msra.mxu0 0.0
    %6672 = vmatprep.subr.mxu0 0.0
    %6673 = vmatpush2.xpose.msra.mxu0 0.0
    %6674 = vmatprep.subr.mxu0 0.0
    %6675 = vmatpush2.xpose.msra.mxu0 0.0
    %6676 = vmatprep.subr.mxu0 0.0
    %6677 = vmatpush2.xpose.msra.mxu0 0.0
    %6678 = vmatprep.subr.mxu0 0.0
    %6679 = vmatpush2.xpose.msra.mxu0 0.0
    %6680 = vmatprep.subr.mxu0 0.0
    %6681 = vmatpush2.xpose.msra.mxu0 0.0
    %6682 = vmatprep.subr.mxu0 0.0
    %6683 = vmatpush2.xpose.msra.mxu0 0.0
    %6684 = vmatprep.mubr.f32.mxu0 0.0
    %6685 = vmatmul.mubr.f32.gmra.mxu0 %v6556
    %v6686 = vpop.f32.mrf.mxu0
    %v6687 = vadd.f32 %v694, %v6686
    %v6688 = vpop.f32.mrf.mxu0
    %6689 = vmatprep.mubr.f32.mxu0 0.0
    %6690 = vmatmul.mubr.f32.gmra.mxu0 %v6558
    %v6691 = vpop.f32.mrf.mxu0
    %v6692 = vadd.f32 %v695, %v6691
    %v6693 = vpop.f32.mrf.mxu0
    %6694 = vmatprep.mubr.f32.mxu0 0.0
    %6695 = vmatmul.mubr.f32.gmra.mxu0 %v6560
    %v6696 = vpop.f32.mrf.mxu0
    %v6697 = vadd.f32 %v696, %v6696
    %v6698 = vpop.f32.mrf.mxu0
    %6699 = vmatprep.mubr.f32.mxu0 0.0
    %6700 = vmatmul.mubr.f32.gmra.mxu0 %v6562
    %v6701 = vpop.f32.mrf.mxu0
    %v6702 = vadd.f32 %v697, %v6701
    %v6703 = vpop.f32.mrf.mxu0
    %6704 = vmatprep.mubr.f32.mxu0 0.0
    %6705 = vmatmul.mubr.f32.gmra.mxu0 %v6564
    %v6706 = vpop.f32.mrf.mxu0
    %v6707 = vadd.f32 %v698, %v6706
    %v6708 = vpop.f32.mrf.mxu0
    %6709 = vmatprep.mubr.f32.mxu0 0.0
    %6710 = vmatmul.mubr.f32.gmra.mxu0 %v6566
    %v6711 = vpop.f32.mrf.mxu0
    %v6712 = vadd.f32 %v699, %v6711
    %v6713 = vpop.f32.mrf.mxu0
    %6714 = vmatprep.mubr.f32.mxu0 0.0
    %6715 = vmatmul.mubr.f32.gmra.mxu0 %v6568
    %v6716 = vpop.f32.mrf.mxu0
    %v6717 = vadd.f32 %v700, %v6716
    %v6718 = vpop.f32.mrf.mxu0
    %6719 = vmatprep.mubr.f32.mxu0 0.0
    %6720 = vmatmul.mubr.f32.gmra.mxu0 %v6570
    %v6721 = vpop.f32.mrf.mxu0
    %v6722 = vadd.f32 %v701, %v6721
    %v6723 = vpop.f32.mrf.mxu0
    %6724 = vmatprep.mubr.f32.mxu0 0.0
    %6725 = vmatmul.mubr.f32.gmra.mxu0 %v6572
    %v6726 = vpop.f32.mrf.mxu0
    %v6727 = vadd.f32 %v702, %v6726
    %v6728 = vpop.f32.mrf.mxu0
    %6729 = vmatprep.mubr.f32.mxu0 0.0
    %6730 = vmatmul.mubr.f32.gmra.mxu0 %v6574
    %v6731 = vpop.f32.mrf.mxu0
    %v6732 = vadd.f32 %v703, %v6731
    %v6733 = vpop.f32.mrf.mxu0
    %6734 = vmatprep.mubr.f32.mxu0 0.0
    %6735 = vmatmul.mubr.f32.gmra.mxu0 %v6576
    %v6736 = vpop.f32.mrf.mxu0
    %v6737 = vadd.f32 %v704, %v6736
    %v6738 = vpop.f32.mrf.mxu0
    %6739 = vmatprep.mubr.f32.mxu0 0.0
    %6740 = vmatmul.mubr.f32.gmra.mxu0 %v6578
    %v6741 = vpop.f32.mrf.mxu0
    %v6742 = vadd.f32 %v705, %v6741
    %v6743 = vpop.f32.mrf.mxu0
    %6744 = vmatprep.mubr.f32.mxu0 0.0
    %6745 = vmatmul.mubr.f32.gmra.mxu0 %v6580
    %v6746 = vpop.f32.mrf.mxu0
    %v6747 = vadd.f32 %v706, %v6746
    %v6748 = vpop.f32.mrf.mxu0
    %6749 = vmatprep.mubr.f32.mxu0 0.0
    %6750 = vmatmul.mubr.f32.gmra.mxu0 %v6582
    %v6751 = vpop.f32.mrf.mxu0
    %v6752 = vadd.f32 %v707, %v6751
    %v6753 = vpop.f32.mrf.mxu0
    %6754 = vmatprep.mubr.f32.mxu0 0.0
    %6755 = vmatmul.mubr.f32.gmra.mxu0 %v6584
    %v6756 = vpop.f32.mrf.mxu0
    %v6757 = vadd.f32 %v708, %v6756
    %v6758 = vpop.f32.mrf.mxu0
    %6759 = vmatprep.mubr.f32.mxu0 0.0
    %6760 = vmatmul.mubr.f32.gmra.mxu0 %v6586
    %v6761 = vpop.f32.mrf.mxu0
    %v6762 = vadd.f32 %v709, %v6761
    %v6763 = vpop.f32.mrf.mxu0
    %6764 = vdwg.mxu0
    %6765 = vmax.xlane.f32.xlu0 %v6687
    %v6766 = vpop.xlane.xlu0 %6765
    %6767 = vmax.xlane.f32.xlu0 %v6692
    %v6768 = vpop.xlane.xlu0 %6767
    %6769 = vmax.xlane.f32.xlu0 %v6697
    %v6770 = vpop.xlane.xlu0 %6769
    %6771 = vmax.xlane.f32.xlu0 %v6702
    %v6772 = vpop.xlane.xlu0 %6771
    %6773 = vmax.xlane.f32.xlu0 %v6707
    %v6774 = vpop.xlane.xlu0 %6773
    %6775 = vmax.xlane.f32.xlu0 %v6712
    %v6776 = vpop.xlane.xlu0 %6775
    %6777 = vmax.xlane.f32.xlu0 %v6717
    %v6778 = vpop.xlane.xlu0 %6777
    %6779 = vmax.xlane.f32.xlu0 %v6722
    %v6780 = vpop.xlane.xlu0 %6779
    %6781 = vmax.xlane.f32.xlu0 %v6727
    %v6782 = vpop.xlane.xlu0 %6781
    %6783 = vmax.xlane.f32.xlu0 %v6732
    %v6784 = vpop.xlane.xlu0 %6783
    %6785 = vmax.xlane.f32.xlu0 %v6737
    %v6786 = vpop.xlane.xlu0 %6785
    %6787 = vmax.xlane.f32.xlu0 %v6742
    %v6788 = vpop.xlane.xlu0 %6787
    %6789 = vmax.xlane.f32.xlu0 %v6747
    %v6790 = vpop.xlane.xlu0 %6789
    %6791 = vmax.xlane.f32.xlu0 %v6752
    %v6792 = vpop.xlane.xlu0 %6791
    %6793 = vmax.xlane.f32.xlu0 %v6757
    %v6794 = vpop.xlane.xlu0 %6793
    %6795 = vmax.xlane.f32.xlu0 %v6762
    %v6796 = vpop.xlane.xlu0 %6795
    %v6797 = vsub.f32 %v6687, %v6766
    %v6798 = vsub.f32 %v6692, %v6768
    %v6799 = vsub.f32 %v6697, %v6770
    %v6800 = vsub.f32 %v6702, %v6772
    %v6801 = vsub.f32 %v6707, %v6774
    %v6802 = vsub.f32 %v6712, %v6776
    %v6803 = vsub.f32 %v6717, %v6778
    %v6804 = vsub.f32 %v6722, %v6780
    %v6805 = vsub.f32 %v6727, %v6782
    %v6806 = vsub.f32 %v6732, %v6784
    %v6807 = vsub.f32 %v6737, %v6786
    %v6808 = vsub.f32 %v6742, %v6788
    %v6809 = vsub.f32 %v6747, %v6790
    %v6810 = vsub.f32 %v6752, %v6792
    %v6811 = vsub.f32 %v6757, %v6794
    %v6812 = vsub.f32 %v6762, %v6796
    %v6813 = vmul.f32 %v6797, 1.442695
    %v6814 = vpow.pop %v6813
    %v6815 = vmul.f32 %v6798, 1.442695
    %v6816 = vpow.pop %v6815
    %v6817 = vmul.f32 %v6799, 1.442695
    %v6818 = vpow.pop %v6817
    %v6819 = vmul.f32 %v6800, 1.442695
    %v6820 = vpow.pop %v6819
    %v6821 = vmul.f32 %v6801, 1.442695
    %v6822 = vpow.pop %v6821
    %v6823 = vmul.f32 %v6802, 1.442695
    %v6824 = vpow.pop %v6823
    %v6825 = vmul.f32 %v6803, 1.442695
    %v6826 = vpow.pop %v6825
    %v6827 = vmul.f32 %v6804, 1.442695
    %v6828 = vpow.pop %v6827
    %v6829 = vmul.f32 %v6805, 1.442695
    %v6830 = vpow.pop %v6829
    %v6831 = vmul.f32 %v6806, 1.442695
    %v6832 = vpow.pop %v6831
    %v6833 = vmul.f32 %v6807, 1.442695
    %v6834 = vpow.pop %v6833
    %v6835 = vmul.f32 %v6808, 1.442695
    %v6836 = vpow.pop %v6835
    %v6837 = vmul.f32 %v6809, 1.442695
    %v6838 = vpow.pop %v6837
    %v6839 = vmul.f32 %v6810, 1.442695
    %v6840 = vpow.pop %v6839
    %v6841 = vmul.f32 %v6811, 1.442695
    %v6842 = vpow.pop %v6841
    %v6843 = vmul.f32 %v6812, 1.442695
    %v6844 = vpow.pop %v6843
    %6845 = vadd.xlane.f32.xlu0 %v6814
    %v6846 = vpop.xlane.xlu0 %6845
    %6847 = vadd.xlane.f32.xlu0 %v6816
    %v6848 = vpop.xlane.xlu0 %6847
    %6849 = vadd.xlane.f32.xlu0 %v6818
    %v6850 = vpop.xlane.xlu0 %6849
    %6851 = vadd.xlane.f32.xlu0 %v6820
    %v6852 = vpop.xlane.xlu0 %6851
    %6853 = vadd.xlane.f32.xlu0 %v6822
    %v6854 = vpop.xlane.xlu0 %6853
    %6855 = vadd.xlane.f32.xlu0 %v6824
    %v6856 = vpop.xlane.xlu0 %6855
    %6857 = vadd.xlane.f32.xlu0 %v6826
    %v6858 = vpop.xlane.xlu0 %6857
    %6859 = vadd.xlane.f32.xlu0 %v6828
    %v6860 = vpop.xlane.xlu0 %6859
    %6861 = vadd.xlane.f32.xlu0 %v6830
    %v6862 = vpop.xlane.xlu0 %6861
    %6863 = vadd.xlane.f32.xlu0 %v6832
    %v6864 = vpop.xlane.xlu0 %6863
    %6865 = vadd.xlane.f32.xlu0 %v6834
    %v6866 = vpop.xlane.xlu0 %6865
    %6867 = vadd.xlane.f32.xlu0 %v6836
    %v6868 = vpop.xlane.xlu0 %6867
    %6869 = vadd.xlane.f32.xlu0 %v6838
    %v6870 = vpop.xlane.xlu0 %6869
    %6871 = vadd.xlane.f32.xlu0 %v6840
    %v6872 = vpop.xlane.xlu0 %6871
    %6873 = vadd.xlane.f32.xlu0 %v6842
    %v6874 = vpop.xlane.xlu0 %6873
    %6875 = vadd.xlane.f32.xlu0 %v6844
    %v6876 = vpop.xlane.xlu0 %6875
    %v6877 = vrcp.pop %v6846
    %v6878 = vmul.f32 1.0, %v6877
    %v6879 = vrcp.pop %v6848
    %v6880 = vmul.f32 1.0, %v6879
    %v6881 = vrcp.pop %v6850
    %v6882 = vmul.f32 1.0, %v6881
    %v6883 = vrcp.pop %v6852
    %v6884 = vmul.f32 1.0, %v6883
    %v6885 = vrcp.pop %v6854
    %v6886 = vmul.f32 1.0, %v6885
    %v6887 = vrcp.pop %v6856
    %v6888 = vmul.f32 1.0, %v6887
    %v6889 = vrcp.pop %v6858
    %v6890 = vmul.f32 1.0, %v6889
    %v6891 = vrcp.pop %v6860
    %v6892 = vmul.f32 1.0, %v6891
    %v6893 = vrcp.pop %v6862
    %v6894 = vmul.f32 1.0, %v6893
    %v6895 = vrcp.pop %v6864
    %v6896 = vmul.f32 1.0, %v6895
    %v6897 = vrcp.pop %v6866
    %v6898 = vmul.f32 1.0, %v6897
    %v6899 = vrcp.pop %v6868
    %v6900 = vmul.f32 1.0, %v6899
    %v6901 = vrcp.pop %v6870
    %v6902 = vmul.f32 1.0, %v6901
    %v6903 = vrcp.pop %v6872
    %v6904 = vmul.f32 1.0, %v6903
    %v6905 = vrcp.pop %v6874
    %v6906 = vmul.f32 1.0, %v6905
    %v6907 = vrcp.pop %v6876
    %v6908 = vmul.f32 1.0, %v6907
    %v6909 = vmul.f32 %v6814, %v6878
    %v6910 = vmul.f32 %v6816, %v6880
    %v6911 = vmul.f32 %v6818, %v6882
    %v6912 = vmul.f32 %v6820, %v6884
    %v6913 = vmul.f32 %v6822, %v6886
    %v6914 = vmul.f32 %v6824, %v6888
    %v6915 = vmul.f32 %v6826, %v6890
    %v6916 = vmul.f32 %v6828, %v6892
    %v6917 = vmul.f32 %v6830, %v6894
    %v6918 = vmul.f32 %v6832, %v6896
    %v6919 = vmul.f32 %v6834, %v6898
    %v6920 = vmul.f32 %v6836, %v6900
    %v6921 = vmul.f32 %v6838, %v6902
    %v6922 = vmul.f32 %v6840, %v6904
    %v6923 = vmul.f32 %v6842, %v6906
    %v6924 = vmul.f32 %v6844, %v6908
    %6925 = vrot.lane.b32.xlu0 %v616, 16
    %v6926 = vpop.permute.xlu0 %6925
    %6927 = vrot.lane.b32.xlu0 %v621, 16
    %v6928 = vpop.permute.xlu0 %6927
    %6929 = vrot.lane.b32.xlu0 %v626, 16
    %v6930 = vpop.permute.xlu0 %6929
    %6931 = vrot.lane.b32.xlu0 %v631, 16
    %v6932 = vpop.permute.xlu0 %6931
    %6933 = vrot.lane.b32.xlu0 %v636, 16
    %v6934 = vpop.permute.xlu0 %6933
    %6935 = vrot.lane.b32.xlu0 %v641, 16
    %v6936 = vpop.permute.xlu0 %6935
    %6937 = vrot.lane.b32.xlu0 %v646, 16
    %v6938 = vpop.permute.xlu0 %6937
    %6939 = vrot.lane.b32.xlu0 %v651, 16
    %v6940 = vpop.permute.xlu0 %6939
    %6941 = vrot.lane.b32.xlu0 %v656, 16
    %v6942 = vpop.permute.xlu0 %6941
    %6943 = vrot.lane.b32.xlu0 %v661, 16
    %v6944 = vpop.permute.xlu0 %6943
    %6945 = vrot.lane.b32.xlu0 %v666, 16
    %v6946 = vpop.permute.xlu0 %6945
    %6947 = vrot.lane.b32.xlu0 %v671, 16
    %v6948 = vpop.permute.xlu0 %6947
    %6949 = vrot.lane.b32.xlu0 %v676, 16
    %v6950 = vpop.permute.xlu0 %6949
    %6951 = vrot.lane.b32.xlu0 %v681, 16
    %v6952 = vpop.permute.xlu0 %6951
    %6953 = vrot.lane.b32.xlu0 %v686, 16
    %v6954 = vpop.permute.xlu0 %6953
    %6955 = vrot.lane.b32.xlu0 %v691, 16
    %v6956 = vpop.permute.xlu0 %6955
    %6973 = vmatprep.subr.mxu0 0.0
    %6974 = vmatpush1.msra.mxu0 %v6956
    %6975 = vmatprep.subr.mxu0 0.0
    %6976 = vmatpush1.msra.mxu0 %v6954
    %6977 = vmatprep.subr.mxu0 0.0
    %6978 = vmatpush1.msra.mxu0 %v6952
    %6979 = vmatprep.subr.mxu0 0.0
    %6980 = vmatpush1.msra.mxu0 %v6950
    %6981 = vmatprep.subr.mxu0 0.0
    %6982 = vmatpush1.msra.mxu0 %v6948
    %6983 = vmatprep.subr.mxu0 0.0
    %6984 = vmatpush1.msra.mxu0 %v6946
    %6985 = vmatprep.subr.mxu0 0.0
    %6986 = vmatpush1.msra.mxu0 %v6944
    %6987 = vmatprep.subr.mxu0 0.0
    %6988 = vmatpush1.msra.mxu0 %v6942
    %6989 = vmatprep.subr.mxu0 0.0
    %6990 = vmatpush1.msra.mxu0 %v6940
    %6991 = vmatprep.subr.mxu0 0.0
    %6992 = vmatpush1.msra.mxu0 %v6938
    %6993 = vmatprep.subr.mxu0 0.0
    %6994 = vmatpush1.msra.mxu0 %v6936
    %6995 = vmatprep.subr.mxu0 0.0
    %6996 = vmatpush1.msra.mxu0 %v6934
    %6997 = vmatprep.subr.mxu0 0.0
    %6998 = vmatpush1.msra.mxu0 %v6932
    %6999 = vmatprep.subr.mxu0 0.0
    %7000 = vmatpush1.msra.mxu0 %v6930
    %7001 = vmatprep.subr.mxu0 0.0
    %7002 = vmatpush1.msra.mxu0 %v6928
    %7003 = vmatprep.subr.mxu0 0.0
    %7004 = vmatpush1.msra.mxu0 %v6926
    %7005 = vmatprep.subr.mxu0 0.0
    %7006 = vmatpush2.msra.mxu0 0.0
    %7007 = vmatprep.subr.mxu0 0.0
    %7008 = vmatpush2.msra.mxu0 0.0
    %7009 = vmatprep.subr.mxu0 0.0
    %7010 = vmatpush2.msra.mxu0 0.0
    %7011 = vmatprep.subr.mxu0 0.0
    %7012 = vmatpush2.msra.mxu0 0.0
    %7013 = vmatprep.subr.mxu0 0.0
    %7014 = vmatpush2.msra.mxu0 0.0
    %7015 = vmatprep.subr.mxu0 0.0
    %7016 = vmatpush2.msra.mxu0 0.0
    %7017 = vmatprep.subr.mxu0 0.0
    %7018 = vmatpush2.msra.mxu0 0.0
    %7019 = vmatprep.subr.mxu0 0.0
    %7020 = vmatpush2.msra.mxu0 0.0
    %7021 = vmatprep.subr.mxu0 0.0
    %7022 = vmatpush2.msra.mxu0 0.0
    %7023 = vmatprep.subr.mxu0 0.0
    %7024 = vmatpush2.msra.mxu0 0.0
    %7025 = vmatprep.subr.mxu0 0.0
    %7026 = vmatpush2.msra.mxu0 0.0
    %7027 = vmatprep.subr.mxu0 0.0
    %7028 = vmatpush2.msra.mxu0 0.0
    %7029 = vmatprep.subr.mxu0 0.0
    %7030 = vmatpush2.msra.mxu0 0.0
    %7031 = vmatprep.subr.mxu0 0.0
    %7032 = vmatpush2.msra.mxu0 0.0
    %7033 = vmatprep.subr.mxu0 0.0
    %7034 = vmatpush2.msra.mxu0 0.0
    %7035 = vmatprep.subr.mxu0 0.0
    %7036 = vmatpush2.msra.mxu0 0.0
    %7037 = vmatprep.mubr.f32.mxu0 0.0
    %7038 = vmatmul.mubr.f32.gmra.mxu0 %v6909
    %v7039 = vpop.f32.mrf.mxu0
    %v7040 = vadd.f32 0.0, %v7039
    %v7041 = vpop.f32.mrf.mxu0
    %7042 = vmatprep.mubr.f32.mxu0 0.0
    %7043 = vmatmul.mubr.f32.gmra.mxu0 %v6910
    %v7044 = vpop.f32.mrf.mxu0
    %v7045 = vadd.f32 0.0, %v7044
    %v7046 = vpop.f32.mrf.mxu0
    %7047 = vmatprep.mubr.f32.mxu0 0.0
    %7048 = vmatmul.mubr.f32.gmra.mxu0 %v6911
    %v7049 = vpop.f32.mrf.mxu0
    %v7050 = vadd.f32 0.0, %v7049
    %v7051 = vpop.f32.mrf.mxu0
    %7052 = vmatprep.mubr.f32.mxu0 0.0
    %7053 = vmatmul.mubr.f32.gmra.mxu0 %v6912
    %v7054 = vpop.f32.mrf.mxu0
    %v7055 = vadd.f32 0.0, %v7054
    %v7056 = vpop.f32.mrf.mxu0
    %7057 = vmatprep.mubr.f32.mxu0 0.0
    %7058 = vmatmul.mubr.f32.gmra.mxu0 %v6913
    %v7059 = vpop.f32.mrf.mxu0
    %v7060 = vadd.f32 0.0, %v7059
    %v7061 = vpop.f32.mrf.mxu0
    %7062 = vmatprep.mubr.f32.mxu0 0.0
    %7063 = vmatmul.mubr.f32.gmra.mxu0 %v6914
    %v7064 = vpop.f32.mrf.mxu0
    %v7065 = vadd.f32 0.0, %v7064
    %v7066 = vpop.f32.mrf.mxu0
    %7067 = vmatprep.mubr.f32.mxu0 0.0
    %7068 = vmatmul.mubr.f32.gmra.mxu0 %v6915
    %v7069 = vpop.f32.mrf.mxu0
    %v7070 = vadd.f32 0.0, %v7069
    %v7071 = vpop.f32.mrf.mxu0
    %7072 = vmatprep.mubr.f32.mxu0 0.0
    %7073 = vmatmul.mubr.f32.gmra.mxu0 %v6916
    %v7074 = vpop.f32.mrf.mxu0
    %v7075 = vadd.f32 0.0, %v7074
    %v7076 = vpop.f32.mrf.mxu0
    %7077 = vmatprep.mubr.f32.mxu0 0.0
    %7078 = vmatmul.mubr.f32.gmra.mxu0 %v6917
    %v7079 = vpop.f32.mrf.mxu0
    %v7080 = vadd.f32 0.0, %v7079
    %v7081 = vpop.f32.mrf.mxu0
    %7082 = vmatprep.mubr.f32.mxu0 0.0
    %7083 = vmatmul.mubr.f32.gmra.mxu0 %v6918
    %v7084 = vpop.f32.mrf.mxu0
    %v7085 = vadd.f32 0.0, %v7084
    %v7086 = vpop.f32.mrf.mxu0
    %7087 = vmatprep.mubr.f32.mxu0 0.0
    %7088 = vmatmul.mubr.f32.gmra.mxu0 %v6919
    %v7089 = vpop.f32.mrf.mxu0
    %v7090 = vadd.f32 0.0, %v7089
    %v7091 = vpop.f32.mrf.mxu0
    %7092 = vmatprep.mubr.f32.mxu0 0.0
    %7093 = vmatmul.mubr.f32.gmra.mxu0 %v6920
    %v7094 = vpop.f32.mrf.mxu0
    %v7095 = vadd.f32 0.0, %v7094
    %v7096 = vpop.f32.mrf.mxu0
    %7097 = vmatprep.mubr.f32.mxu0 0.0
    %7098 = vmatmul.mubr.f32.gmra.mxu0 %v6921
    %v7099 = vpop.f32.mrf.mxu0
    %v7100 = vadd.f32 0.0, %v7099
    %v7101 = vpop.f32.mrf.mxu0
    %7102 = vmatprep.mubr.f32.mxu0 0.0
    %7103 = vmatmul.mubr.f32.gmra.mxu0 %v6922
    %v7104 = vpop.f32.mrf.mxu0
    %v7105 = vadd.f32 0.0, %v7104
    %v7106 = vpop.f32.mrf.mxu0
    %7107 = vmatprep.mubr.f32.mxu0 0.0
    %7108 = vmatmul.mubr.f32.gmra.mxu0 %v6923
    %v7109 = vpop.f32.mrf.mxu0
    %v7110 = vadd.f32 0.0, %v7109
    %v7111 = vpop.f32.mrf.mxu0
    %7112 = vmatprep.mubr.f32.mxu0 0.0
    %7113 = vmatmul.mubr.f32.gmra.mxu0 %v6924
    %v7114 = vpop.f32.mrf.mxu0
    %v7115 = vadd.f32 0.0, %v7114
    %v7116 = vpop.f32.mrf.mxu0
    %7117 = vdwg.mxu0
    %v7119 = vsel %vm742, %v7040, 0
    %v7122 = vsel %vm742, %v7045, 0
    %v7125 = vsel %vm742, %v7050, 0
    %v7128 = vsel %vm742, %v7055, 0
    %v7131 = vsel %vm742, %v7060, 0
    %v7134 = vsel %vm742, %v7065, 0
    %v7137 = vsel %vm742, %v7070, 0
    %v7140 = vsel %vm742, %v7075, 0
    %v7143 = vsel %vm742, %v7080, 0
    %v7146 = vsel %vm742, %v7085, 0
    %v7149 = vsel %vm742, %v7090, 0
    %v7152 = vsel %vm742, %v7095, 0
    %v7155 = vsel %vm742, %v7100, 0
    %v7158 = vsel %vm742, %v7105, 0
    %v7161 = vsel %vm742, %v7110, 0
    %v7164 = vsel %vm742, %v7115, 0
    %7166 = vmatprep.subr.mxu0 0.0
    %7167 = vmatpush1.msra.mxu0 0.0
    %7168 = vmatprep.subr.mxu0 0.0
    %7169 = vmatpush1.msra.mxu0 0.0
    %7170 = vmatprep.subr.mxu0 0.0
    %7171 = vmatpush1.msra.mxu0 0.0
    %7172 = vmatprep.subr.mxu0 0.0
    %7173 = vmatpush1.msra.mxu0 0.0
    %7174 = vmatprep.subr.mxu0 0.0
    %7175 = vmatpush1.msra.mxu0 0.0
    %7176 = vmatprep.subr.mxu0 0.0
    %7177 = vmatpush1.msra.mxu0 0.0
    %7178 = vmatprep.subr.mxu0 0.0
    %7179 = vmatpush1.msra.mxu0 0.0
    %7180 = vmatprep.subr.mxu0 0.0
    %7181 = vmatpush1.msra.mxu0 0.0
    %7182 = vmatprep.subr.mxu0 0.0
    %7183 = vmatpush1.msra.mxu0 0.0
    %7184 = vmatprep.subr.mxu0 0.0
    %7185 = vmatpush1.msra.mxu0 0.0
    %7186 = vmatprep.subr.mxu0 0.0
    %7187 = vmatpush1.msra.mxu0 0.0
    %7188 = vmatprep.subr.mxu0 0.0
    %7189 = vmatpush1.msra.mxu0 0.0
    %7190 = vmatprep.subr.mxu0 0.0
    %7191 = vmatpush1.msra.mxu0 0.0
    %7192 = vmatprep.subr.mxu0 0.0
    %7193 = vmatpush1.msra.mxu0 0.0
    %7194 = vmatprep.subr.mxu0 0.0
    %7195 = vmatpush1.msra.mxu0 %v725
    %7196 = vmatprep.subr.mxu0 0.0
    %7197 = vmatpush1.msra.mxu0 %v724
    %7198 = vmatprep.subr.mxu0 0.0
    %7199 = vmatpush2.msra.mxu0 0.0
    %7200 = vmatprep.subr.mxu0 0.0
    %7201 = vmatpush2.msra.mxu0 0.0
    %7202 = vmatprep.subr.mxu0 0.0
    %7203 = vmatpush2.msra.mxu0 0.0
    %7204 = vmatprep.subr.mxu0 0.0
    %7205 = vmatpush2.msra.mxu0 0.0
    %7206 = vmatprep.subr.mxu0 0.0
    %7207 = vmatpush2.msra.mxu0 0.0
    %7208 = vmatprep.subr.mxu0 0.0
    %7209 = vmatpush2.msra.mxu0 0.0
    %7210 = vmatprep.subr.mxu0 0.0
    %7211 = vmatpush2.msra.mxu0 0.0
    %7212 = vmatprep.subr.mxu0 0.0
    %7213 = vmatpush2.msra.mxu0 0.0
    %7214 = vmatprep.subr.mxu0 0.0
    %7215 = vmatpush2.msra.mxu0 0.0
    %7216 = vmatprep.subr.mxu0 0.0
    %7217 = vmatpush2.msra.mxu0 0.0
    %7218 = vmatprep.subr.mxu0 0.0
    %7219 = vmatpush2.msra.mxu0 0.0
    %7220 = vmatprep.subr.mxu0 0.0
    %7221 = vmatpush2.msra.mxu0 0.0
    %7222 = vmatprep.subr.mxu0 0.0
    %7223 = vmatpush2.msra.mxu0 0.0
    %7224 = vmatprep.subr.mxu0 0.0
    %7225 = vmatpush2.msra.mxu0 0.0
    %7226 = vmatprep.subr.mxu0 0.0
    %7227 = vmatpush2.msra.mxu0 0.0
    %7228 = vmatprep.subr.mxu0 0.0
    %7229 = vmatpush2.msra.mxu0 0.0
    %7230 = vmatprep.mubr.f32.mxu0 0.0
    %7231 = vmatmul.mubr.f32.gmra.mxu0 %v7119
    %v7232 = vpop.f32.mrf.mxu0
    %v7233 = vadd.f32 0.0, %v7232
    %v7234 = vpop.f32.mrf.mxu0
    %7235 = vmatprep.mubr.f32.mxu0 0.0
    %7236 = vmatmul.mubr.f32.gmra.mxu0 %v7122
    %v7237 = vpop.f32.mrf.mxu0
    %v7238 = vadd.f32 0.0, %v7237
    %v7239 = vpop.f32.mrf.mxu0
    %7240 = vmatprep.mubr.f32.mxu0 0.0
    %7241 = vmatmul.mubr.f32.gmra.mxu0 %v7125
    %v7242 = vpop.f32.mrf.mxu0
    %v7243 = vadd.f32 0.0, %v7242
    %v7244 = vpop.f32.mrf.mxu0
    %7245 = vmatprep.mubr.f32.mxu0 0.0
    %7246 = vmatmul.mubr.f32.gmra.mxu0 %v7128
    %v7247 = vpop.f32.mrf.mxu0
    %v7248 = vadd.f32 0.0, %v7247
    %v7249 = vpop.f32.mrf.mxu0
    %7250 = vmatprep.mubr.f32.mxu0 0.0
    %7251 = vmatmul.mubr.f32.gmra.mxu0 %v7131
    %v7252 = vpop.f32.mrf.mxu0
    %v7253 = vadd.f32 0.0, %v7252
    %v7254 = vpop.f32.mrf.mxu0
    %7255 = vmatprep.mubr.f32.mxu0 0.0
    %7256 = vmatmul.mubr.f32.gmra.mxu0 %v7134
    %v7257 = vpop.f32.mrf.mxu0
    %v7258 = vadd.f32 0.0, %v7257
    %v7259 = vpop.f32.mrf.mxu0
    %7260 = vmatprep.mubr.f32.mxu0 0.0
    %7261 = vmatmul.mubr.f32.gmra.mxu0 %v7137
    %v7262 = vpop.f32.mrf.mxu0
    %v7263 = vadd.f32 0.0, %v7262
    %v7264 = vpop.f32.mrf.mxu0
    %7265 = vmatprep.mubr.f32.mxu0 0.0
    %7266 = vmatmul.mubr.f32.gmra.mxu0 %v7140
    %v7267 = vpop.f32.mrf.mxu0
    %v7268 = vadd.f32 0.0, %v7267
    %v7269 = vpop.f32.mrf.mxu0
    %7270 = vmatprep.mubr.f32.mxu0 0.0
    %7271 = vmatmul.mubr.f32.gmra.mxu0 %v7143
    %v7272 = vpop.f32.mrf.mxu0
    %v7273 = vadd.f32 0.0, %v7272
    %v7274 = vpop.f32.mrf.mxu0
    %7275 = vmatprep.mubr.f32.mxu0 0.0
    %7276 = vmatmul.mubr.f32.gmra.mxu0 %v7146
    %v7277 = vpop.f32.mrf.mxu0
    %v7278 = vadd.f32 0.0, %v7277
    %v7279 = vpop.f32.mrf.mxu0
    %7280 = vmatprep.mubr.f32.mxu0 0.0
    %7281 = vmatmul.mubr.f32.gmra.mxu0 %v7149
    %v7282 = vpop.f32.mrf.mxu0
    %v7283 = vadd.f32 0.0, %v7282
    %v7284 = vpop.f32.mrf.mxu0
    %7285 = vmatprep.mubr.f32.mxu0 0.0
    %7286 = vmatmul.mubr.f32.gmra.mxu0 %v7152
    %v7287 = vpop.f32.mrf.mxu0
    %v7288 = vadd.f32 0.0, %v7287
    %v7289 = vpop.f32.mrf.mxu0
    %7290 = vmatprep.mubr.f32.mxu0 0.0
    %7291 = vmatmul.mubr.f32.gmra.mxu0 %v7155
    %v7292 = vpop.f32.mrf.mxu0
    %v7293 = vadd.f32 0.0, %v7292
    %v7294 = vpop.f32.mrf.mxu0
    %7295 = vmatprep.mubr.f32.mxu0 0.0
    %7296 = vmatmul.mubr.f32.gmra.mxu0 %v7158
    %v7297 = vpop.f32.mrf.mxu0
    %v7298 = vadd.f32 0.0, %v7297
    %v7299 = vpop.f32.mrf.mxu0
    %7300 = vmatprep.mubr.f32.mxu0 0.0
    %7301 = vmatmul.mubr.f32.gmra.mxu0 %v7161
    %v7302 = vpop.f32.mrf.mxu0
    %v7303 = vadd.f32 0.0, %v7302
    %v7304 = vpop.f32.mrf.mxu0
    %7305 = vmatprep.mubr.f32.mxu0 0.0
    %7306 = vmatmul.mubr.f32.gmra.mxu0 %v7164
    %v7307 = vpop.f32.mrf.mxu0
    %v7308 = vadd.f32 0.0, %v7307
    %v7309 = vpop.f32.mrf.mxu0
    %7310 = vdwg.mxu0
    %v7311 = vadd.f32 %v6476, %v7233
    %v7312 = vadd.f32 %v6477, %v7238
    %v7313 = vadd.f32 %v6478, %v7243
    %v7314 = vadd.f32 %v6479, %v7248
    %v7315 = vadd.f32 %v6480, %v7253
    %v7316 = vadd.f32 %v6481, %v7258
    %v7317 = vadd.f32 %v6482, %v7263
    %v7318 = vadd.f32 %v6483, %v7268
    %v7319 = vadd.f32 %v6484, %v7273
    %v7320 = vadd.f32 %v6485, %v7278
    %v7321 = vadd.f32 %v6486, %v7283
    %v7322 = vadd.f32 %v6487, %v7288
    %v7323 = vadd.f32 %v6488, %v7293
    %v7324 = vadd.f32 %v6489, %v7298
    %v7325 = vadd.f32 %v6490, %v7303
    %v7326 = vadd.f32 %v6491, %v7308
    %v7327 = vadd.f32 %v84, %v7311
    %v7328 = vadd.f32 %v85, %v7312
    %v7329 = vadd.f32 %v86, %v7313
    %v7330 = vadd.f32 %v87, %v7314
    %v7331 = vadd.f32 %v88, %v7315
    %v7332 = vadd.f32 %v89, %v7316
    %v7333 = vadd.f32 %v90, %v7317
    %v7334 = vadd.f32 %v91, %v7318
    %v7335 = vadd.f32 %v92, %v7319
    %v7336 = vadd.f32 %v93, %v7320
    %v7337 = vadd.f32 %v94, %v7321
    %v7338 = vadd.f32 %v95, %v7322
    %v7339 = vadd.f32 %v96, %v7323
    %v7340 = vadd.f32 %v97, %v7324
    %v7341 = vadd.f32 %v98, %v7325
    %v7342 = vadd.f32 %v99, %v7326
    %v7343 = vld [vmem:[%s7] sm:$0x1]
    %v7345 = vlaneseq
    %v7346 = vshrl.u32 %v7345, 7
    %v7347 = vsub.s32 0, %v7346
    %v7348 = vrot.slane %v7343, %v7347
    %v7350 = vadd.f32 %v7327, %v7348
    %v7351 = vadd.f32 %v7328, %v7348
    %v7352 = vadd.f32 %v7329, %v7348
    %v7353 = vadd.f32 %v7330, %v7348
    %v7354 = vadd.f32 %v7331, %v7348
    %v7355 = vadd.f32 %v7332, %v7348
    %v7356 = vadd.f32 %v7333, %v7348
    %v7357 = vadd.f32 %v7334, %v7348
    %v7358 = vadd.f32 %v7335, %v7348
    %v7359 = vadd.f32 %v7336, %v7348
    %v7360 = vadd.f32 %v7337, %v7348
    %v7361 = vadd.f32 %v7338, %v7348
    %v7362 = vadd.f32 %v7339, %v7348
    %v7363 = vadd.f32 %v7340, %v7348
    %v7364 = vadd.f32 %v7341, %v7348
    %v7365 = vadd.f32 %v7342, %v7348
    %7366 = vst [vmem:[%s8] sm:$0xff] %v7350
    %7367 = vst [vmem:[%s8 + $0x8] sm:$0xff] %v7351
    %7368 = vst [vmem:[%s8 + $0x10] sm:$0xff] %v7352
    %7369 = vst [vmem:[%s8 + $0x18] sm:$0xff] %v7353
    %7370 = vst [vmem:[%s8 + $0x20] sm:$0xff] %v7354
    %7371 = vst [vmem:[%s8 + $0x28] sm:$0xff] %v7355
    %7372 = vst [vmem:[%s8 + $0x30] sm:$0xff] %v7356
    %7373 = vst [vmem:[%s8 + $0x38] sm:$0xff] %v7357
    %7374 = vst [vmem:[%s8 + $0x40] sm:$0xff] %v7358
    %7375 = vst [vmem:[%s8 + $0x48] sm:$0xff] %v7359
    %7376 = vst [vmem:[%s8 + $0x50] sm:$0xff] %v7360
    %7377 = vst [vmem:[%s8 + $0x58] sm:$0xff] %v7361
    %7378 = vst [vmem:[%s8 + $0x60] sm:$0xff] %v7362
    %7379 = vst [vmem:[%s8 + $0x68] sm:$0xff] %v7363
    %7380 = vst [vmem:[%s8 + $0x70] sm:$0xff] %v7364
    %7381 = vst [vmem:[%s8 + $0x78] sm:$0xff] %v7365
    // Predicated region
    $region50: #{mixed_transformer_cell.2} parent=1 // pred_check
      _
    $region51: #{mixed_transformer_cell.2} parent=1 // pred_check_branch
      %7383 = sbr.rel (0) target = $region53
    $region52: #{mixed_transformer_cell.2} parent=1 // pred_region
      _
    $region53: #{mixed_transformer_cell.2} parent=1 // pred_fallthru
      _
    // Predicated region
    $region54: #{mixed_transformer_cell.2} parent=1 // pred_check
      _
    $region55: #{mixed_transformer_cell.2} parent=1 // pred_check_branch
      %7385 = sbr.rel (0) target = $region57
    $region56: #{mixed_transformer_cell.2} parent=1 // pred_region
      _
    $region57: #{mixed_transformer_cell.2} parent=1 // pred_fallthru
      _
    %7386 = vsyncpa [#allocation3], 1
    %7387 = vsyncpa [#allocation5], 1
    %7388 = vsyncpa [#allocation8], 1

</llo_original>
